<compile_context>
chip_gen: v6e
topology: v6e:2x2x1
jax: 0.10.0
libtpu: 0.0.40
codegen_flags: <defaults>
</compile_context>

<pallas_src>
import functools

import jax
import jax.numpy as jnp
from jax import lax
from jax.experimental import pallas as pl
from jax.experimental.pallas import tpu as pltpu

LANE = 128             # lane width / channel padding
TM = 512               # aggregation: node row-block
TK = 512               # aggregation: neighbor (reduction) block
TM_LIN = 512           # feature transform: row block
RESIDENT_T_BYTES = 8 * 1024 * 1024     # keep t resident in VMEM when <= this
VMEM_LIMIT = 48 * 1024 * 1024          # fits v7x (64 MiB physical VMEM)


def _round_up(n, m):
    return ((n + m - 1) // m) * m


def _pad2d(a, rows, cols):
    return jnp.pad(a, ((0, rows - a.shape[0]), (0, cols - a.shape[1])))


# ----------------------------------------------------------------------------
# Kernels
# ----------------------------------------------------------------------------
def _linear_kernel(x_ref, w_ref, o_ref):
    # t = x @ W  (bf16 inputs, f32 MXU accumulate, bf16 out for the agg matmul)
    o_ref[...] = jnp.dot(
        x_ref[...], w_ref[...], preferred_element_type=jnp.float32
    ).astype(o_ref.dtype)


def _agg_kernel(adj_ref, t_ref, b_ref, o_ref, acc_ref, *,
                epilogue, out_c, t_resident):
    k = pl.program_id(1)

    @pl.when(k == 0)
    def _():
        acc_ref[...] = jnp.zeros_like(acc_ref)

    if t_resident:
        # whole t lives in VMEM; slice the k-th neighbor block (no HBM traffic)
        off = pl.multiple_of(k * TK, TK)
        t_blk = t_ref[pl.ds(off, TK), :]
    else:
        t_blk = t_ref[...]

    # steady state: MXU-only accumulate over neighbor blocks
    acc_ref[...] += jnp.dot(adj_ref[...], t_blk,
                            preferred_element_type=jnp.float32)

    @pl.when(k == pl.num_programs(1) - 1)
    def _():
        h = acc_ref[...] + b_ref[...]                       # f32 epilogue
        if epilogue == "relu":
            o_ref[...] = jnp.maximum(h, 0.0).astype(o_ref.dtype)
        else:  # decoder: L2-normalize + masked log_softmax over real channels
            col = lax.broadcasted_iota(jnp.int32, h.shape, dimension=1)
            mask = col < out_c
            h = jnp.where(mask, h, 0.0)
            # F.normalize(z, p=2, dim=-1):  h / max(||h||, 1e-12)
            #   == h * rsqrt(max(||h||^2, 1e-24))   (rsqrt -> EUP slot)
            sq = jnp.sum(h * h, axis=-1, keepdims=True)
            z = h * lax.rsqrt(jnp.maximum(sq, 1e-24))
            zm = jnp.where(mask, z, -jnp.inf)
            m = jnp.max(zm, axis=-1, keepdims=True)
            e = jnp.where(mask, jnp.exp(z - m), 0.0)
            lse = jnp.log(jnp.sum(e, axis=-1, keepdims=True)) + m
            o_ref[...] = (z - lse).astype(o_ref.dtype)


# ----------------------------------------------------------------------------
# pallas_call wrappers
# ----------------------------------------------------------------------------
def _linear(x_p, w_p):
    n_pad, cin_pad = x_p.shape
    cout_pad = w_p.shape[1]
    return pl.pallas_call(
        _linear_kernel,
        out_shape=jax.ShapeDtypeStruct((n_pad, cout_pad), jnp.bfloat16),
        grid_spec=pltpu.PrefetchScalarGridSpec(
            num_scalar_prefetch=0,
            grid=(n_pad // TM_LIN,),
            in_specs=[pl.BlockSpec((TM_LIN, cin_pad), lambda i: (i, 0)),
                      pl.BlockSpec((cin_pad, cout_pad), lambda i: (0, 0))],
            out_specs=pl.BlockSpec((TM_LIN, cout_pad), lambda i: (i, 0))),
        compiler_params=pltpu.CompilerParams(
            dimension_semantics=("parallel",),
            vmem_limit_bytes=VMEM_LIMIT),
        cost_estimate=pl.CostEstimate(
            flops=2 * n_pad * cin_pad * cout_pad,
            transcendentals=0,
            bytes_accessed=2 * (n_pad * cin_pad + cin_pad * cout_pad
                                + n_pad * cout_pad)),
    )(x_p, w_p)


def _aggregate(adj_p, t_p, b_p, *, epilogue, out_c, out_dtype):
    n_pad = adj_p.shape[0]
    cout_pad = t_p.shape[1]

    # Keep t fully resident in VMEM when it fits (removes per-row-block
    # re-reads of t from HBM); otherwise stream TK-blocks.
    t_resident = (n_pad * cout_pad * 2) <= RESIDENT_T_BYTES
    if t_resident:
        t_spec = pl.BlockSpec((n_pad, cout_pad), lambda i, k: (0, 0))
        t_bytes = 2 * n_pad * cout_pad
    else:
        t_spec = pl.BlockSpec((TK, cout_pad), lambda i, k: (k, 0))
        t_bytes = 2 * n_pad * cout_pad * (n_pad // TM)

    kern = functools.partial(_agg_kernel, epilogue=epilogue, out_c=out_c,
                             t_resident=t_resident)
    n_trans = 0 if epilogue == "relu" else n_pad * cout_pad
    return pl.pallas_call(
        kern,
        out_shape=jax.ShapeDtypeStruct((n_pad, cout_pad), out_dtype),
        grid_spec=pltpu.PrefetchScalarGridSpec(
            num_scalar_prefetch=0,
            grid=(n_pad // TM, n_pad // TK),
            in_specs=[pl.BlockSpec((TM, TK), lambda i, k: (i, k)),
                      t_spec,
                      pl.BlockSpec((1, cout_pad), lambda i, k: (0, 0))],
            out_specs=pl.BlockSpec((TM, cout_pad), lambda i, k: (i, 0)),
            scratch_shapes=[pltpu.VMEM((TM, cout_pad), jnp.float32)]),
        compiler_params=pltpu.CompilerParams(
            dimension_semantics=("parallel", "arbitrary"),
            vmem_limit_bytes=VMEM_LIMIT),
        cost_estimate=pl.CostEstimate(
            flops=2 * n_pad * n_pad * cout_pad,
            transcendentals=n_trans,
            bytes_accessed=2 * n_pad * n_pad + t_bytes
                           + n_pad * cout_pad * jnp.dtype(out_dtype).itemsize),
    )(adj_p, t_p, b_p)


# ----------------------------------------------------------------------------
# GNN parameters + one-time preparation (padding / casts hoisted out of jit)
# ----------------------------------------------------------------------------
def init_gnn_params(key, in_channels, hidden_channels, out_channels, num_layers):
    params = {"convs": []}
    c_in = in_channels
    for _ in range(num_layers - 1):
        key, kw = jax.random.split(key)
        scale = (6.0 / (c_in + hidden_channels)) ** 0.5
        w = jax.random.uniform(kw, (c_in, hidden_channels), jnp.float32,
                               minval=-scale, maxval=scale)
        b = jnp.zeros((hidden_channels,), jnp.float32)
        params["convs"].append((w, b))
        c_in = hidden_channels
    key, kw = jax.random.split(key)
    scale = (6.0 / (hidden_channels + out_channels)) ** 0.5
    wd = jax.random.uniform(kw, (hidden_channels, out_channels), jnp.float32,
                            minval=-scale, maxval=scale)
    bd = jnp.zeros((out_channels,), jnp.float32)
    params["decoder"] = (wd, bd)
    return params


def prepare_inputs(params, adj_t):
    """Pad + cast adjacency and weights ONCE, outside the jitted forward."""
    n = adj_t.shape[0]
    n_pad = _round_up(n, max(TM, TK, TM_LIN))
    adj_p = _pad2d(adj_t, n_pad, n_pad).astype(jnp.bfloat16)

    convs = []
    for w, b in params["convs"]:
        cin_pad = _round_up(w.shape[0], LANE)
        cout_pad = _round_up(w.shape[1], LANE)
        convs.append((_pad2d(w, cin_pad, cout_pad).astype(jnp.bfloat16),
                      _pad2d(b[None, :], 1, cout_pad)))            # bias in f32

    wd, bd = params["decoder"]
    cin_pad = _round_up(wd.shape[0], LANE)
    cout_pad = _round_up(wd.shape[1], LANE)
    dec_w = _pad2d(wd, cin_pad, cout_pad).astype(jnp.bfloat16)
    dec_b = _pad2d(bd[None, :], 1, cout_pad)
    return adj_p, tuple(convs), dec_w, dec_b, n, wd.shape[1]


@functools.partial(jax.jit, static_argnames=("n", "out_c"))
def gnn_forward(adj_p, conv_params, dec_w, dec_b, x, *, n, out_c):
    n_pad = adj_p.shape[0]
    cin_pad = conv_params[0][0].shape[0] if conv_params else dec_w.shape[0]
    h = _pad2d(x, n_pad, cin_pad).astype(jnp.bfloat16)

    for w_p, b_p in conv_params:
        t = _linear(h, w_p)                                   # h @ W (reassociated)
        h = _aggregate(adj_p, t, b_p, epilogue="relu",
                       out_c=w_p.shape[1], out_dtype=jnp.bfloat16)
        # dropout: identity (inference path)

    t = _linear(h, dec_w)
    z = _aggregate(adj_p, t, dec_b, epilogue="normalize_log_softmax",
                   out_c=out_c, out_dtype=jnp.float32)
    return z[:n, :out_c]


def gnn_forward_ref(params, x, adj_t):
    # pure-JAX f32 reference (same math) for a numerical sanity check
    h = x
    for w, b in params["convs"]:
        h = jnp.maximum(adj_t @ (h @ w) + b[None, :], 0.0)
    wd, bd = params["decoder"]
    z = adj_t @ (h @ wd) + bd[None, :]
    norm = jnp.sqrt(jnp.sum(z * z, axis=-1, keepdims=True))
    z = z / jnp.maximum(norm, 1e-12)
    return jax.nn.log_softmax(z, axis=-1)


# ----------------------------------------------------------------------------
# main
# ----------------------------------------------------------------------------
if __name__ == "__main__":
    key = jax.random.PRNGKey(0)
    N = 600           # nodes (non-multiple of 512: exercises padding; -> 2 row blocks)
    IN_C = 8          # in_channels
    HID = 32          # hidden_channels
    OUT_C = 10        # out_channels
    NUM_LAYERS = 3    # -> 2 GENsConv layers + decoder

    key, kx, ka, kp = jax.random.split(key, 4)
    x = jax.random.normal(kx, (N, IN_C), jnp.float32)

    # dense symmetric adjacency with self-loops, row-normalized
    a = (jax.random.uniform(ka, (N, N)) < 0.1).astype(jnp.float32)
    a = jnp.maximum(a, a.T) + jnp.eye(N, dtype=jnp.float32)
    a = a / jnp.sum(a, axis=1, keepdims=True)

    params = init_gnn_params(kp, IN_C, HID, OUT_C, NUM_LAYERS)

    # one-time padding / bf16 casts (outside the jitted forward)
    adj_p, conv_params, dec_w, dec_b, n, out_c = prepare_inputs(params, a)

    out = gnn_forward(adj_p, conv_params, dec_w, dec_b, x, n=n, out_c=out_c)
    jax.block_until_ready(out)

    assert out.shape == (N, OUT_C)
    # log-softmax rows must sum (in prob space) to ~1
    assert bool(jnp.allclose(jnp.sum(jnp.exp(out), axis=-1), 1.0, atol=1e-3))
    # matches the f32 reference within bf16 matmul tolerance
    ref = gnn_forward_ref(params, x, a)
    err = float(jnp.max(jnp.abs(out - ref)))
    assert err < 0.1, f"max abs err vs reference: {err}"
    print("KERNEL_OK")
</pallas_src>

<mosaic_0001>
module attributes {stable_mosaic.version = 11 : i64} {
  func.func @_linear_kernel(%arg0: i32, %arg1: memref<512x128xbf16, #tpu.memory_space<vmem>>, %arg2: memref<128x128xbf16, #tpu.memory_space<vmem>>, %arg3: memref<512x128xbf16, #tpu.memory_space<vmem>>) attributes {dimension_semantics = [#tpu.dimension_semantics<parallel>], iteration_bounds = array<i64: 2>, scalar_prefetch = 0 : i64, scratch_operands = 0 : i64, tpu.core_type = #tpu.core_type<tc>, window_params = [{transform_indices = @transform_0, window_bounds = array<i64: 512, 128>}, {pipeline_mode = #tpu.pipeline_mode<synchronous>, transform_indices = @transform_1, window_bounds = array<i64: 128, 128>}, {transform_indices = @transform_2, window_bounds = array<i64: 512, 128>}]} {
    %c0 = arith.constant 0 : index
    %c0_0 = arith.constant 0 : index
    %0 = vector.load %arg1[%c0, %c0_0] : memref<512x128xbf16, #tpu.memory_space<vmem>>, vector<512x128xbf16>
    %c0_1 = arith.constant 0 : index
    %c0_2 = arith.constant 0 : index
    %1 = vector.load %arg2[%c0_1, %c0_2] : memref<128x128xbf16, #tpu.memory_space<vmem>>, vector<128x128xbf16>
    %cst = arith.constant dense<0.000000e+00> : vector<512x128xf32>
    %2 = tpu.matmul %0, %1, %cst {dimension_numbers = #tpu.dot_dimension_numbers<[1], [0], [0], [1], [0, 0, 1, 1], [], []>} : vector<512x128xbf16>, vector<128x128xbf16>, vector<512x128xf32> -> vector<512x128xf32>
    %3 = arith.truncf %2 : vector<512x128xf32> to vector<512x128xbf16>
    %c0_3 = arith.constant 0 : index
    %c0_4 = arith.constant 0 : index
    %4 = vector.load %arg3[%c0_3, %c0_4] : memref<512x128xbf16, #tpu.memory_space<vmem>>, vector<512x128xbf16>
    tpu.vector_store %arg3[%c0_3, %c0_4], %3 {strides = array<i32>} : memref<512x128xbf16, #tpu.memory_space<vmem>>, vector<512x128xbf16>,
    return
  }
  func.func @transform_0(%arg0: i32) -> (i32, i32) {
    %c0_i32 = arith.constant 0 : i32
    %c0_i32_0 = arith.constant 0 : i32
    return %arg0, %c0_i32 : i32, i32
  }
  func.func @transform_1(%arg0: i32) -> (i32, i32) {
    %c0_i32 = arith.constant 0 : i32
    %c0_i32_0 = arith.constant 0 : i32
    %c0_i32_1 = arith.constant 0 : i32
    return %c0_i32, %c0_i32_0 : i32, i32
  }
  func.func @transform_2(%arg0: i32) -> (i32, i32) {
    %c0_i32 = arith.constant 0 : i32
    %c0_i32_0 = arith.constant 0 : i32
    return %arg0, %c0_i32 : i32, i32
  }
}

module attributes {stable_mosaic.version = 11 : i64} {
  func.func @_agg_kernel(%arg0: i32, %arg1: i32, %arg2: memref<512x512xbf16, #tpu.memory_space<vmem>>, %arg3: memref<1024x128xbf16, #tpu.memory_space<vmem>>, %arg4: memref<1x128xf32, #tpu.memory_space<vmem>>, %arg5: memref<512x128xbf16, #tpu.memory_space<vmem>>, %arg6: memref<512x128xf32, #tpu.memory_space<vmem>>) attributes {dimension_semantics = [#tpu.dimension_semantics<parallel>, #tpu.dimension_semantics<arbitrary>], iteration_bounds = array<i64: 2, 2>, scalar_prefetch = 0 : i64, scratch_operands = 1 : i64, tpu.core_type = #tpu.core_type<tc>, window_params = [{transform_indices = @transform_0, window_bounds = array<i64: 512, 512>}, {pipeline_mode = #tpu.pipeline_mode<synchronous>, transform_indices = @transform_1, window_bounds = array<i64: 1024, 128>}, {pipeline_mode = #tpu.pipeline_mode<synchronous>, transform_indices = @transform_2, window_bounds = array<i64: 1, 128>}, {transform_indices = @transform_3, window_bounds = array<i64: 512, 128>}]} {
    %c0_i32 = arith.constant 0 : i32
    %0 = arith.cmpi eq, %arg1, %c0_i32 : i32
    %1 = arith.extui %0 : i1 to i32
    %c0_i32_0 = arith.constant 0 : i32
    %2 = arith.cmpi ne, %1, %c0_i32_0 : i32
    scf.if %2 {
      %cst_8 = arith.constant 0.000000e+00 : f32
      %15 = vector.broadcast %cst_8 : f32 to vector<512x128xf32>
      %c0_9 = arith.constant 0 : index
      %c0_10 = arith.constant 0 : index
      %16 = vector.load %arg6[%c0_9, %c0_10] : memref<512x128xf32, #tpu.memory_space<vmem>>, vector<512x128xf32>
      tpu.vector_store %arg6[%c0_9, %c0_10], %15 {strides = array<i32>} : memref<512x128xf32, #tpu.memory_space<vmem>>, vector<512x128xf32>,
    } else {
    }
    %c512_i32 = arith.constant 512 : i32
    %3 = arith.muli %arg1, %c512_i32 : i32
    %4 = tpu.assume_multiple %3, 512 : i32
    %5 = arith.index_cast %4 : i32 to index
    %c0 = arith.constant 0 : index
    %6 = vector.load %arg3[%5, %c0] : memref<1024x128xbf16, #tpu.memory_space<vmem>>, vector<512x128xbf16>
    %c0_1 = arith.constant 0 : index
    %c0_2 = arith.constant 0 : index
    %7 = vector.load %arg6[%c0_1, %c0_2] : memref<512x128xf32, #tpu.memory_space<vmem>>, vector<512x128xf32>
    %c0_3 = arith.constant 0 : index
    %c0_4 = arith.constant 0 : index
    %8 = vector.load %arg2[%c0_3, %c0_4] : memref<512x512xbf16, #tpu.memory_space<vmem>>, vector<512x512xbf16>
    %cst = arith.constant dense<0.000000e+00> : vector<512x128xf32>
    %9 = tpu.matmul %8, %6, %cst {dimension_numbers = #tpu.dot_dimension_numbers<[1], [0], [0], [1], [0, 0, 1, 1], [], []>} : vector<512x512xbf16>, vector<512x128xbf16>, vector<512x128xf32> -> vector<512x128xf32>
    %10 = arith.addf %7, %9 : vector<512x128xf32>
    %c0_5 = arith.constant 0 : index
    %c0_6 = arith.constant 0 : index
    %11 = vector.load %arg6[%c0_5, %c0_6] : memref<512x128xf32, #tpu.memory_space<vmem>>, vector<512x128xf32>
    tpu.vector_store %arg6[%c0_5, %c0_6], %10 {strides = array<i32>} : memref<512x128xf32, #tpu.memory_space<vmem>>, vector<512x128xf32>,
    %c1_i32 = arith.constant 1 : i32
    %12 = arith.cmpi eq, %arg1, %c1_i32 : i32
    %13 = arith.extui %12 : i1 to i32
    %c0_i32_7 = arith.constant 0 : i32
    %14 = arith.cmpi ne, %13, %c0_i32_7 : i32
    scf.if %14 {
      %c0_8 = arith.constant 0 : index
      %c0_9 = arith.constant 0 : index
      %15 = vector.load %arg6[%c0_8, %c0_9] : memref<512x128xf32, #tpu.memory_space<vmem>>, vector<512x128xf32>
      %c0_10 = arith.constant 0 : index
      %c0_11 = arith.constant 0 : index
      %16 = vector.load %arg4[%c0_10, %c0_11] : memref<1x128xf32, #tpu.memory_space<vmem>>, vector<1x128xf32>
      %17 = vector.broadcast %16 : vector<1x128xf32> to vector<512x128xf32>
      %18 = arith.addf %15, %17 : vector<512x128xf32>
      %cst_12 = arith.constant 0.000000e+00 : f32
      %19 = vector.broadcast %cst_12 : f32 to vector<512x128xf32>
      %20 = arith.maximumf %18, %19 : vector<512x128xf32>
      %21 = arith.truncf %20 : vector<512x128xf32> to vector<512x128xbf16>
      %c0_13 = arith.constant 0 : index
      %c0_14 = arith.constant 0 : index
      %22 = vector.load %arg5[%c0_13, %c0_14] : memref<512x128xbf16, #tpu.memory_space<vmem>>, vector<512x128xbf16>
      tpu.vector_store %arg5[%c0_13, %c0_14], %21 {strides = array<i32>} : memref<512x128xbf16, #tpu.memory_space<vmem>>, vector<512x128xbf16>,
    } else {
    }
    return
  }
  func.func @transform_0(%arg0: i32, %arg1: i32) -> (i32, i32) {
    %c0_i32 = arith.constant 0 : i32
    return %arg0, %arg1 : i32, i32
  }
  func.func @transform_1(%arg0: i32, %arg1: i32) -> (i32, i32) {
    %c0_i32 = arith.constant 0 : i32
    %c0_i32_0 = arith.constant 0 : i32
    %c0_i32_1 = arith.constant 0 : i32
    return %c0_i32, %c0_i32_0 : i32, i32
  }
  func.func @transform_2(%arg0: i32, %arg1: i32) -> (i32, i32) {
    %c0_i32 = arith.constant 0 : i32
    %c0_i32_0 = arith.constant 0 : i32
    %c0_i32_1 = arith.constant 0 : i32
    return %c0_i32, %c0_i32_0 : i32, i32
  }
  func.func @transform_3(%arg0: i32, %arg1: i32) -> (i32, i32) {
    %c0_i32 = arith.constant 0 : i32
    %c0_i32_0 = arith.constant 0 : i32
    return %arg0, %c0_i32 : i32, i32
  }
}

module attributes {stable_mosaic.version = 11 : i64} {
  func.func @_linear_kernel(%arg0: i32, %arg1: memref<512x128xbf16, #tpu.memory_space<vmem>>, %arg2: memref<128x128xbf16, #tpu.memory_space<vmem>>, %arg3: memref<512x128xbf16, #tpu.memory_space<vmem>>) attributes {dimension_semantics = [#tpu.dimension_semantics<parallel>], iteration_bounds = array<i64: 2>, scalar_prefetch = 0 : i64, scratch_operands = 0 : i64, tpu.core_type = #tpu.core_type<tc>, window_params = [{transform_indices = @transform_0, window_bounds = array<i64: 512, 128>}, {pipeline_mode = #tpu.pipeline_mode<synchronous>, transform_indices = @transform_1, window_bounds = array<i64: 128, 128>}, {transform_indices = @transform_2, window_bounds = array<i64: 512, 128>}]} {
    %c0 = arith.constant 0 : index
    %c0_0 = arith.constant 0 : index
    %0 = vector.load %arg1[%c0, %c0_0] : memref<512x128xbf16, #tpu.memory_space<vmem>>, vector<512x128xbf16>
    %c0_1 = arith.constant 0 : index
    %c0_2 = arith.constant 0 : index
    %1 = vector.load %arg2[%c0_1, %c0_2] : memref<128x128xbf16, #tpu.memory_space<vmem>>, vector<128x128xbf16>
    %cst = arith.constant dense<0.000000e+00> : vector<512x128xf32>
    %2 = tpu.matmul %0, %1, %cst {dimension_numbers = #tpu.dot_dimension_numbers<[1], [0], [0], [1], [0, 0, 1, 1], [], []>} : vector<512x128xbf16>, vector<128x128xbf16>, vector<512x128xf32> -> vector<512x128xf32>
    %3 = arith.truncf %2 : vector<512x128xf32> to vector<512x128xbf16>
    %c0_3 = arith.constant 0 : index
    %c0_4 = arith.constant 0 : index
    %4 = vector.load %arg3[%c0_3, %c0_4] : memref<512x128xbf16, #tpu.memory_space<vmem>>, vector<512x128xbf16>
    tpu.vector_store %arg3[%c0_3, %c0_4], %3 {strides = array<i32>} : memref<512x128xbf16, #tpu.memory_space<vmem>>, vector<512x128xbf16>,
    return
  }
  func.func @transform_0(%arg0: i32) -> (i32, i32) {
    %c0_i32 = arith.constant 0 : i32
    %c0_i32_0 = arith.constant 0 : i32
    return %arg0, %c0_i32 : i32, i32
  }
  func.func @transform_1(%arg0: i32) -> (i32, i32) {
    %c0_i32 = arith.constant 0 : i32
    %c0_i32_0 = arith.constant 0 : i32
    %c0_i32_1 = arith.constant 0 : i32
    return %c0_i32, %c0_i32_0 : i32, i32
  }
  func.func @transform_2(%arg0: i32) -> (i32, i32) {
    %c0_i32 = arith.constant 0 : i32
    %c0_i32_0 = arith.constant 0 : i32
    return %arg0, %c0_i32 : i32, i32
  }
}

module attributes {stable_mosaic.version = 11 : i64} {
  func.func @_agg_kernel(%arg0: i32, %arg1: i32, %arg2: memref<512x512xbf16, #tpu.memory_space<vmem>>, %arg3: memref<1024x128xbf16, #tpu.memory_space<vmem>>, %arg4: memref<1x128xf32, #tpu.memory_space<vmem>>, %arg5: memref<512x128xbf16, #tpu.memory_space<vmem>>, %arg6: memref<512x128xf32, #tpu.memory_space<vmem>>) attributes {dimension_semantics = [#tpu.dimension_semantics<parallel>, #tpu.dimension_semantics<arbitrary>], iteration_bounds = array<i64: 2, 2>, scalar_prefetch = 0 : i64, scratch_operands = 1 : i64, tpu.core_type = #tpu.core_type<tc>, window_params = [{transform_indices = @transform_0, window_bounds = array<i64: 512, 512>}, {pipeline_mode = #tpu.pipeline_mode<synchronous>, transform_indices = @transform_1, window_bounds = array<i64: 1024, 128>}, {pipeline_mode = #tpu.pipeline_mode<synchronous>, transform_indices = @transform_2, window_bounds = array<i64: 1, 128>}, {transform_indices = @transform_3, window_bounds = array<i64: 512, 128>}]} {
    %c0_i32 = arith.constant 0 : i32
    %0 = arith.cmpi eq, %arg1, %c0_i32 : i32
    %1 = arith.extui %0 : i1 to i32
    %c0_i32_0 = arith.constant 0 : i32
    %2 = arith.cmpi ne, %1, %c0_i32_0 : i32
    scf.if %2 {
      %cst_8 = arith.constant 0.000000e+00 : f32
      %15 = vector.broadcast %cst_8 : f32 to vector<512x128xf32>
      %c0_9 = arith.constant 0 : index
      %c0_10 = arith.constant 0 : index
      %16 = vector.load %arg6[%c0_9, %c0_10] : memref<512x128xf32, #tpu.memory_space<vmem>>, vector<512x128xf32>
      tpu.vector_store %arg6[%c0_9, %c0_10], %15 {strides = array<i32>} : memref<512x128xf32, #tpu.memory_space<vmem>>, vector<512x128xf32>,
    } else {
    }
    %c512_i32 = arith.constant 512 : i32
    %3 = arith.muli %arg1, %c512_i32 : i32
    %4 = tpu.assume_multiple %3, 512 : i32
    %5 = arith.index_cast %4 : i32 to index
    %c0 = arith.constant 0 : index
    %6 = vector.load %arg3[%5, %c0] : memref<1024x128xbf16, #tpu.memory_space<vmem>>, vector<512x128xbf16>
    %c0_1 = arith.constant 0 : index
    %c0_2 = arith.constant 0 : index
    %7 = vector.load %arg6[%c0_1, %c0_2] : memref<512x128xf32, #tpu.memory_space<vmem>>, vector<512x128xf32>
    %c0_3 = arith.constant 0 : index
    %c0_4 = arith.constant 0 : index
    %8 = vector.load %arg2[%c0_3, %c0_4] : memref<512x512xbf16, #tpu.memory_space<vmem>>, vector<512x512xbf16>
    %cst = arith.constant dense<0.000000e+00> : vector<512x128xf32>
    %9 = tpu.matmul %8, %6, %cst {dimension_numbers = #tpu.dot_dimension_numbers<[1], [0], [0], [1], [0, 0, 1, 1], [], []>} : vector<512x512xbf16>, vector<512x128xbf16>, vector<512x128xf32> -> vector<512x128xf32>
    %10 = arith.addf %7, %9 : vector<512x128xf32>
    %c0_5 = arith.constant 0 : index
    %c0_6 = arith.constant 0 : index
    %11 = vector.load %arg6[%c0_5, %c0_6] : memref<512x128xf32, #tpu.memory_space<vmem>>, vector<512x128xf32>
    tpu.vector_store %arg6[%c0_5, %c0_6], %10 {strides = array<i32>} : memref<512x128xf32, #tpu.memory_space<vmem>>, vector<512x128xf32>,
    %c1_i32 = arith.constant 1 : i32
    %12 = arith.cmpi eq, %arg1, %c1_i32 : i32
    %13 = arith.extui %12 : i1 to i32
    %c0_i32_7 = arith.constant 0 : i32
    %14 = arith.cmpi ne, %13, %c0_i32_7 : i32
    scf.if %14 {
      %c0_8 = arith.constant 0 : index
      %c0_9 = arith.constant 0 : index
      %15 = vector.load %arg6[%c0_8, %c0_9] : memref<512x128xf32, #tpu.memory_space<vmem>>, vector<512x128xf32>
      %c0_10 = arith.constant 0 : index
      %c0_11 = arith.constant 0 : index
      %16 = vector.load %arg4[%c0_10, %c0_11] : memref<1x128xf32, #tpu.memory_space<vmem>>, vector<1x128xf32>
      %17 = vector.broadcast %16 : vector<1x128xf32> to vector<512x128xf32>
      %18 = arith.addf %15, %17 : vector<512x128xf32>
      %cst_12 = arith.constant 0.000000e+00 : f32
      %19 = vector.broadcast %cst_12 : f32 to vector<512x128xf32>
      %20 = arith.maximumf %18, %19 : vector<512x128xf32>
      %21 = arith.truncf %20 : vector<512x128xf32> to vector<512x128xbf16>
      %c0_13 = arith.constant 0 : index
      %c0_14 = arith.constant 0 : index
      %22 = vector.load %arg5[%c0_13, %c0_14] : memref<512x128xbf16, #tpu.memory_space<vmem>>, vector<512x128xbf16>
      tpu.vector_store %arg5[%c0_13, %c0_14], %21 {strides = array<i32>} : memref<512x128xbf16, #tpu.memory_space<vmem>>, vector<512x128xbf16>,
    } else {
    }
    return
  }
  func.func @transform_0(%arg0: i32, %arg1: i32) -> (i32, i32) {
    %c0_i32 = arith.constant 0 : i32
    return %arg0, %arg1 : i32, i32
  }
  func.func @transform_1(%arg0: i32, %arg1: i32) -> (i32, i32) {
    %c0_i32 = arith.constant 0 : i32
    %c0_i32_0 = arith.constant 0 : i32
    %c0_i32_1 = arith.constant 0 : i32
    return %c0_i32, %c0_i32_0 : i32, i32
  }
  func.func @transform_2(%arg0: i32, %arg1: i32) -> (i32, i32) {
    %c0_i32 = arith.constant 0 : i32
    %c0_i32_0 = arith.constant 0 : i32
    %c0_i32_1 = arith.constant 0 : i32
    return %c0_i32, %c0_i32_0 : i32, i32
  }
  func.func @transform_3(%arg0: i32, %arg1: i32) -> (i32, i32) {
    %c0_i32 = arith.constant 0 : i32
    %c0_i32_0 = arith.constant 0 : i32
    return %arg0, %c0_i32 : i32, i32
  }
}

module attributes {stable_mosaic.version = 11 : i64} {
  func.func @_agg_kernel(%arg0: i32, %arg1: i32, %arg2: memref<512x512xbf16, #tpu.memory_space<vmem>>, %arg3: memref<1024x128xbf16, #tpu.memory_space<vmem>>, %arg4: memref<1x128xf32, #tpu.memory_space<vmem>>, %arg5: memref<512x128xf32, #tpu.memory_space<vmem>>, %arg6: memref<512x128xf32, #tpu.memory_space<vmem>>) attributes {dimension_semantics = [#tpu.dimension_semantics<parallel>, #tpu.dimension_semantics<arbitrary>], iteration_bounds = array<i64: 2, 2>, scalar_prefetch = 0 : i64, scratch_operands = 1 : i64, tpu.core_type = #tpu.core_type<tc>, window_params = [{transform_indices = @transform_0, window_bounds = array<i64: 512, 512>}, {pipeline_mode = #tpu.pipeline_mode<synchronous>, transform_indices = @transform_1, window_bounds = array<i64: 1024, 128>}, {pipeline_mode = #tpu.pipeline_mode<synchronous>, transform_indices = @transform_2, window_bounds = array<i64: 1, 128>}, {transform_indices = @transform_3, window_bounds = array<i64: 512, 128>}]} {
    %c0_i32 = arith.constant 0 : i32
    %0 = arith.cmpi eq, %arg1, %c0_i32 : i32
    %1 = arith.extui %0 : i1 to i32
    %c0_i32_0 = arith.constant 0 : i32
    %2 = arith.cmpi ne, %1, %c0_i32_0 : i32
    scf.if %2 {
      %cst_8 = arith.constant 0.000000e+00 : f32
      %15 = vector.broadcast %cst_8 : f32 to vector<512x128xf32>
      %c0_9 = arith.constant 0 : index
      %c0_10 = arith.constant 0 : index
      %16 = vector.load %arg6[%c0_9, %c0_10] : memref<512x128xf32, #tpu.memory_space<vmem>>, vector<512x128xf32>
      tpu.vector_store %arg6[%c0_9, %c0_10], %15 {strides = array<i32>} : memref<512x128xf32, #tpu.memory_space<vmem>>, vector<512x128xf32>,
    } else {
    }
    %c512_i32 = arith.constant 512 : i32
    %3 = arith.muli %arg1, %c512_i32 : i32
    %4 = tpu.assume_multiple %3, 512 : i32
    %5 = arith.index_cast %4 : i32 to index
    %c0 = arith.constant 0 : index
    %6 = vector.load %arg3[%5, %c0] : memref<1024x128xbf16, #tpu.memory_space<vmem>>, vector<512x128xbf16>
    %c0_1 = arith.constant 0 : index
    %c0_2 = arith.constant 0 : index
    %7 = vector.load %arg6[%c0_1, %c0_2] : memref<512x128xf32, #tpu.memory_space<vmem>>, vector<512x128xf32>
    %c0_3 = arith.constant 0 : index
    %c0_4 = arith.constant 0 : index
    %8 = vector.load %arg2[%c0_3, %c0_4] : memref<512x512xbf16, #tpu.memory_space<vmem>>, vector<512x512xbf16>
    %cst = arith.constant dense<0.000000e+00> : vector<512x128xf32>
    %9 = tpu.matmul %8, %6, %cst {dimension_numbers = #tpu.dot_dimension_numbers<[1], [0], [0], [1], [0, 0, 1, 1], [], []>} : vector<512x512xbf16>, vector<512x128xbf16>, vector<512x128xf32> -> vector<512x128xf32>
    %10 = arith.addf %7, %9 : vector<512x128xf32>
    %c0_5 = arith.constant 0 : index
    %c0_6 = arith.constant 0 : index
    %11 = vector.load %arg6[%c0_5, %c0_6] : memref<512x128xf32, #tpu.memory_space<vmem>>, vector<512x128xf32>
    tpu.vector_store %arg6[%c0_5, %c0_6], %10 {strides = array<i32>} : memref<512x128xf32, #tpu.memory_space<vmem>>, vector<512x128xf32>,
    %c1_i32 = arith.constant 1 : i32
    %12 = arith.cmpi eq, %arg1, %c1_i32 : i32
    %13 = arith.extui %12 : i1 to i32
    %c0_i32_7 = arith.constant 0 : i32
    %14 = arith.cmpi ne, %13, %c0_i32_7 : i32
    scf.if %14 {
      %c0_8 = arith.constant 0 : index
      %c0_9 = arith.constant 0 : index
      %15 = vector.load %arg6[%c0_8, %c0_9] : memref<512x128xf32, #tpu.memory_space<vmem>>, vector<512x128xf32>
      %c0_10 = arith.constant 0 : index
      %c0_11 = arith.constant 0 : index
      %16 = vector.load %arg4[%c0_10, %c0_11] : memref<1x128xf32, #tpu.memory_space<vmem>>, vector<1x128xf32>
      %17 = vector.broadcast %16 : vector<1x128xf32> to vector<512x128xf32>
      %18 = arith.addf %15, %17 : vector<512x128xf32>
      %19 = tpu.iota {dimensions = array<i32: 1>} : vector<512x128xi32>
      %c10_i32 = arith.constant 10 : i32
      %20 = vector.broadcast %c10_i32 : i32 to vector<512x128xi32>
      %21 = arith.cmpi slt, %19, %20 : vector<512x128xi32>
      %cst_12 = arith.constant 0.000000e+00 : f32
      %22 = vector.broadcast %cst_12 : f32 to vector<512x128xf32>
      %23 = arith.select %21, %18, %22 : vector<512x128xi1>, vector<512x128xf32>
      %24 = arith.mulf %23, %23 : vector<512x128xf32>
      %cst_13 = arith.constant dense<0.000000e+00> : vector<512xf32>
      %25 = vector.multi_reduction <add>, %24, %cst_13 [1] : vector<512x128xf32> to vector<512xf32>
      %26 = vector.shape_cast %25 : vector<512xf32> to vector<512x1xf32>
      %cst_14 = arith.constant 1.000000e-24 : f32
      %27 = vector.broadcast %cst_14 : f32 to vector<512x1xf32>
      %28 = arith.maximumf %26, %27 : vector<512x1xf32>
      %29 = math.rsqrt %28 : vector<512x1xf32>
      %30 = vector.broadcast %29 : vector<512x1xf32> to vector<512x128xf32>
      %31 = arith.mulf %23, %30 : vector<512x128xf32>
      %cst_15 = arith.constant 0xFF800000 : f32
      %32 = vector.broadcast %cst_15 : f32 to vector<512x128xf32>
      %33 = arith.select %21, %31, %32 : vector<512x128xi1>, vector<512x128xf32>
      %cst_16 = arith.constant dense<0xFF800000> : vector<512xf32>
      %34 = vector.multi_reduction <maximumf>, %33, %cst_16 [1] : vector<512x128xf32> to vector<512xf32>
      %35 = vector.shape_cast %34 : vector<512xf32> to vector<512x1xf32>
      %36 = vector.broadcast %35 : vector<512x1xf32> to vector<512x128xf32>
      %37 = arith.subf %31, %36 : vector<512x128xf32>
      %38 = math.exp %37 : vector<512x128xf32>
      %cst_17 = arith.constant 0.000000e+00 : f32
      %39 = vector.broadcast %cst_17 : f32 to vector<512x128xf32>
      %40 = arith.select %21, %38, %39 : vector<512x128xi1>, vector<512x128xf32>
      %cst_18 = arith.constant dense<0.000000e+00> : vector<512xf32>
      %41 = vector.multi_reduction <add>, %40, %cst_18 [1] : vector<512x128xf32> to vector<512xf32>
      %42 = vector.shape_cast %41 : vector<512xf32> to vector<512x1xf32>
      %43 = math.log %42 : vector<512x1xf32>
      %44 = arith.addf %43, %35 : vector<512x1xf32>
      %45 = vector.broadcast %44 : vector<512x1xf32> to vector<512x128xf32>
      %46 = arith.subf %31, %45 : vector<512x128xf32>
      %c0_19 = arith.constant 0 : index
      %c0_20 = arith.constant 0 : index
      %47 = vector.load %arg5[%c0_19, %c0_20] : memref<512x128xf32, #tpu.memory_space<vmem>>, vector<512x128xf32>
      tpu.vector_store %arg5[%c0_19, %c0_20], %46 {strides = array<i32>} : memref<512x128xf32, #tpu.memory_space<vmem>>, vector<512x128xf32>,
    } else {
    }
    return
  }
  func.func @transform_0(%arg0: i32, %arg1: i32) -> (i32, i32) {
    %c0_i32 = arith.constant 0 : i32
    return %arg0, %arg1 : i32, i32
  }
  func.func @transform_1(%arg0: i32, %arg1: i32) -> (i32, i32) {
    %c0_i32 = arith.constant 0 : i32
    %c0_i32_0 = arith.constant 0 : i32
    %c0_i32_1 = arith.constant 0 : i32
    return %c0_i32, %c0_i32_0 : i32, i32
  }
  func.func @transform_2(%arg0: i32, %arg1: i32) -> (i32, i32) {
    %c0_i32 = arith.constant 0 : i32
    %c0_i32_0 = arith.constant 0 : i32
    %c0_i32_1 = arith.constant 0 : i32
    return %c0_i32, %c0_i32_0 : i32, i32
  }
  func.func @transform_3(%arg0: i32, %arg1: i32) -> (i32, i32) {
    %c0_i32 = arith.constant 0 : i32
    %c0_i32_0 = arith.constant 0 : i32
    return %arg0, %c0_i32 : i32, i32
  }
}

</mosaic_0001>

<llo_original>
// kernel: gnn_forward.6
$region0: #{gnn_forward.6}
  #allocation0 [shape = 'u32[]', space=smem, size = 0x4, offset = 0x4, fixed_abs, tag = 'smem constant byte address 0x4 - core index']
  #allocation1 [shape = 'u32[144,128]{1,0:T(1,128)}', space=vmem, size = 0x12000, scoped, tag = 'internal scratch']
  %s0 = inlined_call_operand.vmem [shape: bf16[1024,128], index: 0, kind: input, shape index: {}]
  %s1 = inlined_call_operand.hbm [shape: bf16[128,128], index: 1, kind: input, shape index: {}]
  %s2 = inlined_call_operand.vmem [shape: bf16[1024,128], index: 2, kind: output, shape index: {}]
  %s3 = sld [smem:[#allocation0]]
  $region45: #{gnn_forward.6} parent=0
    _
  %s5 = ssub.s32 1, %s3
  %s6 = scalar_select 0, %s5, %s3
  $region1: #{gnn_forward.6} parent=0
    #allocation2 [shape = 'u8[32768]{0}', space=vmem, size = 0x8000, scoped, tag = 'input window, operand 1, single buffered']
    #allocation3 [shape = 's32[2]{0}', space=sflag, size = 0x8, scoped, tag = 'scoped memory for gnn_forward.6']
    %7 = vsyncpa [#allocation3], 0
    loop: start=0, step=1, limit=4
    $region2: #{gnn_forward.6} parent=1 // loop_pre_header
      _
    $region3: #{gnn_forward.6} parent=1 // loop_header
      %s9 = sphi 0, %s13
      %p10 = scmp.ge.s32.totalorder %s9, 4
      %s19 = sphi 0, %s21
      %s22 = sphi 0, %s19
      %s23 = sphi 0, %s22
      %s39 = sphi 0, %s23
      %s43 = sphi 0, %s43
      %s45 = sphi 0, %s43
      %s46 = sphi 0, %s45
      %s60 = sphi 0, %s46
      %s66 = sphi 0, %s68
      %s69 = sphi 0, %s66
      %s70 = sphi 0, %s69
      %s86 = sphi 0, %s70
    $region4: #{gnn_forward.6} parent=1 // loop_header_branch
      %12 = sbr.rel (%p10) target = $region8
    $region5: #{gnn_forward.6} parent=1 // loop_body
      %s14 = ssub.s32 %s9, 1
      %s15 = ssub.s32 %s9, 2
      %s16 = sadd.s32 %s9, 1
      %s17 = ssub.s32 %s9, %s16
      %p18 = scmp.eq.s32.totalorder %s17, 0
      %s20 = sadd.s32 %s19, 1
      %s21 = scalar_select %p18, %s19, %s20
      %p24 = pneg %p18
      %p25 = scmp.eq.s32.totalorder %s9, 1
      %p26 = por %p24, %p25
      %p27 = scmp.ne.s32.totalorder %s19, %s22
      %p28 = scmp.eq.s32.totalorder %s9, 0
      %p29 = por %p27, %p28
      %p30 = scmp.ne.s32.totalorder %s19, %s22
      %p31 = scmp.eq.s32.totalorder %s14, 1
      %p32 = por %p30, %p31
      %p33 = scmp.ne.s32.totalorder %s22, %s23
      %p34 = scmp.eq.s32.totalorder %s14, 0
      %p35 = por %p33, %p34
      %p36 = scmp.ne.s32.totalorder %s22, %s23
      %p37 = scmp.eq.s32.totalorder %s15, 1
      %p38 = por %p36, %p37
      %p40 = scmp.ne.s32.totalorder %s23, %s39
      %p41 = scmp.eq.s32.totalorder %s15, 0
      %p42 = por %p40, %p41
      %s44 = sadd.s32 %s43, 1
      %p47 = scmp.eq.s32.totalorder %s9, 1
      %p48 = scmp.ne.s32.totalorder %s43, %s45
      %p49 = scmp.eq.s32.totalorder %s9, 0
      %p50 = por %p48, %p49
      %p51 = scmp.ne.s32.totalorder %s43, %s45
      %p52 = scmp.eq.s32.totalorder %s14, 1
      %p53 = por %p51, %p52
      %p54 = scmp.ne.s32.totalorder %s45, %s46
      %p55 = scmp.eq.s32.totalorder %s14, 0
      %p56 = por %p54, %p55
      %p57 = scmp.ne.s32.totalorder %s45, %s46
      %p58 = scmp.eq.s32.totalorder %s15, 1
      %p59 = por %p57, %p58
      %p61 = scmp.ne.s32.totalorder %s46, %s60
      %p62 = scmp.eq.s32.totalorder %s15, 0
      %p63 = por %p61, %p62
      %s64 = ssub.s32 %s9, %s16
      %p65 = scmp.eq.s32.totalorder %s64, 0
      %s67 = sadd.s32 %s66, 1
      %s68 = scalar_select %p65, %s66, %s67
      %p71 = pneg %p65
      %p72 = scmp.eq.s32.totalorder %s9, 1
      %p73 = por %p71, %p72
      %p74 = scmp.ne.s32.totalorder %s66, %s69
      %p75 = scmp.eq.s32.totalorder %s9, 0
      %p76 = por %p74, %p75
      %p77 = scmp.ne.s32.totalorder %s66, %s69
      %p78 = scmp.eq.s32.totalorder %s14, 1
      %p79 = por %p77, %p78
      %p80 = scmp.ne.s32.totalorder %s69, %s70
      %p81 = scmp.eq.s32.totalorder %s14, 0
      %p82 = por %p80, %p81
      %p83 = scmp.ne.s32.totalorder %s69, %s70
      %p84 = scmp.eq.s32.totalorder %s15, 1
      %p85 = por %p83, %p84
      %p87 = scmp.ne.s32.totalorder %s70, %s86
      %p88 = scmp.eq.s32.totalorder %s15, 0
      %p89 = por %p87, %p88
      %p90 = scmp.le.s32.totalorder 1, %s9
      %p91 = scmp.lt.s32.totalorder %s9, 3
      %p92 = pnand %p90, %p91
      %p93 = pneg %p92
      // Predicated region
      $region9: #{gnn_forward.6} parent=5 // pred_check
        _
      $region10: #{gnn_forward.6} parent=5 // pred_check_branch
        %95 = sbr.rel (%p92) target = $region12
      $region11: #{gnn_forward.6} parent=5 // pred_region
        %s96 = ssub.s32 %s9, 1
        // Predicated region
        $region13: #{gnn_forward.6} parent=11 // pred_check
          %p97 = pneg %p56
        $region14: #{gnn_forward.6} parent=11 // pred_check_branch
          %99 = sbr.rel (%p97) target = $region16
        $region15: #{gnn_forward.6} parent=11 // pred_region
          %s101 = ssub.s32 1024, 1024
          %102 = vsyncadd [#allocation3], %s101
          %s103 = sshll.u32 [#allocation2], 4
          %s104 = int_to_ptr.vmem [resolvable:$true] %s103
          %109 = dma.hbm_to_vmem [thread:$0]  %s1, 1024, %s104, [#allocation3], 64, 64, 4
        $region16: #{gnn_forward.6} parent=11 // pred_fallthru
          _
      $region12: #{gnn_forward.6} parent=5 // pred_fallthru
        _
      %p110 = scmp.lt.s32.totalorder %s9, 2
      // Predicated region
      $region17: #{gnn_forward.6} parent=5 // pred_check
        %p111 = pneg %p110
      $region18: #{gnn_forward.6} parent=5 // pred_check_branch
        %113 = sbr.rel (%p111) target = $region20
      $region19: #{gnn_forward.6} parent=5 // pred_region
        // Predicated region
        $region21: #{gnn_forward.6} parent=19 // pred_check
          %p114 = pneg %p29
        $region22: #{gnn_forward.6} parent=19 // pred_check_branch
          %116 = sbr.rel (%p114) target = $region24
        $region23: #{gnn_forward.6} parent=19 // pred_region
          %s117 = smul.u32 64, %s9
          %p118 = scmp.lt.s32.totalorder %s117, 127
          %s119 = scalar_select %p118, %s117, 127
          %s120 = smul.addr %s119, 4
          %s121 = scalar_lea.vmem %s0, %s120
          %s122 = smul.u32 64, %s9
        $region24: #{gnn_forward.6} parent=19 // pred_fallthru
          _
      $region20: #{gnn_forward.6} parent=5 // pred_fallthru
        _
      %p123 = scmp.le.s32.totalorder 1, %s9
      %p124 = scmp.lt.s32.totalorder %s9, 3
      %p125 = pnand %p123, %p124
      %p126 = pneg %p125
      // Predicated region
      $region25: #{gnn_forward.6} parent=5 // pred_check
        _
      $region26: #{gnn_forward.6} parent=5 // pred_check_branch
        %128 = sbr.rel (%p125) target = $region28
      $region27: #{gnn_forward.6} parent=5 // pred_region
        %s129 = ssub.s32 %s9, 1
        // Predicated region
        $region29: #{gnn_forward.6} parent=27 // pred_check
          %p130 = pneg %p56
        $region30: #{gnn_forward.6} parent=27 // pred_check_branch
          %132 = sbr.rel (%p130) target = $region32
        $region31: #{gnn_forward.6} parent=27 // pred_region
          %133 = dma.done [#allocation3], 1024
        $region32: #{gnn_forward.6} parent=27 // pred_fallthru
          _
        %s134 = smul.u32 64, %s14
        %p135 = scmp.lt.s32.totalorder %s134, 127
        %s136 = scalar_select %p135, %s134, 127
        %s137 = smul.addr %s136, 4
        %s138 = scalar_lea.vmem %s0, %s137
        %p139 = pneg %p35
        %p140 = pneg %p32
        %p141 = pneg %p56
        %p142 = pneg %p53
        %p143 = pneg %p82
        %p144 = pneg %p79
        %s145 = smul.u32 64, %s14
        %p146 = scmp.lt.s32.totalorder %s145, 127
        %s147 = scalar_select %p146, %s145, 127
        %s148 = smul.addr %s147, 4
        %s149 = scalar_lea.vmem %s2, %s148
        %s150 = smul.u32 64, %s14
        %p151 = scmp.lt.s32.totalorder %s150, 127
        %s152 = scalar_select %p151, %s150, 127
        %s153 = smul.addr %s152, 4
        %s154 = scalar_lea.vmem %s0, %s153
        %s155 = smul.u32 64, %s14
        %s156 = smul.u32 64, %s14
        %p157 = scmp.lt.s32.totalorder %s156, 127
        %s158 = scalar_select %p157, %s156, 127
        %s159 = smul.addr %s158, 4
        %s160 = scalar_lea.vmem %s2, %s159
        %s161 = smul.u32 64, %s14
        %v163 = vld [vmem:[%s154] sm:$0xf]
        %v164 = vld [vmem:[%s154 + $0x4] sm:$0xf]
        %v165 = vld [vmem:[%s154 + $0x8] sm:$0xf]
        %v166 = vld [vmem:[%s154 + $0xc] sm:$0xf]
        %v167 = vld [vmem:[%s154 + $0x10] sm:$0xf]
        %v168 = vld [vmem:[%s154 + $0x14] sm:$0xf]
        %v169 = vld [vmem:[%s154 + $0x18] sm:$0xf]
        %v170 = vld [vmem:[%s154 + $0x1c] sm:$0xf]
        %v171 = vld [vmem:[%s154 + $0x20] sm:$0xf]
        %v172 = vld [vmem:[%s154 + $0x24] sm:$0xf]
        %v173 = vld [vmem:[%s154 + $0x28] sm:$0xf]
        %v174 = vld [vmem:[%s154 + $0x2c] sm:$0xf]
        %v175 = vld [vmem:[%s154 + $0x30] sm:$0xf]
        %v176 = vld [vmem:[%s154 + $0x34] sm:$0xf]
        %v177 = vld [vmem:[%s154 + $0x38] sm:$0xf]
        %v178 = vld [vmem:[%s154 + $0x3c] sm:$0xf]
        %v179 = vld [vmem:[%s154 + $0x40] sm:$0xf]
        %v180 = vld [vmem:[%s154 + $0x44] sm:$0xf]
        %v181 = vld [vmem:[%s154 + $0x48] sm:$0xf]
        %v182 = vld [vmem:[%s154 + $0x4c] sm:$0xf]
        %v183 = vld [vmem:[%s154 + $0x50] sm:$0xf]
        %v184 = vld [vmem:[%s154 + $0x54] sm:$0xf]
        %v185 = vld [vmem:[%s154 + $0x58] sm:$0xf]
        %v186 = vld [vmem:[%s154 + $0x5c] sm:$0xf]
        %v187 = vld [vmem:[%s154 + $0x60] sm:$0xf]
        %v188 = vld [vmem:[%s154 + $0x64] sm:$0xf]
        %v189 = vld [vmem:[%s154 + $0x68] sm:$0xf]
        %v190 = vld [vmem:[%s154 + $0x6c] sm:$0xf]
        %v191 = vld [vmem:[%s154 + $0x70] sm:$0xf]
        %v192 = vld [vmem:[%s154 + $0x74] sm:$0xf]
        %v193 = vld [vmem:[%s154 + $0x78] sm:$0xf]
        %v194 = vld [vmem:[%s154 + $0x7c] sm:$0xf]
        %v195 = vld [vmem:[%s154 + $0x80] sm:$0xf]
        %v196 = vld [vmem:[%s154 + $0x84] sm:$0xf]
        %v197 = vld [vmem:[%s154 + $0x88] sm:$0xf]
        %v198 = vld [vmem:[%s154 + $0x8c] sm:$0xf]
        %v199 = vld [vmem:[%s154 + $0x90] sm:$0xf]
        %v200 = vld [vmem:[%s154 + $0x94] sm:$0xf]
        %v201 = vld [vmem:[%s154 + $0x98] sm:$0xf]
        %v202 = vld [vmem:[%s154 + $0x9c] sm:$0xf]
        %v203 = vld [vmem:[%s154 + $0xa0] sm:$0xf]
        %v204 = vld [vmem:[%s154 + $0xa4] sm:$0xf]
        %v205 = vld [vmem:[%s154 + $0xa8] sm:$0xf]
        %v206 = vld [vmem:[%s154 + $0xac] sm:$0xf]
        %v207 = vld [vmem:[%s154 + $0xb0] sm:$0xf]
        %v208 = vld [vmem:[%s154 + $0xb4] sm:$0xf]
        %v209 = vld [vmem:[%s154 + $0xb8] sm:$0xf]
        %v210 = vld [vmem:[%s154 + $0xbc] sm:$0xf]
        %v211 = vld [vmem:[%s154 + $0xc0] sm:$0xf]
        %v212 = vld [vmem:[%s154 + $0xc4] sm:$0xf]
        %v213 = vld [vmem:[%s154 + $0xc8] sm:$0xf]
        %v214 = vld [vmem:[%s154 + $0xcc] sm:$0xf]
        %v215 = vld [vmem:[%s154 + $0xd0] sm:$0xf]
        %v216 = vld [vmem:[%s154 + $0xd4] sm:$0xf]
        %v217 = vld [vmem:[%s154 + $0xd8] sm:$0xf]
        %v218 = vld [vmem:[%s154 + $0xdc] sm:$0xf]
        %v219 = vld [vmem:[%s154 + $0xe0] sm:$0xf]
        %v220 = vld [vmem:[%s154 + $0xe4] sm:$0xf]
        %v221 = vld [vmem:[%s154 + $0xe8] sm:$0xf]
        %v222 = vld [vmem:[%s154 + $0xec] sm:$0xf]
        %v223 = vld [vmem:[%s154 + $0xf0] sm:$0xf]
        %v224 = vld [vmem:[%s154 + $0xf4] sm:$0xf]
        %v225 = vld [vmem:[%s154 + $0xf8] sm:$0xf]
        %v226 = vld [vmem:[%s154 + $0xfc] sm:$0xf]
        %v227 = vld [vmem:[#allocation2] sm:$0xf]
        %v228 = vld [vmem:[#allocation2 + $0x4] sm:$0xf]
        %v229 = vld [vmem:[#allocation2 + $0x8] sm:$0xf]
        %v230 = vld [vmem:[#allocation2 + $0xc] sm:$0xf]
        %v231 = vld [vmem:[#allocation2 + $0x10] sm:$0xf]
        %v232 = vld [vmem:[#allocation2 + $0x14] sm:$0xf]
        %v233 = vld [vmem:[#allocation2 + $0x18] sm:$0xf]
        %v234 = vld [vmem:[#allocation2 + $0x1c] sm:$0xf]
        %v235 = vld [vmem:[#allocation2 + $0x20] sm:$0xf]
        %v236 = vld [vmem:[#allocation2 + $0x24] sm:$0xf]
        %v237 = vld [vmem:[#allocation2 + $0x28] sm:$0xf]
        %v238 = vld [vmem:[#allocation2 + $0x2c] sm:$0xf]
        %v239 = vld [vmem:[#allocation2 + $0x30] sm:$0xf]
        %v240 = vld [vmem:[#allocation2 + $0x34] sm:$0xf]
        %v241 = vld [vmem:[#allocation2 + $0x38] sm:$0xf]
        %v242 = vld [vmem:[#allocation2 + $0x3c] sm:$0xf]
        %v307 = vunpack.c.l.b16 %v163
        %v308 = vunpack.c.l.b16 %v164
        %v309 = vunpack.c.l.b16 %v165
        %v310 = vunpack.c.l.b16 %v166
        %v311 = vunpack.c.l.b16 %v167
        %v312 = vunpack.c.l.b16 %v168
        %v313 = vunpack.c.l.b16 %v169
        %v314 = vunpack.c.l.b16 %v170
        %v315 = vunpack.c.l.b16 %v171
        %v316 = vunpack.c.l.b16 %v172
        %v317 = vunpack.c.l.b16 %v173
        %v318 = vunpack.c.l.b16 %v174
        %v319 = vunpack.c.l.b16 %v175
        %v320 = vunpack.c.l.b16 %v176
        %v321 = vunpack.c.l.b16 %v177
        %v322 = vunpack.c.l.b16 %v178
        %v323 = vunpack.c.l.b16 %v179
        %v324 = vunpack.c.l.b16 %v180
        %v325 = vunpack.c.l.b16 %v181
        %v326 = vunpack.c.l.b16 %v182
        %v327 = vunpack.c.l.b16 %v183
        %v328 = vunpack.c.l.b16 %v184
        %v329 = vunpack.c.l.b16 %v185
        %v330 = vunpack.c.l.b16 %v186
        %v331 = vunpack.c.l.b16 %v187
        %v332 = vunpack.c.l.b16 %v188
        %v333 = vunpack.c.l.b16 %v189
        %v334 = vunpack.c.l.b16 %v190
        %v335 = vunpack.c.l.b16 %v191
        %v336 = vunpack.c.l.b16 %v192
        %v337 = vunpack.c.l.b16 %v193
        %v338 = vunpack.c.l.b16 %v194
        %v339 = vunpack.c.l.b16 %v195
        %v340 = vunpack.c.l.b16 %v196
        %v341 = vunpack.c.l.b16 %v197
        %v342 = vunpack.c.l.b16 %v198
        %v343 = vunpack.c.l.b16 %v199
        %v344 = vunpack.c.l.b16 %v200
        %v345 = vunpack.c.l.b16 %v201
        %v346 = vunpack.c.l.b16 %v202
        %v347 = vunpack.c.l.b16 %v203
        %v348 = vunpack.c.l.b16 %v204
        %v349 = vunpack.c.l.b16 %v205
        %v350 = vunpack.c.l.b16 %v206
        %v351 = vunpack.c.l.b16 %v207
        %v352 = vunpack.c.l.b16 %v208
        %v353 = vunpack.c.l.b16 %v209
        %v354 = vunpack.c.l.b16 %v210
        %v355 = vunpack.c.l.b16 %v211
        %v356 = vunpack.c.l.b16 %v212
        %v357 = vunpack.c.l.b16 %v213
        %v358 = vunpack.c.l.b16 %v214
        %v359 = vunpack.c.l.b16 %v215
        %v360 = vunpack.c.l.b16 %v216
        %v361 = vunpack.c.l.b16 %v217
        %v362 = vunpack.c.l.b16 %v218
        %v363 = vunpack.c.l.b16 %v219
        %v364 = vunpack.c.l.b16 %v220
        %v365 = vunpack.c.l.b16 %v221
        %v366 = vunpack.c.l.b16 %v222
        %v367 = vunpack.c.l.b16 %v223
        %v368 = vunpack.c.l.b16 %v224
        %v369 = vunpack.c.l.b16 %v225
        %v370 = vunpack.c.l.b16 %v226
        %v371 = vpack.c.b16 %v308, %v307
        %v372 = vpack.c.b16 %v310, %v309
        %v373 = vpack.c.b16 %v312, %v311
        %v374 = vpack.c.b16 %v314, %v313
        %v375 = vpack.c.b16 %v316, %v315
        %v376 = vpack.c.b16 %v318, %v317
        %v377 = vpack.c.b16 %v320, %v319
        %v378 = vpack.c.b16 %v322, %v321
        %v379 = vpack.c.b16 %v324, %v323
        %v380 = vpack.c.b16 %v326, %v325
        %v381 = vpack.c.b16 %v328, %v327
        %v382 = vpack.c.b16 %v330, %v329
        %v383 = vpack.c.b16 %v332, %v331
        %v384 = vpack.c.b16 %v334, %v333
        %v385 = vpack.c.b16 %v336, %v335
        %v386 = vpack.c.b16 %v338, %v337
        %v387 = vpack.c.b16 %v340, %v339
        %v388 = vpack.c.b16 %v342, %v341
        %v389 = vpack.c.b16 %v344, %v343
        %v390 = vpack.c.b16 %v346, %v345
        %v391 = vpack.c.b16 %v348, %v347
        %v392 = vpack.c.b16 %v350, %v349
        %v393 = vpack.c.b16 %v352, %v351
        %v394 = vpack.c.b16 %v354, %v353
        %v395 = vpack.c.b16 %v356, %v355
        %v396 = vpack.c.b16 %v358, %v357
        %v397 = vpack.c.b16 %v360, %v359
        %v398 = vpack.c.b16 %v362, %v361
        %v399 = vpack.c.b16 %v364, %v363
        %v400 = vpack.c.b16 %v366, %v365
        %v401 = vpack.c.b16 %v368, %v367
        %v402 = vpack.c.b16 %v370, %v369
        %v451 = vunpack.c.l.b16 %v227
        %v452 = vunpack.c.l.b16 %v228
        %v453 = vunpack.c.l.b16 %v229
        %v454 = vunpack.c.l.b16 %v230
        %v455 = vunpack.c.l.b16 %v231
        %v456 = vunpack.c.l.b16 %v232
        %v457 = vunpack.c.l.b16 %v233
        %v458 = vunpack.c.l.b16 %v234
        %v459 = vunpack.c.l.b16 %v235
        %v460 = vunpack.c.l.b16 %v236
        %v461 = vunpack.c.l.b16 %v237
        %v462 = vunpack.c.l.b16 %v238
        %v463 = vunpack.c.l.b16 %v239
        %v464 = vunpack.c.l.b16 %v240
        %v465 = vunpack.c.l.b16 %v241
        %v466 = vunpack.c.l.b16 %v242
        %v467 = vpack.c.b16 %v452, %v451
        %v468 = vpack.c.b16 %v454, %v453
        %v469 = vpack.c.b16 %v456, %v455
        %v470 = vpack.c.b16 %v458, %v457
        %v471 = vpack.c.b16 %v460, %v459
        %v472 = vpack.c.b16 %v462, %v461
        %v473 = vpack.c.b16 %v464, %v463
        %v474 = vpack.c.b16 %v466, %v465
        %483 = vmatprep.subr.bf16.mxu0 0
        %484 = vmatpush1.bf16.msra.mxu0 %v474
        %485 = vmatprep.subr.bf16.mxu0 0
        %486 = vmatpush1.bf16.msra.mxu0 %v473
        %487 = vmatprep.subr.bf16.mxu0 0
        %488 = vmatpush1.bf16.msra.mxu0 %v472
        %489 = vmatprep.subr.bf16.mxu0 0
        %490 = vmatpush1.bf16.msra.mxu0 %v471
        %491 = vmatprep.subr.bf16.mxu0 0
        %492 = vmatpush1.bf16.msra.mxu0 %v470
        %493 = vmatprep.subr.bf16.mxu0 0
        %494 = vmatpush1.bf16.msra.mxu0 %v469
        %495 = vmatprep.subr.bf16.mxu0 0
        %496 = vmatpush1.bf16.msra.mxu0 %v468
        %497 = vmatprep.subr.bf16.mxu0 0
        %498 = vmatpush1.bf16.msra.mxu0 %v467
        %499 = vmatprep.subr.bf16.mxu0 0
        %500 = vmatpush2.bf16.msra.mxu0 0
        %501 = vmatprep.subr.bf16.mxu0 0
        %502 = vmatpush2.bf16.msra.mxu0 0
        %503 = vmatprep.subr.bf16.mxu0 0
        %504 = vmatpush2.bf16.msra.mxu0 0
        %505 = vmatprep.subr.bf16.mxu0 0
        %506 = vmatpush2.bf16.msra.mxu0 0
        %507 = vmatprep.subr.bf16.mxu0 0
        %508 = vmatpush2.bf16.msra.mxu0 0
        %509 = vmatprep.subr.bf16.mxu0 0
        %510 = vmatpush2.bf16.msra.mxu0 0
        %511 = vmatprep.subr.bf16.mxu0 0
        %512 = vmatpush2.bf16.msra.mxu0 0
        %513 = vmatprep.subr.bf16.mxu0 0
        %514 = vmatpush2.bf16.msra.mxu0 0
        %515 = vmatprep.mubr.bf16.mxu0 0
        %516 = vmatmul.mubr.bf16.gmra.mxu0 %v371
        %v517 = vpop.f32.mrf.mxu0
        %v518 = vadd.f32 0.0, %v517
        %v519 = vpop.f32.mrf.mxu0
        %v520 = vpop.f32.mrf.mxu0
        %v521 = vadd.f32 0.0, %v520
        %v522 = vpop.f32.mrf.mxu0
        %523 = vmatprep.mubr.bf16.mxu0 0
        %524 = vmatmul.mubr.bf16.gmra.mxu0 %v372
        %v525 = vpop.f32.mrf.mxu0
        %v526 = vadd.f32 0.0, %v525
        %v527 = vpop.f32.mrf.mxu0
        %v528 = vpop.f32.mrf.mxu0
        %v529 = vadd.f32 0.0, %v528
        %v530 = vpop.f32.mrf.mxu0
        %531 = vmatprep.mubr.bf16.mxu0 0
        %532 = vmatmul.mubr.bf16.gmra.mxu0 %v373
        %v533 = vpop.f32.mrf.mxu0
        %v534 = vadd.f32 0.0, %v533
        %v535 = vpop.f32.mrf.mxu0
        %v536 = vpop.f32.mrf.mxu0
        %v537 = vadd.f32 0.0, %v536
        %v538 = vpop.f32.mrf.mxu0
        %539 = vmatprep.mubr.bf16.mxu0 0
        %540 = vmatmul.mubr.bf16.gmra.mxu0 %v374
        %v541 = vpop.f32.mrf.mxu0
        %v542 = vadd.f32 0.0, %v541
        %v543 = vpop.f32.mrf.mxu0
        %v544 = vpop.f32.mrf.mxu0
        %v545 = vadd.f32 0.0, %v544
        %v546 = vpop.f32.mrf.mxu0
        %547 = vmatprep.mubr.bf16.mxu0 0
        %548 = vmatmul.mubr.bf16.gmra.mxu0 %v375
        %v549 = vpop.f32.mrf.mxu0
        %v550 = vadd.f32 0.0, %v549
        %v551 = vpop.f32.mrf.mxu0
        %v552 = vpop.f32.mrf.mxu0
        %v553 = vadd.f32 0.0, %v552
        %v554 = vpop.f32.mrf.mxu0
        %555 = vmatprep.mubr.bf16.mxu0 0
        %556 = vmatmul.mubr.bf16.gmra.mxu0 %v376
        %v557 = vpop.f32.mrf.mxu0
        %v558 = vadd.f32 0.0, %v557
        %v559 = vpop.f32.mrf.mxu0
        %v560 = vpop.f32.mrf.mxu0
        %v561 = vadd.f32 0.0, %v560
        %v562 = vpop.f32.mrf.mxu0
        %563 = vmatprep.mubr.bf16.mxu0 0
        %564 = vmatmul.mubr.bf16.gmra.mxu0 %v377
        %v565 = vpop.f32.mrf.mxu0
        %v566 = vadd.f32 0.0, %v565
        %v567 = vpop.f32.mrf.mxu0
        %v568 = vpop.f32.mrf.mxu0
        %v569 = vadd.f32 0.0, %v568
        %v570 = vpop.f32.mrf.mxu0
        %571 = vmatprep.mubr.bf16.mxu0 0
        %572 = vmatmul.mubr.bf16.gmra.mxu0 %v378
        %v573 = vpop.f32.mrf.mxu0
        %v574 = vadd.f32 0.0, %v573
        %v575 = vpop.f32.mrf.mxu0
        %v576 = vpop.f32.mrf.mxu0
        %v577 = vadd.f32 0.0, %v576
        %v578 = vpop.f32.mrf.mxu0
        %579 = vmatprep.mubr.bf16.mxu0 0
        %580 = vmatmul.mubr.bf16.gmra.mxu0 %v379
        %v581 = vpop.f32.mrf.mxu0
        %v582 = vadd.f32 0.0, %v581
        %v583 = vpop.f32.mrf.mxu0
        %v584 = vpop.f32.mrf.mxu0
        %v585 = vadd.f32 0.0, %v584
        %v586 = vpop.f32.mrf.mxu0
        %587 = vmatprep.mubr.bf16.mxu0 0
        %588 = vmatmul.mubr.bf16.gmra.mxu0 %v380
        %v589 = vpop.f32.mrf.mxu0
        %v590 = vadd.f32 0.0, %v589
        %v591 = vpop.f32.mrf.mxu0
        %v592 = vpop.f32.mrf.mxu0
        %v593 = vadd.f32 0.0, %v592
        %v594 = vpop.f32.mrf.mxu0
        %595 = vmatprep.mubr.bf16.mxu0 0
        %596 = vmatmul.mubr.bf16.gmra.mxu0 %v381
        %v597 = vpop.f32.mrf.mxu0
        %v598 = vadd.f32 0.0, %v597
        %v599 = vpop.f32.mrf.mxu0
        %v600 = vpop.f32.mrf.mxu0
        %v601 = vadd.f32 0.0, %v600
        %v602 = vpop.f32.mrf.mxu0
        %603 = vmatprep.mubr.bf16.mxu0 0
        %604 = vmatmul.mubr.bf16.gmra.mxu0 %v382
        %v605 = vpop.f32.mrf.mxu0
        %v606 = vadd.f32 0.0, %v605
        %v607 = vpop.f32.mrf.mxu0
        %v608 = vpop.f32.mrf.mxu0
        %v609 = vadd.f32 0.0, %v608
        %v610 = vpop.f32.mrf.mxu0
        %611 = vmatprep.mubr.bf16.mxu0 0
        %612 = vmatmul.mubr.bf16.gmra.mxu0 %v383
        %v613 = vpop.f32.mrf.mxu0
        %v614 = vadd.f32 0.0, %v613
        %v615 = vpop.f32.mrf.mxu0
        %v616 = vpop.f32.mrf.mxu0
        %v617 = vadd.f32 0.0, %v616
        %v618 = vpop.f32.mrf.mxu0
        %619 = vmatprep.mubr.bf16.mxu0 0
        %620 = vmatmul.mubr.bf16.gmra.mxu0 %v384
        %v621 = vpop.f32.mrf.mxu0
        %v622 = vadd.f32 0.0, %v621
        %v623 = vpop.f32.mrf.mxu0
        %v624 = vpop.f32.mrf.mxu0
        %v625 = vadd.f32 0.0, %v624
        %v626 = vpop.f32.mrf.mxu0
        %627 = vmatprep.mubr.bf16.mxu0 0
        %628 = vmatmul.mubr.bf16.gmra.mxu0 %v385
        %v629 = vpop.f32.mrf.mxu0
        %v630 = vadd.f32 0.0, %v629
        %v631 = vpop.f32.mrf.mxu0
        %v632 = vpop.f32.mrf.mxu0
        %v633 = vadd.f32 0.0, %v632
        %v634 = vpop.f32.mrf.mxu0
        %635 = vmatprep.mubr.bf16.mxu0 0
        %636 = vmatmul.mubr.bf16.gmra.mxu0 %v386
        %v637 = vpop.f32.mrf.mxu0
        %v638 = vadd.f32 0.0, %v637
        %v639 = vpop.f32.mrf.mxu0
        %v640 = vpop.f32.mrf.mxu0
        %v641 = vadd.f32 0.0, %v640
        %v642 = vpop.f32.mrf.mxu0
        %643 = vmatprep.mubr.bf16.mxu0 0
        %644 = vmatmul.mubr.bf16.gmra.mxu0 %v387
        %v645 = vpop.f32.mrf.mxu0
        %v646 = vadd.f32 0.0, %v645
        %v647 = vpop.f32.mrf.mxu0
        %v648 = vpop.f32.mrf.mxu0
        %v649 = vadd.f32 0.0, %v648
        %v650 = vpop.f32.mrf.mxu0
        %651 = vmatprep.mubr.bf16.mxu0 0
        %652 = vmatmul.mubr.bf16.gmra.mxu0 %v388
        %v653 = vpop.f32.mrf.mxu0
        %v654 = vadd.f32 0.0, %v653
        %v655 = vpop.f32.mrf.mxu0
        %v656 = vpop.f32.mrf.mxu0
        %v657 = vadd.f32 0.0, %v656
        %v658 = vpop.f32.mrf.mxu0
        %659 = vmatprep.mubr.bf16.mxu0 0
        %660 = vmatmul.mubr.bf16.gmra.mxu0 %v389
        %v661 = vpop.f32.mrf.mxu0
        %v662 = vadd.f32 0.0, %v661
        %v663 = vpop.f32.mrf.mxu0
        %v664 = vpop.f32.mrf.mxu0
        %v665 = vadd.f32 0.0, %v664
        %v666 = vpop.f32.mrf.mxu0
        %667 = vmatprep.mubr.bf16.mxu0 0
        %668 = vmatmul.mubr.bf16.gmra.mxu0 %v390
        %v669 = vpop.f32.mrf.mxu0
        %v670 = vadd.f32 0.0, %v669
        %v671 = vpop.f32.mrf.mxu0
        %v672 = vpop.f32.mrf.mxu0
        %v673 = vadd.f32 0.0, %v672
        %v674 = vpop.f32.mrf.mxu0
        %675 = vmatprep.mubr.bf16.mxu0 0
        %676 = vmatmul.mubr.bf16.gmra.mxu0 %v391
        %v677 = vpop.f32.mrf.mxu0
        %v678 = vadd.f32 0.0, %v677
        %v679 = vpop.f32.mrf.mxu0
        %v680 = vpop.f32.mrf.mxu0
        %v681 = vadd.f32 0.0, %v680
        %v682 = vpop.f32.mrf.mxu0
        %683 = vmatprep.mubr.bf16.mxu0 0
        %684 = vmatmul.mubr.bf16.gmra.mxu0 %v392
        %v685 = vpop.f32.mrf.mxu0
        %v686 = vadd.f32 0.0, %v685
        %v687 = vpop.f32.mrf.mxu0
        %v688 = vpop.f32.mrf.mxu0
        %v689 = vadd.f32 0.0, %v688
        %v690 = vpop.f32.mrf.mxu0
        %691 = vmatprep.mubr.bf16.mxu0 0
        %692 = vmatmul.mubr.bf16.gmra.mxu0 %v393
        %v693 = vpop.f32.mrf.mxu0
        %v694 = vadd.f32 0.0, %v693
        %v695 = vpop.f32.mrf.mxu0
        %v696 = vpop.f32.mrf.mxu0
        %v697 = vadd.f32 0.0, %v696
        %v698 = vpop.f32.mrf.mxu0
        %699 = vmatprep.mubr.bf16.mxu0 0
        %700 = vmatmul.mubr.bf16.gmra.mxu0 %v394
        %v701 = vpop.f32.mrf.mxu0
        %v702 = vadd.f32 0.0, %v701
        %v703 = vpop.f32.mrf.mxu0
        %v704 = vpop.f32.mrf.mxu0
        %v705 = vadd.f32 0.0, %v704
        %v706 = vpop.f32.mrf.mxu0
        %707 = vmatprep.mubr.bf16.mxu0 0
        %708 = vmatmul.mubr.bf16.gmra.mxu0 %v395
        %v709 = vpop.f32.mrf.mxu0
        %v710 = vadd.f32 0.0, %v709
        %v711 = vpop.f32.mrf.mxu0
        %v712 = vpop.f32.mrf.mxu0
        %v713 = vadd.f32 0.0, %v712
        %v714 = vpop.f32.mrf.mxu0
        %715 = vmatprep.mubr.bf16.mxu0 0
        %716 = vmatmul.mubr.bf16.gmra.mxu0 %v396
        %v717 = vpop.f32.mrf.mxu0
        %v718 = vadd.f32 0.0, %v717
        %v719 = vpop.f32.mrf.mxu0
        %v720 = vpop.f32.mrf.mxu0
        %v721 = vadd.f32 0.0, %v720
        %v722 = vpop.f32.mrf.mxu0
        %723 = vmatprep.mubr.bf16.mxu0 0
        %724 = vmatmul.mubr.bf16.gmra.mxu0 %v397
        %v725 = vpop.f32.mrf.mxu0
        %v726 = vadd.f32 0.0, %v725
        %v727 = vpop.f32.mrf.mxu0
        %v728 = vpop.f32.mrf.mxu0
        %v729 = vadd.f32 0.0, %v728
        %v730 = vpop.f32.mrf.mxu0
        %731 = vmatprep.mubr.bf16.mxu0 0
        %732 = vmatmul.mubr.bf16.gmra.mxu0 %v398
        %v733 = vpop.f32.mrf.mxu0
        %v734 = vadd.f32 0.0, %v733
        %v735 = vpop.f32.mrf.mxu0
        %v736 = vpop.f32.mrf.mxu0
        %v737 = vadd.f32 0.0, %v736
        %v738 = vpop.f32.mrf.mxu0
        %739 = vmatprep.mubr.bf16.mxu0 0
        %740 = vmatmul.mubr.bf16.gmra.mxu0 %v399
        %v741 = vpop.f32.mrf.mxu0
        %v742 = vadd.f32 0.0, %v741
        %v743 = vpop.f32.mrf.mxu0
        %v744 = vpop.f32.mrf.mxu0
        %v745 = vadd.f32 0.0, %v744
        %v746 = vpop.f32.mrf.mxu0
        %747 = vmatprep.mubr.bf16.mxu0 0
        %748 = vmatmul.mubr.bf16.gmra.mxu0 %v400
        %v749 = vpop.f32.mrf.mxu0
        %v750 = vadd.f32 0.0, %v749
        %v751 = vpop.f32.mrf.mxu0
        %v752 = vpop.f32.mrf.mxu0
        %v753 = vadd.f32 0.0, %v752
        %v754 = vpop.f32.mrf.mxu0
        %755 = vmatprep.mubr.bf16.mxu0 0
        %756 = vmatmul.mubr.bf16.gmra.mxu0 %v401
        %v757 = vpop.f32.mrf.mxu0
        %v758 = vadd.f32 0.0, %v757
        %v759 = vpop.f32.mrf.mxu0
        %v760 = vpop.f32.mrf.mxu0
        %v761 = vadd.f32 0.0, %v760
        %v762 = vpop.f32.mrf.mxu0
        %763 = vmatprep.mubr.bf16.mxu0 0
        %764 = vmatmul.mubr.bf16.gmra.mxu0 %v402
        %v765 = vpop.f32.mrf.mxu0
        %v766 = vadd.f32 0.0, %v765
        %v767 = vpop.f32.mrf.mxu0
        %v768 = vpop.f32.mrf.mxu0
        %v769 = vadd.f32 0.0, %v768
        %v770 = vpop.f32.mrf.mxu0
        %771 = vdwg.mxu0
        %v772 = vpack.c.bf16 %v521, %v518
        %v773 = vpack.c.bf16 %v529, %v526
        %v774 = vpack.c.bf16 %v537, %v534
        %v775 = vpack.c.bf16 %v545, %v542
        %v776 = vpack.c.bf16 %v553, %v550
        %v777 = vpack.c.bf16 %v561, %v558
        %v778 = vpack.c.bf16 %v569, %v566
        %v779 = vpack.c.bf16 %v577, %v574
        %v780 = vpack.c.bf16 %v585, %v582
        %v781 = vpack.c.bf16 %v593, %v590
        %v782 = vpack.c.bf16 %v601, %v598
        %v783 = vpack.c.bf16 %v609, %v606
        %v784 = vpack.c.bf16 %v617, %v614
        %v785 = vpack.c.bf16 %v625, %v622
        %v786 = vpack.c.bf16 %v633, %v630
        %v787 = vpack.c.bf16 %v641, %v638
        %v788 = vpack.c.bf16 %v649, %v646
        %v789 = vpack.c.bf16 %v657, %v654
        %v790 = vpack.c.bf16 %v665, %v662
        %v791 = vpack.c.bf16 %v673, %v670
        %v792 = vpack.c.bf16 %v681, %v678
        %v793 = vpack.c.bf16 %v689, %v686
        %v794 = vpack.c.bf16 %v697, %v694
        %v795 = vpack.c.bf16 %v705, %v702
        %v796 = vpack.c.bf16 %v713, %v710
        %v797 = vpack.c.bf16 %v721, %v718
        %v798 = vpack.c.bf16 %v729, %v726
        %v799 = vpack.c.bf16 %v737, %v734
        %v800 = vpack.c.bf16 %v745, %v742
        %v801 = vpack.c.bf16 %v753, %v750
        %v802 = vpack.c.bf16 %v761, %v758
        %v803 = vpack.c.bf16 %v769, %v766
        %v836 = vunpack.c.l.b16 %v772
        %v837 = vunpack.c.h.b16 %v772
        %v838 = vunpack.c.l.b16 %v773
        %v839 = vunpack.c.h.b16 %v773
        %v840 = vunpack.c.l.b16 %v774
        %v841 = vunpack.c.h.b16 %v774
        %v842 = vunpack.c.l.b16 %v775
        %v843 = vunpack.c.h.b16 %v775
        %v844 = vunpack.c.l.b16 %v776
        %v845 = vunpack.c.h.b16 %v776
        %v846 = vunpack.c.l.b16 %v777
        %v847 = vunpack.c.h.b16 %v777
        %v848 = vunpack.c.l.b16 %v778
        %v849 = vunpack.c.h.b16 %v778
        %v850 = vunpack.c.l.b16 %v779
        %v851 = vunpack.c.h.b16 %v779
        %v852 = vunpack.c.l.b16 %v780
        %v853 = vunpack.c.h.b16 %v780
        %v854 = vunpack.c.l.b16 %v781
        %v855 = vunpack.c.h.b16 %v781
        %v856 = vunpack.c.l.b16 %v782
        %v857 = vunpack.c.h.b16 %v782
        %v858 = vunpack.c.l.b16 %v783
        %v859 = vunpack.c.h.b16 %v783
        %v860 = vunpack.c.l.b16 %v784
        %v861 = vunpack.c.h.b16 %v784
        %v862 = vunpack.c.l.b16 %v785
        %v863 = vunpack.c.h.b16 %v785
        %v864 = vunpack.c.l.b16 %v786
        %v865 = vunpack.c.h.b16 %v786
        %v866 = vunpack.c.l.b16 %v787
        %v867 = vunpack.c.h.b16 %v787
        %v868 = vunpack.c.l.b16 %v788
        %v869 = vunpack.c.h.b16 %v788
        %v870 = vunpack.c.l.b16 %v789
        %v871 = vunpack.c.h.b16 %v789
        %v872 = vunpack.c.l.b16 %v790
        %v873 = vunpack.c.h.b16 %v790
        %v874 = vunpack.c.l.b16 %v791
        %v875 = vunpack.c.h.b16 %v791
        %v876 = vunpack.c.l.b16 %v792
        %v877 = vunpack.c.h.b16 %v792
        %v878 = vunpack.c.l.b16 %v793
        %v879 = vunpack.c.h.b16 %v793
        %v880 = vunpack.c.l.b16 %v794
        %v881 = vunpack.c.h.b16 %v794
        %v882 = vunpack.c.l.b16 %v795
        %v883 = vunpack.c.h.b16 %v795
        %v884 = vunpack.c.l.b16 %v796
        %v885 = vunpack.c.h.b16 %v796
        %v886 = vunpack.c.l.b16 %v797
        %v887 = vunpack.c.h.b16 %v797
        %v888 = vunpack.c.l.b16 %v798
        %v889 = vunpack.c.h.b16 %v798
        %v890 = vunpack.c.l.b16 %v799
        %v891 = vunpack.c.h.b16 %v799
        %v892 = vunpack.c.l.b16 %v800
        %v893 = vunpack.c.h.b16 %v800
        %v894 = vunpack.c.l.b16 %v801
        %v895 = vunpack.c.h.b16 %v801
        %v896 = vunpack.c.l.b16 %v802
        %v897 = vunpack.c.h.b16 %v802
        %v898 = vunpack.c.l.b16 %v803
        %v899 = vunpack.c.h.b16 %v803
        %v900 = vpack.c.b16 %v836, %v836
        %v901 = vpack.c.b16 %v837, %v837
        %v902 = vpack.c.b16 %v838, %v838
        %v903 = vpack.c.b16 %v839, %v839
        %v904 = vpack.c.b16 %v840, %v840
        %v905 = vpack.c.b16 %v841, %v841
        %v906 = vpack.c.b16 %v842, %v842
        %v907 = vpack.c.b16 %v843, %v843
        %v908 = vpack.c.b16 %v844, %v844
        %v909 = vpack.c.b16 %v845, %v845
        %v910 = vpack.c.b16 %v846, %v846
        %v911 = vpack.c.b16 %v847, %v847
        %v912 = vpack.c.b16 %v848, %v848
        %v913 = vpack.c.b16 %v849, %v849
        %v914 = vpack.c.b16 %v850, %v850
        %v915 = vpack.c.b16 %v851, %v851
        %v916 = vpack.c.b16 %v852, %v852
        %v917 = vpack.c.b16 %v853, %v853
        %v918 = vpack.c.b16 %v854, %v854
        %v919 = vpack.c.b16 %v855, %v855
        %v920 = vpack.c.b16 %v856, %v856
        %v921 = vpack.c.b16 %v857, %v857
        %v922 = vpack.c.b16 %v858, %v858
        %v923 = vpack.c.b16 %v859, %v859
        %v924 = vpack.c.b16 %v860, %v860
        %v925 = vpack.c.b16 %v861, %v861
        %v926 = vpack.c.b16 %v862, %v862
        %v927 = vpack.c.b16 %v863, %v863
        %v928 = vpack.c.b16 %v864, %v864
        %v929 = vpack.c.b16 %v865, %v865
        %v930 = vpack.c.b16 %v866, %v866
        %v931 = vpack.c.b16 %v867, %v867
        %v932 = vpack.c.b16 %v868, %v868
        %v933 = vpack.c.b16 %v869, %v869
        %v934 = vpack.c.b16 %v870, %v870
        %v935 = vpack.c.b16 %v871, %v871
        %v936 = vpack.c.b16 %v872, %v872
        %v937 = vpack.c.b16 %v873, %v873
        %v938 = vpack.c.b16 %v874, %v874
        %v939 = vpack.c.b16 %v875, %v875
        %v940 = vpack.c.b16 %v876, %v876
        %v941 = vpack.c.b16 %v877, %v877
        %v942 = vpack.c.b16 %v878, %v878
        %v943 = vpack.c.b16 %v879, %v879
        %v944 = vpack.c.b16 %v880, %v880
        %v945 = vpack.c.b16 %v881, %v881
        %v946 = vpack.c.b16 %v882, %v882
        %v947 = vpack.c.b16 %v883, %v883
        %v948 = vpack.c.b16 %v884, %v884
        %v949 = vpack.c.b16 %v885, %v885
        %v950 = vpack.c.b16 %v886, %v886
        %v951 = vpack.c.b16 %v887, %v887
        %v952 = vpack.c.b16 %v888, %v888
        %v953 = vpack.c.b16 %v889, %v889
        %v954 = vpack.c.b16 %v890, %v890
        %v955 = vpack.c.b16 %v891, %v891
        %v956 = vpack.c.b16 %v892, %v892
        %v957 = vpack.c.b16 %v893, %v893
        %v958 = vpack.c.b16 %v894, %v894
        %v959 = vpack.c.b16 %v895, %v895
        %v960 = vpack.c.b16 %v896, %v896
        %v961 = vpack.c.b16 %v897, %v897
        %v962 = vpack.c.b16 %v898, %v898
        %v963 = vpack.c.b16 %v899, %v899
        %1028 = vst [vmem:[%s160] sm:$0xf] %v900
        %1029 = vst [vmem:[%s160 + $0x4] sm:$0xf] %v901
        %1030 = vst [vmem:[%s160 + $0x8] sm:$0xf] %v902
        %1031 = vst [vmem:[%s160 + $0xc] sm:$0xf] %v903
        %1032 = vst [vmem:[%s160 + $0x10] sm:$0xf] %v904
        %1033 = vst [vmem:[%s160 + $0x14] sm:$0xf] %v905
        %1034 = vst [vmem:[%s160 + $0x18] sm:$0xf] %v906
        %1035 = vst [vmem:[%s160 + $0x1c] sm:$0xf] %v907
        %1036 = vst [vmem:[%s160 + $0x20] sm:$0xf] %v908
        %1037 = vst [vmem:[%s160 + $0x24] sm:$0xf] %v909
        %1038 = vst [vmem:[%s160 + $0x28] sm:$0xf] %v910
        %1039 = vst [vmem:[%s160 + $0x2c] sm:$0xf] %v911
        %1040 = vst [vmem:[%s160 + $0x30] sm:$0xf] %v912
        %1041 = vst [vmem:[%s160 + $0x34] sm:$0xf] %v913
        %1042 = vst [vmem:[%s160 + $0x38] sm:$0xf] %v914
        %1043 = vst [vmem:[%s160 + $0x3c] sm:$0xf] %v915
        %1044 = vst [vmem:[%s160 + $0x40] sm:$0xf] %v916
        %1045 = vst [vmem:[%s160 + $0x44] sm:$0xf] %v917
        %1046 = vst [vmem:[%s160 + $0x48] sm:$0xf] %v918
        %1047 = vst [vmem:[%s160 + $0x4c] sm:$0xf] %v919
        %1048 = vst [vmem:[%s160 + $0x50] sm:$0xf] %v920
        %1049 = vst [vmem:[%s160 + $0x54] sm:$0xf] %v921
        %1050 = vst [vmem:[%s160 + $0x58] sm:$0xf] %v922
        %1051 = vst [vmem:[%s160 + $0x5c] sm:$0xf] %v923
        %1052 = vst [vmem:[%s160 + $0x60] sm:$0xf] %v924
        %1053 = vst [vmem:[%s160 + $0x64] sm:$0xf] %v925
        %1054 = vst [vmem:[%s160 + $0x68] sm:$0xf] %v926
        %1055 = vst [vmem:[%s160 + $0x6c] sm:$0xf] %v927
        %1056 = vst [vmem:[%s160 + $0x70] sm:$0xf] %v928
        %1057 = vst [vmem:[%s160 + $0x74] sm:$0xf] %v929
        %1058 = vst [vmem:[%s160 + $0x78] sm:$0xf] %v930
        %1059 = vst [vmem:[%s160 + $0x7c] sm:$0xf] %v931
        %1060 = vst [vmem:[%s160 + $0x80] sm:$0xf] %v932
        %1061 = vst [vmem:[%s160 + $0x84] sm:$0xf] %v933
        %1062 = vst [vmem:[%s160 + $0x88] sm:$0xf] %v934
        %1063 = vst [vmem:[%s160 + $0x8c] sm:$0xf] %v935
        %1064 = vst [vmem:[%s160 + $0x90] sm:$0xf] %v936
        %1065 = vst [vmem:[%s160 + $0x94] sm:$0xf] %v937
        %1066 = vst [vmem:[%s160 + $0x98] sm:$0xf] %v938
        %1067 = vst [vmem:[%s160 + $0x9c] sm:$0xf] %v939
        %1068 = vst [vmem:[%s160 + $0xa0] sm:$0xf] %v940
        %1069 = vst [vmem:[%s160 + $0xa4] sm:$0xf] %v941
        %1070 = vst [vmem:[%s160 + $0xa8] sm:$0xf] %v942
        %1071 = vst [vmem:[%s160 + $0xac] sm:$0xf] %v943
        %1072 = vst [vmem:[%s160 + $0xb0] sm:$0xf] %v944
        %1073 = vst [vmem:[%s160 + $0xb4] sm:$0xf] %v945
        %1074 = vst [vmem:[%s160 + $0xb8] sm:$0xf] %v946
        %1075 = vst [vmem:[%s160 + $0xbc] sm:$0xf] %v947
        %1076 = vst [vmem:[%s160 + $0xc0] sm:$0xf] %v948
        %1077 = vst [vmem:[%s160 + $0xc4] sm:$0xf] %v949
        %1078 = vst [vmem:[%s160 + $0xc8] sm:$0xf] %v950
        %1079 = vst [vmem:[%s160 + $0xcc] sm:$0xf] %v951
        %1080 = vst [vmem:[%s160 + $0xd0] sm:$0xf] %v952
        %1081 = vst [vmem:[%s160 + $0xd4] sm:$0xf] %v953
        %1082 = vst [vmem:[%s160 + $0xd8] sm:$0xf] %v954
        %1083 = vst [vmem:[%s160 + $0xdc] sm:$0xf] %v955
        %1084 = vst [vmem:[%s160 + $0xe0] sm:$0xf] %v956
        %1085 = vst [vmem:[%s160 + $0xe4] sm:$0xf] %v957
        %1086 = vst [vmem:[%s160 + $0xe8] sm:$0xf] %v958
        %1087 = vst [vmem:[%s160 + $0xec] sm:$0xf] %v959
        %1088 = vst [vmem:[%s160 + $0xf0] sm:$0xf] %v960
        %1089 = vst [vmem:[%s160 + $0xf4] sm:$0xf] %v961
        %1090 = vst [vmem:[%s160 + $0xf8] sm:$0xf] %v962
        %1091 = vst [vmem:[%s160 + $0xfc] sm:$0xf] %v963
        %s1092 = smul.u32 64, %s14
        %p1093 = scmp.lt.s32.totalorder %s1092, 127
        %s1094 = scalar_select %p1093, %s1092, 127
        %s1095 = smul.addr %s1094, 4
        %s1096 = scalar_lea.vmem %s2, %s1095
        // Predicated region
        $region33: #{gnn_forward.6} parent=27 // pred_check
          %p1097 = pneg %p79
        $region34: #{gnn_forward.6} parent=27 // pred_check_branch
          %1099 = sbr.rel (%p1097) target = $region36
        $region35: #{gnn_forward.6} parent=27 // pred_region
          %s1100 = smul.u32 64, %s14
        $region36: #{gnn_forward.6} parent=27 // pred_fallthru
          _
      $region28: #{gnn_forward.6} parent=5 // pred_fallthru
        _
      %p1101 = scmp.le.s32.totalorder 2, %s9
      // Predicated region
      $region37: #{gnn_forward.6} parent=5 // pred_check
        %p1102 = pneg %p1101
      $region38: #{gnn_forward.6} parent=5 // pred_check_branch
        %1104 = sbr.rel (%p1102) target = $region40
      $region39: #{gnn_forward.6} parent=5 // pred_region
        %s1105 = ssub.s32 %s9, 2
        // Predicated region
        $region41: #{gnn_forward.6} parent=39 // pred_check
          %p1106 = pneg %p85
        $region42: #{gnn_forward.6} parent=39 // pred_check_branch
          %1108 = sbr.rel (%p1106) target = $region44
        $region43: #{gnn_forward.6} parent=39 // pred_region
          %s1109 = smul.u32 64, %s15
          %p1110 = scmp.lt.s32.totalorder %s1109, 127
          %s1111 = scalar_select %p1110, %s1109, 127
          %s1112 = smul.addr %s1111, 4
          %s1113 = scalar_lea.vmem %s2, %s1112
        $region44: #{gnn_forward.6} parent=39 // pred_fallthru
          _
      $region40: #{gnn_forward.6} parent=5 // pred_fallthru
        _
    $region6: #{gnn_forward.6} parent=1 // loop_footer
      %s13 = sadd.s32 1, %s9
    $region7: #{gnn_forward.6} parent=1 // loop_footer_branch
      %8 = sbr.rel target = $region3
    $region8: #{gnn_forward.6} parent=1 // loop_exit
      _
    %1114 = vsyncpa [#allocation3], 1
    %s1115 = scalar_lea.sflag [#allocation3], 1
    %1116 = vsyncpa %s1115, 1

// kernel: gnn_forward.8
$region0: #{gnn_forward.8}
  #allocation0 [shape = 'u32[]', space=smem, size = 0x4, offset = 0x4, fixed_abs, tag = 'smem constant byte address 0x4 - core index']
  #allocation1 [shape = 'u32[144,128]{1,0:T(1,128)}', space=vmem, size = 0x12000, scoped, tag = 'internal scratch']
  %s0 = inlined_call_operand.vmem [shape: bf16[1024,128], index: 0, kind: input, shape index: {}]
  %s1 = inlined_call_operand.vmem [shape: bf16[128,128], index: 1, kind: input, shape index: {}]
  %s2 = inlined_call_operand.vmem [shape: bf16[1024,128], index: 2, kind: output, shape index: {}]
  %s3 = sld [smem:[#allocation0]]
  $region41: #{gnn_forward.8} parent=0
    _
  %s5 = ssub.s32 1, %s3
  %s6 = scalar_select 0, %s5, %s3
  loop: start=0, step=1, limit=4
  $region2: #{gnn_forward.8} parent=0 // loop_pre_header
    _
  $region3: #{gnn_forward.8} parent=0 // loop_header
    %s8 = sphi 0, %s12
    %p9 = scmp.ge.s32.totalorder %s8, 4
    %s18 = sphi 0, %s20
    %s21 = sphi 0, %s18
    %s22 = sphi 0, %s21
    %s38 = sphi 0, %s22
    %s42 = sphi 0, %s42
    %s44 = sphi 0, %s42
    %s45 = sphi 0, %s44
    %s59 = sphi 0, %s45
    %s65 = sphi 0, %s67
    %s68 = sphi 0, %s65
    %s69 = sphi 0, %s68
    %s85 = sphi 0, %s69
  $region4: #{gnn_forward.8} parent=0 // loop_header_branch
    %11 = sbr.rel (%p9) target = $region8
  $region5: #{gnn_forward.8} parent=0 // loop_body
    %s13 = ssub.s32 %s8, 1
    %s14 = ssub.s32 %s8, 2
    %s15 = sadd.s32 %s8, 1
    %s16 = ssub.s32 %s8, %s15
    %p17 = scmp.eq.s32.totalorder %s16, 0
    %s19 = sadd.s32 %s18, 1
    %s20 = scalar_select %p17, %s18, %s19
    %p23 = pneg %p17
    %p24 = scmp.eq.s32.totalorder %s8, 1
    %p25 = por %p23, %p24
    %p26 = scmp.ne.s32.totalorder %s18, %s21
    %p27 = scmp.eq.s32.totalorder %s8, 0
    %p28 = por %p26, %p27
    %p29 = scmp.ne.s32.totalorder %s18, %s21
    %p30 = scmp.eq.s32.totalorder %s13, 1
    %p31 = por %p29, %p30
    %p32 = scmp.ne.s32.totalorder %s21, %s22
    %p33 = scmp.eq.s32.totalorder %s13, 0
    %p34 = por %p32, %p33
    %p35 = scmp.ne.s32.totalorder %s21, %s22
    %p36 = scmp.eq.s32.totalorder %s14, 1
    %p37 = por %p35, %p36
    %p39 = scmp.ne.s32.totalorder %s22, %s38
    %p40 = scmp.eq.s32.totalorder %s14, 0
    %p41 = por %p39, %p40
    %s43 = sadd.s32 %s42, 1
    %p46 = scmp.eq.s32.totalorder %s8, 1
    %p47 = scmp.ne.s32.totalorder %s42, %s44
    %p48 = scmp.eq.s32.totalorder %s8, 0
    %p49 = por %p47, %p48
    %p50 = scmp.ne.s32.totalorder %s42, %s44
    %p51 = scmp.eq.s32.totalorder %s13, 1
    %p52 = por %p50, %p51
    %p53 = scmp.ne.s32.totalorder %s44, %s45
    %p54 = scmp.eq.s32.totalorder %s13, 0
    %p55 = por %p53, %p54
    %p56 = scmp.ne.s32.totalorder %s44, %s45
    %p57 = scmp.eq.s32.totalorder %s14, 1
    %p58 = por %p56, %p57
    %p60 = scmp.ne.s32.totalorder %s45, %s59
    %p61 = scmp.eq.s32.totalorder %s14, 0
    %p62 = por %p60, %p61
    %s63 = ssub.s32 %s8, %s15
    %p64 = scmp.eq.s32.totalorder %s63, 0
    %s66 = sadd.s32 %s65, 1
    %s67 = scalar_select %p64, %s65, %s66
    %p70 = pneg %p64
    %p71 = scmp.eq.s32.totalorder %s8, 1
    %p72 = por %p70, %p71
    %p73 = scmp.ne.s32.totalorder %s65, %s68
    %p74 = scmp.eq.s32.totalorder %s8, 0
    %p75 = por %p73, %p74
    %p76 = scmp.ne.s32.totalorder %s65, %s68
    %p77 = scmp.eq.s32.totalorder %s13, 1
    %p78 = por %p76, %p77
    %p79 = scmp.ne.s32.totalorder %s68, %s69
    %p80 = scmp.eq.s32.totalorder %s13, 0
    %p81 = por %p79, %p80
    %p82 = scmp.ne.s32.totalorder %s68, %s69
    %p83 = scmp.eq.s32.totalorder %s14, 1
    %p84 = por %p82, %p83
    %p86 = scmp.ne.s32.totalorder %s69, %s85
    %p87 = scmp.eq.s32.totalorder %s14, 0
    %p88 = por %p86, %p87
    %p89 = scmp.le.s32.totalorder 1, %s8
    %p90 = scmp.lt.s32.totalorder %s8, 3
    %p91 = pnand %p89, %p90
    %p92 = pneg %p91
    // Predicated region
    $region9: #{gnn_forward.8} parent=5 // pred_check
      _
    $region10: #{gnn_forward.8} parent=5 // pred_check_branch
      %94 = sbr.rel (%p91) target = $region12
    $region11: #{gnn_forward.8} parent=5 // pred_region
      %s95 = ssub.s32 %s8, 1
      // Predicated region
      $region13: #{gnn_forward.8} parent=11 // pred_check
        %p96 = pneg %p55
      $region14: #{gnn_forward.8} parent=11 // pred_check_branch
        %98 = sbr.rel (%p96) target = $region16
      $region15: #{gnn_forward.8} parent=11 // pred_region
        _
      $region16: #{gnn_forward.8} parent=11 // pred_fallthru
        _
    $region12: #{gnn_forward.8} parent=5 // pred_fallthru
      _
    %p99 = scmp.lt.s32.totalorder %s8, 2
    // Predicated region
    $region17: #{gnn_forward.8} parent=5 // pred_check
      %p100 = pneg %p99
    $region18: #{gnn_forward.8} parent=5 // pred_check_branch
      %102 = sbr.rel (%p100) target = $region20
    $region19: #{gnn_forward.8} parent=5 // pred_region
      // Predicated region
      $region21: #{gnn_forward.8} parent=19 // pred_check
        %p103 = pneg %p28
      $region22: #{gnn_forward.8} parent=19 // pred_check_branch
        %105 = sbr.rel (%p103) target = $region24
      $region23: #{gnn_forward.8} parent=19 // pred_region
        %s106 = smul.u32 64, %s8
        %p107 = scmp.lt.s32.totalorder %s106, 127
        %s108 = scalar_select %p107, %s106, 127
        %s109 = smul.addr %s108, 4
        %s110 = scalar_lea.vmem %s0, %s109
        %s111 = smul.u32 64, %s8
      $region24: #{gnn_forward.8} parent=19 // pred_fallthru
        _
    $region20: #{gnn_forward.8} parent=5 // pred_fallthru
      _
    %p112 = scmp.le.s32.totalorder 1, %s8
    %p113 = scmp.lt.s32.totalorder %s8, 3
    %p114 = pnand %p112, %p113
    %p115 = pneg %p114
    // Predicated region
    $region25: #{gnn_forward.8} parent=5 // pred_check
      _
    $region26: #{gnn_forward.8} parent=5 // pred_check_branch
      %117 = sbr.rel (%p114) target = $region28
    $region27: #{gnn_forward.8} parent=5 // pred_region
      %s118 = ssub.s32 %s8, 1
      %s119 = smul.u32 64, %s13
      %p120 = scmp.lt.s32.totalorder %s119, 127
      %s121 = scalar_select %p120, %s119, 127
      %s122 = smul.addr %s121, 4
      %s123 = scalar_lea.vmem %s0, %s122
      %p124 = pneg %p34
      %p125 = pneg %p31
      %p126 = pneg %p55
      %p127 = pneg %p52
      %p128 = pneg %p81
      %p129 = pneg %p78
      %s130 = smul.u32 64, %s13
      %p131 = scmp.lt.s32.totalorder %s130, 127
      %s132 = scalar_select %p131, %s130, 127
      %s133 = smul.addr %s132, 4
      %s134 = scalar_lea.vmem %s2, %s133
      %s135 = smul.u32 64, %s13
      %p136 = scmp.lt.s32.totalorder %s135, 127
      %s137 = scalar_select %p136, %s135, 127
      %s138 = smul.addr %s137, 4
      %s139 = scalar_lea.vmem %s0, %s138
      %s140 = smul.u32 64, %s13
      %s141 = smul.u32 64, %s13
      %p142 = scmp.lt.s32.totalorder %s141, 127
      %s143 = scalar_select %p142, %s141, 127
      %s144 = smul.addr %s143, 4
      %s145 = scalar_lea.vmem %s2, %s144
      %s146 = smul.u32 64, %s13
      %v148 = vld [vmem:[%s139] sm:$0xf]
      %v149 = vld [vmem:[%s139 + $0x4] sm:$0xf]
      %v150 = vld [vmem:[%s139 + $0x8] sm:$0xf]
      %v151 = vld [vmem:[%s139 + $0xc] sm:$0xf]
      %v152 = vld [vmem:[%s139 + $0x10] sm:$0xf]
      %v153 = vld [vmem:[%s139 + $0x14] sm:$0xf]
      %v154 = vld [vmem:[%s139 + $0x18] sm:$0xf]
      %v155 = vld [vmem:[%s139 + $0x1c] sm:$0xf]
      %v156 = vld [vmem:[%s139 + $0x20] sm:$0xf]
      %v157 = vld [vmem:[%s139 + $0x24] sm:$0xf]
      %v158 = vld [vmem:[%s139 + $0x28] sm:$0xf]
      %v159 = vld [vmem:[%s139 + $0x2c] sm:$0xf]
      %v160 = vld [vmem:[%s139 + $0x30] sm:$0xf]
      %v161 = vld [vmem:[%s139 + $0x34] sm:$0xf]
      %v162 = vld [vmem:[%s139 + $0x38] sm:$0xf]
      %v163 = vld [vmem:[%s139 + $0x3c] sm:$0xf]
      %v164 = vld [vmem:[%s139 + $0x40] sm:$0xf]
      %v165 = vld [vmem:[%s139 + $0x44] sm:$0xf]
      %v166 = vld [vmem:[%s139 + $0x48] sm:$0xf]
      %v167 = vld [vmem:[%s139 + $0x4c] sm:$0xf]
      %v168 = vld [vmem:[%s139 + $0x50] sm:$0xf]
      %v169 = vld [vmem:[%s139 + $0x54] sm:$0xf]
      %v170 = vld [vmem:[%s139 + $0x58] sm:$0xf]
      %v171 = vld [vmem:[%s139 + $0x5c] sm:$0xf]
      %v172 = vld [vmem:[%s139 + $0x60] sm:$0xf]
      %v173 = vld [vmem:[%s139 + $0x64] sm:$0xf]
      %v174 = vld [vmem:[%s139 + $0x68] sm:$0xf]
      %v175 = vld [vmem:[%s139 + $0x6c] sm:$0xf]
      %v176 = vld [vmem:[%s139 + $0x70] sm:$0xf]
      %v177 = vld [vmem:[%s139 + $0x74] sm:$0xf]
      %v178 = vld [vmem:[%s139 + $0x78] sm:$0xf]
      %v179 = vld [vmem:[%s139 + $0x7c] sm:$0xf]
      %v180 = vld [vmem:[%s139 + $0x80] sm:$0xf]
      %v181 = vld [vmem:[%s139 + $0x84] sm:$0xf]
      %v182 = vld [vmem:[%s139 + $0x88] sm:$0xf]
      %v183 = vld [vmem:[%s139 + $0x8c] sm:$0xf]
      %v184 = vld [vmem:[%s139 + $0x90] sm:$0xf]
      %v185 = vld [vmem:[%s139 + $0x94] sm:$0xf]
      %v186 = vld [vmem:[%s139 + $0x98] sm:$0xf]
      %v187 = vld [vmem:[%s139 + $0x9c] sm:$0xf]
      %v188 = vld [vmem:[%s139 + $0xa0] sm:$0xf]
      %v189 = vld [vmem:[%s139 + $0xa4] sm:$0xf]
      %v190 = vld [vmem:[%s139 + $0xa8] sm:$0xf]
      %v191 = vld [vmem:[%s139 + $0xac] sm:$0xf]
      %v192 = vld [vmem:[%s139 + $0xb0] sm:$0xf]
      %v193 = vld [vmem:[%s139 + $0xb4] sm:$0xf]
      %v194 = vld [vmem:[%s139 + $0xb8] sm:$0xf]
      %v195 = vld [vmem:[%s139 + $0xbc] sm:$0xf]
      %v196 = vld [vmem:[%s139 + $0xc0] sm:$0xf]
      %v197 = vld [vmem:[%s139 + $0xc4] sm:$0xf]
      %v198 = vld [vmem:[%s139 + $0xc8] sm:$0xf]
      %v199 = vld [vmem:[%s139 + $0xcc] sm:$0xf]
      %v200 = vld [vmem:[%s139 + $0xd0] sm:$0xf]
      %v201 = vld [vmem:[%s139 + $0xd4] sm:$0xf]
      %v202 = vld [vmem:[%s139 + $0xd8] sm:$0xf]
      %v203 = vld [vmem:[%s139 + $0xdc] sm:$0xf]
      %v204 = vld [vmem:[%s139 + $0xe0] sm:$0xf]
      %v205 = vld [vmem:[%s139 + $0xe4] sm:$0xf]
      %v206 = vld [vmem:[%s139 + $0xe8] sm:$0xf]
      %v207 = vld [vmem:[%s139 + $0xec] sm:$0xf]
      %v208 = vld [vmem:[%s139 + $0xf0] sm:$0xf]
      %v209 = vld [vmem:[%s139 + $0xf4] sm:$0xf]
      %v210 = vld [vmem:[%s139 + $0xf8] sm:$0xf]
      %v211 = vld [vmem:[%s139 + $0xfc] sm:$0xf]
      %v212 = vld [vmem:[%s1] sm:$0xf]
      %v213 = vld [vmem:[%s1 + $0x4] sm:$0xf]
      %v214 = vld [vmem:[%s1 + $0x8] sm:$0xf]
      %v215 = vld [vmem:[%s1 + $0xc] sm:$0xf]
      %v216 = vld [vmem:[%s1 + $0x10] sm:$0xf]
      %v217 = vld [vmem:[%s1 + $0x14] sm:$0xf]
      %v218 = vld [vmem:[%s1 + $0x18] sm:$0xf]
      %v219 = vld [vmem:[%s1 + $0x1c] sm:$0xf]
      %v220 = vld [vmem:[%s1 + $0x20] sm:$0xf]
      %v221 = vld [vmem:[%s1 + $0x24] sm:$0xf]
      %v222 = vld [vmem:[%s1 + $0x28] sm:$0xf]
      %v223 = vld [vmem:[%s1 + $0x2c] sm:$0xf]
      %v224 = vld [vmem:[%s1 + $0x30] sm:$0xf]
      %v225 = vld [vmem:[%s1 + $0x34] sm:$0xf]
      %v226 = vld [vmem:[%s1 + $0x38] sm:$0xf]
      %v227 = vld [vmem:[%s1 + $0x3c] sm:$0xf]
      %v292 = vunpack.c.l.b16 %v148
      %v293 = vunpack.c.l.b16 %v149
      %v294 = vunpack.c.l.b16 %v150
      %v295 = vunpack.c.l.b16 %v151
      %v296 = vunpack.c.l.b16 %v152
      %v297 = vunpack.c.l.b16 %v153
      %v298 = vunpack.c.l.b16 %v154
      %v299 = vunpack.c.l.b16 %v155
      %v300 = vunpack.c.l.b16 %v156
      %v301 = vunpack.c.l.b16 %v157
      %v302 = vunpack.c.l.b16 %v158
      %v303 = vunpack.c.l.b16 %v159
      %v304 = vunpack.c.l.b16 %v160
      %v305 = vunpack.c.l.b16 %v161
      %v306 = vunpack.c.l.b16 %v162
      %v307 = vunpack.c.l.b16 %v163
      %v308 = vunpack.c.l.b16 %v164
      %v309 = vunpack.c.l.b16 %v165
      %v310 = vunpack.c.l.b16 %v166
      %v311 = vunpack.c.l.b16 %v167
      %v312 = vunpack.c.l.b16 %v168
      %v313 = vunpack.c.l.b16 %v169
      %v314 = vunpack.c.l.b16 %v170
      %v315 = vunpack.c.l.b16 %v171
      %v316 = vunpack.c.l.b16 %v172
      %v317 = vunpack.c.l.b16 %v173
      %v318 = vunpack.c.l.b16 %v174
      %v319 = vunpack.c.l.b16 %v175
      %v320 = vunpack.c.l.b16 %v176
      %v321 = vunpack.c.l.b16 %v177
      %v322 = vunpack.c.l.b16 %v178
      %v323 = vunpack.c.l.b16 %v179
      %v324 = vunpack.c.l.b16 %v180
      %v325 = vunpack.c.l.b16 %v181
      %v326 = vunpack.c.l.b16 %v182
      %v327 = vunpack.c.l.b16 %v183
      %v328 = vunpack.c.l.b16 %v184
      %v329 = vunpack.c.l.b16 %v185
      %v330 = vunpack.c.l.b16 %v186
      %v331 = vunpack.c.l.b16 %v187
      %v332 = vunpack.c.l.b16 %v188
      %v333 = vunpack.c.l.b16 %v189
      %v334 = vunpack.c.l.b16 %v190
      %v335 = vunpack.c.l.b16 %v191
      %v336 = vunpack.c.l.b16 %v192
      %v337 = vunpack.c.l.b16 %v193
      %v338 = vunpack.c.l.b16 %v194
      %v339 = vunpack.c.l.b16 %v195
      %v340 = vunpack.c.l.b16 %v196
      %v341 = vunpack.c.l.b16 %v197
      %v342 = vunpack.c.l.b16 %v198
      %v343 = vunpack.c.l.b16 %v199
      %v344 = vunpack.c.l.b16 %v200
      %v345 = vunpack.c.l.b16 %v201
      %v346 = vunpack.c.l.b16 %v202
      %v347 = vunpack.c.l.b16 %v203
      %v348 = vunpack.c.l.b16 %v204
      %v349 = vunpack.c.l.b16 %v205
      %v350 = vunpack.c.l.b16 %v206
      %v351 = vunpack.c.l.b16 %v207
      %v352 = vunpack.c.l.b16 %v208
      %v353 = vunpack.c.l.b16 %v209
      %v354 = vunpack.c.l.b16 %v210
      %v355 = vunpack.c.l.b16 %v211
      %v356 = vpack.c.b16 %v293, %v292
      %v357 = vpack.c.b16 %v295, %v294
      %v358 = vpack.c.b16 %v297, %v296
      %v359 = vpack.c.b16 %v299, %v298
      %v360 = vpack.c.b16 %v301, %v300
      %v361 = vpack.c.b16 %v303, %v302
      %v362 = vpack.c.b16 %v305, %v304
      %v363 = vpack.c.b16 %v307, %v306
      %v364 = vpack.c.b16 %v309, %v308
      %v365 = vpack.c.b16 %v311, %v310
      %v366 = vpack.c.b16 %v313, %v312
      %v367 = vpack.c.b16 %v315, %v314
      %v368 = vpack.c.b16 %v317, %v316
      %v369 = vpack.c.b16 %v319, %v318
      %v370 = vpack.c.b16 %v321, %v320
      %v371 = vpack.c.b16 %v323, %v322
      %v372 = vpack.c.b16 %v325, %v324
      %v373 = vpack.c.b16 %v327, %v326
      %v374 = vpack.c.b16 %v329, %v328
      %v375 = vpack.c.b16 %v331, %v330
      %v376 = vpack.c.b16 %v333, %v332
      %v377 = vpack.c.b16 %v335, %v334
      %v378 = vpack.c.b16 %v337, %v336
      %v379 = vpack.c.b16 %v339, %v338
      %v380 = vpack.c.b16 %v341, %v340
      %v381 = vpack.c.b16 %v343, %v342
      %v382 = vpack.c.b16 %v345, %v344
      %v383 = vpack.c.b16 %v347, %v346
      %v384 = vpack.c.b16 %v349, %v348
      %v385 = vpack.c.b16 %v351, %v350
      %v386 = vpack.c.b16 %v353, %v352
      %v387 = vpack.c.b16 %v355, %v354
      %v436 = vunpack.c.l.b16 %v212
      %v437 = vunpack.c.l.b16 %v213
      %v438 = vunpack.c.l.b16 %v214
      %v439 = vunpack.c.l.b16 %v215
      %v440 = vunpack.c.l.b16 %v216
      %v441 = vunpack.c.l.b16 %v217
      %v442 = vunpack.c.l.b16 %v218
      %v443 = vunpack.c.l.b16 %v219
      %v444 = vunpack.c.l.b16 %v220
      %v445 = vunpack.c.l.b16 %v221
      %v446 = vunpack.c.l.b16 %v222
      %v447 = vunpack.c.l.b16 %v223
      %v448 = vunpack.c.l.b16 %v224
      %v449 = vunpack.c.l.b16 %v225
      %v450 = vunpack.c.l.b16 %v226
      %v451 = vunpack.c.l.b16 %v227
      %v452 = vpack.c.b16 %v437, %v436
      %v453 = vpack.c.b16 %v439, %v438
      %v454 = vpack.c.b16 %v441, %v440
      %v455 = vpack.c.b16 %v443, %v442
      %v456 = vpack.c.b16 %v445, %v444
      %v457 = vpack.c.b16 %v447, %v446
      %v458 = vpack.c.b16 %v449, %v448
      %v459 = vpack.c.b16 %v451, %v450
      %468 = vmatprep.subr.bf16.mxu0 0
      %469 = vmatpush1.bf16.msra.mxu0 %v459
      %470 = vmatprep.subr.bf16.mxu0 0
      %471 = vmatpush1.bf16.msra.mxu0 %v458
      %472 = vmatprep.subr.bf16.mxu0 0
      %473 = vmatpush1.bf16.msra.mxu0 %v457
      %474 = vmatprep.subr.bf16.mxu0 0
      %475 = vmatpush1.bf16.msra.mxu0 %v456
      %476 = vmatprep.subr.bf16.mxu0 0
      %477 = vmatpush1.bf16.msra.mxu0 %v455
      %478 = vmatprep.subr.bf16.mxu0 0
      %479 = vmatpush1.bf16.msra.mxu0 %v454
      %480 = vmatprep.subr.bf16.mxu0 0
      %481 = vmatpush1.bf16.msra.mxu0 %v453
      %482 = vmatprep.subr.bf16.mxu0 0
      %483 = vmatpush1.bf16.msra.mxu0 %v452
      %484 = vmatprep.subr.bf16.mxu0 0
      %485 = vmatpush2.bf16.msra.mxu0 0
      %486 = vmatprep.subr.bf16.mxu0 0
      %487 = vmatpush2.bf16.msra.mxu0 0
      %488 = vmatprep.subr.bf16.mxu0 0
      %489 = vmatpush2.bf16.msra.mxu0 0
      %490 = vmatprep.subr.bf16.mxu0 0
      %491 = vmatpush2.bf16.msra.mxu0 0
      %492 = vmatprep.subr.bf16.mxu0 0
      %493 = vmatpush2.bf16.msra.mxu0 0
      %494 = vmatprep.subr.bf16.mxu0 0
      %495 = vmatpush2.bf16.msra.mxu0 0
      %496 = vmatprep.subr.bf16.mxu0 0
      %497 = vmatpush2.bf16.msra.mxu0 0
      %498 = vmatprep.subr.bf16.mxu0 0
      %499 = vmatpush2.bf16.msra.mxu0 0
      %500 = vmatprep.mubr.bf16.mxu0 0
      %501 = vmatmul.mubr.bf16.gmra.mxu0 %v356
      %v502 = vpop.f32.mrf.mxu0
      %v503 = vadd.f32 0.0, %v502
      %v504 = vpop.f32.mrf.mxu0
      %v505 = vpop.f32.mrf.mxu0
      %v506 = vadd.f32 0.0, %v505
      %v507 = vpop.f32.mrf.mxu0
      %508 = vmatprep.mubr.bf16.mxu0 0
      %509 = vmatmul.mubr.bf16.gmra.mxu0 %v357
      %v510 = vpop.f32.mrf.mxu0
      %v511 = vadd.f32 0.0, %v510
      %v512 = vpop.f32.mrf.mxu0
      %v513 = vpop.f32.mrf.mxu0
      %v514 = vadd.f32 0.0, %v513
      %v515 = vpop.f32.mrf.mxu0
      %516 = vmatprep.mubr.bf16.mxu0 0
      %517 = vmatmul.mubr.bf16.gmra.mxu0 %v358
      %v518 = vpop.f32.mrf.mxu0
      %v519 = vadd.f32 0.0, %v518
      %v520 = vpop.f32.mrf.mxu0
      %v521 = vpop.f32.mrf.mxu0
      %v522 = vadd.f32 0.0, %v521
      %v523 = vpop.f32.mrf.mxu0
      %524 = vmatprep.mubr.bf16.mxu0 0
      %525 = vmatmul.mubr.bf16.gmra.mxu0 %v359
      %v526 = vpop.f32.mrf.mxu0
      %v527 = vadd.f32 0.0, %v526
      %v528 = vpop.f32.mrf.mxu0
      %v529 = vpop.f32.mrf.mxu0
      %v530 = vadd.f32 0.0, %v529
      %v531 = vpop.f32.mrf.mxu0
      %532 = vmatprep.mubr.bf16.mxu0 0
      %533 = vmatmul.mubr.bf16.gmra.mxu0 %v360
      %v534 = vpop.f32.mrf.mxu0
      %v535 = vadd.f32 0.0, %v534
      %v536 = vpop.f32.mrf.mxu0
      %v537 = vpop.f32.mrf.mxu0
      %v538 = vadd.f32 0.0, %v537
      %v539 = vpop.f32.mrf.mxu0
      %540 = vmatprep.mubr.bf16.mxu0 0
      %541 = vmatmul.mubr.bf16.gmra.mxu0 %v361
      %v542 = vpop.f32.mrf.mxu0
      %v543 = vadd.f32 0.0, %v542
      %v544 = vpop.f32.mrf.mxu0
      %v545 = vpop.f32.mrf.mxu0
      %v546 = vadd.f32 0.0, %v545
      %v547 = vpop.f32.mrf.mxu0
      %548 = vmatprep.mubr.bf16.mxu0 0
      %549 = vmatmul.mubr.bf16.gmra.mxu0 %v362
      %v550 = vpop.f32.mrf.mxu0
      %v551 = vadd.f32 0.0, %v550
      %v552 = vpop.f32.mrf.mxu0
      %v553 = vpop.f32.mrf.mxu0
      %v554 = vadd.f32 0.0, %v553
      %v555 = vpop.f32.mrf.mxu0
      %556 = vmatprep.mubr.bf16.mxu0 0
      %557 = vmatmul.mubr.bf16.gmra.mxu0 %v363
      %v558 = vpop.f32.mrf.mxu0
      %v559 = vadd.f32 0.0, %v558
      %v560 = vpop.f32.mrf.mxu0
      %v561 = vpop.f32.mrf.mxu0
      %v562 = vadd.f32 0.0, %v561
      %v563 = vpop.f32.mrf.mxu0
      %564 = vmatprep.mubr.bf16.mxu0 0
      %565 = vmatmul.mubr.bf16.gmra.mxu0 %v364
      %v566 = vpop.f32.mrf.mxu0
      %v567 = vadd.f32 0.0, %v566
      %v568 = vpop.f32.mrf.mxu0
      %v569 = vpop.f32.mrf.mxu0
      %v570 = vadd.f32 0.0, %v569
      %v571 = vpop.f32.mrf.mxu0
      %572 = vmatprep.mubr.bf16.mxu0 0
      %573 = vmatmul.mubr.bf16.gmra.mxu0 %v365
      %v574 = vpop.f32.mrf.mxu0
      %v575 = vadd.f32 0.0, %v574
      %v576 = vpop.f32.mrf.mxu0
      %v577 = vpop.f32.mrf.mxu0
      %v578 = vadd.f32 0.0, %v577
      %v579 = vpop.f32.mrf.mxu0
      %580 = vmatprep.mubr.bf16.mxu0 0
      %581 = vmatmul.mubr.bf16.gmra.mxu0 %v366
      %v582 = vpop.f32.mrf.mxu0
      %v583 = vadd.f32 0.0, %v582
      %v584 = vpop.f32.mrf.mxu0
      %v585 = vpop.f32.mrf.mxu0
      %v586 = vadd.f32 0.0, %v585
      %v587 = vpop.f32.mrf.mxu0
      %588 = vmatprep.mubr.bf16.mxu0 0
      %589 = vmatmul.mubr.bf16.gmra.mxu0 %v367
      %v590 = vpop.f32.mrf.mxu0
      %v591 = vadd.f32 0.0, %v590
      %v592 = vpop.f32.mrf.mxu0
      %v593 = vpop.f32.mrf.mxu0
      %v594 = vadd.f32 0.0, %v593
      %v595 = vpop.f32.mrf.mxu0
      %596 = vmatprep.mubr.bf16.mxu0 0
      %597 = vmatmul.mubr.bf16.gmra.mxu0 %v368
      %v598 = vpop.f32.mrf.mxu0
      %v599 = vadd.f32 0.0, %v598
      %v600 = vpop.f32.mrf.mxu0
      %v601 = vpop.f32.mrf.mxu0
      %v602 = vadd.f32 0.0, %v601
      %v603 = vpop.f32.mrf.mxu0
      %604 = vmatprep.mubr.bf16.mxu0 0
      %605 = vmatmul.mubr.bf16.gmra.mxu0 %v369
      %v606 = vpop.f32.mrf.mxu0
      %v607 = vadd.f32 0.0, %v606
      %v608 = vpop.f32.mrf.mxu0
      %v609 = vpop.f32.mrf.mxu0
      %v610 = vadd.f32 0.0, %v609
      %v611 = vpop.f32.mrf.mxu0
      %612 = vmatprep.mubr.bf16.mxu0 0
      %613 = vmatmul.mubr.bf16.gmra.mxu0 %v370
      %v614 = vpop.f32.mrf.mxu0
      %v615 = vadd.f32 0.0, %v614
      %v616 = vpop.f32.mrf.mxu0
      %v617 = vpop.f32.mrf.mxu0
      %v618 = vadd.f32 0.0, %v617
      %v619 = vpop.f32.mrf.mxu0
      %620 = vmatprep.mubr.bf16.mxu0 0
      %621 = vmatmul.mubr.bf16.gmra.mxu0 %v371
      %v622 = vpop.f32.mrf.mxu0
      %v623 = vadd.f32 0.0, %v622
      %v624 = vpop.f32.mrf.mxu0
      %v625 = vpop.f32.mrf.mxu0
      %v626 = vadd.f32 0.0, %v625
      %v627 = vpop.f32.mrf.mxu0
      %628 = vmatprep.mubr.bf16.mxu0 0
      %629 = vmatmul.mubr.bf16.gmra.mxu0 %v372
      %v630 = vpop.f32.mrf.mxu0
      %v631 = vadd.f32 0.0, %v630
      %v632 = vpop.f32.mrf.mxu0
      %v633 = vpop.f32.mrf.mxu0
      %v634 = vadd.f32 0.0, %v633
      %v635 = vpop.f32.mrf.mxu0
      %636 = vmatprep.mubr.bf16.mxu0 0
      %637 = vmatmul.mubr.bf16.gmra.mxu0 %v373
      %v638 = vpop.f32.mrf.mxu0
      %v639 = vadd.f32 0.0, %v638
      %v640 = vpop.f32.mrf.mxu0
      %v641 = vpop.f32.mrf.mxu0
      %v642 = vadd.f32 0.0, %v641
      %v643 = vpop.f32.mrf.mxu0
      %644 = vmatprep.mubr.bf16.mxu0 0
      %645 = vmatmul.mubr.bf16.gmra.mxu0 %v374
      %v646 = vpop.f32.mrf.mxu0
      %v647 = vadd.f32 0.0, %v646
      %v648 = vpop.f32.mrf.mxu0
      %v649 = vpop.f32.mrf.mxu0
      %v650 = vadd.f32 0.0, %v649
      %v651 = vpop.f32.mrf.mxu0
      %652 = vmatprep.mubr.bf16.mxu0 0
      %653 = vmatmul.mubr.bf16.gmra.mxu0 %v375
      %v654 = vpop.f32.mrf.mxu0
      %v655 = vadd.f32 0.0, %v654
      %v656 = vpop.f32.mrf.mxu0
      %v657 = vpop.f32.mrf.mxu0
      %v658 = vadd.f32 0.0, %v657
      %v659 = vpop.f32.mrf.mxu0
      %660 = vmatprep.mubr.bf16.mxu0 0
      %661 = vmatmul.mubr.bf16.gmra.mxu0 %v376
      %v662 = vpop.f32.mrf.mxu0
      %v663 = vadd.f32 0.0, %v662
      %v664 = vpop.f32.mrf.mxu0
      %v665 = vpop.f32.mrf.mxu0
      %v666 = vadd.f32 0.0, %v665
      %v667 = vpop.f32.mrf.mxu0
      %668 = vmatprep.mubr.bf16.mxu0 0
      %669 = vmatmul.mubr.bf16.gmra.mxu0 %v377
      %v670 = vpop.f32.mrf.mxu0
      %v671 = vadd.f32 0.0, %v670
      %v672 = vpop.f32.mrf.mxu0
      %v673 = vpop.f32.mrf.mxu0
      %v674 = vadd.f32 0.0, %v673
      %v675 = vpop.f32.mrf.mxu0
      %676 = vmatprep.mubr.bf16.mxu0 0
      %677 = vmatmul.mubr.bf16.gmra.mxu0 %v378
      %v678 = vpop.f32.mrf.mxu0
      %v679 = vadd.f32 0.0, %v678
      %v680 = vpop.f32.mrf.mxu0
      %v681 = vpop.f32.mrf.mxu0
      %v682 = vadd.f32 0.0, %v681
      %v683 = vpop.f32.mrf.mxu0
      %684 = vmatprep.mubr.bf16.mxu0 0
      %685 = vmatmul.mubr.bf16.gmra.mxu0 %v379
      %v686 = vpop.f32.mrf.mxu0
      %v687 = vadd.f32 0.0, %v686
      %v688 = vpop.f32.mrf.mxu0
      %v689 = vpop.f32.mrf.mxu0
      %v690 = vadd.f32 0.0, %v689
      %v691 = vpop.f32.mrf.mxu0
      %692 = vmatprep.mubr.bf16.mxu0 0
      %693 = vmatmul.mubr.bf16.gmra.mxu0 %v380
      %v694 = vpop.f32.mrf.mxu0
      %v695 = vadd.f32 0.0, %v694
      %v696 = vpop.f32.mrf.mxu0
      %v697 = vpop.f32.mrf.mxu0
      %v698 = vadd.f32 0.0, %v697
      %v699 = vpop.f32.mrf.mxu0
      %700 = vmatprep.mubr.bf16.mxu0 0
      %701 = vmatmul.mubr.bf16.gmra.mxu0 %v381
      %v702 = vpop.f32.mrf.mxu0
      %v703 = vadd.f32 0.0, %v702
      %v704 = vpop.f32.mrf.mxu0
      %v705 = vpop.f32.mrf.mxu0
      %v706 = vadd.f32 0.0, %v705
      %v707 = vpop.f32.mrf.mxu0
      %708 = vmatprep.mubr.bf16.mxu0 0
      %709 = vmatmul.mubr.bf16.gmra.mxu0 %v382
      %v710 = vpop.f32.mrf.mxu0
      %v711 = vadd.f32 0.0, %v710
      %v712 = vpop.f32.mrf.mxu0
      %v713 = vpop.f32.mrf.mxu0
      %v714 = vadd.f32 0.0, %v713
      %v715 = vpop.f32.mrf.mxu0
      %716 = vmatprep.mubr.bf16.mxu0 0
      %717 = vmatmul.mubr.bf16.gmra.mxu0 %v383
      %v718 = vpop.f32.mrf.mxu0
      %v719 = vadd.f32 0.0, %v718
      %v720 = vpop.f32.mrf.mxu0
      %v721 = vpop.f32.mrf.mxu0
      %v722 = vadd.f32 0.0, %v721
      %v723 = vpop.f32.mrf.mxu0
      %724 = vmatprep.mubr.bf16.mxu0 0
      %725 = vmatmul.mubr.bf16.gmra.mxu0 %v384
      %v726 = vpop.f32.mrf.mxu0
      %v727 = vadd.f32 0.0, %v726
      %v728 = vpop.f32.mrf.mxu0
      %v729 = vpop.f32.mrf.mxu0
      %v730 = vadd.f32 0.0, %v729
      %v731 = vpop.f32.mrf.mxu0
      %732 = vmatprep.mubr.bf16.mxu0 0
      %733 = vmatmul.mubr.bf16.gmra.mxu0 %v385
      %v734 = vpop.f32.mrf.mxu0
      %v735 = vadd.f32 0.0, %v734
      %v736 = vpop.f32.mrf.mxu0
      %v737 = vpop.f32.mrf.mxu0
      %v738 = vadd.f32 0.0, %v737
      %v739 = vpop.f32.mrf.mxu0
      %740 = vmatprep.mubr.bf16.mxu0 0
      %741 = vmatmul.mubr.bf16.gmra.mxu0 %v386
      %v742 = vpop.f32.mrf.mxu0
      %v743 = vadd.f32 0.0, %v742
      %v744 = vpop.f32.mrf.mxu0
      %v745 = vpop.f32.mrf.mxu0
      %v746 = vadd.f32 0.0, %v745
      %v747 = vpop.f32.mrf.mxu0
      %748 = vmatprep.mubr.bf16.mxu0 0
      %749 = vmatmul.mubr.bf16.gmra.mxu0 %v387
      %v750 = vpop.f32.mrf.mxu0
      %v751 = vadd.f32 0.0, %v750
      %v752 = vpop.f32.mrf.mxu0
      %v753 = vpop.f32.mrf.mxu0
      %v754 = vadd.f32 0.0, %v753
      %v755 = vpop.f32.mrf.mxu0
      %756 = vdwg.mxu0
      %v757 = vpack.c.bf16 %v506, %v503
      %v758 = vpack.c.bf16 %v514, %v511
      %v759 = vpack.c.bf16 %v522, %v519
      %v760 = vpack.c.bf16 %v530, %v527
      %v761 = vpack.c.bf16 %v538, %v535
      %v762 = vpack.c.bf16 %v546, %v543
      %v763 = vpack.c.bf16 %v554, %v551
      %v764 = vpack.c.bf16 %v562, %v559
      %v765 = vpack.c.bf16 %v570, %v567
      %v766 = vpack.c.bf16 %v578, %v575
      %v767 = vpack.c.bf16 %v586, %v583
      %v768 = vpack.c.bf16 %v594, %v591
      %v769 = vpack.c.bf16 %v602, %v599
      %v770 = vpack.c.bf16 %v610, %v607
      %v771 = vpack.c.bf16 %v618, %v615
      %v772 = vpack.c.bf16 %v626, %v623
      %v773 = vpack.c.bf16 %v634, %v631
      %v774 = vpack.c.bf16 %v642, %v639
      %v775 = vpack.c.bf16 %v650, %v647
      %v776 = vpack.c.bf16 %v658, %v655
      %v777 = vpack.c.bf16 %v666, %v663
      %v778 = vpack.c.bf16 %v674, %v671
      %v779 = vpack.c.bf16 %v682, %v679
      %v780 = vpack.c.bf16 %v690, %v687
      %v781 = vpack.c.bf16 %v698, %v695
      %v782 = vpack.c.bf16 %v706, %v703
      %v783 = vpack.c.bf16 %v714, %v711
      %v784 = vpack.c.bf16 %v722, %v719
      %v785 = vpack.c.bf16 %v730, %v727
      %v786 = vpack.c.bf16 %v738, %v735
      %v787 = vpack.c.bf16 %v746, %v743
      %v788 = vpack.c.bf16 %v754, %v751
      %v821 = vunpack.c.l.b16 %v757
      %v822 = vunpack.c.h.b16 %v757
      %v823 = vunpack.c.l.b16 %v758
      %v824 = vunpack.c.h.b16 %v758
      %v825 = vunpack.c.l.b16 %v759
      %v826 = vunpack.c.h.b16 %v759
      %v827 = vunpack.c.l.b16 %v760
      %v828 = vunpack.c.h.b16 %v760
      %v829 = vunpack.c.l.b16 %v761
      %v830 = vunpack.c.h.b16 %v761
      %v831 = vunpack.c.l.b16 %v762
      %v832 = vunpack.c.h.b16 %v762
      %v833 = vunpack.c.l.b16 %v763
      %v834 = vunpack.c.h.b16 %v763
      %v835 = vunpack.c.l.b16 %v764
      %v836 = vunpack.c.h.b16 %v764
      %v837 = vunpack.c.l.b16 %v765
      %v838 = vunpack.c.h.b16 %v765
      %v839 = vunpack.c.l.b16 %v766
      %v840 = vunpack.c.h.b16 %v766
      %v841 = vunpack.c.l.b16 %v767
      %v842 = vunpack.c.h.b16 %v767
      %v843 = vunpack.c.l.b16 %v768
      %v844 = vunpack.c.h.b16 %v768
      %v845 = vunpack.c.l.b16 %v769
      %v846 = vunpack.c.h.b16 %v769
      %v847 = vunpack.c.l.b16 %v770
      %v848 = vunpack.c.h.b16 %v770
      %v849 = vunpack.c.l.b16 %v771
      %v850 = vunpack.c.h.b16 %v771
      %v851 = vunpack.c.l.b16 %v772
      %v852 = vunpack.c.h.b16 %v772
      %v853 = vunpack.c.l.b16 %v773
      %v854 = vunpack.c.h.b16 %v773
      %v855 = vunpack.c.l.b16 %v774
      %v856 = vunpack.c.h.b16 %v774
      %v857 = vunpack.c.l.b16 %v775
      %v858 = vunpack.c.h.b16 %v775
      %v859 = vunpack.c.l.b16 %v776
      %v860 = vunpack.c.h.b16 %v776
      %v861 = vunpack.c.l.b16 %v777
      %v862 = vunpack.c.h.b16 %v777
      %v863 = vunpack.c.l.b16 %v778
      %v864 = vunpack.c.h.b16 %v778
      %v865 = vunpack.c.l.b16 %v779
      %v866 = vunpack.c.h.b16 %v779
      %v867 = vunpack.c.l.b16 %v780
      %v868 = vunpack.c.h.b16 %v780
      %v869 = vunpack.c.l.b16 %v781
      %v870 = vunpack.c.h.b16 %v781
      %v871 = vunpack.c.l.b16 %v782
      %v872 = vunpack.c.h.b16 %v782
      %v873 = vunpack.c.l.b16 %v783
      %v874 = vunpack.c.h.b16 %v783
      %v875 = vunpack.c.l.b16 %v784
      %v876 = vunpack.c.h.b16 %v784
      %v877 = vunpack.c.l.b16 %v785
      %v878 = vunpack.c.h.b16 %v785
      %v879 = vunpack.c.l.b16 %v786
      %v880 = vunpack.c.h.b16 %v786
      %v881 = vunpack.c.l.b16 %v787
      %v882 = vunpack.c.h.b16 %v787
      %v883 = vunpack.c.l.b16 %v788
      %v884 = vunpack.c.h.b16 %v788
      %v885 = vpack.c.b16 %v821, %v821
      %v886 = vpack.c.b16 %v822, %v822
      %v887 = vpack.c.b16 %v823, %v823
      %v888 = vpack.c.b16 %v824, %v824
      %v889 = vpack.c.b16 %v825, %v825
      %v890 = vpack.c.b16 %v826, %v826
      %v891 = vpack.c.b16 %v827, %v827
      %v892 = vpack.c.b16 %v828, %v828
      %v893 = vpack.c.b16 %v829, %v829
      %v894 = vpack.c.b16 %v830, %v830
      %v895 = vpack.c.b16 %v831, %v831
      %v896 = vpack.c.b16 %v832, %v832
      %v897 = vpack.c.b16 %v833, %v833
      %v898 = vpack.c.b16 %v834, %v834
      %v899 = vpack.c.b16 %v835, %v835
      %v900 = vpack.c.b16 %v836, %v836
      %v901 = vpack.c.b16 %v837, %v837
      %v902 = vpack.c.b16 %v838, %v838
      %v903 = vpack.c.b16 %v839, %v839
      %v904 = vpack.c.b16 %v840, %v840
      %v905 = vpack.c.b16 %v841, %v841
      %v906 = vpack.c.b16 %v842, %v842
      %v907 = vpack.c.b16 %v843, %v843
      %v908 = vpack.c.b16 %v844, %v844
      %v909 = vpack.c.b16 %v845, %v845
      %v910 = vpack.c.b16 %v846, %v846
      %v911 = vpack.c.b16 %v847, %v847
      %v912 = vpack.c.b16 %v848, %v848
      %v913 = vpack.c.b16 %v849, %v849
      %v914 = vpack.c.b16 %v850, %v850
      %v915 = vpack.c.b16 %v851, %v851
      %v916 = vpack.c.b16 %v852, %v852
      %v917 = vpack.c.b16 %v853, %v853
      %v918 = vpack.c.b16 %v854, %v854
      %v919 = vpack.c.b16 %v855, %v855
      %v920 = vpack.c.b16 %v856, %v856
      %v921 = vpack.c.b16 %v857, %v857
      %v922 = vpack.c.b16 %v858, %v858
      %v923 = vpack.c.b16 %v859, %v859
      %v924 = vpack.c.b16 %v860, %v860
      %v925 = vpack.c.b16 %v861, %v861
      %v926 = vpack.c.b16 %v862, %v862
      %v927 = vpack.c.b16 %v863, %v863
      %v928 = vpack.c.b16 %v864, %v864
      %v929 = vpack.c.b16 %v865, %v865
      %v930 = vpack.c.b16 %v866, %v866
      %v931 = vpack.c.b16 %v867, %v867
      %v932 = vpack.c.b16 %v868, %v868
      %v933 = vpack.c.b16 %v869, %v869
      %v934 = vpack.c.b16 %v870, %v870
      %v935 = vpack.c.b16 %v871, %v871
      %v936 = vpack.c.b16 %v872, %v872
      %v937 = vpack.c.b16 %v873, %v873
      %v938 = vpack.c.b16 %v874, %v874
      %v939 = vpack.c.b16 %v875, %v875
      %v940 = vpack.c.b16 %v876, %v876
      %v941 = vpack.c.b16 %v877, %v877
      %v942 = vpack.c.b16 %v878, %v878
      %v943 = vpack.c.b16 %v879, %v879
      %v944 = vpack.c.b16 %v880, %v880
      %v945 = vpack.c.b16 %v881, %v881
      %v946 = vpack.c.b16 %v882, %v882
      %v947 = vpack.c.b16 %v883, %v883
      %v948 = vpack.c.b16 %v884, %v884
      %1013 = vst [vmem:[%s145] sm:$0xf] %v885
      %1014 = vst [vmem:[%s145 + $0x4] sm:$0xf] %v886
      %1015 = vst [vmem:[%s145 + $0x8] sm:$0xf] %v887
      %1016 = vst [vmem:[%s145 + $0xc] sm:$0xf] %v888
      %1017 = vst [vmem:[%s145 + $0x10] sm:$0xf] %v889
      %1018 = vst [vmem:[%s145 + $0x14] sm:$0xf] %v890
      %1019 = vst [vmem:[%s145 + $0x18] sm:$0xf] %v891
      %1020 = vst [vmem:[%s145 + $0x1c] sm:$0xf] %v892
      %1021 = vst [vmem:[%s145 + $0x20] sm:$0xf] %v893
      %1022 = vst [vmem:[%s145 + $0x24] sm:$0xf] %v894
      %1023 = vst [vmem:[%s145 + $0x28] sm:$0xf] %v895
      %1024 = vst [vmem:[%s145 + $0x2c] sm:$0xf] %v896
      %1025 = vst [vmem:[%s145 + $0x30] sm:$0xf] %v897
      %1026 = vst [vmem:[%s145 + $0x34] sm:$0xf] %v898
      %1027 = vst [vmem:[%s145 + $0x38] sm:$0xf] %v899
      %1028 = vst [vmem:[%s145 + $0x3c] sm:$0xf] %v900
      %1029 = vst [vmem:[%s145 + $0x40] sm:$0xf] %v901
      %1030 = vst [vmem:[%s145 + $0x44] sm:$0xf] %v902
      %1031 = vst [vmem:[%s145 + $0x48] sm:$0xf] %v903
      %1032 = vst [vmem:[%s145 + $0x4c] sm:$0xf] %v904
      %1033 = vst [vmem:[%s145 + $0x50] sm:$0xf] %v905
      %1034 = vst [vmem:[%s145 + $0x54] sm:$0xf] %v906
      %1035 = vst [vmem:[%s145 + $0x58] sm:$0xf] %v907
      %1036 = vst [vmem:[%s145 + $0x5c] sm:$0xf] %v908
      %1037 = vst [vmem:[%s145 + $0x60] sm:$0xf] %v909
      %1038 = vst [vmem:[%s145 + $0x64] sm:$0xf] %v910
      %1039 = vst [vmem:[%s145 + $0x68] sm:$0xf] %v911
      %1040 = vst [vmem:[%s145 + $0x6c] sm:$0xf] %v912
      %1041 = vst [vmem:[%s145 + $0x70] sm:$0xf] %v913
      %1042 = vst [vmem:[%s145 + $0x74] sm:$0xf] %v914
      %1043 = vst [vmem:[%s145 + $0x78] sm:$0xf] %v915
      %1044 = vst [vmem:[%s145 + $0x7c] sm:$0xf] %v916
      %1045 = vst [vmem:[%s145 + $0x80] sm:$0xf] %v917
      %1046 = vst [vmem:[%s145 + $0x84] sm:$0xf] %v918
      %1047 = vst [vmem:[%s145 + $0x88] sm:$0xf] %v919
      %1048 = vst [vmem:[%s145 + $0x8c] sm:$0xf] %v920
      %1049 = vst [vmem:[%s145 + $0x90] sm:$0xf] %v921
      %1050 = vst [vmem:[%s145 + $0x94] sm:$0xf] %v922
      %1051 = vst [vmem:[%s145 + $0x98] sm:$0xf] %v923
      %1052 = vst [vmem:[%s145 + $0x9c] sm:$0xf] %v924
      %1053 = vst [vmem:[%s145 + $0xa0] sm:$0xf] %v925
      %1054 = vst [vmem:[%s145 + $0xa4] sm:$0xf] %v926
      %1055 = vst [vmem:[%s145 + $0xa8] sm:$0xf] %v927
      %1056 = vst [vmem:[%s145 + $0xac] sm:$0xf] %v928
      %1057 = vst [vmem:[%s145 + $0xb0] sm:$0xf] %v929
      %1058 = vst [vmem:[%s145 + $0xb4] sm:$0xf] %v930
      %1059 = vst [vmem:[%s145 + $0xb8] sm:$0xf] %v931
      %1060 = vst [vmem:[%s145 + $0xbc] sm:$0xf] %v932
      %1061 = vst [vmem:[%s145 + $0xc0] sm:$0xf] %v933
      %1062 = vst [vmem:[%s145 + $0xc4] sm:$0xf] %v934
      %1063 = vst [vmem:[%s145 + $0xc8] sm:$0xf] %v935
      %1064 = vst [vmem:[%s145 + $0xcc] sm:$0xf] %v936
      %1065 = vst [vmem:[%s145 + $0xd0] sm:$0xf] %v937
      %1066 = vst [vmem:[%s145 + $0xd4] sm:$0xf] %v938
      %1067 = vst [vmem:[%s145 + $0xd8] sm:$0xf] %v939
      %1068 = vst [vmem:[%s145 + $0xdc] sm:$0xf] %v940
      %1069 = vst [vmem:[%s145 + $0xe0] sm:$0xf] %v941
      %1070 = vst [vmem:[%s145 + $0xe4] sm:$0xf] %v942
      %1071 = vst [vmem:[%s145 + $0xe8] sm:$0xf] %v943
      %1072 = vst [vmem:[%s145 + $0xec] sm:$0xf] %v944
      %1073 = vst [vmem:[%s145 + $0xf0] sm:$0xf] %v945
      %1074 = vst [vmem:[%s145 + $0xf4] sm:$0xf] %v946
      %1075 = vst [vmem:[%s145 + $0xf8] sm:$0xf] %v947
      %1076 = vst [vmem:[%s145 + $0xfc] sm:$0xf] %v948
      %s1077 = smul.u32 64, %s13
      %p1078 = scmp.lt.s32.totalorder %s1077, 127
      %s1079 = scalar_select %p1078, %s1077, 127
      %s1080 = smul.addr %s1079, 4
      %s1081 = scalar_lea.vmem %s2, %s1080
      // Predicated region
      $region29: #{gnn_forward.8} parent=27 // pred_check
        %p1082 = pneg %p78
      $region30: #{gnn_forward.8} parent=27 // pred_check_branch
        %1084 = sbr.rel (%p1082) target = $region32
      $region31: #{gnn_forward.8} parent=27 // pred_region
        %s1085 = smul.u32 64, %s13
      $region32: #{gnn_forward.8} parent=27 // pred_fallthru
        _
    $region28: #{gnn_forward.8} parent=5 // pred_fallthru
      _
    %p1086 = scmp.le.s32.totalorder 2, %s8
    // Predicated region
    $region33: #{gnn_forward.8} parent=5 // pred_check
      %p1087 = pneg %p1086
    $region34: #{gnn_forward.8} parent=5 // pred_check_branch
      %1089 = sbr.rel (%p1087) target = $region36
    $region35: #{gnn_forward.8} parent=5 // pred_region
      %s1090 = ssub.s32 %s8, 2
      // Predicated region
      $region37: #{gnn_forward.8} parent=35 // pred_check
        %p1091 = pneg %p84
      $region38: #{gnn_forward.8} parent=35 // pred_check_branch
        %1093 = sbr.rel (%p1091) target = $region40
      $region39: #{gnn_forward.8} parent=35 // pred_region
        %s1094 = smul.u32 64, %s14
        %p1095 = scmp.lt.s32.totalorder %s1094, 127
        %s1096 = scalar_select %p1095, %s1094, 127
        %s1097 = smul.addr %s1096, 4
        %s1098 = scalar_lea.vmem %s2, %s1097
      $region40: #{gnn_forward.8} parent=35 // pred_fallthru
        _
    $region36: #{gnn_forward.8} parent=5 // pred_fallthru
      _
  $region6: #{gnn_forward.8} parent=0 // loop_footer
    %s12 = sadd.s32 1, %s8
  $region7: #{gnn_forward.8} parent=0 // loop_footer_branch
    %7 = sbr.rel target = $region3
  $region8: #{gnn_forward.8} parent=0 // loop_exit
    _

// kernel: gnn_forward.7
$region0: #{gnn_forward.7}
  #allocation0 [shape = 'u32[]', space=smem, size = 0x4, offset = 0x4, fixed_abs, tag = 'smem constant byte address 0x4 - core index']
  #allocation1 [shape = 'u32[144,128]{1,0:T(1,128)}', space=vmem, size = 0x12000, scoped, tag = 'internal scratch']
  #allocation2 [shape = 'f32[512,128]{1,0:T(8,128)}', space=vmem, size = 0x40000, scoped, tag = 'scratch operand']
  %s0 = inlined_call_operand.hbm [shape: bf16[1024,1024], index: 0, kind: input, shape index: {}]
  %s1 = inlined_call_operand.vmem [shape: bf16[1024,128], index: 1, kind: input, shape index: {}]
  %s2 = inlined_call_operand.hbm [shape: f32[1,128], index: 2, kind: input, shape index: {}]
  %s3 = inlined_call_operand.vmem [shape: bf16[1024,128], index: 3, kind: output, shape index: {}]
  %s4 = sld [smem:[#allocation0]]
  $region61: #{gnn_forward.7} parent=0
    _
  %s6 = ssub.s32 1, %s4
  %s7 = scalar_select 0, %s6, %s4
  $region1: #{gnn_forward.7} parent=0
    #allocation3 [shape = 'u8[1048576]{0}', space=vmem, size = 0x100000, scoped, tag = 'input window, operand 0']
    #allocation4 [shape = 's32[2]{0}', space=sflag, size = 0x8, scoped, tag = 'scoped memory for gnn_forward.7']
    #allocation5 [shape = 'u8[512]{0}', space=vmem, size = 0x400, scoped, tag = 'input window, operand 2, single buffered']
    #allocation6 [shape = 's32[1]{0}', space=sflag, size = 0x4, scoped, tag = 'scoped memory for gnn_forward.7']
    %8 = vsyncpa [#allocation4], 0
    %s9 = scalar_lea.sflag [#allocation4], 1
    %10 = vsyncpa %s9, 0
    %11 = vsyncpa [#allocation6], 0
    loop: start=0, step=1, limit=6
    $region2: #{gnn_forward.7} parent=1 // loop_pre_header
      _
    $region3: #{gnn_forward.7} parent=1 // loop_header
      %s13 = sphi 0, %s17
      %p14 = scmp.ge.s32.totalorder %s13, 6
      %s20 = sphi 0, %s32
      %s21 = sphi 0, %s28
      %s22 = sphi 0, %s20
      %s23 = sphi 0, %s21
      %s24 = sphi 0, %s22
      %s25 = sphi 0, %s23
      %s37 = sphi 0, %s39
      %s40 = sphi 0, %s37
      %s41 = sphi 0, %s40
      %s57 = sphi 0, %s41
      %s61 = sphi 0, %s61
      %s63 = sphi 0, %s61
      %s64 = sphi 0, %s63
      %s78 = sphi 0, %s64
      %s82 = sphi 0, %s82
      %s84 = sphi 0, %s82
      %s85 = sphi 0, %s84
      %s99 = sphi 0, %s85
      %s105 = sphi 0, %s107
      %s108 = sphi 0, %s105
      %s109 = sphi 0, %s108
      %s125 = sphi 0, %s109
    $region4: #{gnn_forward.7} parent=1 // loop_header_branch
      %16 = sbr.rel (%p14) target = $region8
    $region5: #{gnn_forward.7} parent=1 // loop_body
      %s18 = ssub.s32 %s13, 1
      %s19 = ssub.s32 %s13, 2
      %s26 = sadd.s32 1, %s21
      %p27 = scmp.ge.s32.totalorder %s26, 2
      %s28 = scalar_select %p27, 0, %s26
      %s29 = sadd.s32 1, %s20
      %s30 = scalar_select %p27, %s29, %s20
      %p31 = scmp.ge.s32.totalorder %s30, 2
      %s32 = scalar_select %p31, 0, %s30
      %s33 = ssub.s32 %s20, %s32
      %s34 = ssub.s32 %s21, %s28
      %s35 = sor.u32 %s33, %s34
      %p36 = scmp.eq.s32.totalorder %s35, 0
      %s38 = sadd.s32 %s37, 1
      %s39 = scalar_select %p36, %s37, %s38
      %p42 = pneg %p36
      %p43 = scmp.eq.s32.totalorder %s13, 3
      %p44 = por %p42, %p43
      %p45 = scmp.ne.s32.totalorder %s37, %s40
      %p46 = scmp.eq.s32.totalorder %s13, 0
      %p47 = por %p45, %p46
      %p48 = scmp.ne.s32.totalorder %s37, %s40
      %p49 = scmp.eq.s32.totalorder %s18, 3
      %p50 = por %p48, %p49
      %p51 = scmp.ne.s32.totalorder %s40, %s41
      %p52 = scmp.eq.s32.totalorder %s18, 0
      %p53 = por %p51, %p52
      %p54 = scmp.ne.s32.totalorder %s40, %s41
      %p55 = scmp.eq.s32.totalorder %s19, 3
      %p56 = por %p54, %p55
      %p58 = scmp.ne.s32.totalorder %s41, %s57
      %p59 = scmp.eq.s32.totalorder %s19, 0
      %p60 = por %p58, %p59
      %s62 = sadd.s32 %s61, 1
      %p65 = scmp.eq.s32.totalorder %s13, 3
      %p66 = scmp.ne.s32.totalorder %s61, %s63
      %p67 = scmp.eq.s32.totalorder %s13, 0
      %p68 = por %p66, %p67
      %p69 = scmp.ne.s32.totalorder %s61, %s63
      %p70 = scmp.eq.s32.totalorder %s18, 3
      %p71 = por %p69, %p70
      %p72 = scmp.ne.s32.totalorder %s63, %s64
      %p73 = scmp.eq.s32.totalorder %s18, 0
      %p74 = por %p72, %p73
      %p75 = scmp.ne.s32.totalorder %s63, %s64
      %p76 = scmp.eq.s32.totalorder %s19, 3
      %p77 = por %p75, %p76
      %p79 = scmp.ne.s32.totalorder %s64, %s78
      %p80 = scmp.eq.s32.totalorder %s19, 0
      %p81 = por %p79, %p80
      %s83 = sadd.s32 %s82, 1
      %p86 = scmp.eq.s32.totalorder %s13, 3
      %p87 = scmp.ne.s32.totalorder %s82, %s84
      %p88 = scmp.eq.s32.totalorder %s13, 0
      %p89 = por %p87, %p88
      %p90 = scmp.ne.s32.totalorder %s82, %s84
      %p91 = scmp.eq.s32.totalorder %s18, 3
      %p92 = por %p90, %p91
      %p93 = scmp.ne.s32.totalorder %s84, %s85
      %p94 = scmp.eq.s32.totalorder %s18, 0
      %p95 = por %p93, %p94
      %p96 = scmp.ne.s32.totalorder %s84, %s85
      %p97 = scmp.eq.s32.totalorder %s19, 3
      %p98 = por %p96, %p97
      %p100 = scmp.ne.s32.totalorder %s85, %s99
      %p101 = scmp.eq.s32.totalorder %s19, 0
      %p102 = por %p100, %p101
      %s103 = ssub.s32 %s20, %s32
      %p104 = scmp.eq.s32.totalorder %s103, 0
      %s106 = sadd.s32 %s105, 1
      %s107 = scalar_select %p104, %s105, %s106
      %p110 = pneg %p104
      %p111 = scmp.eq.s32.totalorder %s13, 3
      %p112 = por %p110, %p111
      %p113 = scmp.ne.s32.totalorder %s105, %s108
      %p114 = scmp.eq.s32.totalorder %s13, 0
      %p115 = por %p113, %p114
      %p116 = scmp.ne.s32.totalorder %s105, %s108
      %p117 = scmp.eq.s32.totalorder %s18, 3
      %p118 = por %p116, %p117
      %p119 = scmp.ne.s32.totalorder %s108, %s109
      %p120 = scmp.eq.s32.totalorder %s18, 0
      %p121 = por %p119, %p120
      %p122 = scmp.ne.s32.totalorder %s108, %s109
      %p123 = scmp.eq.s32.totalorder %s19, 3
      %p124 = por %p122, %p123
      %p126 = scmp.ne.s32.totalorder %s109, %s125
      %p127 = scmp.eq.s32.totalorder %s19, 0
      %p128 = por %p126, %p127
      %p129 = scmp.le.s32.totalorder 1, %s13
      %p130 = scmp.lt.s32.totalorder %s13, 5
      %p131 = pnand %p129, %p130
      %p132 = pneg %p131
      // Predicated region
      $region9: #{gnn_forward.7} parent=5 // pred_check
        _
      $region10: #{gnn_forward.7} parent=5 // pred_check_branch
        %134 = sbr.rel (%p131) target = $region12
      $region11: #{gnn_forward.7} parent=5 // pred_region
        %s135 = ssub.s32 %s13, 1
        // Predicated region
        $region13: #{gnn_forward.7} parent=11 // pred_check
          %p136 = pneg %p74
        $region14: #{gnn_forward.7} parent=11 // pred_check_branch
          %138 = sbr.rel (%p136) target = $region16
        $region15: #{gnn_forward.7} parent=11 // pred_region
          _
        $region16: #{gnn_forward.7} parent=11 // pred_fallthru
          _
        // Predicated region
        $region17: #{gnn_forward.7} parent=11 // pred_check
          %p139 = pneg %p95
        $region18: #{gnn_forward.7} parent=11 // pred_check_branch
          %141 = sbr.rel (%p139) target = $region20
        $region19: #{gnn_forward.7} parent=11 // pred_region
          %s143 = ssub.s32 16, 16
          %144 = vsyncadd [#allocation6], %s143
          %s146 = sshll.u32 [#allocation5], 4
          %s147 = int_to_ptr.vmem [resolvable:$true] %s146
          %149 = dma.hbm_to_vmem [thread:$0]  %s2, 16, %s147, [#allocation6]
        $region20: #{gnn_forward.7} parent=11 // pred_fallthru
          _
      $region12: #{gnn_forward.7} parent=5 // pred_fallthru
        _
      %p150 = scmp.lt.s32.totalorder %s13, 4
      // Predicated region
      $region21: #{gnn_forward.7} parent=5 // pred_check
        %p151 = pneg %p150
      $region22: #{gnn_forward.7} parent=5 // pred_check_branch
        %153 = sbr.rel (%p151) target = $region24
      $region23: #{gnn_forward.7} parent=5 // pred_region
        // Predicated region
        $region25: #{gnn_forward.7} parent=23 // pred_check
          %p154 = pneg %p47
        $region26: #{gnn_forward.7} parent=23 // pred_check_branch
          %156 = sbr.rel (%p154) target = $region28
        $region27: #{gnn_forward.7} parent=23 // pred_region
          %s157 = sand.u32 %s37, 1
          %s158 = scalar_lea.sflag [#allocation4], %s157
          %s159 = sand.u32 %s37, 1
          %s160 = smul.addr %s159, 1024
          %s161 = scalar_lea.vmem [#allocation3], %s160
          %s162 = smul.u32 64, %s20
          %s163 = smul.u32 4, %s21
          %s165 = ssub.s32 16384, 16384
          %166 = vsyncadd %s158, %s165
          %s167 = smul.addr %s162, 8
          %s168 = sadd.s32 %s163, %s167
          %s169 = smul.addr %s168, 64
          %s170 = scalar_lea.hbm %s0, %s169
          %s171 = sshll.u32 %s161, 4
          %s172 = int_to_ptr.vmem [resolvable:$true] %s171
          %177 = dma.hbm_to_vmem [thread:$0]  %s170, 16384, %s172, %s158, 512, 256, 16
        $region28: #{gnn_forward.7} parent=23 // pred_fallthru
          _
      $region24: #{gnn_forward.7} parent=5 // pred_fallthru
        _
      %p178 = scmp.le.s32.totalorder 1, %s13
      %p179 = scmp.lt.s32.totalorder %s13, 5
      %p180 = pnand %p178, %p179
      %p181 = pneg %p180
      // Predicated region
      $region29: #{gnn_forward.7} parent=5 // pred_check
        _
      $region30: #{gnn_forward.7} parent=5 // pred_check_branch
        %183 = sbr.rel (%p180) target = $region32
      $region31: #{gnn_forward.7} parent=5 // pred_region
        %s184 = ssub.s32 %s13, 1
        %s185 = sand.u32 %s40, 1
        %s186 = scalar_lea.sflag [#allocation4], %s185
        %s187 = sand.u32 %s40, 1
        %s188 = smul.addr %s187, 1024
        %s189 = scalar_lea.vmem [#allocation3], %s188
        // Predicated region
        $region33: #{gnn_forward.7} parent=31 // pred_check
          %p190 = pneg %p53
        $region34: #{gnn_forward.7} parent=31 // pred_check_branch
          %192 = sbr.rel (%p190) target = $region36
        $region35: #{gnn_forward.7} parent=31 // pred_region
          %193 = dma.done %s186, 16384
        $region36: #{gnn_forward.7} parent=31 // pred_fallthru
          _
        // Predicated region
        $region37: #{gnn_forward.7} parent=31 // pred_check
          %p194 = pneg %p95
        $region38: #{gnn_forward.7} parent=31 // pred_check_branch
          %196 = sbr.rel (%p194) target = $region40
        $region39: #{gnn_forward.7} parent=31 // pred_region
          %197 = dma.done [#allocation6], 16
        $region40: #{gnn_forward.7} parent=31 // pred_fallthru
          _
        %s198 = sand.u32 %s40, 1
        %s199 = scalar_lea.sflag [#allocation4], %s198
        %s200 = sand.u32 %s40, 1
        %s201 = smul.addr %s200, 1024
        %s202 = scalar_lea.vmem [#allocation3], %s201
        %p203 = pneg %p53
        %p204 = pneg %p50
        %p205 = pneg %p74
        %p206 = pneg %p71
        %p207 = pneg %p95
        %p208 = pneg %p92
        %p209 = pneg %p121
        %p210 = pneg %p118
        %s211 = smul.u32 64, %s22
        %p212 = scmp.lt.s32.totalorder %s211, 127
        %s213 = scalar_select %p212, %s211, 127
        %s214 = smul.addr %s213, 4
        %s215 = scalar_lea.vmem %s3, %s214
        %s216 = smul.u32 64, %s22
        %s217 = smul.u32 4, %s23
        %s218 = smul.u32 64, %s22
        %p219 = scmp.lt.s32.totalorder %s218, 127
        %s220 = scalar_select %p219, %s218, 127
        %s221 = smul.addr %s220, 4
        %s222 = scalar_lea.vmem %s3, %s221
        %s223 = smul.u32 64, %s22
        %p225 = scmp.eq.s32.totalorder %s23, 0
        // Predicated region
        $region41: #{gnn_forward.7} parent=31 // pred_check
          %p226 = pneg %p225
        $region42: #{gnn_forward.7} parent=31 // pred_check_branch
          %228 = sbr.rel (%p226) target = $region44
        $region43: #{gnn_forward.7} parent=31 // pred_region
          %229 = vst [vmem:[#allocation2] sm:$0xff] 0.0
          %230 = vst [vmem:[#allocation2 + $0x8] sm:$0xff] 0.0
          %231 = vst [vmem:[#allocation2 + $0x10] sm:$0xff] 0.0
          %232 = vst [vmem:[#allocation2 + $0x18] sm:$0xff] 0.0
          %233 = vst [vmem:[#allocation2 + $0x20] sm:$0xff] 0.0
          %234 = vst [vmem:[#allocation2 + $0x28] sm:$0xff] 0.0
          %235 = vst [vmem:[#allocation2 + $0x30] sm:$0xff] 0.0
          %236 = vst [vmem:[#allocation2 + $0x38] sm:$0xff] 0.0
          %237 = vst [vmem:[#allocation2 + $0x40] sm:$0xff] 0.0
          %238 = vst [vmem:[#allocation2 + $0x48] sm:$0xff] 0.0
          %239 = vst [vmem:[#allocation2 + $0x50] sm:$0xff] 0.0
          %240 = vst [vmem:[#allocation2 + $0x58] sm:$0xff] 0.0
          %241 = vst [vmem:[#allocation2 + $0x60] sm:$0xff] 0.0
          %242 = vst [vmem:[#allocation2 + $0x68] sm:$0xff] 0.0
          %243 = vst [vmem:[#allocation2 + $0x70] sm:$0xff] 0.0
          %244 = vst [vmem:[#allocation2 + $0x78] sm:$0xff] 0.0
          %245 = vst [vmem:[#allocation2 + $0x80] sm:$0xff] 0.0
          %246 = vst [vmem:[#allocation2 + $0x88] sm:$0xff] 0.0
          %247 = vst [vmem:[#allocation2 + $0x90] sm:$0xff] 0.0
          %248 = vst [vmem:[#allocation2 + $0x98] sm:$0xff] 0.0
          %249 = vst [vmem:[#allocation2 + $0xa0] sm:$0xff] 0.0
          %250 = vst [vmem:[#allocation2 + $0xa8] sm:$0xff] 0.0
          %251 = vst [vmem:[#allocation2 + $0xb0] sm:$0xff] 0.0
          %252 = vst [vmem:[#allocation2 + $0xb8] sm:$0xff] 0.0
          %253 = vst [vmem:[#allocation2 + $0xc0] sm:$0xff] 0.0
          %254 = vst [vmem:[#allocation2 + $0xc8] sm:$0xff] 0.0
          %255 = vst [vmem:[#allocation2 + $0xd0] sm:$0xff] 0.0
          %256 = vst [vmem:[#allocation2 + $0xd8] sm:$0xff] 0.0
          %257 = vst [vmem:[#allocation2 + $0xe0] sm:$0xff] 0.0
          %258 = vst [vmem:[#allocation2 + $0xe8] sm:$0xff] 0.0
          %259 = vst [vmem:[#allocation2 + $0xf0] sm:$0xff] 0.0
          %260 = vst [vmem:[#allocation2 + $0xf8] sm:$0xff] 0.0
          %261 = vst [vmem:[#allocation2 + $0x100] sm:$0xff] 0.0
          %262 = vst [vmem:[#allocation2 + $0x108] sm:$0xff] 0.0
          %263 = vst [vmem:[#allocation2 + $0x110] sm:$0xff] 0.0
          %264 = vst [vmem:[#allocation2 + $0x118] sm:$0xff] 0.0
          %265 = vst [vmem:[#allocation2 + $0x120] sm:$0xff] 0.0
          %266 = vst [vmem:[#allocation2 + $0x128] sm:$0xff] 0.0
          %267 = vst [vmem:[#allocation2 + $0x130] sm:$0xff] 0.0
          %268 = vst [vmem:[#allocation2 + $0x138] sm:$0xff] 0.0
          %269 = vst [vmem:[#allocation2 + $0x140] sm:$0xff] 0.0
          %270 = vst [vmem:[#allocation2 + $0x148] sm:$0xff] 0.0
          %271 = vst [vmem:[#allocation2 + $0x150] sm:$0xff] 0.0
          %272 = vst [vmem:[#allocation2 + $0x158] sm:$0xff] 0.0
          %273 = vst [vmem:[#allocation2 + $0x160] sm:$0xff] 0.0
          %274 = vst [vmem:[#allocation2 + $0x168] sm:$0xff] 0.0
          %275 = vst [vmem:[#allocation2 + $0x170] sm:$0xff] 0.0
          %276 = vst [vmem:[#allocation2 + $0x178] sm:$0xff] 0.0
          %277 = vst [vmem:[#allocation2 + $0x180] sm:$0xff] 0.0
          %278 = vst [vmem:[#allocation2 + $0x188] sm:$0xff] 0.0
          %279 = vst [vmem:[#allocation2 + $0x190] sm:$0xff] 0.0
          %280 = vst [vmem:[#allocation2 + $0x198] sm:$0xff] 0.0
          %281 = vst [vmem:[#allocation2 + $0x1a0] sm:$0xff] 0.0
          %282 = vst [vmem:[#allocation2 + $0x1a8] sm:$0xff] 0.0
          %283 = vst [vmem:[#allocation2 + $0x1b0] sm:$0xff] 0.0
          %284 = vst [vmem:[#allocation2 + $0x1b8] sm:$0xff] 0.0
          %285 = vst [vmem:[#allocation2 + $0x1c0] sm:$0xff] 0.0
          %286 = vst [vmem:[#allocation2 + $0x1c8] sm:$0xff] 0.0
          %287 = vst [vmem:[#allocation2 + $0x1d0] sm:$0xff] 0.0
          %288 = vst [vmem:[#allocation2 + $0x1d8] sm:$0xff] 0.0
          %289 = vst [vmem:[#allocation2 + $0x1e0] sm:$0xff] 0.0
          %290 = vst [vmem:[#allocation2 + $0x1e8] sm:$0xff] 0.0
          %291 = vst [vmem:[#allocation2 + $0x1f0] sm:$0xff] 0.0
          %292 = vst [vmem:[#allocation2 + $0x1f8] sm:$0xff] 0.0
        $region44: #{gnn_forward.7} parent=31 // pred_fallthru
          _
        %s293 = smul.u32 %s23, 512
        %s294 = sshra.s32 %s293, 3
        %s295 = sand.u32 %s293, 7
        %s296 = smul.addr %s294, 4
        %s297 = scalar_lea.vmem %s1, %s296
        %v298 = vld [vmem:[%s297] sm:$0xf]
        %v299 = vld [vmem:[%s297 + $0x4] sm:$0xf]
        %v300 = vld [vmem:[%s297 + $0x8] sm:$0xf]
        %v301 = vld [vmem:[%s297 + $0xc] sm:$0xf]
        %v302 = vld [vmem:[%s297 + $0x10] sm:$0xf]
        %v303 = vld [vmem:[%s297 + $0x14] sm:$0xf]
        %v304 = vld [vmem:[%s297 + $0x18] sm:$0xf]
        %v305 = vld [vmem:[%s297 + $0x1c] sm:$0xf]
        %v306 = vld [vmem:[%s297 + $0x20] sm:$0xf]
        %v307 = vld [vmem:[%s297 + $0x24] sm:$0xf]
        %v308 = vld [vmem:[%s297 + $0x28] sm:$0xf]
        %v309 = vld [vmem:[%s297 + $0x2c] sm:$0xf]
        %v310 = vld [vmem:[%s297 + $0x30] sm:$0xf]
        %v311 = vld [vmem:[%s297 + $0x34] sm:$0xf]
        %v312 = vld [vmem:[%s297 + $0x38] sm:$0xf]
        %v313 = vld [vmem:[%s297 + $0x3c] sm:$0xf]
        %v314 = vld [vmem:[%s297 + $0x40] sm:$0xf]
        %v315 = vld [vmem:[%s297 + $0x44] sm:$0xf]
        %v316 = vld [vmem:[%s297 + $0x48] sm:$0xf]
        %v317 = vld [vmem:[%s297 + $0x4c] sm:$0xf]
        %v318 = vld [vmem:[%s297 + $0x50] sm:$0xf]
        %v319 = vld [vmem:[%s297 + $0x54] sm:$0xf]
        %v320 = vld [vmem:[%s297 + $0x58] sm:$0xf]
        %v321 = vld [vmem:[%s297 + $0x5c] sm:$0xf]
        %v322 = vld [vmem:[%s297 + $0x60] sm:$0xf]
        %v323 = vld [vmem:[%s297 + $0x64] sm:$0xf]
        %v324 = vld [vmem:[%s297 + $0x68] sm:$0xf]
        %v325 = vld [vmem:[%s297 + $0x6c] sm:$0xf]
        %v326 = vld [vmem:[%s297 + $0x70] sm:$0xf]
        %v327 = vld [vmem:[%s297 + $0x74] sm:$0xf]
        %v328 = vld [vmem:[%s297 + $0x78] sm:$0xf]
        %v329 = vld [vmem:[%s297 + $0x7c] sm:$0xf]
        %v330 = vld [vmem:[%s297 + $0x80] sm:$0xf]
        %v331 = vld [vmem:[%s297 + $0x84] sm:$0xf]
        %v332 = vld [vmem:[%s297 + $0x88] sm:$0xf]
        %v333 = vld [vmem:[%s297 + $0x8c] sm:$0xf]
        %v334 = vld [vmem:[%s297 + $0x90] sm:$0xf]
        %v335 = vld [vmem:[%s297 + $0x94] sm:$0xf]
        %v336 = vld [vmem:[%s297 + $0x98] sm:$0xf]
        %v337 = vld [vmem:[%s297 + $0x9c] sm:$0xf]
        %v338 = vld [vmem:[%s297 + $0xa0] sm:$0xf]
        %v339 = vld [vmem:[%s297 + $0xa4] sm:$0xf]
        %v340 = vld [vmem:[%s297 + $0xa8] sm:$0xf]
        %v341 = vld [vmem:[%s297 + $0xac] sm:$0xf]
        %v342 = vld [vmem:[%s297 + $0xb0] sm:$0xf]
        %v343 = vld [vmem:[%s297 + $0xb4] sm:$0xf]
        %v344 = vld [vmem:[%s297 + $0xb8] sm:$0xf]
        %v345 = vld [vmem:[%s297 + $0xbc] sm:$0xf]
        %v346 = vld [vmem:[%s297 + $0xc0] sm:$0xf]
        %v347 = vld [vmem:[%s297 + $0xc4] sm:$0xf]
        %v348 = vld [vmem:[%s297 + $0xc8] sm:$0xf]
        %v349 = vld [vmem:[%s297 + $0xcc] sm:$0xf]
        %v350 = vld [vmem:[%s297 + $0xd0] sm:$0xf]
        %v351 = vld [vmem:[%s297 + $0xd4] sm:$0xf]
        %v352 = vld [vmem:[%s297 + $0xd8] sm:$0xf]
        %v353 = vld [vmem:[%s297 + $0xdc] sm:$0xf]
        %v354 = vld [vmem:[%s297 + $0xe0] sm:$0xf]
        %v355 = vld [vmem:[%s297 + $0xe4] sm:$0xf]
        %v356 = vld [vmem:[%s297 + $0xe8] sm:$0xf]
        %v357 = vld [vmem:[%s297 + $0xec] sm:$0xf]
        %v358 = vld [vmem:[%s297 + $0xf0] sm:$0xf]
        %v359 = vld [vmem:[%s297 + $0xf4] sm:$0xf]
        %v360 = vld [vmem:[%s297 + $0xf8] sm:$0xf]
        %v361 = vld [vmem:[%s297 + $0xfc] sm:$0xf]
        %v362 = vld [vmem:[#allocation2] sm:$0xff]
        %v363 = vld [vmem:[#allocation2 + $0x8] sm:$0xff]
        %v364 = vld [vmem:[#allocation2 + $0x10] sm:$0xff]
        %v365 = vld [vmem:[#allocation2 + $0x18] sm:$0xff]
        %v366 = vld [vmem:[#allocation2 + $0x20] sm:$0xff]
        %v367 = vld [vmem:[#allocation2 + $0x28] sm:$0xff]
        %v368 = vld [vmem:[#allocation2 + $0x30] sm:$0xff]
        %v369 = vld [vmem:[#allocation2 + $0x38] sm:$0xff]
        %v370 = vld [vmem:[#allocation2 + $0x40] sm:$0xff]
        %v371 = vld [vmem:[#allocation2 + $0x48] sm:$0xff]
        %v372 = vld [vmem:[#allocation2 + $0x50] sm:$0xff]
        %v373 = vld [vmem:[#allocation2 + $0x58] sm:$0xff]
        %v374 = vld [vmem:[#allocation2 + $0x60] sm:$0xff]
        %v375 = vld [vmem:[#allocation2 + $0x68] sm:$0xff]
        %v376 = vld [vmem:[#allocation2 + $0x70] sm:$0xff]
        %v377 = vld [vmem:[#allocation2 + $0x78] sm:$0xff]
        %v378 = vld [vmem:[#allocation2 + $0x80] sm:$0xff]
        %v379 = vld [vmem:[#allocation2 + $0x88] sm:$0xff]
        %v380 = vld [vmem:[#allocation2 + $0x90] sm:$0xff]
        %v381 = vld [vmem:[#allocation2 + $0x98] sm:$0xff]
        %v382 = vld [vmem:[#allocation2 + $0xa0] sm:$0xff]
        %v383 = vld [vmem:[#allocation2 + $0xa8] sm:$0xff]
        %v384 = vld [vmem:[#allocation2 + $0xb0] sm:$0xff]
        %v385 = vld [vmem:[#allocation2 + $0xb8] sm:$0xff]
        %v386 = vld [vmem:[#allocation2 + $0xc0] sm:$0xff]
        %v387 = vld [vmem:[#allocation2 + $0xc8] sm:$0xff]
        %v388 = vld [vmem:[#allocation2 + $0xd0] sm:$0xff]
        %v389 = vld [vmem:[#allocation2 + $0xd8] sm:$0xff]
        %v390 = vld [vmem:[#allocation2 + $0xe0] sm:$0xff]
        %v391 = vld [vmem:[#allocation2 + $0xe8] sm:$0xff]
        %v392 = vld [vmem:[#allocation2 + $0xf0] sm:$0xff]
        %v393 = vld [vmem:[#allocation2 + $0xf8] sm:$0xff]
        %v394 = vld [vmem:[#allocation2 + $0x100] sm:$0xff]
        %v395 = vld [vmem:[#allocation2 + $0x108] sm:$0xff]
        %v396 = vld [vmem:[#allocation2 + $0x110] sm:$0xff]
        %v397 = vld [vmem:[#allocation2 + $0x118] sm:$0xff]
        %v398 = vld [vmem:[#allocation2 + $0x120] sm:$0xff]
        %v399 = vld [vmem:[#allocation2 + $0x128] sm:$0xff]
        %v400 = vld [vmem:[#allocation2 + $0x130] sm:$0xff]
        %v401 = vld [vmem:[#allocation2 + $0x138] sm:$0xff]
        %v402 = vld [vmem:[#allocation2 + $0x140] sm:$0xff]
        %v403 = vld [vmem:[#allocation2 + $0x148] sm:$0xff]
        %v404 = vld [vmem:[#allocation2 + $0x150] sm:$0xff]
        %v405 = vld [vmem:[#allocation2 + $0x158] sm:$0xff]
        %v406 = vld [vmem:[#allocation2 + $0x160] sm:$0xff]
        %v407 = vld [vmem:[#allocation2 + $0x168] sm:$0xff]
        %v408 = vld [vmem:[#allocation2 + $0x170] sm:$0xff]
        %v409 = vld [vmem:[#allocation2 + $0x178] sm:$0xff]
        %v410 = vld [vmem:[#allocation2 + $0x180] sm:$0xff]
        %v411 = vld [vmem:[#allocation2 + $0x188] sm:$0xff]
        %v412 = vld [vmem:[#allocation2 + $0x190] sm:$0xff]
        %v413 = vld [vmem:[#allocation2 + $0x198] sm:$0xff]
        %v414 = vld [vmem:[#allocation2 + $0x1a0] sm:$0xff]
        %v415 = vld [vmem:[#allocation2 + $0x1a8] sm:$0xff]
        %v416 = vld [vmem:[#allocation2 + $0x1b0] sm:$0xff]
        %v417 = vld [vmem:[#allocation2 + $0x1b8] sm:$0xff]
        %v418 = vld [vmem:[#allocation2 + $0x1c0] sm:$0xff]
        %v419 = vld [vmem:[#allocation2 + $0x1c8] sm:$0xff]
        %v420 = vld [vmem:[#allocation2 + $0x1d0] sm:$0xff]
        %v421 = vld [vmem:[#allocation2 + $0x1d8] sm:$0xff]
        %v422 = vld [vmem:[#allocation2 + $0x1e0] sm:$0xff]
        %v423 = vld [vmem:[#allocation2 + $0x1e8] sm:$0xff]
        %v424 = vld [vmem:[#allocation2 + $0x1f0] sm:$0xff]
        %v425 = vld [vmem:[#allocation2 + $0x1f8] sm:$0xff]
        %v426 = vld [vmem:[%s189] sm:$0xff]
        %v427 = vld [vmem:[%s189 + $0x8] sm:$0xff]
        %v428 = vld [vmem:[%s189 + $0x10] sm:$0xff]
        %v429 = vld [vmem:[%s189 + $0x18] sm:$0xff]
        %v430 = vld [vmem:[%s189 + $0x20] sm:$0xff]
        %v431 = vld [vmem:[%s189 + $0x28] sm:$0xff]
        %v432 = vld [vmem:[%s189 + $0x30] sm:$0xff]
        %v433 = vld [vmem:[%s189 + $0x38] sm:$0xff]
        %v434 = vld [vmem:[%s189 + $0x40] sm:$0xff]
        %v435 = vld [vmem:[%s189 + $0x48] sm:$0xff]
        %v436 = vld [vmem:[%s189 + $0x50] sm:$0xff]
        %v437 = vld [vmem:[%s189 + $0x58] sm:$0xff]
        %v438 = vld [vmem:[%s189 + $0x60] sm:$0xff]
        %v439 = vld [vmem:[%s189 + $0x68] sm:$0xff]
        %v440 = vld [vmem:[%s189 + $0x70] sm:$0xff]
        %v441 = vld [vmem:[%s189 + $0x78] sm:$0xff]
        %v442 = vld [vmem:[%s189 + $0x80] sm:$0xff]
        %v443 = vld [vmem:[%s189 + $0x88] sm:$0xff]
        %v444 = vld [vmem:[%s189 + $0x90] sm:$0xff]
        %v445 = vld [vmem:[%s189 + $0x98] sm:$0xff]
        %v446 = vld [vmem:[%s189 + $0xa0] sm:$0xff]
        %v447 = vld [vmem:[%s189 + $0xa8] sm:$0xff]
        %v448 = vld [vmem:[%s189 + $0xb0] sm:$0xff]
        %v449 = vld [vmem:[%s189 + $0xb8] sm:$0xff]
        %v450 = vld [vmem:[%s189 + $0xc0] sm:$0xff]
        %v451 = vld [vmem:[%s189 + $0xc8] sm:$0xff]
        %v452 = vld [vmem:[%s189 + $0xd0] sm:$0xff]
        %v453 = vld [vmem:[%s189 + $0xd8] sm:$0xff]
        %v454 = vld [vmem:[%s189 + $0xe0] sm:$0xff]
        %v455 = vld [vmem:[%s189 + $0xe8] sm:$0xff]
        %v456 = vld [vmem:[%s189 + $0xf0] sm:$0xff]
        %v457 = vld [vmem:[%s189 + $0xf8] sm:$0xff]
        %v458 = vld [vmem:[%s189 + $0x100] sm:$0xff]
        %v459 = vld [vmem:[%s189 + $0x108] sm:$0xff]
        %v460 = vld [vmem:[%s189 + $0x110] sm:$0xff]
        %v461 = vld [vmem:[%s189 + $0x118] sm:$0xff]
        %v462 = vld [vmem:[%s189 + $0x120] sm:$0xff]
        %v463 = vld [vmem:[%s189 + $0x128] sm:$0xff]
        %v464 = vld [vmem:[%s189 + $0x130] sm:$0xff]
        %v465 = vld [vmem:[%s189 + $0x138] sm:$0xff]
        %v466 = vld [vmem:[%s189 + $0x140] sm:$0xff]
        %v467 = vld [vmem:[%s189 + $0x148] sm:$0xff]
        %v468 = vld [vmem:[%s189 + $0x150] sm:$0xff]
        %v469 = vld [vmem:[%s189 + $0x158] sm:$0xff]
        %v470 = vld [vmem:[%s189 + $0x160] sm:$0xff]
        %v471 = vld [vmem:[%s189 + $0x168] sm:$0xff]
        %v472 = vld [vmem:[%s189 + $0x170] sm:$0xff]
        %v473 = vld [vmem:[%s189 + $0x178] sm:$0xff]
        %v474 = vld [vmem:[%s189 + $0x180] sm:$0xff]
        %v475 = vld [vmem:[%s189 + $0x188] sm:$0xff]
        %v476 = vld [vmem:[%s189 + $0x190] sm:$0xff]
        %v477 = vld [vmem:[%s189 + $0x198] sm:$0xff]
        %v478 = vld [vmem:[%s189 + $0x1a0] sm:$0xff]
        %v479 = vld [vmem:[%s189 + $0x1a8] sm:$0xff]
        %v480 = vld [vmem:[%s189 + $0x1b0] sm:$0xff]
        %v481 = vld [vmem:[%s189 + $0x1b8] sm:$0xff]
        %v482 = vld [vmem:[%s189 + $0x1c0] sm:$0xff]
        %v483 = vld [vmem:[%s189 + $0x1c8] sm:$0xff]
        %v484 = vld [vmem:[%s189 + $0x1d0] sm:$0xff]
        %v485 = vld [vmem:[%s189 + $0x1d8] sm:$0xff]
        %v486 = vld [vmem:[%s189 + $0x1e0] sm:$0xff]
        %v487 = vld [vmem:[%s189 + $0x1e8] sm:$0xff]
        %v488 = vld [vmem:[%s189 + $0x1f0] sm:$0xff]
        %v489 = vld [vmem:[%s189 + $0x1f8] sm:$0xff]
        %v490 = vld [vmem:[%s189 + $0x200] sm:$0xff]
        %v491 = vld [vmem:[%s189 + $0x208] sm:$0xff]
        %v492 = vld [vmem:[%s189 + $0x210] sm:$0xff]
        %v493 = vld [vmem:[%s189 + $0x218] sm:$0xff]
        %v494 = vld [vmem:[%s189 + $0x220] sm:$0xff]
        %v495 = vld [vmem:[%s189 + $0x228] sm:$0xff]
        %v496 = vld [vmem:[%s189 + $0x230] sm:$0xff]
        %v497 = vld [vmem:[%s189 + $0x238] sm:$0xff]
        %v498 = vld [vmem:[%s189 + $0x240] sm:$0xff]
        %v499 = vld [vmem:[%s189 + $0x248] sm:$0xff]
        %v500 = vld [vmem:[%s189 + $0x250] sm:$0xff]
        %v501 = vld [vmem:[%s189 + $0x258] sm:$0xff]
        %v502 = vld [vmem:[%s189 + $0x260] sm:$0xff]
        %v503 = vld [vmem:[%s189 + $0x268] sm:$0xff]
        %v504 = vld [vmem:[%s189 + $0x270] sm:$0xff]
        %v505 = vld [vmem:[%s189 + $0x278] sm:$0xff]
        %v506 = vld [vmem:[%s189 + $0x280] sm:$0xff]
        %v507 = vld [vmem:[%s189 + $0x288] sm:$0xff]
        %v508 = vld [vmem:[%s189 + $0x290] sm:$0xff]
        %v509 = vld [vmem:[%s189 + $0x298] sm:$0xff]
        %v510 = vld [vmem:[%s189 + $0x2a0] sm:$0xff]
        %v511 = vld [vmem:[%s189 + $0x2a8] sm:$0xff]
        %v512 = vld [vmem:[%s189 + $0x2b0] sm:$0xff]
        %v513 = vld [vmem:[%s189 + $0x2b8] sm:$0xff]
        %v514 = vld [vmem:[%s189 + $0x2c0] sm:$0xff]
        %v515 = vld [vmem:[%s189 + $0x2c8] sm:$0xff]
        %v516 = vld [vmem:[%s189 + $0x2d0] sm:$0xff]
        %v517 = vld [vmem:[%s189 + $0x2d8] sm:$0xff]
        %v518 = vld [vmem:[%s189 + $0x2e0] sm:$0xff]
        %v519 = vld [vmem:[%s189 + $0x2e8] sm:$0xff]
        %v520 = vld [vmem:[%s189 + $0x2f0] sm:$0xff]
        %v521 = vld [vmem:[%s189 + $0x2f8] sm:$0xff]
        %v522 = vld [vmem:[%s189 + $0x300] sm:$0xff]
        %v523 = vld [vmem:[%s189 + $0x308] sm:$0xff]
        %v524 = vld [vmem:[%s189 + $0x310] sm:$0xff]
        %v525 = vld [vmem:[%s189 + $0x318] sm:$0xff]
        %v526 = vld [vmem:[%s189 + $0x320] sm:$0xff]
        %v527 = vld [vmem:[%s189 + $0x328] sm:$0xff]
        %v528 = vld [vmem:[%s189 + $0x330] sm:$0xff]
        %v529 = vld [vmem:[%s189 + $0x338] sm:$0xff]
        %v530 = vld [vmem:[%s189 + $0x340] sm:$0xff]
        %v531 = vld [vmem:[%s189 + $0x348] sm:$0xff]
        %v532 = vld [vmem:[%s189 + $0x350] sm:$0xff]
        %v533 = vld [vmem:[%s189 + $0x358] sm:$0xff]
        %v534 = vld [vmem:[%s189 + $0x360] sm:$0xff]
        %v535 = vld [vmem:[%s189 + $0x368] sm:$0xff]
        %v536 = vld [vmem:[%s189 + $0x370] sm:$0xff]
        %v537 = vld [vmem:[%s189 + $0x378] sm:$0xff]
        %v538 = vld [vmem:[%s189 + $0x380] sm:$0xff]
        %v539 = vld [vmem:[%s189 + $0x388] sm:$0xff]
        %v540 = vld [vmem:[%s189 + $0x390] sm:$0xff]
        %v541 = vld [vmem:[%s189 + $0x398] sm:$0xff]
        %v542 = vld [vmem:[%s189 + $0x3a0] sm:$0xff]
        %v543 = vld [vmem:[%s189 + $0x3a8] sm:$0xff]
        %v544 = vld [vmem:[%s189 + $0x3b0] sm:$0xff]
        %v545 = vld [vmem:[%s189 + $0x3b8] sm:$0xff]
        %v546 = vld [vmem:[%s189 + $0x3c0] sm:$0xff]
        %v547 = vld [vmem:[%s189 + $0x3c8] sm:$0xff]
        %v548 = vld [vmem:[%s189 + $0x3d0] sm:$0xff]
        %v549 = vld [vmem:[%s189 + $0x3d8] sm:$0xff]
        %v550 = vld [vmem:[%s189 + $0x3e0] sm:$0xff]
        %v551 = vld [vmem:[%s189 + $0x3e8] sm:$0xff]
        %v552 = vld [vmem:[%s189 + $0x3f0] sm:$0xff]
        %v553 = vld [vmem:[%s189 + $0x3f8] sm:$0xff]
        %v682 = vunpack.c.l.b16 %v426
        %v683 = vunpack.c.h.b16 %v426
        %v684 = vunpack.c.l.b16 %v427
        %v685 = vunpack.c.h.b16 %v427
        %v686 = vunpack.c.l.b16 %v428
        %v687 = vunpack.c.h.b16 %v428
        %v688 = vunpack.c.l.b16 %v429
        %v689 = vunpack.c.h.b16 %v429
        %v690 = vunpack.c.l.b16 %v430
        %v691 = vunpack.c.h.b16 %v430
        %v692 = vunpack.c.l.b16 %v431
        %v693 = vunpack.c.h.b16 %v431
        %v694 = vunpack.c.l.b16 %v432
        %v695 = vunpack.c.h.b16 %v432
        %v696 = vunpack.c.l.b16 %v433
        %v697 = vunpack.c.h.b16 %v433
        %v698 = vunpack.c.l.b16 %v434
        %v699 = vunpack.c.h.b16 %v434
        %v700 = vunpack.c.l.b16 %v435
        %v701 = vunpack.c.h.b16 %v435
        %v702 = vunpack.c.l.b16 %v436
        %v703 = vunpack.c.h.b16 %v436
        %v704 = vunpack.c.l.b16 %v437
        %v705 = vunpack.c.h.b16 %v437
        %v706 = vunpack.c.l.b16 %v438
        %v707 = vunpack.c.h.b16 %v438
        %v708 = vunpack.c.l.b16 %v439
        %v709 = vunpack.c.h.b16 %v439
        %v710 = vunpack.c.l.b16 %v440
        %v711 = vunpack.c.h.b16 %v440
        %v712 = vunpack.c.l.b16 %v441
        %v713 = vunpack.c.h.b16 %v441
        %v714 = vunpack.c.l.b16 %v442
        %v715 = vunpack.c.h.b16 %v442
        %v716 = vunpack.c.l.b16 %v443
        %v717 = vunpack.c.h.b16 %v443
        %v718 = vunpack.c.l.b16 %v444
        %v719 = vunpack.c.h.b16 %v444
        %v720 = vunpack.c.l.b16 %v445
        %v721 = vunpack.c.h.b16 %v445
        %v722 = vunpack.c.l.b16 %v446
        %v723 = vunpack.c.h.b16 %v446
        %v724 = vunpack.c.l.b16 %v447
        %v725 = vunpack.c.h.b16 %v447
        %v726 = vunpack.c.l.b16 %v448
        %v727 = vunpack.c.h.b16 %v448
        %v728 = vunpack.c.l.b16 %v449
        %v729 = vunpack.c.h.b16 %v449
        %v730 = vunpack.c.l.b16 %v450
        %v731 = vunpack.c.h.b16 %v450
        %v732 = vunpack.c.l.b16 %v451
        %v733 = vunpack.c.h.b16 %v451
        %v734 = vunpack.c.l.b16 %v452
        %v735 = vunpack.c.h.b16 %v452
        %v736 = vunpack.c.l.b16 %v453
        %v737 = vunpack.c.h.b16 %v453
        %v738 = vunpack.c.l.b16 %v454
        %v739 = vunpack.c.h.b16 %v454
        %v740 = vunpack.c.l.b16 %v455
        %v741 = vunpack.c.h.b16 %v455
        %v742 = vunpack.c.l.b16 %v456
        %v743 = vunpack.c.h.b16 %v456
        %v744 = vunpack.c.l.b16 %v457
        %v745 = vunpack.c.h.b16 %v457
        %v746 = vunpack.c.l.b16 %v458
        %v747 = vunpack.c.h.b16 %v458
        %v748 = vunpack.c.l.b16 %v459
        %v749 = vunpack.c.h.b16 %v459
        %v750 = vunpack.c.l.b16 %v460
        %v751 = vunpack.c.h.b16 %v460
        %v752 = vunpack.c.l.b16 %v461
        %v753 = vunpack.c.h.b16 %v461
        %v754 = vunpack.c.l.b16 %v462
        %v755 = vunpack.c.h.b16 %v462
        %v756 = vunpack.c.l.b16 %v463
        %v757 = vunpack.c.h.b16 %v463
        %v758 = vunpack.c.l.b16 %v464
        %v759 = vunpack.c.h.b16 %v464
        %v760 = vunpack.c.l.b16 %v465
        %v761 = vunpack.c.h.b16 %v465
        %v762 = vunpack.c.l.b16 %v466
        %v763 = vunpack.c.h.b16 %v466
        %v764 = vunpack.c.l.b16 %v467
        %v765 = vunpack.c.h.b16 %v467
        %v766 = vunpack.c.l.b16 %v468
        %v767 = vunpack.c.h.b16 %v468
        %v768 = vunpack.c.l.b16 %v469
        %v769 = vunpack.c.h.b16 %v469
        %v770 = vunpack.c.l.b16 %v470
        %v771 = vunpack.c.h.b16 %v470
        %v772 = vunpack.c.l.b16 %v471
        %v773 = vunpack.c.h.b16 %v471
        %v774 = vunpack.c.l.b16 %v472
        %v775 = vunpack.c.h.b16 %v472
        %v776 = vunpack.c.l.b16 %v473
        %v777 = vunpack.c.h.b16 %v473
        %v778 = vunpack.c.l.b16 %v474
        %v779 = vunpack.c.h.b16 %v474
        %v780 = vunpack.c.l.b16 %v475
        %v781 = vunpack.c.h.b16 %v475
        %v782 = vunpack.c.l.b16 %v476
        %v783 = vunpack.c.h.b16 %v476
        %v784 = vunpack.c.l.b16 %v477
        %v785 = vunpack.c.h.b16 %v477
        %v786 = vunpack.c.l.b16 %v478
        %v787 = vunpack.c.h.b16 %v478
        %v788 = vunpack.c.l.b16 %v479
        %v789 = vunpack.c.h.b16 %v479
        %v790 = vunpack.c.l.b16 %v480
        %v791 = vunpack.c.h.b16 %v480
        %v792 = vunpack.c.l.b16 %v481
        %v793 = vunpack.c.h.b16 %v481
        %v794 = vunpack.c.l.b16 %v482
        %v795 = vunpack.c.h.b16 %v482
        %v796 = vunpack.c.l.b16 %v483
        %v797 = vunpack.c.h.b16 %v483
        %v798 = vunpack.c.l.b16 %v484
        %v799 = vunpack.c.h.b16 %v484
        %v800 = vunpack.c.l.b16 %v485
        %v801 = vunpack.c.h.b16 %v485
        %v802 = vunpack.c.l.b16 %v486
        %v803 = vunpack.c.h.b16 %v486
        %v804 = vunpack.c.l.b16 %v487
        %v805 = vunpack.c.h.b16 %v487
        %v806 = vunpack.c.l.b16 %v488
        %v807 = vunpack.c.h.b16 %v488
        %v808 = vunpack.c.l.b16 %v489
        %v809 = vunpack.c.h.b16 %v489
        %v810 = vunpack.c.l.b16 %v490
        %v811 = vunpack.c.h.b16 %v490
        %v812 = vunpack.c.l.b16 %v491
        %v813 = vunpack.c.h.b16 %v491
        %v814 = vunpack.c.l.b16 %v492
        %v815 = vunpack.c.h.b16 %v492
        %v816 = vunpack.c.l.b16 %v493
        %v817 = vunpack.c.h.b16 %v493
        %v818 = vunpack.c.l.b16 %v494
        %v819 = vunpack.c.h.b16 %v494
        %v820 = vunpack.c.l.b16 %v495
        %v821 = vunpack.c.h.b16 %v495
        %v822 = vunpack.c.l.b16 %v496
        %v823 = vunpack.c.h.b16 %v496
        %v824 = vunpack.c.l.b16 %v497
        %v825 = vunpack.c.h.b16 %v497
        %v826 = vunpack.c.l.b16 %v498
        %v827 = vunpack.c.h.b16 %v498
        %v828 = vunpack.c.l.b16 %v499
        %v829 = vunpack.c.h.b16 %v499
        %v830 = vunpack.c.l.b16 %v500
        %v831 = vunpack.c.h.b16 %v500
        %v832 = vunpack.c.l.b16 %v501
        %v833 = vunpack.c.h.b16 %v501
        %v834 = vunpack.c.l.b16 %v502
        %v835 = vunpack.c.h.b16 %v502
        %v836 = vunpack.c.l.b16 %v503
        %v837 = vunpack.c.h.b16 %v503
        %v838 = vunpack.c.l.b16 %v504
        %v839 = vunpack.c.h.b16 %v504
        %v840 = vunpack.c.l.b16 %v505
        %v841 = vunpack.c.h.b16 %v505
        %v842 = vunpack.c.l.b16 %v506
        %v843 = vunpack.c.h.b16 %v506
        %v844 = vunpack.c.l.b16 %v507
        %v845 = vunpack.c.h.b16 %v507
        %v846 = vunpack.c.l.b16 %v508
        %v847 = vunpack.c.h.b16 %v508
        %v848 = vunpack.c.l.b16 %v509
        %v849 = vunpack.c.h.b16 %v509
        %v850 = vunpack.c.l.b16 %v510
        %v851 = vunpack.c.h.b16 %v510
        %v852 = vunpack.c.l.b16 %v511
        %v853 = vunpack.c.h.b16 %v511
        %v854 = vunpack.c.l.b16 %v512
        %v855 = vunpack.c.h.b16 %v512
        %v856 = vunpack.c.l.b16 %v513
        %v857 = vunpack.c.h.b16 %v513
        %v858 = vunpack.c.l.b16 %v514
        %v859 = vunpack.c.h.b16 %v514
        %v860 = vunpack.c.l.b16 %v515
        %v861 = vunpack.c.h.b16 %v515
        %v862 = vunpack.c.l.b16 %v516
        %v863 = vunpack.c.h.b16 %v516
        %v864 = vunpack.c.l.b16 %v517
        %v865 = vunpack.c.h.b16 %v517
        %v866 = vunpack.c.l.b16 %v518
        %v867 = vunpack.c.h.b16 %v518
        %v868 = vunpack.c.l.b16 %v519
        %v869 = vunpack.c.h.b16 %v519
        %v870 = vunpack.c.l.b16 %v520
        %v871 = vunpack.c.h.b16 %v520
        %v872 = vunpack.c.l.b16 %v521
        %v873 = vunpack.c.h.b16 %v521
        %v874 = vunpack.c.l.b16 %v522
        %v875 = vunpack.c.h.b16 %v522
        %v876 = vunpack.c.l.b16 %v523
        %v877 = vunpack.c.h.b16 %v523
        %v878 = vunpack.c.l.b16 %v524
        %v879 = vunpack.c.h.b16 %v524
        %v880 = vunpack.c.l.b16 %v525
        %v881 = vunpack.c.h.b16 %v525
        %v882 = vunpack.c.l.b16 %v526
        %v883 = vunpack.c.h.b16 %v526
        %v884 = vunpack.c.l.b16 %v527
        %v885 = vunpack.c.h.b16 %v527
        %v886 = vunpack.c.l.b16 %v528
        %v887 = vunpack.c.h.b16 %v528
        %v888 = vunpack.c.l.b16 %v529
        %v889 = vunpack.c.h.b16 %v529
        %v890 = vunpack.c.l.b16 %v530
        %v891 = vunpack.c.h.b16 %v530
        %v892 = vunpack.c.l.b16 %v531
        %v893 = vunpack.c.h.b16 %v531
        %v894 = vunpack.c.l.b16 %v532
        %v895 = vunpack.c.h.b16 %v532
        %v896 = vunpack.c.l.b16 %v533
        %v897 = vunpack.c.h.b16 %v533
        %v898 = vunpack.c.l.b16 %v534
        %v899 = vunpack.c.h.b16 %v534
        %v900 = vunpack.c.l.b16 %v535
        %v901 = vunpack.c.h.b16 %v535
        %v902 = vunpack.c.l.b16 %v536
        %v903 = vunpack.c.h.b16 %v536
        %v904 = vunpack.c.l.b16 %v537
        %v905 = vunpack.c.h.b16 %v537
        %v906 = vunpack.c.l.b16 %v538
        %v907 = vunpack.c.h.b16 %v538
        %v908 = vunpack.c.l.b16 %v539
        %v909 = vunpack.c.h.b16 %v539
        %v910 = vunpack.c.l.b16 %v540
        %v911 = vunpack.c.h.b16 %v540
        %v912 = vunpack.c.l.b16 %v541
        %v913 = vunpack.c.h.b16 %v541
        %v914 = vunpack.c.l.b16 %v542
        %v915 = vunpack.c.h.b16 %v542
        %v916 = vunpack.c.l.b16 %v543
        %v917 = vunpack.c.h.b16 %v543
        %v918 = vunpack.c.l.b16 %v544
        %v919 = vunpack.c.h.b16 %v544
        %v920 = vunpack.c.l.b16 %v545
        %v921 = vunpack.c.h.b16 %v545
        %v922 = vunpack.c.l.b16 %v546
        %v923 = vunpack.c.h.b16 %v546
        %v924 = vunpack.c.l.b16 %v547
        %v925 = vunpack.c.h.b16 %v547
        %v926 = vunpack.c.l.b16 %v548
        %v927 = vunpack.c.h.b16 %v548
        %v928 = vunpack.c.l.b16 %v549
        %v929 = vunpack.c.h.b16 %v549
        %v930 = vunpack.c.l.b16 %v550
        %v931 = vunpack.c.h.b16 %v550
        %v932 = vunpack.c.l.b16 %v551
        %v933 = vunpack.c.h.b16 %v551
        %v934 = vunpack.c.l.b16 %v552
        %v935 = vunpack.c.h.b16 %v552
        %v936 = vunpack.c.l.b16 %v553
        %v937 = vunpack.c.h.b16 %v553
        %v938 = vpack.c.b16 %v686, %v682
        %v939 = vpack.c.b16 %v687, %v683
        %v940 = vpack.c.b16 %v688, %v684
        %v941 = vpack.c.b16 %v689, %v685
        %v942 = vpack.c.b16 %v694, %v690
        %v943 = vpack.c.b16 %v695, %v691
        %v944 = vpack.c.b16 %v696, %v692
        %v945 = vpack.c.b16 %v697, %v693
        %v946 = vpack.c.b16 %v702, %v698
        %v947 = vpack.c.b16 %v703, %v699
        %v948 = vpack.c.b16 %v704, %v700
        %v949 = vpack.c.b16 %v705, %v701
        %v950 = vpack.c.b16 %v710, %v706
        %v951 = vpack.c.b16 %v711, %v707
        %v952 = vpack.c.b16 %v712, %v708
        %v953 = vpack.c.b16 %v713, %v709
        %v954 = vpack.c.b16 %v718, %v714
        %v955 = vpack.c.b16 %v719, %v715
        %v956 = vpack.c.b16 %v720, %v716
        %v957 = vpack.c.b16 %v721, %v717
        %v958 = vpack.c.b16 %v726, %v722
        %v959 = vpack.c.b16 %v727, %v723
        %v960 = vpack.c.b16 %v728, %v724
        %v961 = vpack.c.b16 %v729, %v725
        %v962 = vpack.c.b16 %v734, %v730
        %v963 = vpack.c.b16 %v735, %v731
        %v964 = vpack.c.b16 %v736, %v732
        %v965 = vpack.c.b16 %v737, %v733
        %v966 = vpack.c.b16 %v742, %v738
        %v967 = vpack.c.b16 %v743, %v739
        %v968 = vpack.c.b16 %v744, %v740
        %v969 = vpack.c.b16 %v745, %v741
        %v970 = vpack.c.b16 %v750, %v746
        %v971 = vpack.c.b16 %v751, %v747
        %v972 = vpack.c.b16 %v752, %v748
        %v973 = vpack.c.b16 %v753, %v749
        %v974 = vpack.c.b16 %v758, %v754
        %v975 = vpack.c.b16 %v759, %v755
        %v976 = vpack.c.b16 %v760, %v756
        %v977 = vpack.c.b16 %v761, %v757
        %v978 = vpack.c.b16 %v766, %v762
        %v979 = vpack.c.b16 %v767, %v763
        %v980 = vpack.c.b16 %v768, %v764
        %v981 = vpack.c.b16 %v769, %v765
        %v982 = vpack.c.b16 %v774, %v770
        %v983 = vpack.c.b16 %v775, %v771
        %v984 = vpack.c.b16 %v776, %v772
        %v985 = vpack.c.b16 %v777, %v773
        %v986 = vpack.c.b16 %v782, %v778
        %v987 = vpack.c.b16 %v783, %v779
        %v988 = vpack.c.b16 %v784, %v780
        %v989 = vpack.c.b16 %v785, %v781
        %v990 = vpack.c.b16 %v790, %v786
        %v991 = vpack.c.b16 %v791, %v787
        %v992 = vpack.c.b16 %v792, %v788
        %v993 = vpack.c.b16 %v793, %v789
        %v994 = vpack.c.b16 %v798, %v794
        %v995 = vpack.c.b16 %v799, %v795
        %v996 = vpack.c.b16 %v800, %v796
        %v997 = vpack.c.b16 %v801, %v797
        %v998 = vpack.c.b16 %v806, %v802
        %v999 = vpack.c.b16 %v807, %v803
        %v1000 = vpack.c.b16 %v808, %v804
        %v1001 = vpack.c.b16 %v809, %v805
        %v1002 = vpack.c.b16 %v814, %v810
        %v1003 = vpack.c.b16 %v815, %v811
        %v1004 = vpack.c.b16 %v816, %v812
        %v1005 = vpack.c.b16 %v817, %v813
        %v1006 = vpack.c.b16 %v822, %v818
        %v1007 = vpack.c.b16 %v823, %v819
        %v1008 = vpack.c.b16 %v824, %v820
        %v1009 = vpack.c.b16 %v825, %v821
        %v1010 = vpack.c.b16 %v830, %v826
        %v1011 = vpack.c.b16 %v831, %v827
        %v1012 = vpack.c.b16 %v832, %v828
        %v1013 = vpack.c.b16 %v833, %v829
        %v1014 = vpack.c.b16 %v838, %v834
        %v1015 = vpack.c.b16 %v839, %v835
        %v1016 = vpack.c.b16 %v840, %v836
        %v1017 = vpack.c.b16 %v841, %v837
        %v1018 = vpack.c.b16 %v846, %v842
        %v1019 = vpack.c.b16 %v847, %v843
        %v1020 = vpack.c.b16 %v848, %v844
        %v1021 = vpack.c.b16 %v849, %v845
        %v1022 = vpack.c.b16 %v854, %v850
        %v1023 = vpack.c.b16 %v855, %v851
        %v1024 = vpack.c.b16 %v856, %v852
        %v1025 = vpack.c.b16 %v857, %v853
        %v1026 = vpack.c.b16 %v862, %v858
        %v1027 = vpack.c.b16 %v863, %v859
        %v1028 = vpack.c.b16 %v864, %v860
        %v1029 = vpack.c.b16 %v865, %v861
        %v1030 = vpack.c.b16 %v870, %v866
        %v1031 = vpack.c.b16 %v871, %v867
        %v1032 = vpack.c.b16 %v872, %v868
        %v1033 = vpack.c.b16 %v873, %v869
        %v1034 = vpack.c.b16 %v878, %v874
        %v1035 = vpack.c.b16 %v879, %v875
        %v1036 = vpack.c.b16 %v880, %v876
        %v1037 = vpack.c.b16 %v881, %v877
        %v1038 = vpack.c.b16 %v886, %v882
        %v1039 = vpack.c.b16 %v887, %v883
        %v1040 = vpack.c.b16 %v888, %v884
        %v1041 = vpack.c.b16 %v889, %v885
        %v1042 = vpack.c.b16 %v894, %v890
        %v1043 = vpack.c.b16 %v895, %v891
        %v1044 = vpack.c.b16 %v896, %v892
        %v1045 = vpack.c.b16 %v897, %v893
        %v1046 = vpack.c.b16 %v902, %v898
        %v1047 = vpack.c.b16 %v903, %v899
        %v1048 = vpack.c.b16 %v904, %v900
        %v1049 = vpack.c.b16 %v905, %v901
        %v1050 = vpack.c.b16 %v910, %v906
        %v1051 = vpack.c.b16 %v911, %v907
        %v1052 = vpack.c.b16 %v912, %v908
        %v1053 = vpack.c.b16 %v913, %v909
        %v1054 = vpack.c.b16 %v918, %v914
        %v1055 = vpack.c.b16 %v919, %v915
        %v1056 = vpack.c.b16 %v920, %v916
        %v1057 = vpack.c.b16 %v921, %v917
        %v1058 = vpack.c.b16 %v926, %v922
        %v1059 = vpack.c.b16 %v927, %v923
        %v1060 = vpack.c.b16 %v928, %v924
        %v1061 = vpack.c.b16 %v929, %v925
        %v1062 = vpack.c.b16 %v934, %v930
        %v1063 = vpack.c.b16 %v935, %v931
        %v1064 = vpack.c.b16 %v936, %v932
        %v1065 = vpack.c.b16 %v937, %v933
        %v1258 = vunpack.c.l.b16 %v298
        %v1259 = vunpack.c.l.b16 %v299
        %v1260 = vunpack.c.l.b16 %v300
        %v1261 = vunpack.c.l.b16 %v301
        %v1262 = vunpack.c.l.b16 %v302
        %v1263 = vunpack.c.l.b16 %v303
        %v1264 = vunpack.c.l.b16 %v304
        %v1265 = vunpack.c.l.b16 %v305
        %v1266 = vunpack.c.l.b16 %v306
        %v1267 = vunpack.c.l.b16 %v307
        %v1268 = vunpack.c.l.b16 %v308
        %v1269 = vunpack.c.l.b16 %v309
        %v1270 = vunpack.c.l.b16 %v310
        %v1271 = vunpack.c.l.b16 %v311
        %v1272 = vunpack.c.l.b16 %v312
        %v1273 = vunpack.c.l.b16 %v313
        %v1274 = vunpack.c.l.b16 %v314
        %v1275 = vunpack.c.l.b16 %v315
        %v1276 = vunpack.c.l.b16 %v316
        %v1277 = vunpack.c.l.b16 %v317
        %v1278 = vunpack.c.l.b16 %v318
        %v1279 = vunpack.c.l.b16 %v319
        %v1280 = vunpack.c.l.b16 %v320
        %v1281 = vunpack.c.l.b16 %v321
        %v1282 = vunpack.c.l.b16 %v322
        %v1283 = vunpack.c.l.b16 %v323
        %v1284 = vunpack.c.l.b16 %v324
        %v1285 = vunpack.c.l.b16 %v325
        %v1286 = vunpack.c.l.b16 %v326
        %v1287 = vunpack.c.l.b16 %v327
        %v1288 = vunpack.c.l.b16 %v328
        %v1289 = vunpack.c.l.b16 %v329
        %v1290 = vunpack.c.l.b16 %v330
        %v1291 = vunpack.c.l.b16 %v331
        %v1292 = vunpack.c.l.b16 %v332
        %v1293 = vunpack.c.l.b16 %v333
        %v1294 = vunpack.c.l.b16 %v334
        %v1295 = vunpack.c.l.b16 %v335
        %v1296 = vunpack.c.l.b16 %v336
        %v1297 = vunpack.c.l.b16 %v337
        %v1298 = vunpack.c.l.b16 %v338
        %v1299 = vunpack.c.l.b16 %v339
        %v1300 = vunpack.c.l.b16 %v340
        %v1301 = vunpack.c.l.b16 %v341
        %v1302 = vunpack.c.l.b16 %v342
        %v1303 = vunpack.c.l.b16 %v343
        %v1304 = vunpack.c.l.b16 %v344
        %v1305 = vunpack.c.l.b16 %v345
        %v1306 = vunpack.c.l.b16 %v346
        %v1307 = vunpack.c.l.b16 %v347
        %v1308 = vunpack.c.l.b16 %v348
        %v1309 = vunpack.c.l.b16 %v349
        %v1310 = vunpack.c.l.b16 %v350
        %v1311 = vunpack.c.l.b16 %v351
        %v1312 = vunpack.c.l.b16 %v352
        %v1313 = vunpack.c.l.b16 %v353
        %v1314 = vunpack.c.l.b16 %v354
        %v1315 = vunpack.c.l.b16 %v355
        %v1316 = vunpack.c.l.b16 %v356
        %v1317 = vunpack.c.l.b16 %v357
        %v1318 = vunpack.c.l.b16 %v358
        %v1319 = vunpack.c.l.b16 %v359
        %v1320 = vunpack.c.l.b16 %v360
        %v1321 = vunpack.c.l.b16 %v361
        %v1322 = vpack.c.b16 %v1259, %v1258
        %v1323 = vpack.c.b16 %v1261, %v1260
        %v1324 = vpack.c.b16 %v1263, %v1262
        %v1325 = vpack.c.b16 %v1265, %v1264
        %v1326 = vpack.c.b16 %v1267, %v1266
        %v1327 = vpack.c.b16 %v1269, %v1268
        %v1328 = vpack.c.b16 %v1271, %v1270
        %v1329 = vpack.c.b16 %v1273, %v1272
        %v1330 = vpack.c.b16 %v1275, %v1274
        %v1331 = vpack.c.b16 %v1277, %v1276
        %v1332 = vpack.c.b16 %v1279, %v1278
        %v1333 = vpack.c.b16 %v1281, %v1280
        %v1334 = vpack.c.b16 %v1283, %v1282
        %v1335 = vpack.c.b16 %v1285, %v1284
        %v1336 = vpack.c.b16 %v1287, %v1286
        %v1337 = vpack.c.b16 %v1289, %v1288
        %v1338 = vpack.c.b16 %v1291, %v1290
        %v1339 = vpack.c.b16 %v1293, %v1292
        %v1340 = vpack.c.b16 %v1295, %v1294
        %v1341 = vpack.c.b16 %v1297, %v1296
        %v1342 = vpack.c.b16 %v1299, %v1298
        %v1343 = vpack.c.b16 %v1301, %v1300
        %v1344 = vpack.c.b16 %v1303, %v1302
        %v1345 = vpack.c.b16 %v1305, %v1304
        %v1346 = vpack.c.b16 %v1307, %v1306
        %v1347 = vpack.c.b16 %v1309, %v1308
        %v1348 = vpack.c.b16 %v1311, %v1310
        %v1349 = vpack.c.b16 %v1313, %v1312
        %v1350 = vpack.c.b16 %v1315, %v1314
        %v1351 = vpack.c.b16 %v1317, %v1316
        %v1352 = vpack.c.b16 %v1319, %v1318
        %v1353 = vpack.c.b16 %v1321, %v1320
        %1386 = vmatprep.subr.bf16.mxu0 0
        %1387 = vmatpush1.bf16.msra.mxu0 %v1329
        %1388 = vmatprep.subr.bf16.mxu0 0
        %1389 = vmatpush1.bf16.msra.mxu0 %v1328
        %1390 = vmatprep.subr.bf16.mxu0 0
        %1391 = vmatpush1.bf16.msra.mxu0 %v1327
        %1392 = vmatprep.subr.bf16.mxu0 0
        %1393 = vmatpush1.bf16.msra.mxu0 %v1326
        %1394 = vmatprep.subr.bf16.mxu0 0
        %1395 = vmatpush1.bf16.msra.mxu0 %v1325
        %1396 = vmatprep.subr.bf16.mxu0 0
        %1397 = vmatpush1.bf16.msra.mxu0 %v1324
        %1398 = vmatprep.subr.bf16.mxu0 0
        %1399 = vmatpush1.bf16.msra.mxu0 %v1323
        %1400 = vmatprep.subr.bf16.mxu0 0
        %1401 = vmatpush1.bf16.msra.mxu0 %v1322
        %1402 = vmatprep.subr.bf16.mxu0 0
        %1403 = vmatpush2.bf16.msra.mxu0 %v1337
        %1404 = vmatprep.subr.bf16.mxu0 0
        %1405 = vmatpush2.bf16.msra.mxu0 %v1336
        %1406 = vmatprep.subr.bf16.mxu0 0
        %1407 = vmatpush2.bf16.msra.mxu0 %v1335
        %1408 = vmatprep.subr.bf16.mxu0 0
        %1409 = vmatpush2.bf16.msra.mxu0 %v1334
        %1410 = vmatprep.subr.bf16.mxu0 0
        %1411 = vmatpush2.bf16.msra.mxu0 %v1333
        %1412 = vmatprep.subr.bf16.mxu0 0
        %1413 = vmatpush2.bf16.msra.mxu0 %v1332
        %1414 = vmatprep.subr.bf16.mxu0 0
        %1415 = vmatpush2.bf16.msra.mxu0 %v1331
        %1416 = vmatprep.subr.bf16.mxu0 0
        %1417 = vmatpush2.bf16.msra.mxu0 %v1330
        %1418 = vmatprep.mubr.bf16.mxu0 %v939
        %1419 = vmatmul.mubr.bf16.gmra.mxu0 %v938
        %v1420 = vpop.f32.mrf.mxu0
        %v1421 = vadd.f32 0.0, %v1420
        %v1422 = vpop.f32.mrf.mxu0
        %v1423 = vpop.f32.mrf.mxu0
        %v1424 = vadd.f32 0.0, %v1423
        %v1425 = vpop.f32.mrf.mxu0
        %1426 = vmatprep.mubr.bf16.mxu0 %v943
        %1427 = vmatmul.mubr.bf16.gmra.mxu0 %v942
        %v1428 = vpop.f32.mrf.mxu0
        %v1429 = vadd.f32 0.0, %v1428
        %v1430 = vpop.f32.mrf.mxu0
        %v1431 = vpop.f32.mrf.mxu0
        %v1432 = vadd.f32 0.0, %v1431
        %v1433 = vpop.f32.mrf.mxu0
        %1434 = vmatprep.mubr.bf16.mxu0 %v947
        %1435 = vmatmul.mubr.bf16.gmra.mxu0 %v946
        %v1436 = vpop.f32.mrf.mxu0
        %v1437 = vadd.f32 0.0, %v1436
        %v1438 = vpop.f32.mrf.mxu0
        %v1439 = vpop.f32.mrf.mxu0
        %v1440 = vadd.f32 0.0, %v1439
        %v1441 = vpop.f32.mrf.mxu0
        %1442 = vmatprep.mubr.bf16.mxu0 %v951
        %1443 = vmatmul.mubr.bf16.gmra.mxu0 %v950
        %v1444 = vpop.f32.mrf.mxu0
        %v1445 = vadd.f32 0.0, %v1444
        %v1446 = vpop.f32.mrf.mxu0
        %v1447 = vpop.f32.mrf.mxu0
        %v1448 = vadd.f32 0.0, %v1447
        %v1449 = vpop.f32.mrf.mxu0
        %1450 = vmatprep.mubr.bf16.mxu0 %v955
        %1451 = vmatmul.mubr.bf16.gmra.mxu0 %v954
        %v1452 = vpop.f32.mrf.mxu0
        %v1453 = vadd.f32 0.0, %v1452
        %v1454 = vpop.f32.mrf.mxu0
        %v1455 = vpop.f32.mrf.mxu0
        %v1456 = vadd.f32 0.0, %v1455
        %v1457 = vpop.f32.mrf.mxu0
        %1458 = vmatprep.mubr.bf16.mxu0 %v959
        %1459 = vmatmul.mubr.bf16.gmra.mxu0 %v958
        %v1460 = vpop.f32.mrf.mxu0
        %v1461 = vadd.f32 0.0, %v1460
        %v1462 = vpop.f32.mrf.mxu0
        %v1463 = vpop.f32.mrf.mxu0
        %v1464 = vadd.f32 0.0, %v1463
        %v1465 = vpop.f32.mrf.mxu0
        %1466 = vmatprep.mubr.bf16.mxu0 %v963
        %1467 = vmatmul.mubr.bf16.gmra.mxu0 %v962
        %v1468 = vpop.f32.mrf.mxu0
        %v1469 = vadd.f32 0.0, %v1468
        %v1470 = vpop.f32.mrf.mxu0
        %v1471 = vpop.f32.mrf.mxu0
        %v1472 = vadd.f32 0.0, %v1471
        %v1473 = vpop.f32.mrf.mxu0
        %1474 = vmatprep.mubr.bf16.mxu0 %v967
        %1475 = vmatmul.mubr.bf16.gmra.mxu0 %v966
        %v1476 = vpop.f32.mrf.mxu0
        %v1477 = vadd.f32 0.0, %v1476
        %v1478 = vpop.f32.mrf.mxu0
        %v1479 = vpop.f32.mrf.mxu0
        %v1480 = vadd.f32 0.0, %v1479
        %v1481 = vpop.f32.mrf.mxu0
        %1482 = vmatprep.mubr.bf16.mxu0 %v971
        %1483 = vmatmul.mubr.bf16.gmra.mxu0 %v970
        %v1484 = vpop.f32.mrf.mxu0
        %v1485 = vadd.f32 0.0, %v1484
        %v1486 = vpop.f32.mrf.mxu0
        %v1487 = vpop.f32.mrf.mxu0
        %v1488 = vadd.f32 0.0, %v1487
        %v1489 = vpop.f32.mrf.mxu0
        %1490 = vmatprep.mubr.bf16.mxu0 %v975
        %1491 = vmatmul.mubr.bf16.gmra.mxu0 %v974
        %v1492 = vpop.f32.mrf.mxu0
        %v1493 = vadd.f32 0.0, %v1492
        %v1494 = vpop.f32.mrf.mxu0
        %v1495 = vpop.f32.mrf.mxu0
        %v1496 = vadd.f32 0.0, %v1495
        %v1497 = vpop.f32.mrf.mxu0
        %1498 = vmatprep.mubr.bf16.mxu0 %v979
        %1499 = vmatmul.mubr.bf16.gmra.mxu0 %v978
        %v1500 = vpop.f32.mrf.mxu0
        %v1501 = vadd.f32 0.0, %v1500
        %v1502 = vpop.f32.mrf.mxu0
        %v1503 = vpop.f32.mrf.mxu0
        %v1504 = vadd.f32 0.0, %v1503
        %v1505 = vpop.f32.mrf.mxu0
        %1506 = vmatprep.mubr.bf16.mxu0 %v983
        %1507 = vmatmul.mubr.bf16.gmra.mxu0 %v982
        %v1508 = vpop.f32.mrf.mxu0
        %v1509 = vadd.f32 0.0, %v1508
        %v1510 = vpop.f32.mrf.mxu0
        %v1511 = vpop.f32.mrf.mxu0
        %v1512 = vadd.f32 0.0, %v1511
        %v1513 = vpop.f32.mrf.mxu0
        %1514 = vmatprep.mubr.bf16.mxu0 %v987
        %1515 = vmatmul.mubr.bf16.gmra.mxu0 %v986
        %v1516 = vpop.f32.mrf.mxu0
        %v1517 = vadd.f32 0.0, %v1516
        %v1518 = vpop.f32.mrf.mxu0
        %v1519 = vpop.f32.mrf.mxu0
        %v1520 = vadd.f32 0.0, %v1519
        %v1521 = vpop.f32.mrf.mxu0
        %1522 = vmatprep.mubr.bf16.mxu0 %v991
        %1523 = vmatmul.mubr.bf16.gmra.mxu0 %v990
        %v1524 = vpop.f32.mrf.mxu0
        %v1525 = vadd.f32 0.0, %v1524
        %v1526 = vpop.f32.mrf.mxu0
        %v1527 = vpop.f32.mrf.mxu0
        %v1528 = vadd.f32 0.0, %v1527
        %v1529 = vpop.f32.mrf.mxu0
        %1530 = vmatprep.mubr.bf16.mxu0 %v995
        %1531 = vmatmul.mubr.bf16.gmra.mxu0 %v994
        %v1532 = vpop.f32.mrf.mxu0
        %v1533 = vadd.f32 0.0, %v1532
        %v1534 = vpop.f32.mrf.mxu0
        %v1535 = vpop.f32.mrf.mxu0
        %v1536 = vadd.f32 0.0, %v1535
        %v1537 = vpop.f32.mrf.mxu0
        %1538 = vmatprep.mubr.bf16.mxu0 %v999
        %1539 = vmatmul.mubr.bf16.gmra.mxu0 %v998
        %v1540 = vpop.f32.mrf.mxu0
        %v1541 = vadd.f32 0.0, %v1540
        %v1542 = vpop.f32.mrf.mxu0
        %v1543 = vpop.f32.mrf.mxu0
        %v1544 = vadd.f32 0.0, %v1543
        %v1545 = vpop.f32.mrf.mxu0
        %1546 = vmatprep.mubr.bf16.mxu0 %v1003
        %1547 = vmatmul.mubr.bf16.gmra.mxu0 %v1002
        %v1548 = vpop.f32.mrf.mxu0
        %v1549 = vadd.f32 0.0, %v1548
        %v1550 = vpop.f32.mrf.mxu0
        %v1551 = vpop.f32.mrf.mxu0
        %v1552 = vadd.f32 0.0, %v1551
        %v1553 = vpop.f32.mrf.mxu0
        %1554 = vmatprep.mubr.bf16.mxu0 %v1007
        %1555 = vmatmul.mubr.bf16.gmra.mxu0 %v1006
        %v1556 = vpop.f32.mrf.mxu0
        %v1557 = vadd.f32 0.0, %v1556
        %v1558 = vpop.f32.mrf.mxu0
        %v1559 = vpop.f32.mrf.mxu0
        %v1560 = vadd.f32 0.0, %v1559
        %v1561 = vpop.f32.mrf.mxu0
        %1562 = vmatprep.mubr.bf16.mxu0 %v1011
        %1563 = vmatmul.mubr.bf16.gmra.mxu0 %v1010
        %v1564 = vpop.f32.mrf.mxu0
        %v1565 = vadd.f32 0.0, %v1564
        %v1566 = vpop.f32.mrf.mxu0
        %v1567 = vpop.f32.mrf.mxu0
        %v1568 = vadd.f32 0.0, %v1567
        %v1569 = vpop.f32.mrf.mxu0
        %1570 = vmatprep.mubr.bf16.mxu0 %v1015
        %1571 = vmatmul.mubr.bf16.gmra.mxu0 %v1014
        %v1572 = vpop.f32.mrf.mxu0
        %v1573 = vadd.f32 0.0, %v1572
        %v1574 = vpop.f32.mrf.mxu0
        %v1575 = vpop.f32.mrf.mxu0
        %v1576 = vadd.f32 0.0, %v1575
        %v1577 = vpop.f32.mrf.mxu0
        %1578 = vmatprep.mubr.bf16.mxu0 %v1019
        %1579 = vmatmul.mubr.bf16.gmra.mxu0 %v1018
        %v1580 = vpop.f32.mrf.mxu0
        %v1581 = vadd.f32 0.0, %v1580
        %v1582 = vpop.f32.mrf.mxu0
        %v1583 = vpop.f32.mrf.mxu0
        %v1584 = vadd.f32 0.0, %v1583
        %v1585 = vpop.f32.mrf.mxu0
        %1586 = vmatprep.mubr.bf16.mxu0 %v1023
        %1587 = vmatmul.mubr.bf16.gmra.mxu0 %v1022
        %v1588 = vpop.f32.mrf.mxu0
        %v1589 = vadd.f32 0.0, %v1588
        %v1590 = vpop.f32.mrf.mxu0
        %v1591 = vpop.f32.mrf.mxu0
        %v1592 = vadd.f32 0.0, %v1591
        %v1593 = vpop.f32.mrf.mxu0
        %1594 = vmatprep.mubr.bf16.mxu0 %v1027
        %1595 = vmatmul.mubr.bf16.gmra.mxu0 %v1026
        %v1596 = vpop.f32.mrf.mxu0
        %v1597 = vadd.f32 0.0, %v1596
        %v1598 = vpop.f32.mrf.mxu0
        %v1599 = vpop.f32.mrf.mxu0
        %v1600 = vadd.f32 0.0, %v1599
        %v1601 = vpop.f32.mrf.mxu0
        %1602 = vmatprep.mubr.bf16.mxu0 %v1031
        %1603 = vmatmul.mubr.bf16.gmra.mxu0 %v1030
        %v1604 = vpop.f32.mrf.mxu0
        %v1605 = vadd.f32 0.0, %v1604
        %v1606 = vpop.f32.mrf.mxu0
        %v1607 = vpop.f32.mrf.mxu0
        %v1608 = vadd.f32 0.0, %v1607
        %v1609 = vpop.f32.mrf.mxu0
        %1610 = vmatprep.mubr.bf16.mxu0 %v1035
        %1611 = vmatmul.mubr.bf16.gmra.mxu0 %v1034
        %v1612 = vpop.f32.mrf.mxu0
        %v1613 = vadd.f32 0.0, %v1612
        %v1614 = vpop.f32.mrf.mxu0
        %v1615 = vpop.f32.mrf.mxu0
        %v1616 = vadd.f32 0.0, %v1615
        %v1617 = vpop.f32.mrf.mxu0
        %1618 = vmatprep.mubr.bf16.mxu0 %v1039
        %1619 = vmatmul.mubr.bf16.gmra.mxu0 %v1038
        %v1620 = vpop.f32.mrf.mxu0
        %v1621 = vadd.f32 0.0, %v1620
        %v1622 = vpop.f32.mrf.mxu0
        %v1623 = vpop.f32.mrf.mxu0
        %v1624 = vadd.f32 0.0, %v1623
        %v1625 = vpop.f32.mrf.mxu0
        %1626 = vmatprep.mubr.bf16.mxu0 %v1043
        %1627 = vmatmul.mubr.bf16.gmra.mxu0 %v1042
        %v1628 = vpop.f32.mrf.mxu0
        %v1629 = vadd.f32 0.0, %v1628
        %v1630 = vpop.f32.mrf.mxu0
        %v1631 = vpop.f32.mrf.mxu0
        %v1632 = vadd.f32 0.0, %v1631
        %v1633 = vpop.f32.mrf.mxu0
        %1634 = vmatprep.mubr.bf16.mxu0 %v1047
        %1635 = vmatmul.mubr.bf16.gmra.mxu0 %v1046
        %v1636 = vpop.f32.mrf.mxu0
        %v1637 = vadd.f32 0.0, %v1636
        %v1638 = vpop.f32.mrf.mxu0
        %v1639 = vpop.f32.mrf.mxu0
        %v1640 = vadd.f32 0.0, %v1639
        %v1641 = vpop.f32.mrf.mxu0
        %1642 = vmatprep.mubr.bf16.mxu0 %v1051
        %1643 = vmatmul.mubr.bf16.gmra.mxu0 %v1050
        %v1644 = vpop.f32.mrf.mxu0
        %v1645 = vadd.f32 0.0, %v1644
        %v1646 = vpop.f32.mrf.mxu0
        %v1647 = vpop.f32.mrf.mxu0
        %v1648 = vadd.f32 0.0, %v1647
        %v1649 = vpop.f32.mrf.mxu0
        %1650 = vmatprep.mubr.bf16.mxu0 %v1055
        %1651 = vmatmul.mubr.bf16.gmra.mxu0 %v1054
        %v1652 = vpop.f32.mrf.mxu0
        %v1653 = vadd.f32 0.0, %v1652
        %v1654 = vpop.f32.mrf.mxu0
        %v1655 = vpop.f32.mrf.mxu0
        %v1656 = vadd.f32 0.0, %v1655
        %v1657 = vpop.f32.mrf.mxu0
        %1658 = vmatprep.mubr.bf16.mxu0 %v1059
        %1659 = vmatmul.mubr.bf16.gmra.mxu0 %v1058
        %v1660 = vpop.f32.mrf.mxu0
        %v1661 = vadd.f32 0.0, %v1660
        %v1662 = vpop.f32.mrf.mxu0
        %v1663 = vpop.f32.mrf.mxu0
        %v1664 = vadd.f32 0.0, %v1663
        %v1665 = vpop.f32.mrf.mxu0
        %1666 = vmatprep.mubr.bf16.mxu0 %v1063
        %1667 = vmatmul.mubr.bf16.gmra.mxu0 %v1062
        %v1668 = vpop.f32.mrf.mxu0
        %v1669 = vadd.f32 0.0, %v1668
        %v1670 = vpop.f32.mrf.mxu0
        %v1671 = vpop.f32.mrf.mxu0
        %v1672 = vadd.f32 0.0, %v1671
        %v1673 = vpop.f32.mrf.mxu0
        %1674 = vdwg.mxu0
        %1675 = vmatprep.subr.bf16.mxu0 0
        %1676 = vmatpush1.bf16.msra.mxu0 %v1345
        %1677 = vmatprep.subr.bf16.mxu0 0
        %1678 = vmatpush1.bf16.msra.mxu0 %v1344
        %1679 = vmatprep.subr.bf16.mxu0 0
        %1680 = vmatpush1.bf16.msra.mxu0 %v1343
        %1681 = vmatprep.subr.bf16.mxu0 0
        %1682 = vmatpush1.bf16.msra.mxu0 %v1342
        %1683 = vmatprep.subr.bf16.mxu0 0
        %1684 = vmatpush1.bf16.msra.mxu0 %v1341
        %1685 = vmatprep.subr.bf16.mxu0 0
        %1686 = vmatpush1.bf16.msra.mxu0 %v1340
        %1687 = vmatprep.subr.bf16.mxu0 0
        %1688 = vmatpush1.bf16.msra.mxu0 %v1339
        %1689 = vmatprep.subr.bf16.mxu0 0
        %1690 = vmatpush1.bf16.msra.mxu0 %v1338
        %1691 = vmatprep.subr.bf16.mxu0 0
        %1692 = vmatpush2.bf16.msra.mxu0 %v1353
        %1693 = vmatprep.subr.bf16.mxu0 0
        %1694 = vmatpush2.bf16.msra.mxu0 %v1352
        %1695 = vmatprep.subr.bf16.mxu0 0
        %1696 = vmatpush2.bf16.msra.mxu0 %v1351
        %1697 = vmatprep.subr.bf16.mxu0 0
        %1698 = vmatpush2.bf16.msra.mxu0 %v1350
        %1699 = vmatprep.subr.bf16.mxu0 0
        %1700 = vmatpush2.bf16.msra.mxu0 %v1349
        %1701 = vmatprep.subr.bf16.mxu0 0
        %1702 = vmatpush2.bf16.msra.mxu0 %v1348
        %1703 = vmatprep.subr.bf16.mxu0 0
        %1704 = vmatpush2.bf16.msra.mxu0 %v1347
        %1705 = vmatprep.subr.bf16.mxu0 0
        %1706 = vmatpush2.bf16.msra.mxu0 %v1346
        %1707 = vmatprep.mubr.bf16.mxu0 %v941
        %1708 = vmatmul.mubr.bf16.gmra.mxu0 %v940
        %v1709 = vpop.f32.mrf.mxu0
        %v1710 = vadd.f32 %v1421, %v1709
        %v1711 = vpop.f32.mrf.mxu0
        %v1712 = vpop.f32.mrf.mxu0
        %v1713 = vadd.f32 %v1424, %v1712
        %v1714 = vpop.f32.mrf.mxu0
        %1715 = vmatprep.mubr.bf16.mxu0 %v945
        %1716 = vmatmul.mubr.bf16.gmra.mxu0 %v944
        %v1717 = vpop.f32.mrf.mxu0
        %v1718 = vadd.f32 %v1429, %v1717
        %v1719 = vpop.f32.mrf.mxu0
        %v1720 = vpop.f32.mrf.mxu0
        %v1721 = vadd.f32 %v1432, %v1720
        %v1722 = vpop.f32.mrf.mxu0
        %1723 = vmatprep.mubr.bf16.mxu0 %v949
        %1724 = vmatmul.mubr.bf16.gmra.mxu0 %v948
        %v1725 = vpop.f32.mrf.mxu0
        %v1726 = vadd.f32 %v1437, %v1725
        %v1727 = vpop.f32.mrf.mxu0
        %v1728 = vpop.f32.mrf.mxu0
        %v1729 = vadd.f32 %v1440, %v1728
        %v1730 = vpop.f32.mrf.mxu0
        %1731 = vmatprep.mubr.bf16.mxu0 %v953
        %1732 = vmatmul.mubr.bf16.gmra.mxu0 %v952
        %v1733 = vpop.f32.mrf.mxu0
        %v1734 = vadd.f32 %v1445, %v1733
        %v1735 = vpop.f32.mrf.mxu0
        %v1736 = vpop.f32.mrf.mxu0
        %v1737 = vadd.f32 %v1448, %v1736
        %v1738 = vpop.f32.mrf.mxu0
        %1739 = vmatprep.mubr.bf16.mxu0 %v957
        %1740 = vmatmul.mubr.bf16.gmra.mxu0 %v956
        %v1741 = vpop.f32.mrf.mxu0
        %v1742 = vadd.f32 %v1453, %v1741
        %v1743 = vpop.f32.mrf.mxu0
        %v1744 = vpop.f32.mrf.mxu0
        %v1745 = vadd.f32 %v1456, %v1744
        %v1746 = vpop.f32.mrf.mxu0
        %1747 = vmatprep.mubr.bf16.mxu0 %v961
        %1748 = vmatmul.mubr.bf16.gmra.mxu0 %v960
        %v1749 = vpop.f32.mrf.mxu0
        %v1750 = vadd.f32 %v1461, %v1749
        %v1751 = vpop.f32.mrf.mxu0
        %v1752 = vpop.f32.mrf.mxu0
        %v1753 = vadd.f32 %v1464, %v1752
        %v1754 = vpop.f32.mrf.mxu0
        %1755 = vmatprep.mubr.bf16.mxu0 %v965
        %1756 = vmatmul.mubr.bf16.gmra.mxu0 %v964
        %v1757 = vpop.f32.mrf.mxu0
        %v1758 = vadd.f32 %v1469, %v1757
        %v1759 = vpop.f32.mrf.mxu0
        %v1760 = vpop.f32.mrf.mxu0
        %v1761 = vadd.f32 %v1472, %v1760
        %v1762 = vpop.f32.mrf.mxu0
        %1763 = vmatprep.mubr.bf16.mxu0 %v969
        %1764 = vmatmul.mubr.bf16.gmra.mxu0 %v968
        %v1765 = vpop.f32.mrf.mxu0
        %v1766 = vadd.f32 %v1477, %v1765
        %v1767 = vpop.f32.mrf.mxu0
        %v1768 = vpop.f32.mrf.mxu0
        %v1769 = vadd.f32 %v1480, %v1768
        %v1770 = vpop.f32.mrf.mxu0
        %1771 = vmatprep.mubr.bf16.mxu0 %v973
        %1772 = vmatmul.mubr.bf16.gmra.mxu0 %v972
        %v1773 = vpop.f32.mrf.mxu0
        %v1774 = vadd.f32 %v1485, %v1773
        %v1775 = vpop.f32.mrf.mxu0
        %v1776 = vpop.f32.mrf.mxu0
        %v1777 = vadd.f32 %v1488, %v1776
        %v1778 = vpop.f32.mrf.mxu0
        %1779 = vmatprep.mubr.bf16.mxu0 %v977
        %1780 = vmatmul.mubr.bf16.gmra.mxu0 %v976
        %v1781 = vpop.f32.mrf.mxu0
        %v1782 = vadd.f32 %v1493, %v1781
        %v1783 = vpop.f32.mrf.mxu0
        %v1784 = vpop.f32.mrf.mxu0
        %v1785 = vadd.f32 %v1496, %v1784
        %v1786 = vpop.f32.mrf.mxu0
        %1787 = vmatprep.mubr.bf16.mxu0 %v981
        %1788 = vmatmul.mubr.bf16.gmra.mxu0 %v980
        %v1789 = vpop.f32.mrf.mxu0
        %v1790 = vadd.f32 %v1501, %v1789
        %v1791 = vpop.f32.mrf.mxu0
        %v1792 = vpop.f32.mrf.mxu0
        %v1793 = vadd.f32 %v1504, %v1792
        %v1794 = vpop.f32.mrf.mxu0
        %1795 = vmatprep.mubr.bf16.mxu0 %v985
        %1796 = vmatmul.mubr.bf16.gmra.mxu0 %v984
        %v1797 = vpop.f32.mrf.mxu0
        %v1798 = vadd.f32 %v1509, %v1797
        %v1799 = vpop.f32.mrf.mxu0
        %v1800 = vpop.f32.mrf.mxu0
        %v1801 = vadd.f32 %v1512, %v1800
        %v1802 = vpop.f32.mrf.mxu0
        %1803 = vmatprep.mubr.bf16.mxu0 %v989
        %1804 = vmatmul.mubr.bf16.gmra.mxu0 %v988
        %v1805 = vpop.f32.mrf.mxu0
        %v1806 = vadd.f32 %v1517, %v1805
        %v1807 = vpop.f32.mrf.mxu0
        %v1808 = vpop.f32.mrf.mxu0
        %v1809 = vadd.f32 %v1520, %v1808
        %v1810 = vpop.f32.mrf.mxu0
        %1811 = vmatprep.mubr.bf16.mxu0 %v993
        %1812 = vmatmul.mubr.bf16.gmra.mxu0 %v992
        %v1813 = vpop.f32.mrf.mxu0
        %v1814 = vadd.f32 %v1525, %v1813
        %v1815 = vpop.f32.mrf.mxu0
        %v1816 = vpop.f32.mrf.mxu0
        %v1817 = vadd.f32 %v1528, %v1816
        %v1818 = vpop.f32.mrf.mxu0
        %1819 = vmatprep.mubr.bf16.mxu0 %v997
        %1820 = vmatmul.mubr.bf16.gmra.mxu0 %v996
        %v1821 = vpop.f32.mrf.mxu0
        %v1822 = vadd.f32 %v1533, %v1821
        %v1823 = vpop.f32.mrf.mxu0
        %v1824 = vpop.f32.mrf.mxu0
        %v1825 = vadd.f32 %v1536, %v1824
        %v1826 = vpop.f32.mrf.mxu0
        %1827 = vmatprep.mubr.bf16.mxu0 %v1001
        %1828 = vmatmul.mubr.bf16.gmra.mxu0 %v1000
        %v1829 = vpop.f32.mrf.mxu0
        %v1830 = vadd.f32 %v1541, %v1829
        %v1831 = vpop.f32.mrf.mxu0
        %v1832 = vpop.f32.mrf.mxu0
        %v1833 = vadd.f32 %v1544, %v1832
        %v1834 = vpop.f32.mrf.mxu0
        %1835 = vmatprep.mubr.bf16.mxu0 %v1005
        %1836 = vmatmul.mubr.bf16.gmra.mxu0 %v1004
        %v1837 = vpop.f32.mrf.mxu0
        %v1838 = vadd.f32 %v1549, %v1837
        %v1839 = vpop.f32.mrf.mxu0
        %v1840 = vpop.f32.mrf.mxu0
        %v1841 = vadd.f32 %v1552, %v1840
        %v1842 = vpop.f32.mrf.mxu0
        %1843 = vmatprep.mubr.bf16.mxu0 %v1009
        %1844 = vmatmul.mubr.bf16.gmra.mxu0 %v1008
        %v1845 = vpop.f32.mrf.mxu0
        %v1846 = vadd.f32 %v1557, %v1845
        %v1847 = vpop.f32.mrf.mxu0
        %v1848 = vpop.f32.mrf.mxu0
        %v1849 = vadd.f32 %v1560, %v1848
        %v1850 = vpop.f32.mrf.mxu0
        %1851 = vmatprep.mubr.bf16.mxu0 %v1013
        %1852 = vmatmul.mubr.bf16.gmra.mxu0 %v1012
        %v1853 = vpop.f32.mrf.mxu0
        %v1854 = vadd.f32 %v1565, %v1853
        %v1855 = vpop.f32.mrf.mxu0
        %v1856 = vpop.f32.mrf.mxu0
        %v1857 = vadd.f32 %v1568, %v1856
        %v1858 = vpop.f32.mrf.mxu0
        %1859 = vmatprep.mubr.bf16.mxu0 %v1017
        %1860 = vmatmul.mubr.bf16.gmra.mxu0 %v1016
        %v1861 = vpop.f32.mrf.mxu0
        %v1862 = vadd.f32 %v1573, %v1861
        %v1863 = vpop.f32.mrf.mxu0
        %v1864 = vpop.f32.mrf.mxu0
        %v1865 = vadd.f32 %v1576, %v1864
        %v1866 = vpop.f32.mrf.mxu0
        %1867 = vmatprep.mubr.bf16.mxu0 %v1021
        %1868 = vmatmul.mubr.bf16.gmra.mxu0 %v1020
        %v1869 = vpop.f32.mrf.mxu0
        %v1870 = vadd.f32 %v1581, %v1869
        %v1871 = vpop.f32.mrf.mxu0
        %v1872 = vpop.f32.mrf.mxu0
        %v1873 = vadd.f32 %v1584, %v1872
        %v1874 = vpop.f32.mrf.mxu0
        %1875 = vmatprep.mubr.bf16.mxu0 %v1025
        %1876 = vmatmul.mubr.bf16.gmra.mxu0 %v1024
        %v1877 = vpop.f32.mrf.mxu0
        %v1878 = vadd.f32 %v1589, %v1877
        %v1879 = vpop.f32.mrf.mxu0
        %v1880 = vpop.f32.mrf.mxu0
        %v1881 = vadd.f32 %v1592, %v1880
        %v1882 = vpop.f32.mrf.mxu0
        %1883 = vmatprep.mubr.bf16.mxu0 %v1029
        %1884 = vmatmul.mubr.bf16.gmra.mxu0 %v1028
        %v1885 = vpop.f32.mrf.mxu0
        %v1886 = vadd.f32 %v1597, %v1885
        %v1887 = vpop.f32.mrf.mxu0
        %v1888 = vpop.f32.mrf.mxu0
        %v1889 = vadd.f32 %v1600, %v1888
        %v1890 = vpop.f32.mrf.mxu0
        %1891 = vmatprep.mubr.bf16.mxu0 %v1033
        %1892 = vmatmul.mubr.bf16.gmra.mxu0 %v1032
        %v1893 = vpop.f32.mrf.mxu0
        %v1894 = vadd.f32 %v1605, %v1893
        %v1895 = vpop.f32.mrf.mxu0
        %v1896 = vpop.f32.mrf.mxu0
        %v1897 = vadd.f32 %v1608, %v1896
        %v1898 = vpop.f32.mrf.mxu0
        %1899 = vmatprep.mubr.bf16.mxu0 %v1037
        %1900 = vmatmul.mubr.bf16.gmra.mxu0 %v1036
        %v1901 = vpop.f32.mrf.mxu0
        %v1902 = vadd.f32 %v1613, %v1901
        %v1903 = vpop.f32.mrf.mxu0
        %v1904 = vpop.f32.mrf.mxu0
        %v1905 = vadd.f32 %v1616, %v1904
        %v1906 = vpop.f32.mrf.mxu0
        %1907 = vmatprep.mubr.bf16.mxu0 %v1041
        %1908 = vmatmul.mubr.bf16.gmra.mxu0 %v1040
        %v1909 = vpop.f32.mrf.mxu0
        %v1910 = vadd.f32 %v1621, %v1909
        %v1911 = vpop.f32.mrf.mxu0
        %v1912 = vpop.f32.mrf.mxu0
        %v1913 = vadd.f32 %v1624, %v1912
        %v1914 = vpop.f32.mrf.mxu0
        %1915 = vmatprep.mubr.bf16.mxu0 %v1045
        %1916 = vmatmul.mubr.bf16.gmra.mxu0 %v1044
        %v1917 = vpop.f32.mrf.mxu0
        %v1918 = vadd.f32 %v1629, %v1917
        %v1919 = vpop.f32.mrf.mxu0
        %v1920 = vpop.f32.mrf.mxu0
        %v1921 = vadd.f32 %v1632, %v1920
        %v1922 = vpop.f32.mrf.mxu0
        %1923 = vmatprep.mubr.bf16.mxu0 %v1049
        %1924 = vmatmul.mubr.bf16.gmra.mxu0 %v1048
        %v1925 = vpop.f32.mrf.mxu0
        %v1926 = vadd.f32 %v1637, %v1925
        %v1927 = vpop.f32.mrf.mxu0
        %v1928 = vpop.f32.mrf.mxu0
        %v1929 = vadd.f32 %v1640, %v1928
        %v1930 = vpop.f32.mrf.mxu0
        %1931 = vmatprep.mubr.bf16.mxu0 %v1053
        %1932 = vmatmul.mubr.bf16.gmra.mxu0 %v1052
        %v1933 = vpop.f32.mrf.mxu0
        %v1934 = vadd.f32 %v1645, %v1933
        %v1935 = vpop.f32.mrf.mxu0
        %v1936 = vpop.f32.mrf.mxu0
        %v1937 = vadd.f32 %v1648, %v1936
        %v1938 = vpop.f32.mrf.mxu0
        %1939 = vmatprep.mubr.bf16.mxu0 %v1057
        %1940 = vmatmul.mubr.bf16.gmra.mxu0 %v1056
        %v1941 = vpop.f32.mrf.mxu0
        %v1942 = vadd.f32 %v1653, %v1941
        %v1943 = vpop.f32.mrf.mxu0
        %v1944 = vpop.f32.mrf.mxu0
        %v1945 = vadd.f32 %v1656, %v1944
        %v1946 = vpop.f32.mrf.mxu0
        %1947 = vmatprep.mubr.bf16.mxu0 %v1061
        %1948 = vmatmul.mubr.bf16.gmra.mxu0 %v1060
        %v1949 = vpop.f32.mrf.mxu0
        %v1950 = vadd.f32 %v1661, %v1949
        %v1951 = vpop.f32.mrf.mxu0
        %v1952 = vpop.f32.mrf.mxu0
        %v1953 = vadd.f32 %v1664, %v1952
        %v1954 = vpop.f32.mrf.mxu0
        %1955 = vmatprep.mubr.bf16.mxu0 %v1065
        %1956 = vmatmul.mubr.bf16.gmra.mxu0 %v1064
        %v1957 = vpop.f32.mrf.mxu0
        %v1958 = vadd.f32 %v1669, %v1957
        %v1959 = vpop.f32.mrf.mxu0
        %v1960 = vpop.f32.mrf.mxu0
        %v1961 = vadd.f32 %v1672, %v1960
        %v1962 = vpop.f32.mrf.mxu0
        %1963 = vdwg.mxu0
        %v1964 = vadd.f32 %v362, %v1710
        %v1965 = vadd.f32 %v363, %v1713
        %v1966 = vadd.f32 %v364, %v1718
        %v1967 = vadd.f32 %v365, %v1721
        %v1968 = vadd.f32 %v366, %v1726
        %v1969 = vadd.f32 %v367, %v1729
        %v1970 = vadd.f32 %v368, %v1734
        %v1971 = vadd.f32 %v369, %v1737
        %v1972 = vadd.f32 %v370, %v1742
        %v1973 = vadd.f32 %v371, %v1745
        %v1974 = vadd.f32 %v372, %v1750
        %v1975 = vadd.f32 %v373, %v1753
        %v1976 = vadd.f32 %v374, %v1758
        %v1977 = vadd.f32 %v375, %v1761
        %v1978 = vadd.f32 %v376, %v1766
        %v1979 = vadd.f32 %v377, %v1769
        %v1980 = vadd.f32 %v378, %v1774
        %v1981 = vadd.f32 %v379, %v1777
        %v1982 = vadd.f32 %v380, %v1782
        %v1983 = vadd.f32 %v381, %v1785
        %v1984 = vadd.f32 %v382, %v1790
        %v1985 = vadd.f32 %v383, %v1793
        %v1986 = vadd.f32 %v384, %v1798
        %v1987 = vadd.f32 %v385, %v1801
        %v1988 = vadd.f32 %v386, %v1806
        %v1989 = vadd.f32 %v387, %v1809
        %v1990 = vadd.f32 %v388, %v1814
        %v1991 = vadd.f32 %v389, %v1817
        %v1992 = vadd.f32 %v390, %v1822
        %v1993 = vadd.f32 %v391, %v1825
        %v1994 = vadd.f32 %v392, %v1830
        %v1995 = vadd.f32 %v393, %v1833
        %v1996 = vadd.f32 %v394, %v1838
        %v1997 = vadd.f32 %v395, %v1841
        %v1998 = vadd.f32 %v396, %v1846
        %v1999 = vadd.f32 %v397, %v1849
        %v2000 = vadd.f32 %v398, %v1854
        %v2001 = vadd.f32 %v399, %v1857
        %v2002 = vadd.f32 %v400, %v1862
        %v2003 = vadd.f32 %v401, %v1865
        %v2004 = vadd.f32 %v402, %v1870
        %v2005 = vadd.f32 %v403, %v1873
        %v2006 = vadd.f32 %v404, %v1878
        %v2007 = vadd.f32 %v405, %v1881
        %v2008 = vadd.f32 %v406, %v1886
        %v2009 = vadd.f32 %v407, %v1889
        %v2010 = vadd.f32 %v408, %v1894
        %v2011 = vadd.f32 %v409, %v1897
        %v2012 = vadd.f32 %v410, %v1902
        %v2013 = vadd.f32 %v411, %v1905
        %v2014 = vadd.f32 %v412, %v1910
        %v2015 = vadd.f32 %v413, %v1913
        %v2016 = vadd.f32 %v414, %v1918
        %v2017 = vadd.f32 %v415, %v1921
        %v2018 = vadd.f32 %v416, %v1926
        %v2019 = vadd.f32 %v417, %v1929
        %v2020 = vadd.f32 %v418, %v1934
        %v2021 = vadd.f32 %v419, %v1937
        %v2022 = vadd.f32 %v420, %v1942
        %v2023 = vadd.f32 %v421, %v1945
        %v2024 = vadd.f32 %v422, %v1950
        %v2025 = vadd.f32 %v423, %v1953
        %v2026 = vadd.f32 %v424, %v1958
        %v2027 = vadd.f32 %v425, %v1961
        %2028 = vst [vmem:[#allocation2] sm:$0xff] %v1964
        %2029 = vst [vmem:[#allocation2 + $0x8] sm:$0xff] %v1965
        %2030 = vst [vmem:[#allocation2 + $0x10] sm:$0xff] %v1966
        %2031 = vst [vmem:[#allocation2 + $0x18] sm:$0xff] %v1967
        %2032 = vst [vmem:[#allocation2 + $0x20] sm:$0xff] %v1968
        %2033 = vst [vmem:[#allocation2 + $0x28] sm:$0xff] %v1969
        %2034 = vst [vmem:[#allocation2 + $0x30] sm:$0xff] %v1970
        %2035 = vst [vmem:[#allocation2 + $0x38] sm:$0xff] %v1971
        %2036 = vst [vmem:[#allocation2 + $0x40] sm:$0xff] %v1972
        %2037 = vst [vmem:[#allocation2 + $0x48] sm:$0xff] %v1973
        %2038 = vst [vmem:[#allocation2 + $0x50] sm:$0xff] %v1974
        %2039 = vst [vmem:[#allocation2 + $0x58] sm:$0xff] %v1975
        %2040 = vst [vmem:[#allocation2 + $0x60] sm:$0xff] %v1976
        %2041 = vst [vmem:[#allocation2 + $0x68] sm:$0xff] %v1977
        %2042 = vst [vmem:[#allocation2 + $0x70] sm:$0xff] %v1978
        %2043 = vst [vmem:[#allocation2 + $0x78] sm:$0xff] %v1979
        %2044 = vst [vmem:[#allocation2 + $0x80] sm:$0xff] %v1980
        %2045 = vst [vmem:[#allocation2 + $0x88] sm:$0xff] %v1981
        %2046 = vst [vmem:[#allocation2 + $0x90] sm:$0xff] %v1982
        %2047 = vst [vmem:[#allocation2 + $0x98] sm:$0xff] %v1983
        %2048 = vst [vmem:[#allocation2 + $0xa0] sm:$0xff] %v1984
        %2049 = vst [vmem:[#allocation2 + $0xa8] sm:$0xff] %v1985
        %2050 = vst [vmem:[#allocation2 + $0xb0] sm:$0xff] %v1986
        %2051 = vst [vmem:[#allocation2 + $0xb8] sm:$0xff] %v1987
        %2052 = vst [vmem:[#allocation2 + $0xc0] sm:$0xff] %v1988
        %2053 = vst [vmem:[#allocation2 + $0xc8] sm:$0xff] %v1989
        %2054 = vst [vmem:[#allocation2 + $0xd0] sm:$0xff] %v1990
        %2055 = vst [vmem:[#allocation2 + $0xd8] sm:$0xff] %v1991
        %2056 = vst [vmem:[#allocation2 + $0xe0] sm:$0xff] %v1992
        %2057 = vst [vmem:[#allocation2 + $0xe8] sm:$0xff] %v1993
        %2058 = vst [vmem:[#allocation2 + $0xf0] sm:$0xff] %v1994
        %2059 = vst [vmem:[#allocation2 + $0xf8] sm:$0xff] %v1995
        %2060 = vst [vmem:[#allocation2 + $0x100] sm:$0xff] %v1996
        %2061 = vst [vmem:[#allocation2 + $0x108] sm:$0xff] %v1997
        %2062 = vst [vmem:[#allocation2 + $0x110] sm:$0xff] %v1998
        %2063 = vst [vmem:[#allocation2 + $0x118] sm:$0xff] %v1999
        %2064 = vst [vmem:[#allocation2 + $0x120] sm:$0xff] %v2000
        %2065 = vst [vmem:[#allocation2 + $0x128] sm:$0xff] %v2001
        %2066 = vst [vmem:[#allocation2 + $0x130] sm:$0xff] %v2002
        %2067 = vst [vmem:[#allocation2 + $0x138] sm:$0xff] %v2003
        %2068 = vst [vmem:[#allocation2 + $0x140] sm:$0xff] %v2004
        %2069 = vst [vmem:[#allocation2 + $0x148] sm:$0xff] %v2005
        %2070 = vst [vmem:[#allocation2 + $0x150] sm:$0xff] %v2006
        %2071 = vst [vmem:[#allocation2 + $0x158] sm:$0xff] %v2007
        %2072 = vst [vmem:[#allocation2 + $0x160] sm:$0xff] %v2008
        %2073 = vst [vmem:[#allocation2 + $0x168] sm:$0xff] %v2009
        %2074 = vst [vmem:[#allocation2 + $0x170] sm:$0xff] %v2010
        %2075 = vst [vmem:[#allocation2 + $0x178] sm:$0xff] %v2011
        %2076 = vst [vmem:[#allocation2 + $0x180] sm:$0xff] %v2012
        %2077 = vst [vmem:[#allocation2 + $0x188] sm:$0xff] %v2013
        %2078 = vst [vmem:[#allocation2 + $0x190] sm:$0xff] %v2014
        %2079 = vst [vmem:[#allocation2 + $0x198] sm:$0xff] %v2015
        %2080 = vst [vmem:[#allocation2 + $0x1a0] sm:$0xff] %v2016
        %2081 = vst [vmem:[#allocation2 + $0x1a8] sm:$0xff] %v2017
        %2082 = vst [vmem:[#allocation2 + $0x1b0] sm:$0xff] %v2018
        %2083 = vst [vmem:[#allocation2 + $0x1b8] sm:$0xff] %v2019
        %2084 = vst [vmem:[#allocation2 + $0x1c0] sm:$0xff] %v2020
        %2085 = vst [vmem:[#allocation2 + $0x1c8] sm:$0xff] %v2021
        %2086 = vst [vmem:[#allocation2 + $0x1d0] sm:$0xff] %v2022
        %2087 = vst [vmem:[#allocation2 + $0x1d8] sm:$0xff] %v2023
        %2088 = vst [vmem:[#allocation2 + $0x1e0] sm:$0xff] %v2024
        %2089 = vst [vmem:[#allocation2 + $0x1e8] sm:$0xff] %v2025
        %2090 = vst [vmem:[#allocation2 + $0x1f0] sm:$0xff] %v2026
        %2091 = vst [vmem:[#allocation2 + $0x1f8] sm:$0xff] %v2027
        %p2092 = scmp.eq.s32.totalorder %s23, 1
        // Predicated region
        $region45: #{gnn_forward.7} parent=31 // pred_check
          %p2093 = pneg %p2092
        $region46: #{gnn_forward.7} parent=31 // pred_check_branch
          %2095 = sbr.rel (%p2093) target = $region48
        $region47: #{gnn_forward.7} parent=31 // pred_region
          %v2096 = vld [vmem:[#allocation2] sm:$0xff]
          %v2097 = vld [vmem:[#allocation2 + $0x8] sm:$0xff]
          %v2098 = vld [vmem:[#allocation2 + $0x10] sm:$0xff]
          %v2099 = vld [vmem:[#allocation2 + $0x18] sm:$0xff]
          %v2100 = vld [vmem:[#allocation2 + $0x20] sm:$0xff]
          %v2101 = vld [vmem:[#allocation2 + $0x28] sm:$0xff]
          %v2102 = vld [vmem:[#allocation2 + $0x30] sm:$0xff]
          %v2103 = vld [vmem:[#allocation2 + $0x38] sm:$0xff]
          %v2104 = vld [vmem:[#allocation2 + $0x40] sm:$0xff]
          %v2105 = vld [vmem:[#allocation2 + $0x48] sm:$0xff]
          %v2106 = vld [vmem:[#allocation2 + $0x50] sm:$0xff]
          %v2107 = vld [vmem:[#allocation2 + $0x58] sm:$0xff]
          %v2108 = vld [vmem:[#allocation2 + $0x60] sm:$0xff]
          %v2109 = vld [vmem:[#allocation2 + $0x68] sm:$0xff]
          %v2110 = vld [vmem:[#allocation2 + $0x70] sm:$0xff]
          %v2111 = vld [vmem:[#allocation2 + $0x78] sm:$0xff]
          %v2112 = vld [vmem:[#allocation2 + $0x80] sm:$0xff]
          %v2113 = vld [vmem:[#allocation2 + $0x88] sm:$0xff]
          %v2114 = vld [vmem:[#allocation2 + $0x90] sm:$0xff]
          %v2115 = vld [vmem:[#allocation2 + $0x98] sm:$0xff]
          %v2116 = vld [vmem:[#allocation2 + $0xa0] sm:$0xff]
          %v2117 = vld [vmem:[#allocation2 + $0xa8] sm:$0xff]
          %v2118 = vld [vmem:[#allocation2 + $0xb0] sm:$0xff]
          %v2119 = vld [vmem:[#allocation2 + $0xb8] sm:$0xff]
          %v2120 = vld [vmem:[#allocation2 + $0xc0] sm:$0xff]
          %v2121 = vld [vmem:[#allocation2 + $0xc8] sm:$0xff]
          %v2122 = vld [vmem:[#allocation2 + $0xd0] sm:$0xff]
          %v2123 = vld [vmem:[#allocation2 + $0xd8] sm:$0xff]
          %v2124 = vld [vmem:[#allocation2 + $0xe0] sm:$0xff]
          %v2125 = vld [vmem:[#allocation2 + $0xe8] sm:$0xff]
          %v2126 = vld [vmem:[#allocation2 + $0xf0] sm:$0xff]
          %v2127 = vld [vmem:[#allocation2 + $0xf8] sm:$0xff]
          %v2128 = vld [vmem:[#allocation2 + $0x100] sm:$0xff]
          %v2129 = vld [vmem:[#allocation2 + $0x108] sm:$0xff]
          %v2130 = vld [vmem:[#allocation2 + $0x110] sm:$0xff]
          %v2131 = vld [vmem:[#allocation2 + $0x118] sm:$0xff]
          %v2132 = vld [vmem:[#allocation2 + $0x120] sm:$0xff]
          %v2133 = vld [vmem:[#allocation2 + $0x128] sm:$0xff]
          %v2134 = vld [vmem:[#allocation2 + $0x130] sm:$0xff]
          %v2135 = vld [vmem:[#allocation2 + $0x138] sm:$0xff]
          %v2136 = vld [vmem:[#allocation2 + $0x140] sm:$0xff]
          %v2137 = vld [vmem:[#allocation2 + $0x148] sm:$0xff]
          %v2138 = vld [vmem:[#allocation2 + $0x150] sm:$0xff]
          %v2139 = vld [vmem:[#allocation2 + $0x158] sm:$0xff]
          %v2140 = vld [vmem:[#allocation2 + $0x160] sm:$0xff]
          %v2141 = vld [vmem:[#allocation2 + $0x168] sm:$0xff]
          %v2142 = vld [vmem:[#allocation2 + $0x170] sm:$0xff]
          %v2143 = vld [vmem:[#allocation2 + $0x178] sm:$0xff]
          %v2144 = vld [vmem:[#allocation2 + $0x180] sm:$0xff]
          %v2145 = vld [vmem:[#allocation2 + $0x188] sm:$0xff]
          %v2146 = vld [vmem:[#allocation2 + $0x190] sm:$0xff]
          %v2147 = vld [vmem:[#allocation2 + $0x198] sm:$0xff]
          %v2148 = vld [vmem:[#allocation2 + $0x1a0] sm:$0xff]
          %v2149 = vld [vmem:[#allocation2 + $0x1a8] sm:$0xff]
          %v2150 = vld [vmem:[#allocation2 + $0x1b0] sm:$0xff]
          %v2151 = vld [vmem:[#allocation2 + $0x1b8] sm:$0xff]
          %v2152 = vld [vmem:[#allocation2 + $0x1c0] sm:$0xff]
          %v2153 = vld [vmem:[#allocation2 + $0x1c8] sm:$0xff]
          %v2154 = vld [vmem:[#allocation2 + $0x1d0] sm:$0xff]
          %v2155 = vld [vmem:[#allocation2 + $0x1d8] sm:$0xff]
          %v2156 = vld [vmem:[#allocation2 + $0x1e0] sm:$0xff]
          %v2157 = vld [vmem:[#allocation2 + $0x1e8] sm:$0xff]
          %v2158 = vld [vmem:[#allocation2 + $0x1f0] sm:$0xff]
          %v2159 = vld [vmem:[#allocation2 + $0x1f8] sm:$0xff]
          %v2160 = vld [vmem:[#allocation5] sm:$0x1]
          %v2162 = vlaneseq
          %v2163 = vshrl.u32 %v2162, 7
          %v2164 = vsub.s32 0, %v2163
          %v2165 = vrot.slane %v2160, %v2164
          %v2167 = vadd.f32 %v2096, %v2165
          %v2168 = vadd.f32 %v2097, %v2165
          %v2169 = vadd.f32 %v2098, %v2165
          %v2170 = vadd.f32 %v2099, %v2165
          %v2171 = vadd.f32 %v2100, %v2165
          %v2172 = vadd.f32 %v2101, %v2165
          %v2173 = vadd.f32 %v2102, %v2165
          %v2174 = vadd.f32 %v2103, %v2165
          %v2175 = vadd.f32 %v2104, %v2165
          %v2176 = vadd.f32 %v2105, %v2165
          %v2177 = vadd.f32 %v2106, %v2165
          %v2178 = vadd.f32 %v2107, %v2165
          %v2179 = vadd.f32 %v2108, %v2165
          %v2180 = vadd.f32 %v2109, %v2165
          %v2181 = vadd.f32 %v2110, %v2165
          %v2182 = vadd.f32 %v2111, %v2165
          %v2183 = vadd.f32 %v2112, %v2165
          %v2184 = vadd.f32 %v2113, %v2165
          %v2185 = vadd.f32 %v2114, %v2165
          %v2186 = vadd.f32 %v2115, %v2165
          %v2187 = vadd.f32 %v2116, %v2165
          %v2188 = vadd.f32 %v2117, %v2165
          %v2189 = vadd.f32 %v2118, %v2165
          %v2190 = vadd.f32 %v2119, %v2165
          %v2191 = vadd.f32 %v2120, %v2165
          %v2192 = vadd.f32 %v2121, %v2165
          %v2193 = vadd.f32 %v2122, %v2165
          %v2194 = vadd.f32 %v2123, %v2165
          %v2195 = vadd.f32 %v2124, %v2165
          %v2196 = vadd.f32 %v2125, %v2165
          %v2197 = vadd.f32 %v2126, %v2165
          %v2198 = vadd.f32 %v2127, %v2165
          %v2199 = vadd.f32 %v2128, %v2165
          %v2200 = vadd.f32 %v2129, %v2165
          %v2201 = vadd.f32 %v2130, %v2165
          %v2202 = vadd.f32 %v2131, %v2165
          %v2203 = vadd.f32 %v2132, %v2165
          %v2204 = vadd.f32 %v2133, %v2165
          %v2205 = vadd.f32 %v2134, %v2165
          %v2206 = vadd.f32 %v2135, %v2165
          %v2207 = vadd.f32 %v2136, %v2165
          %v2208 = vadd.f32 %v2137, %v2165
          %v2209 = vadd.f32 %v2138, %v2165
          %v2210 = vadd.f32 %v2139, %v2165
          %v2211 = vadd.f32 %v2140, %v2165
          %v2212 = vadd.f32 %v2141, %v2165
          %v2213 = vadd.f32 %v2142, %v2165
          %v2214 = vadd.f32 %v2143, %v2165
          %v2215 = vadd.f32 %v2144, %v2165
          %v2216 = vadd.f32 %v2145, %v2165
          %v2217 = vadd.f32 %v2146, %v2165
          %v2218 = vadd.f32 %v2147, %v2165
          %v2219 = vadd.f32 %v2148, %v2165
          %v2220 = vadd.f32 %v2149, %v2165
          %v2221 = vadd.f32 %v2150, %v2165
          %v2222 = vadd.f32 %v2151, %v2165
          %v2223 = vadd.f32 %v2152, %v2165
          %v2224 = vadd.f32 %v2153, %v2165
          %v2225 = vadd.f32 %v2154, %v2165
          %v2226 = vadd.f32 %v2155, %v2165
          %v2227 = vadd.f32 %v2156, %v2165
          %v2228 = vadd.f32 %v2157, %v2165
          %v2229 = vadd.f32 %v2158, %v2165
          %v2230 = vadd.f32 %v2159, %v2165
          %v2231 = vmax.f32 %v2167, 0.0
          %v2232 = vmax.f32 %v2168, 0.0
          %v2233 = vmax.f32 %v2169, 0.0
          %v2234 = vmax.f32 %v2170, 0.0
          %v2235 = vmax.f32 %v2171, 0.0
          %v2236 = vmax.f32 %v2172, 0.0
          %v2237 = vmax.f32 %v2173, 0.0
          %v2238 = vmax.f32 %v2174, 0.0
          %v2239 = vmax.f32 %v2175, 0.0
          %v2240 = vmax.f32 %v2176, 0.0
          %v2241 = vmax.f32 %v2177, 0.0
          %v2242 = vmax.f32 %v2178, 0.0
          %v2243 = vmax.f32 %v2179, 0.0
          %v2244 = vmax.f32 %v2180, 0.0
          %v2245 = vmax.f32 %v2181, 0.0
          %v2246 = vmax.f32 %v2182, 0.0
          %v2247 = vmax.f32 %v2183, 0.0
          %v2248 = vmax.f32 %v2184, 0.0
          %v2249 = vmax.f32 %v2185, 0.0
          %v2250 = vmax.f32 %v2186, 0.0
          %v2251 = vmax.f32 %v2187, 0.0
          %v2252 = vmax.f32 %v2188, 0.0
          %v2253 = vmax.f32 %v2189, 0.0
          %v2254 = vmax.f32 %v2190, 0.0
          %v2255 = vmax.f32 %v2191, 0.0
          %v2256 = vmax.f32 %v2192, 0.0
          %v2257 = vmax.f32 %v2193, 0.0
          %v2258 = vmax.f32 %v2194, 0.0
          %v2259 = vmax.f32 %v2195, 0.0
          %v2260 = vmax.f32 %v2196, 0.0
          %v2261 = vmax.f32 %v2197, 0.0
          %v2262 = vmax.f32 %v2198, 0.0
          %v2263 = vmax.f32 %v2199, 0.0
          %v2264 = vmax.f32 %v2200, 0.0
          %v2265 = vmax.f32 %v2201, 0.0
          %v2266 = vmax.f32 %v2202, 0.0
          %v2267 = vmax.f32 %v2203, 0.0
          %v2268 = vmax.f32 %v2204, 0.0
          %v2269 = vmax.f32 %v2205, 0.0
          %v2270 = vmax.f32 %v2206, 0.0
          %v2271 = vmax.f32 %v2207, 0.0
          %v2272 = vmax.f32 %v2208, 0.0
          %v2273 = vmax.f32 %v2209, 0.0
          %v2274 = vmax.f32 %v2210, 0.0
          %v2275 = vmax.f32 %v2211, 0.0
          %v2276 = vmax.f32 %v2212, 0.0
          %v2277 = vmax.f32 %v2213, 0.0
          %v2278 = vmax.f32 %v2214, 0.0
          %v2279 = vmax.f32 %v2215, 0.0
          %v2280 = vmax.f32 %v2216, 0.0
          %v2281 = vmax.f32 %v2217, 0.0
          %v2282 = vmax.f32 %v2218, 0.0
          %v2283 = vmax.f32 %v2219, 0.0
          %v2284 = vmax.f32 %v2220, 0.0
          %v2285 = vmax.f32 %v2221, 0.0
          %v2286 = vmax.f32 %v2222, 0.0
          %v2287 = vmax.f32 %v2223, 0.0
          %v2288 = vmax.f32 %v2224, 0.0
          %v2289 = vmax.f32 %v2225, 0.0
          %v2290 = vmax.f32 %v2226, 0.0
          %v2291 = vmax.f32 %v2227, 0.0
          %v2292 = vmax.f32 %v2228, 0.0
          %v2293 = vmax.f32 %v2229, 0.0
          %v2294 = vmax.f32 %v2230, 0.0
          %v2295 = vpack.c.bf16 %v2232, %v2231
          %v2296 = vpack.c.bf16 %v2234, %v2233
          %v2297 = vpack.c.bf16 %v2236, %v2235
          %v2298 = vpack.c.bf16 %v2238, %v2237
          %v2299 = vpack.c.bf16 %v2240, %v2239
          %v2300 = vpack.c.bf16 %v2242, %v2241
          %v2301 = vpack.c.bf16 %v2244, %v2243
          %v2302 = vpack.c.bf16 %v2246, %v2245
          %v2303 = vpack.c.bf16 %v2248, %v2247
          %v2304 = vpack.c.bf16 %v2250, %v2249
          %v2305 = vpack.c.bf16 %v2252, %v2251
          %v2306 = vpack.c.bf16 %v2254, %v2253
          %v2307 = vpack.c.bf16 %v2256, %v2255
          %v2308 = vpack.c.bf16 %v2258, %v2257
          %v2309 = vpack.c.bf16 %v2260, %v2259
          %v2310 = vpack.c.bf16 %v2262, %v2261
          %v2311 = vpack.c.bf16 %v2264, %v2263
          %v2312 = vpack.c.bf16 %v2266, %v2265
          %v2313 = vpack.c.bf16 %v2268, %v2267
          %v2314 = vpack.c.bf16 %v2270, %v2269
          %v2315 = vpack.c.bf16 %v2272, %v2271
          %v2316 = vpack.c.bf16 %v2274, %v2273
          %v2317 = vpack.c.bf16 %v2276, %v2275
          %v2318 = vpack.c.bf16 %v2278, %v2277
          %v2319 = vpack.c.bf16 %v2280, %v2279
          %v2320 = vpack.c.bf16 %v2282, %v2281
          %v2321 = vpack.c.bf16 %v2284, %v2283
          %v2322 = vpack.c.bf16 %v2286, %v2285
          %v2323 = vpack.c.bf16 %v2288, %v2287
          %v2324 = vpack.c.bf16 %v2290, %v2289
          %v2325 = vpack.c.bf16 %v2292, %v2291
          %v2326 = vpack.c.bf16 %v2294, %v2293
          %v2359 = vunpack.c.l.b16 %v2295
          %v2360 = vunpack.c.h.b16 %v2295
          %v2361 = vunpack.c.l.b16 %v2296
          %v2362 = vunpack.c.h.b16 %v2296
          %v2363 = vunpack.c.l.b16 %v2297
          %v2364 = vunpack.c.h.b16 %v2297
          %v2365 = vunpack.c.l.b16 %v2298
          %v2366 = vunpack.c.h.b16 %v2298
          %v2367 = vunpack.c.l.b16 %v2299
          %v2368 = vunpack.c.h.b16 %v2299
          %v2369 = vunpack.c.l.b16 %v2300
          %v2370 = vunpack.c.h.b16 %v2300
          %v2371 = vunpack.c.l.b16 %v2301
          %v2372 = vunpack.c.h.b16 %v2301
          %v2373 = vunpack.c.l.b16 %v2302
          %v2374 = vunpack.c.h.b16 %v2302
          %v2375 = vunpack.c.l.b16 %v2303
          %v2376 = vunpack.c.h.b16 %v2303
          %v2377 = vunpack.c.l.b16 %v2304
          %v2378 = vunpack.c.h.b16 %v2304
          %v2379 = vunpack.c.l.b16 %v2305
          %v2380 = vunpack.c.h.b16 %v2305
          %v2381 = vunpack.c.l.b16 %v2306
          %v2382 = vunpack.c.h.b16 %v2306
          %v2383 = vunpack.c.l.b16 %v2307
          %v2384 = vunpack.c.h.b16 %v2307
          %v2385 = vunpack.c.l.b16 %v2308
          %v2386 = vunpack.c.h.b16 %v2308
          %v2387 = vunpack.c.l.b16 %v2309
          %v2388 = vunpack.c.h.b16 %v2309
          %v2389 = vunpack.c.l.b16 %v2310
          %v2390 = vunpack.c.h.b16 %v2310
          %v2391 = vunpack.c.l.b16 %v2311
          %v2392 = vunpack.c.h.b16 %v2311
          %v2393 = vunpack.c.l.b16 %v2312
          %v2394 = vunpack.c.h.b16 %v2312
          %v2395 = vunpack.c.l.b16 %v2313
          %v2396 = vunpack.c.h.b16 %v2313
          %v2397 = vunpack.c.l.b16 %v2314
          %v2398 = vunpack.c.h.b16 %v2314
          %v2399 = vunpack.c.l.b16 %v2315
          %v2400 = vunpack.c.h.b16 %v2315
          %v2401 = vunpack.c.l.b16 %v2316
          %v2402 = vunpack.c.h.b16 %v2316
          %v2403 = vunpack.c.l.b16 %v2317
          %v2404 = vunpack.c.h.b16 %v2317
          %v2405 = vunpack.c.l.b16 %v2318
          %v2406 = vunpack.c.h.b16 %v2318
          %v2407 = vunpack.c.l.b16 %v2319
          %v2408 = vunpack.c.h.b16 %v2319
          %v2409 = vunpack.c.l.b16 %v2320
          %v2410 = vunpack.c.h.b16 %v2320
          %v2411 = vunpack.c.l.b16 %v2321
          %v2412 = vunpack.c.h.b16 %v2321
          %v2413 = vunpack.c.l.b16 %v2322
          %v2414 = vunpack.c.h.b16 %v2322
          %v2415 = vunpack.c.l.b16 %v2323
          %v2416 = vunpack.c.h.b16 %v2323
          %v2417 = vunpack.c.l.b16 %v2324
          %v2418 = vunpack.c.h.b16 %v2324
          %v2419 = vunpack.c.l.b16 %v2325
          %v2420 = vunpack.c.h.b16 %v2325
          %v2421 = vunpack.c.l.b16 %v2326
          %v2422 = vunpack.c.h.b16 %v2326
          %v2423 = vpack.c.b16 %v2359, %v2359
          %v2424 = vpack.c.b16 %v2360, %v2360
          %v2425 = vpack.c.b16 %v2361, %v2361
          %v2426 = vpack.c.b16 %v2362, %v2362
          %v2427 = vpack.c.b16 %v2363, %v2363
          %v2428 = vpack.c.b16 %v2364, %v2364
          %v2429 = vpack.c.b16 %v2365, %v2365
          %v2430 = vpack.c.b16 %v2366, %v2366
          %v2431 = vpack.c.b16 %v2367, %v2367
          %v2432 = vpack.c.b16 %v2368, %v2368
          %v2433 = vpack.c.b16 %v2369, %v2369
          %v2434 = vpack.c.b16 %v2370, %v2370
          %v2435 = vpack.c.b16 %v2371, %v2371
          %v2436 = vpack.c.b16 %v2372, %v2372
          %v2437 = vpack.c.b16 %v2373, %v2373
          %v2438 = vpack.c.b16 %v2374, %v2374
          %v2439 = vpack.c.b16 %v2375, %v2375
          %v2440 = vpack.c.b16 %v2376, %v2376
          %v2441 = vpack.c.b16 %v2377, %v2377
          %v2442 = vpack.c.b16 %v2378, %v2378
          %v2443 = vpack.c.b16 %v2379, %v2379
          %v2444 = vpack.c.b16 %v2380, %v2380
          %v2445 = vpack.c.b16 %v2381, %v2381
          %v2446 = vpack.c.b16 %v2382, %v2382
          %v2447 = vpack.c.b16 %v2383, %v2383
          %v2448 = vpack.c.b16 %v2384, %v2384
          %v2449 = vpack.c.b16 %v2385, %v2385
          %v2450 = vpack.c.b16 %v2386, %v2386
          %v2451 = vpack.c.b16 %v2387, %v2387
          %v2452 = vpack.c.b16 %v2388, %v2388
          %v2453 = vpack.c.b16 %v2389, %v2389
          %v2454 = vpack.c.b16 %v2390, %v2390
          %v2455 = vpack.c.b16 %v2391, %v2391
          %v2456 = vpack.c.b16 %v2392, %v2392
          %v2457 = vpack.c.b16 %v2393, %v2393
          %v2458 = vpack.c.b16 %v2394, %v2394
          %v2459 = vpack.c.b16 %v2395, %v2395
          %v2460 = vpack.c.b16 %v2396, %v2396
          %v2461 = vpack.c.b16 %v2397, %v2397
          %v2462 = vpack.c.b16 %v2398, %v2398
          %v2463 = vpack.c.b16 %v2399, %v2399
          %v2464 = vpack.c.b16 %v2400, %v2400
          %v2465 = vpack.c.b16 %v2401, %v2401
          %v2466 = vpack.c.b16 %v2402, %v2402
          %v2467 = vpack.c.b16 %v2403, %v2403
          %v2468 = vpack.c.b16 %v2404, %v2404
          %v2469 = vpack.c.b16 %v2405, %v2405
          %v2470 = vpack.c.b16 %v2406, %v2406
          %v2471 = vpack.c.b16 %v2407, %v2407
          %v2472 = vpack.c.b16 %v2408, %v2408
          %v2473 = vpack.c.b16 %v2409, %v2409
          %v2474 = vpack.c.b16 %v2410, %v2410
          %v2475 = vpack.c.b16 %v2411, %v2411
          %v2476 = vpack.c.b16 %v2412, %v2412
          %v2477 = vpack.c.b16 %v2413, %v2413
          %v2478 = vpack.c.b16 %v2414, %v2414
          %v2479 = vpack.c.b16 %v2415, %v2415
          %v2480 = vpack.c.b16 %v2416, %v2416
          %v2481 = vpack.c.b16 %v2417, %v2417
          %v2482 = vpack.c.b16 %v2418, %v2418
          %v2483 = vpack.c.b16 %v2419, %v2419
          %v2484 = vpack.c.b16 %v2420, %v2420
          %v2485 = vpack.c.b16 %v2421, %v2421
          %v2486 = vpack.c.b16 %v2422, %v2422
          %2551 = vst [vmem:[%s222] sm:$0xf] %v2423
          %2552 = vst [vmem:[%s222 + $0x4] sm:$0xf] %v2424
          %2553 = vst [vmem:[%s222 + $0x8] sm:$0xf] %v2425
          %2554 = vst [vmem:[%s222 + $0xc] sm:$0xf] %v2426
          %2555 = vst [vmem:[%s222 + $0x10] sm:$0xf] %v2427
          %2556 = vst [vmem:[%s222 + $0x14] sm:$0xf] %v2428
          %2557 = vst [vmem:[%s222 + $0x18] sm:$0xf] %v2429
          %2558 = vst [vmem:[%s222 + $0x1c] sm:$0xf] %v2430
          %2559 = vst [vmem:[%s222 + $0x20] sm:$0xf] %v2431
          %2560 = vst [vmem:[%s222 + $0x24] sm:$0xf] %v2432
          %2561 = vst [vmem:[%s222 + $0x28] sm:$0xf] %v2433
          %2562 = vst [vmem:[%s222 + $0x2c] sm:$0xf] %v2434
          %2563 = vst [vmem:[%s222 + $0x30] sm:$0xf] %v2435
          %2564 = vst [vmem:[%s222 + $0x34] sm:$0xf] %v2436
          %2565 = vst [vmem:[%s222 + $0x38] sm:$0xf] %v2437
          %2566 = vst [vmem:[%s222 + $0x3c] sm:$0xf] %v2438
          %2567 = vst [vmem:[%s222 + $0x40] sm:$0xf] %v2439
          %2568 = vst [vmem:[%s222 + $0x44] sm:$0xf] %v2440
          %2569 = vst [vmem:[%s222 + $0x48] sm:$0xf] %v2441
          %2570 = vst [vmem:[%s222 + $0x4c] sm:$0xf] %v2442
          %2571 = vst [vmem:[%s222 + $0x50] sm:$0xf] %v2443
          %2572 = vst [vmem:[%s222 + $0x54] sm:$0xf] %v2444
          %2573 = vst [vmem:[%s222 + $0x58] sm:$0xf] %v2445
          %2574 = vst [vmem:[%s222 + $0x5c] sm:$0xf] %v2446
          %2575 = vst [vmem:[%s222 + $0x60] sm:$0xf] %v2447
          %2576 = vst [vmem:[%s222 + $0x64] sm:$0xf] %v2448
          %2577 = vst [vmem:[%s222 + $0x68] sm:$0xf] %v2449
          %2578 = vst [vmem:[%s222 + $0x6c] sm:$0xf] %v2450
          %2579 = vst [vmem:[%s222 + $0x70] sm:$0xf] %v2451
          %2580 = vst [vmem:[%s222 + $0x74] sm:$0xf] %v2452
          %2581 = vst [vmem:[%s222 + $0x78] sm:$0xf] %v2453
          %2582 = vst [vmem:[%s222 + $0x7c] sm:$0xf] %v2454
          %2583 = vst [vmem:[%s222 + $0x80] sm:$0xf] %v2455
          %2584 = vst [vmem:[%s222 + $0x84] sm:$0xf] %v2456
          %2585 = vst [vmem:[%s222 + $0x88] sm:$0xf] %v2457
          %2586 = vst [vmem:[%s222 + $0x8c] sm:$0xf] %v2458
          %2587 = vst [vmem:[%s222 + $0x90] sm:$0xf] %v2459
          %2588 = vst [vmem:[%s222 + $0x94] sm:$0xf] %v2460
          %2589 = vst [vmem:[%s222 + $0x98] sm:$0xf] %v2461
          %2590 = vst [vmem:[%s222 + $0x9c] sm:$0xf] %v2462
          %2591 = vst [vmem:[%s222 + $0xa0] sm:$0xf] %v2463
          %2592 = vst [vmem:[%s222 + $0xa4] sm:$0xf] %v2464
          %2593 = vst [vmem:[%s222 + $0xa8] sm:$0xf] %v2465
          %2594 = vst [vmem:[%s222 + $0xac] sm:$0xf] %v2466
          %2595 = vst [vmem:[%s222 + $0xb0] sm:$0xf] %v2467
          %2596 = vst [vmem:[%s222 + $0xb4] sm:$0xf] %v2468
          %2597 = vst [vmem:[%s222 + $0xb8] sm:$0xf] %v2469
          %2598 = vst [vmem:[%s222 + $0xbc] sm:$0xf] %v2470
          %2599 = vst [vmem:[%s222 + $0xc0] sm:$0xf] %v2471
          %2600 = vst [vmem:[%s222 + $0xc4] sm:$0xf] %v2472
          %2601 = vst [vmem:[%s222 + $0xc8] sm:$0xf] %v2473
          %2602 = vst [vmem:[%s222 + $0xcc] sm:$0xf] %v2474
          %2603 = vst [vmem:[%s222 + $0xd0] sm:$0xf] %v2475
          %2604 = vst [vmem:[%s222 + $0xd4] sm:$0xf] %v2476
          %2605 = vst [vmem:[%s222 + $0xd8] sm:$0xf] %v2477
          %2606 = vst [vmem:[%s222 + $0xdc] sm:$0xf] %v2478
          %2607 = vst [vmem:[%s222 + $0xe0] sm:$0xf] %v2479
          %2608 = vst [vmem:[%s222 + $0xe4] sm:$0xf] %v2480
          %2609 = vst [vmem:[%s222 + $0xe8] sm:$0xf] %v2481
          %2610 = vst [vmem:[%s222 + $0xec] sm:$0xf] %v2482
          %2611 = vst [vmem:[%s222 + $0xf0] sm:$0xf] %v2483
          %2612 = vst [vmem:[%s222 + $0xf4] sm:$0xf] %v2484
          %2613 = vst [vmem:[%s222 + $0xf8] sm:$0xf] %v2485
          %2614 = vst [vmem:[%s222 + $0xfc] sm:$0xf] %v2486
        $region48: #{gnn_forward.7} parent=31 // pred_fallthru
          _
        %s2615 = smul.u32 64, %s22
        %p2616 = scmp.lt.s32.totalorder %s2615, 127
        %s2617 = scalar_select %p2616, %s2615, 127
        %s2618 = smul.addr %s2617, 4
        %s2619 = scalar_lea.vmem %s3, %s2618
        // Predicated region
        $region49: #{gnn_forward.7} parent=31 // pred_check
          %p2620 = pneg %p118
        $region50: #{gnn_forward.7} parent=31 // pred_check_branch
          %2622 = sbr.rel (%p2620) target = $region52
        $region51: #{gnn_forward.7} parent=31 // pred_region
          %s2623 = smul.u32 64, %s22
        $region52: #{gnn_forward.7} parent=31 // pred_fallthru
          _
      $region32: #{gnn_forward.7} parent=5 // pred_fallthru
        _
      %p2624 = scmp.le.s32.totalorder 2, %s13
      // Predicated region
      $region53: #{gnn_forward.7} parent=5 // pred_check
        %p2625 = pneg %p2624
      $region54: #{gnn_forward.7} parent=5 // pred_check_branch
        %2627 = sbr.rel (%p2625) target = $region56
      $region55: #{gnn_forward.7} parent=5 // pred_region
        %s2628 = ssub.s32 %s13, 2
        // Predicated region
        $region57: #{gnn_forward.7} parent=55 // pred_check
          %p2629 = pneg %p124
        $region58: #{gnn_forward.7} parent=55 // pred_check_branch
          %2631 = sbr.rel (%p2629) target = $region60
        $region59: #{gnn_forward.7} parent=55 // pred_region
          %s2632 = smul.u32 64, %s24
          %p2633 = scmp.lt.s32.totalorder %s2632, 127
          %s2634 = scalar_select %p2633, %s2632, 127
          %s2635 = smul.addr %s2634, 4
          %s2636 = scalar_lea.vmem %s3, %s2635
        $region60: #{gnn_forward.7} parent=55 // pred_fallthru
          _
      $region56: #{gnn_forward.7} parent=5 // pred_fallthru
        _
    $region6: #{gnn_forward.7} parent=1 // loop_footer
      %s17 = sadd.s32 1, %s13
    $region7: #{gnn_forward.7} parent=1 // loop_footer_branch
      %12 = sbr.rel target = $region3
    $region8: #{gnn_forward.7} parent=1 // loop_exit
      _
    %2637 = vsyncpa [#allocation4], 1
    %s2638 = scalar_lea.sflag [#allocation4], 1
    %2639 = vsyncpa %s2638, 1
    %2640 = vsyncpa [#allocation6], 1

// kernel: gnn_forward.9
$region0: #{gnn_forward.9}
  #allocation0 [shape = 'u32[]', space=smem, size = 0x4, offset = 0x4, fixed_abs, tag = 'smem constant byte address 0x4 - core index']
  #allocation1 [shape = 'u32[144,128]{1,0:T(1,128)}', space=vmem, size = 0x12000, scoped, tag = 'internal scratch']
  #allocation2 [shape = 'f32[512,128]{1,0:T(8,128)}', space=vmem, size = 0x40000, scoped, tag = 'scratch operand']
  %s0 = inlined_call_operand.vmem [shape: bf16[1024,1024], index: 0, kind: input, shape index: {}]
  %s1 = inlined_call_operand.vmem [shape: bf16[1024,128], index: 1, kind: input, shape index: {}]
  %s2 = inlined_call_operand.vmem [shape: f32[1,128], index: 2, kind: input, shape index: {}]
  %s3 = inlined_call_operand.vmem [shape: bf16[1024,128], index: 3, kind: output, shape index: {}]
  %s4 = sld [smem:[#allocation0]]
  $region76: #{gnn_forward.9} parent=0
    _
  %s6 = ssub.s32 1, %s4
  %s7 = scalar_select 0, %s6, %s4
  $region1: #{gnn_forward.9} parent=0
    #allocation3 [shape = 'u8[1048576]{0}', space=vmem, size = 0x100000, scoped, tag = 'input window, operand 0']
    loop: start=0, step=1, limit=6
    $region2: #{gnn_forward.9} parent=1 // loop_pre_header
      _
    $region3: #{gnn_forward.9} parent=1 // loop_header
      %s9 = sphi 0, %s13
      %p10 = scmp.ge.s32.totalorder %s9, 6
      %s16 = sphi 0, %s28
      %s17 = sphi 0, %s24
      %s18 = sphi 0, %s16
      %s19 = sphi 0, %s17
      %s20 = sphi 0, %s18
      %s21 = sphi 0, %s19
      %s33 = sphi 0, %s35
      %s36 = sphi 0, %s33
      %s37 = sphi 0, %s36
      %s53 = sphi 0, %s37
      %s57 = sphi 0, %s57
      %s59 = sphi 0, %s57
      %s60 = sphi 0, %s59
      %s74 = sphi 0, %s60
      %s78 = sphi 0, %s78
      %s80 = sphi 0, %s78
      %s81 = sphi 0, %s80
      %s95 = sphi 0, %s81
      %s101 = sphi 0, %s103
      %s104 = sphi 0, %s101
      %s105 = sphi 0, %s104
      %s121 = sphi 0, %s105
    $region4: #{gnn_forward.9} parent=1 // loop_header_branch
      %12 = sbr.rel (%p10) target = $region8
    $region5: #{gnn_forward.9} parent=1 // loop_body
      %s14 = ssub.s32 %s9, 1
      %s15 = ssub.s32 %s9, 2
      %s22 = sadd.s32 1, %s17
      %p23 = scmp.ge.s32.totalorder %s22, 2
      %s24 = scalar_select %p23, 0, %s22
      %s25 = sadd.s32 1, %s16
      %s26 = scalar_select %p23, %s25, %s16
      %p27 = scmp.ge.s32.totalorder %s26, 2
      %s28 = scalar_select %p27, 0, %s26
      %s29 = ssub.s32 %s16, %s28
      %s30 = ssub.s32 %s17, %s24
      %s31 = sor.u32 %s29, %s30
      %p32 = scmp.eq.s32.totalorder %s31, 0
      %s34 = sadd.s32 %s33, 1
      %s35 = scalar_select %p32, %s33, %s34
      %p38 = pneg %p32
      %p39 = scmp.eq.s32.totalorder %s9, 3
      %p40 = por %p38, %p39
      %p41 = scmp.ne.s32.totalorder %s33, %s36
      %p42 = scmp.eq.s32.totalorder %s9, 0
      %p43 = por %p41, %p42
      %p44 = scmp.ne.s32.totalorder %s33, %s36
      %p45 = scmp.eq.s32.totalorder %s14, 3
      %p46 = por %p44, %p45
      %p47 = scmp.ne.s32.totalorder %s36, %s37
      %p48 = scmp.eq.s32.totalorder %s14, 0
      %p49 = por %p47, %p48
      %p50 = scmp.ne.s32.totalorder %s36, %s37
      %p51 = scmp.eq.s32.totalorder %s15, 3
      %p52 = por %p50, %p51
      %p54 = scmp.ne.s32.totalorder %s37, %s53
      %p55 = scmp.eq.s32.totalorder %s15, 0
      %p56 = por %p54, %p55
      %s58 = sadd.s32 %s57, 1
      %p61 = scmp.eq.s32.totalorder %s9, 3
      %p62 = scmp.ne.s32.totalorder %s57, %s59
      %p63 = scmp.eq.s32.totalorder %s9, 0
      %p64 = por %p62, %p63
      %p65 = scmp.ne.s32.totalorder %s57, %s59
      %p66 = scmp.eq.s32.totalorder %s14, 3
      %p67 = por %p65, %p66
      %p68 = scmp.ne.s32.totalorder %s59, %s60
      %p69 = scmp.eq.s32.totalorder %s14, 0
      %p70 = por %p68, %p69
      %p71 = scmp.ne.s32.totalorder %s59, %s60
      %p72 = scmp.eq.s32.totalorder %s15, 3
      %p73 = por %p71, %p72
      %p75 = scmp.ne.s32.totalorder %s60, %s74
      %p76 = scmp.eq.s32.totalorder %s15, 0
      %p77 = por %p75, %p76
      %s79 = sadd.s32 %s78, 1
      %p82 = scmp.eq.s32.totalorder %s9, 3
      %p83 = scmp.ne.s32.totalorder %s78, %s80
      %p84 = scmp.eq.s32.totalorder %s9, 0
      %p85 = por %p83, %p84
      %p86 = scmp.ne.s32.totalorder %s78, %s80
      %p87 = scmp.eq.s32.totalorder %s14, 3
      %p88 = por %p86, %p87
      %p89 = scmp.ne.s32.totalorder %s80, %s81
      %p90 = scmp.eq.s32.totalorder %s14, 0
      %p91 = por %p89, %p90
      %p92 = scmp.ne.s32.totalorder %s80, %s81
      %p93 = scmp.eq.s32.totalorder %s15, 3
      %p94 = por %p92, %p93
      %p96 = scmp.ne.s32.totalorder %s81, %s95
      %p97 = scmp.eq.s32.totalorder %s15, 0
      %p98 = por %p96, %p97
      %s99 = ssub.s32 %s16, %s28
      %p100 = scmp.eq.s32.totalorder %s99, 0
      %s102 = sadd.s32 %s101, 1
      %s103 = scalar_select %p100, %s101, %s102
      %p106 = pneg %p100
      %p107 = scmp.eq.s32.totalorder %s9, 3
      %p108 = por %p106, %p107
      %p109 = scmp.ne.s32.totalorder %s101, %s104
      %p110 = scmp.eq.s32.totalorder %s9, 0
      %p111 = por %p109, %p110
      %p112 = scmp.ne.s32.totalorder %s101, %s104
      %p113 = scmp.eq.s32.totalorder %s14, 3
      %p114 = por %p112, %p113
      %p115 = scmp.ne.s32.totalorder %s104, %s105
      %p116 = scmp.eq.s32.totalorder %s14, 0
      %p117 = por %p115, %p116
      %p118 = scmp.ne.s32.totalorder %s104, %s105
      %p119 = scmp.eq.s32.totalorder %s15, 3
      %p120 = por %p118, %p119
      %p122 = scmp.ne.s32.totalorder %s105, %s121
      %p123 = scmp.eq.s32.totalorder %s15, 0
      %p124 = por %p122, %p123
      %p125 = scmp.le.s32.totalorder 1, %s9
      %p126 = scmp.lt.s32.totalorder %s9, 5
      %p127 = pnand %p125, %p126
      %p128 = pneg %p127
      // Predicated region
      $region9: #{gnn_forward.9} parent=5 // pred_check
        _
      $region10: #{gnn_forward.9} parent=5 // pred_check_branch
        %130 = sbr.rel (%p127) target = $region12
      $region11: #{gnn_forward.9} parent=5 // pred_region
        %s131 = ssub.s32 %s9, 1
        // Predicated region
        $region13: #{gnn_forward.9} parent=11 // pred_check
          %p132 = pneg %p70
        $region14: #{gnn_forward.9} parent=11 // pred_check_branch
          %134 = sbr.rel (%p132) target = $region16
        $region15: #{gnn_forward.9} parent=11 // pred_region
          _
        $region16: #{gnn_forward.9} parent=11 // pred_fallthru
          _
        // Predicated region
        $region17: #{gnn_forward.9} parent=11 // pred_check
          %p135 = pneg %p91
        $region18: #{gnn_forward.9} parent=11 // pred_check_branch
          %137 = sbr.rel (%p135) target = $region20
        $region19: #{gnn_forward.9} parent=11 // pred_region
          _
        $region20: #{gnn_forward.9} parent=11 // pred_fallthru
          _
      $region12: #{gnn_forward.9} parent=5 // pred_fallthru
        _
      %p138 = scmp.lt.s32.totalorder %s9, 4
      // Predicated region
      $region21: #{gnn_forward.9} parent=5 // pred_check
        %p139 = pneg %p138
      $region22: #{gnn_forward.9} parent=5 // pred_check_branch
        %141 = sbr.rel (%p139) target = $region24
      $region23: #{gnn_forward.9} parent=5 // pred_region
        // Predicated region
        $region25: #{gnn_forward.9} parent=23 // pred_check
          %p142 = pneg %p43
        $region26: #{gnn_forward.9} parent=23 // pred_check_branch
          %144 = sbr.rel (%p142) target = $region28
        $region27: #{gnn_forward.9} parent=23 // pred_region
          %s145 = sand.u32 %s33, 1
          %s146 = sand.u32 %s33, 1
          %s147 = smul.addr %s146, 1024
          %s148 = scalar_lea.vmem [#allocation3], %s147
          %s149 = smul.u32 64, %s16
          %s150 = smul.u32 4, %s17
          %s151 = smul.addr %s149, 8
          %s152 = sadd.s32 %s150, %s151
          %s153 = smul.addr %s152, 4
          %s154 = scalar_lea.vmem %s0, %s153
          // Predicated region
          $region29: #{gnn_forward.9} parent=27 // pred_check
            _
          $region30: #{gnn_forward.9} parent=27 // pred_check_branch
            %156 = sbr.rel (0) target = $region32
          $region31: #{gnn_forward.9} parent=27 // pred_region
            // Predicated region
            $region33: #{gnn_forward.9} parent=31 // pred_check
              _
            $region34: #{gnn_forward.9} parent=31 // pred_check_branch
              %158 = sbr.rel (0) target = $region36
            $region35: #{gnn_forward.9} parent=31 // pred_region
              loop: start=0, step=1, limit=1
              $region37: #{gnn_forward.9} parent=35 // loop_pre_header
                _
              $region38: #{gnn_forward.9} parent=35 // loop_header
                %s160 = sphi 0, %s164
                %p161 = scmp.ge.s32.totalorder %s160, 1
                %s165 = sphi %s154, %s154
                %s166 = sphi %s148, %s148
              $region39: #{gnn_forward.9} parent=35 // loop_header_branch
                %163 = sbr.rel (%p161) target = $region43
              $region40: #{gnn_forward.9} parent=35 // loop_body
                %v167 = vld [vmem:[%s165] sm:$0xff]
                %168 = vst [vmem:[%s166] sm:$0xff] %v167
                %v169 = vld [vmem:[%s165 + $0x8] sm:$0xff]
                %170 = vst [vmem:[%s166 + $0x8] sm:$0xff] %v169
                %v171 = vld [vmem:[%s165 + $0x20] sm:$0xff]
                %172 = vst [vmem:[%s166 + $0x10] sm:$0xff] %v171
                %v173 = vld [vmem:[%s165 + $0x28] sm:$0xff]
                %174 = vst [vmem:[%s166 + $0x18] sm:$0xff] %v173
                %v175 = vld [vmem:[%s165 + $0x40] sm:$0xff]
                %176 = vst [vmem:[%s166 + $0x20] sm:$0xff] %v175
                %v177 = vld [vmem:[%s165 + $0x48] sm:$0xff]
                %178 = vst [vmem:[%s166 + $0x28] sm:$0xff] %v177
                %v179 = vld [vmem:[%s165 + $0x60] sm:$0xff]
                %180 = vst [vmem:[%s166 + $0x30] sm:$0xff] %v179
                %v181 = vld [vmem:[%s165 + $0x68] sm:$0xff]
                %182 = vst [vmem:[%s166 + $0x38] sm:$0xff] %v181
                %v183 = vld [vmem:[%s165 + $0x80] sm:$0xff]
                %184 = vst [vmem:[%s166 + $0x40] sm:$0xff] %v183
                %v185 = vld [vmem:[%s165 + $0x88] sm:$0xff]
                %186 = vst [vmem:[%s166 + $0x48] sm:$0xff] %v185
                %v187 = vld [vmem:[%s165 + $0xa0] sm:$0xff]
                %188 = vst [vmem:[%s166 + $0x50] sm:$0xff] %v187
                %v189 = vld [vmem:[%s165 + $0xa8] sm:$0xff]
                %190 = vst [vmem:[%s166 + $0x58] sm:$0xff] %v189
                %v191 = vld [vmem:[%s165 + $0xc0] sm:$0xff]
                %192 = vst [vmem:[%s166 + $0x60] sm:$0xff] %v191
                %v193 = vld [vmem:[%s165 + $0xc8] sm:$0xff]
                %194 = vst [vmem:[%s166 + $0x68] sm:$0xff] %v193
                %v195 = vld [vmem:[%s165 + $0xe0] sm:$0xff]
                %196 = vst [vmem:[%s166 + $0x70] sm:$0xff] %v195
                %v197 = vld [vmem:[%s165 + $0xe8] sm:$0xff]
                %198 = vst [vmem:[%s166 + $0x78] sm:$0xff] %v197
                %v199 = vld [vmem:[%s165 + $0x100] sm:$0xff]
                %200 = vst [vmem:[%s166 + $0x80] sm:$0xff] %v199
                %v201 = vld [vmem:[%s165 + $0x108] sm:$0xff]
                %202 = vst [vmem:[%s166 + $0x88] sm:$0xff] %v201
                %v203 = vld [vmem:[%s165 + $0x120] sm:$0xff]
                %204 = vst [vmem:[%s166 + $0x90] sm:$0xff] %v203
                %v205 = vld [vmem:[%s165 + $0x128] sm:$0xff]
                %206 = vst [vmem:[%s166 + $0x98] sm:$0xff] %v205
                %v207 = vld [vmem:[%s165 + $0x140] sm:$0xff]
                %208 = vst [vmem:[%s166 + $0xa0] sm:$0xff] %v207
                %v209 = vld [vmem:[%s165 + $0x148] sm:$0xff]
                %210 = vst [vmem:[%s166 + $0xa8] sm:$0xff] %v209
                %v211 = vld [vmem:[%s165 + $0x160] sm:$0xff]
                %212 = vst [vmem:[%s166 + $0xb0] sm:$0xff] %v211
                %v213 = vld [vmem:[%s165 + $0x168] sm:$0xff]
                %214 = vst [vmem:[%s166 + $0xb8] sm:$0xff] %v213
                %v215 = vld [vmem:[%s165 + $0x180] sm:$0xff]
                %216 = vst [vmem:[%s166 + $0xc0] sm:$0xff] %v215
                %v217 = vld [vmem:[%s165 + $0x188] sm:$0xff]
                %218 = vst [vmem:[%s166 + $0xc8] sm:$0xff] %v217
                %v219 = vld [vmem:[%s165 + $0x1a0] sm:$0xff]
                %220 = vst [vmem:[%s166 + $0xd0] sm:$0xff] %v219
                %v221 = vld [vmem:[%s165 + $0x1a8] sm:$0xff]
                %222 = vst [vmem:[%s166 + $0xd8] sm:$0xff] %v221
                %v223 = vld [vmem:[%s165 + $0x1c0] sm:$0xff]
                %224 = vst [vmem:[%s166 + $0xe0] sm:$0xff] %v223
                %v225 = vld [vmem:[%s165 + $0x1c8] sm:$0xff]
                %226 = vst [vmem:[%s166 + $0xe8] sm:$0xff] %v225
                %v227 = vld [vmem:[%s165 + $0x1e0] sm:$0xff]
                %228 = vst [vmem:[%s166 + $0xf0] sm:$0xff] %v227
                %v229 = vld [vmem:[%s165 + $0x1e8] sm:$0xff]
                %230 = vst [vmem:[%s166 + $0xf8] sm:$0xff] %v229
                %v231 = vld [vmem:[%s165 + $0x200] sm:$0xff]
                %232 = vst [vmem:[%s166 + $0x100] sm:$0xff] %v231
                %v233 = vld [vmem:[%s165 + $0x208] sm:$0xff]
                %234 = vst [vmem:[%s166 + $0x108] sm:$0xff] %v233
                %v235 = vld [vmem:[%s165 + $0x220] sm:$0xff]
                %236 = vst [vmem:[%s166 + $0x110] sm:$0xff] %v235
                %v237 = vld [vmem:[%s165 + $0x228] sm:$0xff]
                %238 = vst [vmem:[%s166 + $0x118] sm:$0xff] %v237
                %v239 = vld [vmem:[%s165 + $0x240] sm:$0xff]
                %240 = vst [vmem:[%s166 + $0x120] sm:$0xff] %v239
                %v241 = vld [vmem:[%s165 + $0x248] sm:$0xff]
                %242 = vst [vmem:[%s166 + $0x128] sm:$0xff] %v241
                %v243 = vld [vmem:[%s165 + $0x260] sm:$0xff]
                %244 = vst [vmem:[%s166 + $0x130] sm:$0xff] %v243
                %v245 = vld [vmem:[%s165 + $0x268] sm:$0xff]
                %246 = vst [vmem:[%s166 + $0x138] sm:$0xff] %v245
                %v247 = vld [vmem:[%s165 + $0x280] sm:$0xff]
                %248 = vst [vmem:[%s166 + $0x140] sm:$0xff] %v247
                %v249 = vld [vmem:[%s165 + $0x288] sm:$0xff]
                %250 = vst [vmem:[%s166 + $0x148] sm:$0xff] %v249
                %v251 = vld [vmem:[%s165 + $0x2a0] sm:$0xff]
                %252 = vst [vmem:[%s166 + $0x150] sm:$0xff] %v251
                %v253 = vld [vmem:[%s165 + $0x2a8] sm:$0xff]
                %254 = vst [vmem:[%s166 + $0x158] sm:$0xff] %v253
                %v255 = vld [vmem:[%s165 + $0x2c0] sm:$0xff]
                %256 = vst [vmem:[%s166 + $0x160] sm:$0xff] %v255
                %v257 = vld [vmem:[%s165 + $0x2c8] sm:$0xff]
                %258 = vst [vmem:[%s166 + $0x168] sm:$0xff] %v257
                %v259 = vld [vmem:[%s165 + $0x2e0] sm:$0xff]
                %260 = vst [vmem:[%s166 + $0x170] sm:$0xff] %v259
                %v261 = vld [vmem:[%s165 + $0x2e8] sm:$0xff]
                %262 = vst [vmem:[%s166 + $0x178] sm:$0xff] %v261
                %v263 = vld [vmem:[%s165 + $0x300] sm:$0xff]
                %264 = vst [vmem:[%s166 + $0x180] sm:$0xff] %v263
                %v265 = vld [vmem:[%s165 + $0x308] sm:$0xff]
                %266 = vst [vmem:[%s166 + $0x188] sm:$0xff] %v265
                %v267 = vld [vmem:[%s165 + $0x320] sm:$0xff]
                %268 = vst [vmem:[%s166 + $0x190] sm:$0xff] %v267
                %v269 = vld [vmem:[%s165 + $0x328] sm:$0xff]
                %270 = vst [vmem:[%s166 + $0x198] sm:$0xff] %v269
                %v271 = vld [vmem:[%s165 + $0x340] sm:$0xff]
                %272 = vst [vmem:[%s166 + $0x1a0] sm:$0xff] %v271
                %v273 = vld [vmem:[%s165 + $0x348] sm:$0xff]
                %274 = vst [vmem:[%s166 + $0x1a8] sm:$0xff] %v273
                %v275 = vld [vmem:[%s165 + $0x360] sm:$0xff]
                %276 = vst [vmem:[%s166 + $0x1b0] sm:$0xff] %v275
                %v277 = vld [vmem:[%s165 + $0x368] sm:$0xff]
                %278 = vst [vmem:[%s166 + $0x1b8] sm:$0xff] %v277
                %v279 = vld [vmem:[%s165 + $0x380] sm:$0xff]
                %280 = vst [vmem:[%s166 + $0x1c0] sm:$0xff] %v279
                %v281 = vld [vmem:[%s165 + $0x388] sm:$0xff]
                %282 = vst [vmem:[%s166 + $0x1c8] sm:$0xff] %v281
                %v283 = vld [vmem:[%s165 + $0x3a0] sm:$0xff]
                %284 = vst [vmem:[%s166 + $0x1d0] sm:$0xff] %v283
                %v285 = vld [vmem:[%s165 + $0x3a8] sm:$0xff]
                %286 = vst [vmem:[%s166 + $0x1d8] sm:$0xff] %v285
                %v287 = vld [vmem:[%s165 + $0x3c0] sm:$0xff]
                %288 = vst [vmem:[%s166 + $0x1e0] sm:$0xff] %v287
                %v289 = vld [vmem:[%s165 + $0x3c8] sm:$0xff]
                %290 = vst [vmem:[%s166 + $0x1e8] sm:$0xff] %v289
                %v291 = vld [vmem:[%s165 + $0x3e0] sm:$0xff]
                %292 = vst [vmem:[%s166 + $0x1f0] sm:$0xff] %v291
                %v293 = vld [vmem:[%s165 + $0x3e8] sm:$0xff]
                %294 = vst [vmem:[%s166 + $0x1f8] sm:$0xff] %v293
                %v295 = vld [vmem:[%s165 + $0x400] sm:$0xff]
                %296 = vst [vmem:[%s166 + $0x200] sm:$0xff] %v295
                %v297 = vld [vmem:[%s165 + $0x408] sm:$0xff]
                %298 = vst [vmem:[%s166 + $0x208] sm:$0xff] %v297
                %v299 = vld [vmem:[%s165 + $0x420] sm:$0xff]
                %300 = vst [vmem:[%s166 + $0x210] sm:$0xff] %v299
                %v301 = vld [vmem:[%s165 + $0x428] sm:$0xff]
                %302 = vst [vmem:[%s166 + $0x218] sm:$0xff] %v301
                %v303 = vld [vmem:[%s165 + $0x440] sm:$0xff]
                %304 = vst [vmem:[%s166 + $0x220] sm:$0xff] %v303
                %v305 = vld [vmem:[%s165 + $0x448] sm:$0xff]
                %306 = vst [vmem:[%s166 + $0x228] sm:$0xff] %v305
                %v307 = vld [vmem:[%s165 + $0x460] sm:$0xff]
                %308 = vst [vmem:[%s166 + $0x230] sm:$0xff] %v307
                %v309 = vld [vmem:[%s165 + $0x468] sm:$0xff]
                %310 = vst [vmem:[%s166 + $0x238] sm:$0xff] %v309
                %v311 = vld [vmem:[%s165 + $0x480] sm:$0xff]
                %312 = vst [vmem:[%s166 + $0x240] sm:$0xff] %v311
                %v313 = vld [vmem:[%s165 + $0x488] sm:$0xff]
                %314 = vst [vmem:[%s166 + $0x248] sm:$0xff] %v313
                %v315 = vld [vmem:[%s165 + $0x4a0] sm:$0xff]
                %316 = vst [vmem:[%s166 + $0x250] sm:$0xff] %v315
                %v317 = vld [vmem:[%s165 + $0x4a8] sm:$0xff]
                %318 = vst [vmem:[%s166 + $0x258] sm:$0xff] %v317
                %v319 = vld [vmem:[%s165 + $0x4c0] sm:$0xff]
                %320 = vst [vmem:[%s166 + $0x260] sm:$0xff] %v319
                %v321 = vld [vmem:[%s165 + $0x4c8] sm:$0xff]
                %322 = vst [vmem:[%s166 + $0x268] sm:$0xff] %v321
                %v323 = vld [vmem:[%s165 + $0x4e0] sm:$0xff]
                %324 = vst [vmem:[%s166 + $0x270] sm:$0xff] %v323
                %v325 = vld [vmem:[%s165 + $0x4e8] sm:$0xff]
                %326 = vst [vmem:[%s166 + $0x278] sm:$0xff] %v325
                %v327 = vld [vmem:[%s165 + $0x500] sm:$0xff]
                %328 = vst [vmem:[%s166 + $0x280] sm:$0xff] %v327
                %v329 = vld [vmem:[%s165 + $0x508] sm:$0xff]
                %330 = vst [vmem:[%s166 + $0x288] sm:$0xff] %v329
                %v331 = vld [vmem:[%s165 + $0x520] sm:$0xff]
                %332 = vst [vmem:[%s166 + $0x290] sm:$0xff] %v331
                %v333 = vld [vmem:[%s165 + $0x528] sm:$0xff]
                %334 = vst [vmem:[%s166 + $0x298] sm:$0xff] %v333
                %v335 = vld [vmem:[%s165 + $0x540] sm:$0xff]
                %336 = vst [vmem:[%s166 + $0x2a0] sm:$0xff] %v335
                %v337 = vld [vmem:[%s165 + $0x548] sm:$0xff]
                %338 = vst [vmem:[%s166 + $0x2a8] sm:$0xff] %v337
                %v339 = vld [vmem:[%s165 + $0x560] sm:$0xff]
                %340 = vst [vmem:[%s166 + $0x2b0] sm:$0xff] %v339
                %v341 = vld [vmem:[%s165 + $0x568] sm:$0xff]
                %342 = vst [vmem:[%s166 + $0x2b8] sm:$0xff] %v341
                %v343 = vld [vmem:[%s165 + $0x580] sm:$0xff]
                %344 = vst [vmem:[%s166 + $0x2c0] sm:$0xff] %v343
                %v345 = vld [vmem:[%s165 + $0x588] sm:$0xff]
                %346 = vst [vmem:[%s166 + $0x2c8] sm:$0xff] %v345
                %v347 = vld [vmem:[%s165 + $0x5a0] sm:$0xff]
                %348 = vst [vmem:[%s166 + $0x2d0] sm:$0xff] %v347
                %v349 = vld [vmem:[%s165 + $0x5a8] sm:$0xff]
                %350 = vst [vmem:[%s166 + $0x2d8] sm:$0xff] %v349
                %v351 = vld [vmem:[%s165 + $0x5c0] sm:$0xff]
                %352 = vst [vmem:[%s166 + $0x2e0] sm:$0xff] %v351
                %v353 = vld [vmem:[%s165 + $0x5c8] sm:$0xff]
                %354 = vst [vmem:[%s166 + $0x2e8] sm:$0xff] %v353
                %v355 = vld [vmem:[%s165 + $0x5e0] sm:$0xff]
                %356 = vst [vmem:[%s166 + $0x2f0] sm:$0xff] %v355
                %v357 = vld [vmem:[%s165 + $0x5e8] sm:$0xff]
                %358 = vst [vmem:[%s166 + $0x2f8] sm:$0xff] %v357
                %v359 = vld [vmem:[%s165 + $0x600] sm:$0xff]
                %360 = vst [vmem:[%s166 + $0x300] sm:$0xff] %v359
                %v361 = vld [vmem:[%s165 + $0x608] sm:$0xff]
                %362 = vst [vmem:[%s166 + $0x308] sm:$0xff] %v361
                %v363 = vld [vmem:[%s165 + $0x620] sm:$0xff]
                %364 = vst [vmem:[%s166 + $0x310] sm:$0xff] %v363
                %v365 = vld [vmem:[%s165 + $0x628] sm:$0xff]
                %366 = vst [vmem:[%s166 + $0x318] sm:$0xff] %v365
                %v367 = vld [vmem:[%s165 + $0x640] sm:$0xff]
                %368 = vst [vmem:[%s166 + $0x320] sm:$0xff] %v367
                %v369 = vld [vmem:[%s165 + $0x648] sm:$0xff]
                %370 = vst [vmem:[%s166 + $0x328] sm:$0xff] %v369
                %v371 = vld [vmem:[%s165 + $0x660] sm:$0xff]
                %372 = vst [vmem:[%s166 + $0x330] sm:$0xff] %v371
                %v373 = vld [vmem:[%s165 + $0x668] sm:$0xff]
                %374 = vst [vmem:[%s166 + $0x338] sm:$0xff] %v373
                %v375 = vld [vmem:[%s165 + $0x680] sm:$0xff]
                %376 = vst [vmem:[%s166 + $0x340] sm:$0xff] %v375
                %v377 = vld [vmem:[%s165 + $0x688] sm:$0xff]
                %378 = vst [vmem:[%s166 + $0x348] sm:$0xff] %v377
                %v379 = vld [vmem:[%s165 + $0x6a0] sm:$0xff]
                %380 = vst [vmem:[%s166 + $0x350] sm:$0xff] %v379
                %v381 = vld [vmem:[%s165 + $0x6a8] sm:$0xff]
                %382 = vst [vmem:[%s166 + $0x358] sm:$0xff] %v381
                %v383 = vld [vmem:[%s165 + $0x6c0] sm:$0xff]
                %384 = vst [vmem:[%s166 + $0x360] sm:$0xff] %v383
                %v385 = vld [vmem:[%s165 + $0x6c8] sm:$0xff]
                %386 = vst [vmem:[%s166 + $0x368] sm:$0xff] %v385
                %v387 = vld [vmem:[%s165 + $0x6e0] sm:$0xff]
                %388 = vst [vmem:[%s166 + $0x370] sm:$0xff] %v387
                %v389 = vld [vmem:[%s165 + $0x6e8] sm:$0xff]
                %390 = vst [vmem:[%s166 + $0x378] sm:$0xff] %v389
                %v391 = vld [vmem:[%s165 + $0x700] sm:$0xff]
                %392 = vst [vmem:[%s166 + $0x380] sm:$0xff] %v391
                %v393 = vld [vmem:[%s165 + $0x708] sm:$0xff]
                %394 = vst [vmem:[%s166 + $0x388] sm:$0xff] %v393
                %v395 = vld [vmem:[%s165 + $0x720] sm:$0xff]
                %396 = vst [vmem:[%s166 + $0x390] sm:$0xff] %v395
                %v397 = vld [vmem:[%s165 + $0x728] sm:$0xff]
                %398 = vst [vmem:[%s166 + $0x398] sm:$0xff] %v397
                %v399 = vld [vmem:[%s165 + $0x740] sm:$0xff]
                %400 = vst [vmem:[%s166 + $0x3a0] sm:$0xff] %v399
                %v401 = vld [vmem:[%s165 + $0x748] sm:$0xff]
                %402 = vst [vmem:[%s166 + $0x3a8] sm:$0xff] %v401
                %v403 = vld [vmem:[%s165 + $0x760] sm:$0xff]
                %404 = vst [vmem:[%s166 + $0x3b0] sm:$0xff] %v403
                %v405 = vld [vmem:[%s165 + $0x768] sm:$0xff]
                %406 = vst [vmem:[%s166 + $0x3b8] sm:$0xff] %v405
                %v407 = vld [vmem:[%s165 + $0x780] sm:$0xff]
                %408 = vst [vmem:[%s166 + $0x3c0] sm:$0xff] %v407
                %v409 = vld [vmem:[%s165 + $0x788] sm:$0xff]
                %410 = vst [vmem:[%s166 + $0x3c8] sm:$0xff] %v409
                %v411 = vld [vmem:[%s165 + $0x7a0] sm:$0xff]
                %412 = vst [vmem:[%s166 + $0x3d0] sm:$0xff] %v411
                %v413 = vld [vmem:[%s165 + $0x7a8] sm:$0xff]
                %414 = vst [vmem:[%s166 + $0x3d8] sm:$0xff] %v413
                %v415 = vld [vmem:[%s165 + $0x7c0] sm:$0xff]
                %416 = vst [vmem:[%s166 + $0x3e0] sm:$0xff] %v415
                %v417 = vld [vmem:[%s165 + $0x7c8] sm:$0xff]
                %418 = vst [vmem:[%s166 + $0x3e8] sm:$0xff] %v417
                %v419 = vld [vmem:[%s165 + $0x7e0] sm:$0xff]
                %420 = vst [vmem:[%s166 + $0x3f0] sm:$0xff] %v419
                %v421 = vld [vmem:[%s165 + $0x7e8] sm:$0xff]
                %422 = vst [vmem:[%s166 + $0x3f8] sm:$0xff] %v421
              $region41: #{gnn_forward.9} parent=35 // loop_footer
                %s164 = sadd.s32 1, %s160
              $region42: #{gnn_forward.9} parent=35 // loop_footer_branch
                %159 = sbr.rel target = $region38
              $region43: #{gnn_forward.9} parent=35 // loop_exit
                _
            $region36: #{gnn_forward.9} parent=31 // pred_fallthru
              _
            // Predicated region
            $region44: #{gnn_forward.9} parent=31 // pred_check
              _
            $region45: #{gnn_forward.9} parent=31 // pred_check_branch
              %424 = sbr.rel target = $region47
            $region46: #{gnn_forward.9} parent=31 // pred_region
              _
            $region47: #{gnn_forward.9} parent=31 // pred_fallthru
              _
          $region32: #{gnn_forward.9} parent=27 // pred_fallthru
            _
          %425 = vnop
        $region28: #{gnn_forward.9} parent=23 // pred_fallthru
          _
      $region24: #{gnn_forward.9} parent=5 // pred_fallthru
        _
      %p426 = scmp.le.s32.totalorder 1, %s9
      %p427 = scmp.lt.s32.totalorder %s9, 5
      %p428 = pnand %p426, %p427
      %p429 = pneg %p428
      // Predicated region
      $region48: #{gnn_forward.9} parent=5 // pred_check
        _
      $region49: #{gnn_forward.9} parent=5 // pred_check_branch
        %431 = sbr.rel (%p428) target = $region51
      $region50: #{gnn_forward.9} parent=5 // pred_region
        %s432 = ssub.s32 %s9, 1
        %s433 = sand.u32 %s36, 1
        %s434 = sand.u32 %s36, 1
        %s435 = smul.addr %s434, 1024
        %s436 = scalar_lea.vmem [#allocation3], %s435
        // Predicated region
        $region52: #{gnn_forward.9} parent=50 // pred_check
          %p437 = pneg %p49
        $region53: #{gnn_forward.9} parent=50 // pred_check_branch
          %439 = sbr.rel (%p437) target = $region55
        $region54: #{gnn_forward.9} parent=50 // pred_region
          _
        $region55: #{gnn_forward.9} parent=50 // pred_fallthru
          _
        %s440 = sand.u32 %s36, 1
        %s441 = sand.u32 %s36, 1
        %s442 = smul.addr %s441, 1024
        %s443 = scalar_lea.vmem [#allocation3], %s442
        %p444 = pneg %p49
        %p445 = pneg %p46
        %p446 = pneg %p70
        %p447 = pneg %p67
        %p448 = pneg %p91
        %p449 = pneg %p88
        %p450 = pneg %p117
        %p451 = pneg %p114
        %s452 = smul.u32 64, %s18
        %p453 = scmp.lt.s32.totalorder %s452, 127
        %s454 = scalar_select %p453, %s452, 127
        %s455 = smul.addr %s454, 4
        %s456 = scalar_lea.vmem %s3, %s455
        %s457 = smul.u32 64, %s18
        %s458 = smul.u32 4, %s19
        %s459 = smul.u32 64, %s18
        %p460 = scmp.lt.s32.totalorder %s459, 127
        %s461 = scalar_select %p460, %s459, 127
        %s462 = smul.addr %s461, 4
        %s463 = scalar_lea.vmem %s3, %s462
        %s464 = smul.u32 64, %s18
        %p466 = scmp.eq.s32.totalorder %s19, 0
        // Predicated region
        $region56: #{gnn_forward.9} parent=50 // pred_check
          %p467 = pneg %p466
        $region57: #{gnn_forward.9} parent=50 // pred_check_branch
          %469 = sbr.rel (%p467) target = $region59
        $region58: #{gnn_forward.9} parent=50 // pred_region
          %470 = vst [vmem:[#allocation2] sm:$0xff] 0.0
          %471 = vst [vmem:[#allocation2 + $0x8] sm:$0xff] 0.0
          %472 = vst [vmem:[#allocation2 + $0x10] sm:$0xff] 0.0
          %473 = vst [vmem:[#allocation2 + $0x18] sm:$0xff] 0.0
          %474 = vst [vmem:[#allocation2 + $0x20] sm:$0xff] 0.0
          %475 = vst [vmem:[#allocation2 + $0x28] sm:$0xff] 0.0
          %476 = vst [vmem:[#allocation2 + $0x30] sm:$0xff] 0.0
          %477 = vst [vmem:[#allocation2 + $0x38] sm:$0xff] 0.0
          %478 = vst [vmem:[#allocation2 + $0x40] sm:$0xff] 0.0
          %479 = vst [vmem:[#allocation2 + $0x48] sm:$0xff] 0.0
          %480 = vst [vmem:[#allocation2 + $0x50] sm:$0xff] 0.0
          %481 = vst [vmem:[#allocation2 + $0x58] sm:$0xff] 0.0
          %482 = vst [vmem:[#allocation2 + $0x60] sm:$0xff] 0.0
          %483 = vst [vmem:[#allocation2 + $0x68] sm:$0xff] 0.0
          %484 = vst [vmem:[#allocation2 + $0x70] sm:$0xff] 0.0
          %485 = vst [vmem:[#allocation2 + $0x78] sm:$0xff] 0.0
          %486 = vst [vmem:[#allocation2 + $0x80] sm:$0xff] 0.0
          %487 = vst [vmem:[#allocation2 + $0x88] sm:$0xff] 0.0
          %488 = vst [vmem:[#allocation2 + $0x90] sm:$0xff] 0.0
          %489 = vst [vmem:[#allocation2 + $0x98] sm:$0xff] 0.0
          %490 = vst [vmem:[#allocation2 + $0xa0] sm:$0xff] 0.0
          %491 = vst [vmem:[#allocation2 + $0xa8] sm:$0xff] 0.0
          %492 = vst [vmem:[#allocation2 + $0xb0] sm:$0xff] 0.0
          %493 = vst [vmem:[#allocation2 + $0xb8] sm:$0xff] 0.0
          %494 = vst [vmem:[#allocation2 + $0xc0] sm:$0xff] 0.0
          %495 = vst [vmem:[#allocation2 + $0xc8] sm:$0xff] 0.0
          %496 = vst [vmem:[#allocation2 + $0xd0] sm:$0xff] 0.0
          %497 = vst [vmem:[#allocation2 + $0xd8] sm:$0xff] 0.0
          %498 = vst [vmem:[#allocation2 + $0xe0] sm:$0xff] 0.0
          %499 = vst [vmem:[#allocation2 + $0xe8] sm:$0xff] 0.0
          %500 = vst [vmem:[#allocation2 + $0xf0] sm:$0xff] 0.0
          %501 = vst [vmem:[#allocation2 + $0xf8] sm:$0xff] 0.0
          %502 = vst [vmem:[#allocation2 + $0x100] sm:$0xff] 0.0
          %503 = vst [vmem:[#allocation2 + $0x108] sm:$0xff] 0.0
          %504 = vst [vmem:[#allocation2 + $0x110] sm:$0xff] 0.0
          %505 = vst [vmem:[#allocation2 + $0x118] sm:$0xff] 0.0
          %506 = vst [vmem:[#allocation2 + $0x120] sm:$0xff] 0.0
          %507 = vst [vmem:[#allocation2 + $0x128] sm:$0xff] 0.0
          %508 = vst [vmem:[#allocation2 + $0x130] sm:$0xff] 0.0
          %509 = vst [vmem:[#allocation2 + $0x138] sm:$0xff] 0.0
          %510 = vst [vmem:[#allocation2 + $0x140] sm:$0xff] 0.0
          %511 = vst [vmem:[#allocation2 + $0x148] sm:$0xff] 0.0
          %512 = vst [vmem:[#allocation2 + $0x150] sm:$0xff] 0.0
          %513 = vst [vmem:[#allocation2 + $0x158] sm:$0xff] 0.0
          %514 = vst [vmem:[#allocation2 + $0x160] sm:$0xff] 0.0
          %515 = vst [vmem:[#allocation2 + $0x168] sm:$0xff] 0.0
          %516 = vst [vmem:[#allocation2 + $0x170] sm:$0xff] 0.0
          %517 = vst [vmem:[#allocation2 + $0x178] sm:$0xff] 0.0
          %518 = vst [vmem:[#allocation2 + $0x180] sm:$0xff] 0.0
          %519 = vst [vmem:[#allocation2 + $0x188] sm:$0xff] 0.0
          %520 = vst [vmem:[#allocation2 + $0x190] sm:$0xff] 0.0
          %521 = vst [vmem:[#allocation2 + $0x198] sm:$0xff] 0.0
          %522 = vst [vmem:[#allocation2 + $0x1a0] sm:$0xff] 0.0
          %523 = vst [vmem:[#allocation2 + $0x1a8] sm:$0xff] 0.0
          %524 = vst [vmem:[#allocation2 + $0x1b0] sm:$0xff] 0.0
          %525 = vst [vmem:[#allocation2 + $0x1b8] sm:$0xff] 0.0
          %526 = vst [vmem:[#allocation2 + $0x1c0] sm:$0xff] 0.0
          %527 = vst [vmem:[#allocation2 + $0x1c8] sm:$0xff] 0.0
          %528 = vst [vmem:[#allocation2 + $0x1d0] sm:$0xff] 0.0
          %529 = vst [vmem:[#allocation2 + $0x1d8] sm:$0xff] 0.0
          %530 = vst [vmem:[#allocation2 + $0x1e0] sm:$0xff] 0.0
          %531 = vst [vmem:[#allocation2 + $0x1e8] sm:$0xff] 0.0
          %532 = vst [vmem:[#allocation2 + $0x1f0] sm:$0xff] 0.0
          %533 = vst [vmem:[#allocation2 + $0x1f8] sm:$0xff] 0.0
        $region59: #{gnn_forward.9} parent=50 // pred_fallthru
          _
        %s534 = smul.u32 %s19, 512
        %s535 = sshra.s32 %s534, 3
        %s536 = sand.u32 %s534, 7
        %s537 = smul.addr %s535, 4
        %s538 = scalar_lea.vmem %s1, %s537
        %v539 = vld [vmem:[%s538] sm:$0xf]
        %v540 = vld [vmem:[%s538 + $0x4] sm:$0xf]
        %v541 = vld [vmem:[%s538 + $0x8] sm:$0xf]
        %v542 = vld [vmem:[%s538 + $0xc] sm:$0xf]
        %v543 = vld [vmem:[%s538 + $0x10] sm:$0xf]
        %v544 = vld [vmem:[%s538 + $0x14] sm:$0xf]
        %v545 = vld [vmem:[%s538 + $0x18] sm:$0xf]
        %v546 = vld [vmem:[%s538 + $0x1c] sm:$0xf]
        %v547 = vld [vmem:[%s538 + $0x20] sm:$0xf]
        %v548 = vld [vmem:[%s538 + $0x24] sm:$0xf]
        %v549 = vld [vmem:[%s538 + $0x28] sm:$0xf]
        %v550 = vld [vmem:[%s538 + $0x2c] sm:$0xf]
        %v551 = vld [vmem:[%s538 + $0x30] sm:$0xf]
        %v552 = vld [vmem:[%s538 + $0x34] sm:$0xf]
        %v553 = vld [vmem:[%s538 + $0x38] sm:$0xf]
        %v554 = vld [vmem:[%s538 + $0x3c] sm:$0xf]
        %v555 = vld [vmem:[%s538 + $0x40] sm:$0xf]
        %v556 = vld [vmem:[%s538 + $0x44] sm:$0xf]
        %v557 = vld [vmem:[%s538 + $0x48] sm:$0xf]
        %v558 = vld [vmem:[%s538 + $0x4c] sm:$0xf]
        %v559 = vld [vmem:[%s538 + $0x50] sm:$0xf]
        %v560 = vld [vmem:[%s538 + $0x54] sm:$0xf]
        %v561 = vld [vmem:[%s538 + $0x58] sm:$0xf]
        %v562 = vld [vmem:[%s538 + $0x5c] sm:$0xf]
        %v563 = vld [vmem:[%s538 + $0x60] sm:$0xf]
        %v564 = vld [vmem:[%s538 + $0x64] sm:$0xf]
        %v565 = vld [vmem:[%s538 + $0x68] sm:$0xf]
        %v566 = vld [vmem:[%s538 + $0x6c] sm:$0xf]
        %v567 = vld [vmem:[%s538 + $0x70] sm:$0xf]
        %v568 = vld [vmem:[%s538 + $0x74] sm:$0xf]
        %v569 = vld [vmem:[%s538 + $0x78] sm:$0xf]
        %v570 = vld [vmem:[%s538 + $0x7c] sm:$0xf]
        %v571 = vld [vmem:[%s538 + $0x80] sm:$0xf]
        %v572 = vld [vmem:[%s538 + $0x84] sm:$0xf]
        %v573 = vld [vmem:[%s538 + $0x88] sm:$0xf]
        %v574 = vld [vmem:[%s538 + $0x8c] sm:$0xf]
        %v575 = vld [vmem:[%s538 + $0x90] sm:$0xf]
        %v576 = vld [vmem:[%s538 + $0x94] sm:$0xf]
        %v577 = vld [vmem:[%s538 + $0x98] sm:$0xf]
        %v578 = vld [vmem:[%s538 + $0x9c] sm:$0xf]
        %v579 = vld [vmem:[%s538 + $0xa0] sm:$0xf]
        %v580 = vld [vmem:[%s538 + $0xa4] sm:$0xf]
        %v581 = vld [vmem:[%s538 + $0xa8] sm:$0xf]
        %v582 = vld [vmem:[%s538 + $0xac] sm:$0xf]
        %v583 = vld [vmem:[%s538 + $0xb0] sm:$0xf]
        %v584 = vld [vmem:[%s538 + $0xb4] sm:$0xf]
        %v585 = vld [vmem:[%s538 + $0xb8] sm:$0xf]
        %v586 = vld [vmem:[%s538 + $0xbc] sm:$0xf]
        %v587 = vld [vmem:[%s538 + $0xc0] sm:$0xf]
        %v588 = vld [vmem:[%s538 + $0xc4] sm:$0xf]
        %v589 = vld [vmem:[%s538 + $0xc8] sm:$0xf]
        %v590 = vld [vmem:[%s538 + $0xcc] sm:$0xf]
        %v591 = vld [vmem:[%s538 + $0xd0] sm:$0xf]
        %v592 = vld [vmem:[%s538 + $0xd4] sm:$0xf]
        %v593 = vld [vmem:[%s538 + $0xd8] sm:$0xf]
        %v594 = vld [vmem:[%s538 + $0xdc] sm:$0xf]
        %v595 = vld [vmem:[%s538 + $0xe0] sm:$0xf]
        %v596 = vld [vmem:[%s538 + $0xe4] sm:$0xf]
        %v597 = vld [vmem:[%s538 + $0xe8] sm:$0xf]
        %v598 = vld [vmem:[%s538 + $0xec] sm:$0xf]
        %v599 = vld [vmem:[%s538 + $0xf0] sm:$0xf]
        %v600 = vld [vmem:[%s538 + $0xf4] sm:$0xf]
        %v601 = vld [vmem:[%s538 + $0xf8] sm:$0xf]
        %v602 = vld [vmem:[%s538 + $0xfc] sm:$0xf]
        %v603 = vld [vmem:[#allocation2] sm:$0xff]
        %v604 = vld [vmem:[#allocation2 + $0x8] sm:$0xff]
        %v605 = vld [vmem:[#allocation2 + $0x10] sm:$0xff]
        %v606 = vld [vmem:[#allocation2 + $0x18] sm:$0xff]
        %v607 = vld [vmem:[#allocation2 + $0x20] sm:$0xff]
        %v608 = vld [vmem:[#allocation2 + $0x28] sm:$0xff]
        %v609 = vld [vmem:[#allocation2 + $0x30] sm:$0xff]
        %v610 = vld [vmem:[#allocation2 + $0x38] sm:$0xff]
        %v611 = vld [vmem:[#allocation2 + $0x40] sm:$0xff]
        %v612 = vld [vmem:[#allocation2 + $0x48] sm:$0xff]
        %v613 = vld [vmem:[#allocation2 + $0x50] sm:$0xff]
        %v614 = vld [vmem:[#allocation2 + $0x58] sm:$0xff]
        %v615 = vld [vmem:[#allocation2 + $0x60] sm:$0xff]
        %v616 = vld [vmem:[#allocation2 + $0x68] sm:$0xff]
        %v617 = vld [vmem:[#allocation2 + $0x70] sm:$0xff]
        %v618 = vld [vmem:[#allocation2 + $0x78] sm:$0xff]
        %v619 = vld [vmem:[#allocation2 + $0x80] sm:$0xff]
        %v620 = vld [vmem:[#allocation2 + $0x88] sm:$0xff]
        %v621 = vld [vmem:[#allocation2 + $0x90] sm:$0xff]
        %v622 = vld [vmem:[#allocation2 + $0x98] sm:$0xff]
        %v623 = vld [vmem:[#allocation2 + $0xa0] sm:$0xff]
        %v624 = vld [vmem:[#allocation2 + $0xa8] sm:$0xff]
        %v625 = vld [vmem:[#allocation2 + $0xb0] sm:$0xff]
        %v626 = vld [vmem:[#allocation2 + $0xb8] sm:$0xff]
        %v627 = vld [vmem:[#allocation2 + $0xc0] sm:$0xff]
        %v628 = vld [vmem:[#allocation2 + $0xc8] sm:$0xff]
        %v629 = vld [vmem:[#allocation2 + $0xd0] sm:$0xff]
        %v630 = vld [vmem:[#allocation2 + $0xd8] sm:$0xff]
        %v631 = vld [vmem:[#allocation2 + $0xe0] sm:$0xff]
        %v632 = vld [vmem:[#allocation2 + $0xe8] sm:$0xff]
        %v633 = vld [vmem:[#allocation2 + $0xf0] sm:$0xff]
        %v634 = vld [vmem:[#allocation2 + $0xf8] sm:$0xff]
        %v635 = vld [vmem:[#allocation2 + $0x100] sm:$0xff]
        %v636 = vld [vmem:[#allocation2 + $0x108] sm:$0xff]
        %v637 = vld [vmem:[#allocation2 + $0x110] sm:$0xff]
        %v638 = vld [vmem:[#allocation2 + $0x118] sm:$0xff]
        %v639 = vld [vmem:[#allocation2 + $0x120] sm:$0xff]
        %v640 = vld [vmem:[#allocation2 + $0x128] sm:$0xff]
        %v641 = vld [vmem:[#allocation2 + $0x130] sm:$0xff]
        %v642 = vld [vmem:[#allocation2 + $0x138] sm:$0xff]
        %v643 = vld [vmem:[#allocation2 + $0x140] sm:$0xff]
        %v644 = vld [vmem:[#allocation2 + $0x148] sm:$0xff]
        %v645 = vld [vmem:[#allocation2 + $0x150] sm:$0xff]
        %v646 = vld [vmem:[#allocation2 + $0x158] sm:$0xff]
        %v647 = vld [vmem:[#allocation2 + $0x160] sm:$0xff]
        %v648 = vld [vmem:[#allocation2 + $0x168] sm:$0xff]
        %v649 = vld [vmem:[#allocation2 + $0x170] sm:$0xff]
        %v650 = vld [vmem:[#allocation2 + $0x178] sm:$0xff]
        %v651 = vld [vmem:[#allocation2 + $0x180] sm:$0xff]
        %v652 = vld [vmem:[#allocation2 + $0x188] sm:$0xff]
        %v653 = vld [vmem:[#allocation2 + $0x190] sm:$0xff]
        %v654 = vld [vmem:[#allocation2 + $0x198] sm:$0xff]
        %v655 = vld [vmem:[#allocation2 + $0x1a0] sm:$0xff]
        %v656 = vld [vmem:[#allocation2 + $0x1a8] sm:$0xff]
        %v657 = vld [vmem:[#allocation2 + $0x1b0] sm:$0xff]
        %v658 = vld [vmem:[#allocation2 + $0x1b8] sm:$0xff]
        %v659 = vld [vmem:[#allocation2 + $0x1c0] sm:$0xff]
        %v660 = vld [vmem:[#allocation2 + $0x1c8] sm:$0xff]
        %v661 = vld [vmem:[#allocation2 + $0x1d0] sm:$0xff]
        %v662 = vld [vmem:[#allocation2 + $0x1d8] sm:$0xff]
        %v663 = vld [vmem:[#allocation2 + $0x1e0] sm:$0xff]
        %v664 = vld [vmem:[#allocation2 + $0x1e8] sm:$0xff]
        %v665 = vld [vmem:[#allocation2 + $0x1f0] sm:$0xff]
        %v666 = vld [vmem:[#allocation2 + $0x1f8] sm:$0xff]
        %v667 = vld [vmem:[%s436] sm:$0xff]
        %v668 = vld [vmem:[%s436 + $0x8] sm:$0xff]
        %v669 = vld [vmem:[%s436 + $0x10] sm:$0xff]
        %v670 = vld [vmem:[%s436 + $0x18] sm:$0xff]
        %v671 = vld [vmem:[%s436 + $0x20] sm:$0xff]
        %v672 = vld [vmem:[%s436 + $0x28] sm:$0xff]
        %v673 = vld [vmem:[%s436 + $0x30] sm:$0xff]
        %v674 = vld [vmem:[%s436 + $0x38] sm:$0xff]
        %v675 = vld [vmem:[%s436 + $0x40] sm:$0xff]
        %v676 = vld [vmem:[%s436 + $0x48] sm:$0xff]
        %v677 = vld [vmem:[%s436 + $0x50] sm:$0xff]
        %v678 = vld [vmem:[%s436 + $0x58] sm:$0xff]
        %v679 = vld [vmem:[%s436 + $0x60] sm:$0xff]
        %v680 = vld [vmem:[%s436 + $0x68] sm:$0xff]
        %v681 = vld [vmem:[%s436 + $0x70] sm:$0xff]
        %v682 = vld [vmem:[%s436 + $0x78] sm:$0xff]
        %v683 = vld [vmem:[%s436 + $0x80] sm:$0xff]
        %v684 = vld [vmem:[%s436 + $0x88] sm:$0xff]
        %v685 = vld [vmem:[%s436 + $0x90] sm:$0xff]
        %v686 = vld [vmem:[%s436 + $0x98] sm:$0xff]
        %v687 = vld [vmem:[%s436 + $0xa0] sm:$0xff]
        %v688 = vld [vmem:[%s436 + $0xa8] sm:$0xff]
        %v689 = vld [vmem:[%s436 + $0xb0] sm:$0xff]
        %v690 = vld [vmem:[%s436 + $0xb8] sm:$0xff]
        %v691 = vld [vmem:[%s436 + $0xc0] sm:$0xff]
        %v692 = vld [vmem:[%s436 + $0xc8] sm:$0xff]
        %v693 = vld [vmem:[%s436 + $0xd0] sm:$0xff]
        %v694 = vld [vmem:[%s436 + $0xd8] sm:$0xff]
        %v695 = vld [vmem:[%s436 + $0xe0] sm:$0xff]
        %v696 = vld [vmem:[%s436 + $0xe8] sm:$0xff]
        %v697 = vld [vmem:[%s436 + $0xf0] sm:$0xff]
        %v698 = vld [vmem:[%s436 + $0xf8] sm:$0xff]
        %v699 = vld [vmem:[%s436 + $0x100] sm:$0xff]
        %v700 = vld [vmem:[%s436 + $0x108] sm:$0xff]
        %v701 = vld [vmem:[%s436 + $0x110] sm:$0xff]
        %v702 = vld [vmem:[%s436 + $0x118] sm:$0xff]
        %v703 = vld [vmem:[%s436 + $0x120] sm:$0xff]
        %v704 = vld [vmem:[%s436 + $0x128] sm:$0xff]
        %v705 = vld [vmem:[%s436 + $0x130] sm:$0xff]
        %v706 = vld [vmem:[%s436 + $0x138] sm:$0xff]
        %v707 = vld [vmem:[%s436 + $0x140] sm:$0xff]
        %v708 = vld [vmem:[%s436 + $0x148] sm:$0xff]
        %v709 = vld [vmem:[%s436 + $0x150] sm:$0xff]
        %v710 = vld [vmem:[%s436 + $0x158] sm:$0xff]
        %v711 = vld [vmem:[%s436 + $0x160] sm:$0xff]
        %v712 = vld [vmem:[%s436 + $0x168] sm:$0xff]
        %v713 = vld [vmem:[%s436 + $0x170] sm:$0xff]
        %v714 = vld [vmem:[%s436 + $0x178] sm:$0xff]
        %v715 = vld [vmem:[%s436 + $0x180] sm:$0xff]
        %v716 = vld [vmem:[%s436 + $0x188] sm:$0xff]
        %v717 = vld [vmem:[%s436 + $0x190] sm:$0xff]
        %v718 = vld [vmem:[%s436 + $0x198] sm:$0xff]
        %v719 = vld [vmem:[%s436 + $0x1a0] sm:$0xff]
        %v720 = vld [vmem:[%s436 + $0x1a8] sm:$0xff]
        %v721 = vld [vmem:[%s436 + $0x1b0] sm:$0xff]
        %v722 = vld [vmem:[%s436 + $0x1b8] sm:$0xff]
        %v723 = vld [vmem:[%s436 + $0x1c0] sm:$0xff]
        %v724 = vld [vmem:[%s436 + $0x1c8] sm:$0xff]
        %v725 = vld [vmem:[%s436 + $0x1d0] sm:$0xff]
        %v726 = vld [vmem:[%s436 + $0x1d8] sm:$0xff]
        %v727 = vld [vmem:[%s436 + $0x1e0] sm:$0xff]
        %v728 = vld [vmem:[%s436 + $0x1e8] sm:$0xff]
        %v729 = vld [vmem:[%s436 + $0x1f0] sm:$0xff]
        %v730 = vld [vmem:[%s436 + $0x1f8] sm:$0xff]
        %v731 = vld [vmem:[%s436 + $0x200] sm:$0xff]
        %v732 = vld [vmem:[%s436 + $0x208] sm:$0xff]
        %v733 = vld [vmem:[%s436 + $0x210] sm:$0xff]
        %v734 = vld [vmem:[%s436 + $0x218] sm:$0xff]
        %v735 = vld [vmem:[%s436 + $0x220] sm:$0xff]
        %v736 = vld [vmem:[%s436 + $0x228] sm:$0xff]
        %v737 = vld [vmem:[%s436 + $0x230] sm:$0xff]
        %v738 = vld [vmem:[%s436 + $0x238] sm:$0xff]
        %v739 = vld [vmem:[%s436 + $0x240] sm:$0xff]
        %v740 = vld [vmem:[%s436 + $0x248] sm:$0xff]
        %v741 = vld [vmem:[%s436 + $0x250] sm:$0xff]
        %v742 = vld [vmem:[%s436 + $0x258] sm:$0xff]
        %v743 = vld [vmem:[%s436 + $0x260] sm:$0xff]
        %v744 = vld [vmem:[%s436 + $0x268] sm:$0xff]
        %v745 = vld [vmem:[%s436 + $0x270] sm:$0xff]
        %v746 = vld [vmem:[%s436 + $0x278] sm:$0xff]
        %v747 = vld [vmem:[%s436 + $0x280] sm:$0xff]
        %v748 = vld [vmem:[%s436 + $0x288] sm:$0xff]
        %v749 = vld [vmem:[%s436 + $0x290] sm:$0xff]
        %v750 = vld [vmem:[%s436 + $0x298] sm:$0xff]
        %v751 = vld [vmem:[%s436 + $0x2a0] sm:$0xff]
        %v752 = vld [vmem:[%s436 + $0x2a8] sm:$0xff]
        %v753 = vld [vmem:[%s436 + $0x2b0] sm:$0xff]
        %v754 = vld [vmem:[%s436 + $0x2b8] sm:$0xff]
        %v755 = vld [vmem:[%s436 + $0x2c0] sm:$0xff]
        %v756 = vld [vmem:[%s436 + $0x2c8] sm:$0xff]
        %v757 = vld [vmem:[%s436 + $0x2d0] sm:$0xff]
        %v758 = vld [vmem:[%s436 + $0x2d8] sm:$0xff]
        %v759 = vld [vmem:[%s436 + $0x2e0] sm:$0xff]
        %v760 = vld [vmem:[%s436 + $0x2e8] sm:$0xff]
        %v761 = vld [vmem:[%s436 + $0x2f0] sm:$0xff]
        %v762 = vld [vmem:[%s436 + $0x2f8] sm:$0xff]
        %v763 = vld [vmem:[%s436 + $0x300] sm:$0xff]
        %v764 = vld [vmem:[%s436 + $0x308] sm:$0xff]
        %v765 = vld [vmem:[%s436 + $0x310] sm:$0xff]
        %v766 = vld [vmem:[%s436 + $0x318] sm:$0xff]
        %v767 = vld [vmem:[%s436 + $0x320] sm:$0xff]
        %v768 = vld [vmem:[%s436 + $0x328] sm:$0xff]
        %v769 = vld [vmem:[%s436 + $0x330] sm:$0xff]
        %v770 = vld [vmem:[%s436 + $0x338] sm:$0xff]
        %v771 = vld [vmem:[%s436 + $0x340] sm:$0xff]
        %v772 = vld [vmem:[%s436 + $0x348] sm:$0xff]
        %v773 = vld [vmem:[%s436 + $0x350] sm:$0xff]
        %v774 = vld [vmem:[%s436 + $0x358] sm:$0xff]
        %v775 = vld [vmem:[%s436 + $0x360] sm:$0xff]
        %v776 = vld [vmem:[%s436 + $0x368] sm:$0xff]
        %v777 = vld [vmem:[%s436 + $0x370] sm:$0xff]
        %v778 = vld [vmem:[%s436 + $0x378] sm:$0xff]
        %v779 = vld [vmem:[%s436 + $0x380] sm:$0xff]
        %v780 = vld [vmem:[%s436 + $0x388] sm:$0xff]
        %v781 = vld [vmem:[%s436 + $0x390] sm:$0xff]
        %v782 = vld [vmem:[%s436 + $0x398] sm:$0xff]
        %v783 = vld [vmem:[%s436 + $0x3a0] sm:$0xff]
        %v784 = vld [vmem:[%s436 + $0x3a8] sm:$0xff]
        %v785 = vld [vmem:[%s436 + $0x3b0] sm:$0xff]
        %v786 = vld [vmem:[%s436 + $0x3b8] sm:$0xff]
        %v787 = vld [vmem:[%s436 + $0x3c0] sm:$0xff]
        %v788 = vld [vmem:[%s436 + $0x3c8] sm:$0xff]
        %v789 = vld [vmem:[%s436 + $0x3d0] sm:$0xff]
        %v790 = vld [vmem:[%s436 + $0x3d8] sm:$0xff]
        %v791 = vld [vmem:[%s436 + $0x3e0] sm:$0xff]
        %v792 = vld [vmem:[%s436 + $0x3e8] sm:$0xff]
        %v793 = vld [vmem:[%s436 + $0x3f0] sm:$0xff]
        %v794 = vld [vmem:[%s436 + $0x3f8] sm:$0xff]
        %v923 = vunpack.c.l.b16 %v667
        %v924 = vunpack.c.h.b16 %v667
        %v925 = vunpack.c.l.b16 %v668
        %v926 = vunpack.c.h.b16 %v668
        %v927 = vunpack.c.l.b16 %v669
        %v928 = vunpack.c.h.b16 %v669
        %v929 = vunpack.c.l.b16 %v670
        %v930 = vunpack.c.h.b16 %v670
        %v931 = vunpack.c.l.b16 %v671
        %v932 = vunpack.c.h.b16 %v671
        %v933 = vunpack.c.l.b16 %v672
        %v934 = vunpack.c.h.b16 %v672
        %v935 = vunpack.c.l.b16 %v673
        %v936 = vunpack.c.h.b16 %v673
        %v937 = vunpack.c.l.b16 %v674
        %v938 = vunpack.c.h.b16 %v674
        %v939 = vunpack.c.l.b16 %v675
        %v940 = vunpack.c.h.b16 %v675
        %v941 = vunpack.c.l.b16 %v676
        %v942 = vunpack.c.h.b16 %v676
        %v943 = vunpack.c.l.b16 %v677
        %v944 = vunpack.c.h.b16 %v677
        %v945 = vunpack.c.l.b16 %v678
        %v946 = vunpack.c.h.b16 %v678
        %v947 = vunpack.c.l.b16 %v679
        %v948 = vunpack.c.h.b16 %v679
        %v949 = vunpack.c.l.b16 %v680
        %v950 = vunpack.c.h.b16 %v680
        %v951 = vunpack.c.l.b16 %v681
        %v952 = vunpack.c.h.b16 %v681
        %v953 = vunpack.c.l.b16 %v682
        %v954 = vunpack.c.h.b16 %v682
        %v955 = vunpack.c.l.b16 %v683
        %v956 = vunpack.c.h.b16 %v683
        %v957 = vunpack.c.l.b16 %v684
        %v958 = vunpack.c.h.b16 %v684
        %v959 = vunpack.c.l.b16 %v685
        %v960 = vunpack.c.h.b16 %v685
        %v961 = vunpack.c.l.b16 %v686
        %v962 = vunpack.c.h.b16 %v686
        %v963 = vunpack.c.l.b16 %v687
        %v964 = vunpack.c.h.b16 %v687
        %v965 = vunpack.c.l.b16 %v688
        %v966 = vunpack.c.h.b16 %v688
        %v967 = vunpack.c.l.b16 %v689
        %v968 = vunpack.c.h.b16 %v689
        %v969 = vunpack.c.l.b16 %v690
        %v970 = vunpack.c.h.b16 %v690
        %v971 = vunpack.c.l.b16 %v691
        %v972 = vunpack.c.h.b16 %v691
        %v973 = vunpack.c.l.b16 %v692
        %v974 = vunpack.c.h.b16 %v692
        %v975 = vunpack.c.l.b16 %v693
        %v976 = vunpack.c.h.b16 %v693
        %v977 = vunpack.c.l.b16 %v694
        %v978 = vunpack.c.h.b16 %v694
        %v979 = vunpack.c.l.b16 %v695
        %v980 = vunpack.c.h.b16 %v695
        %v981 = vunpack.c.l.b16 %v696
        %v982 = vunpack.c.h.b16 %v696
        %v983 = vunpack.c.l.b16 %v697
        %v984 = vunpack.c.h.b16 %v697
        %v985 = vunpack.c.l.b16 %v698
        %v986 = vunpack.c.h.b16 %v698
        %v987 = vunpack.c.l.b16 %v699
        %v988 = vunpack.c.h.b16 %v699
        %v989 = vunpack.c.l.b16 %v700
        %v990 = vunpack.c.h.b16 %v700
        %v991 = vunpack.c.l.b16 %v701
        %v992 = vunpack.c.h.b16 %v701
        %v993 = vunpack.c.l.b16 %v702
        %v994 = vunpack.c.h.b16 %v702
        %v995 = vunpack.c.l.b16 %v703
        %v996 = vunpack.c.h.b16 %v703
        %v997 = vunpack.c.l.b16 %v704
        %v998 = vunpack.c.h.b16 %v704
        %v999 = vunpack.c.l.b16 %v705
        %v1000 = vunpack.c.h.b16 %v705
        %v1001 = vunpack.c.l.b16 %v706
        %v1002 = vunpack.c.h.b16 %v706
        %v1003 = vunpack.c.l.b16 %v707
        %v1004 = vunpack.c.h.b16 %v707
        %v1005 = vunpack.c.l.b16 %v708
        %v1006 = vunpack.c.h.b16 %v708
        %v1007 = vunpack.c.l.b16 %v709
        %v1008 = vunpack.c.h.b16 %v709
        %v1009 = vunpack.c.l.b16 %v710
        %v1010 = vunpack.c.h.b16 %v710
        %v1011 = vunpack.c.l.b16 %v711
        %v1012 = vunpack.c.h.b16 %v711
        %v1013 = vunpack.c.l.b16 %v712
        %v1014 = vunpack.c.h.b16 %v712
        %v1015 = vunpack.c.l.b16 %v713
        %v1016 = vunpack.c.h.b16 %v713
        %v1017 = vunpack.c.l.b16 %v714
        %v1018 = vunpack.c.h.b16 %v714
        %v1019 = vunpack.c.l.b16 %v715
        %v1020 = vunpack.c.h.b16 %v715
        %v1021 = vunpack.c.l.b16 %v716
        %v1022 = vunpack.c.h.b16 %v716
        %v1023 = vunpack.c.l.b16 %v717
        %v1024 = vunpack.c.h.b16 %v717
        %v1025 = vunpack.c.l.b16 %v718
        %v1026 = vunpack.c.h.b16 %v718
        %v1027 = vunpack.c.l.b16 %v719
        %v1028 = vunpack.c.h.b16 %v719
        %v1029 = vunpack.c.l.b16 %v720
        %v1030 = vunpack.c.h.b16 %v720
        %v1031 = vunpack.c.l.b16 %v721
        %v1032 = vunpack.c.h.b16 %v721
        %v1033 = vunpack.c.l.b16 %v722
        %v1034 = vunpack.c.h.b16 %v722
        %v1035 = vunpack.c.l.b16 %v723
        %v1036 = vunpack.c.h.b16 %v723
        %v1037 = vunpack.c.l.b16 %v724
        %v1038 = vunpack.c.h.b16 %v724
        %v1039 = vunpack.c.l.b16 %v725
        %v1040 = vunpack.c.h.b16 %v725
        %v1041 = vunpack.c.l.b16 %v726
        %v1042 = vunpack.c.h.b16 %v726
        %v1043 = vunpack.c.l.b16 %v727
        %v1044 = vunpack.c.h.b16 %v727
        %v1045 = vunpack.c.l.b16 %v728
        %v1046 = vunpack.c.h.b16 %v728
        %v1047 = vunpack.c.l.b16 %v729
        %v1048 = vunpack.c.h.b16 %v729
        %v1049 = vunpack.c.l.b16 %v730
        %v1050 = vunpack.c.h.b16 %v730
        %v1051 = vunpack.c.l.b16 %v731
        %v1052 = vunpack.c.h.b16 %v731
        %v1053 = vunpack.c.l.b16 %v732
        %v1054 = vunpack.c.h.b16 %v732
        %v1055 = vunpack.c.l.b16 %v733
        %v1056 = vunpack.c.h.b16 %v733
        %v1057 = vunpack.c.l.b16 %v734
        %v1058 = vunpack.c.h.b16 %v734
        %v1059 = vunpack.c.l.b16 %v735
        %v1060 = vunpack.c.h.b16 %v735
        %v1061 = vunpack.c.l.b16 %v736
        %v1062 = vunpack.c.h.b16 %v736
        %v1063 = vunpack.c.l.b16 %v737
        %v1064 = vunpack.c.h.b16 %v737
        %v1065 = vunpack.c.l.b16 %v738
        %v1066 = vunpack.c.h.b16 %v738
        %v1067 = vunpack.c.l.b16 %v739
        %v1068 = vunpack.c.h.b16 %v739
        %v1069 = vunpack.c.l.b16 %v740
        %v1070 = vunpack.c.h.b16 %v740
        %v1071 = vunpack.c.l.b16 %v741
        %v1072 = vunpack.c.h.b16 %v741
        %v1073 = vunpack.c.l.b16 %v742
        %v1074 = vunpack.c.h.b16 %v742
        %v1075 = vunpack.c.l.b16 %v743
        %v1076 = vunpack.c.h.b16 %v743
        %v1077 = vunpack.c.l.b16 %v744
        %v1078 = vunpack.c.h.b16 %v744
        %v1079 = vunpack.c.l.b16 %v745
        %v1080 = vunpack.c.h.b16 %v745
        %v1081 = vunpack.c.l.b16 %v746
        %v1082 = vunpack.c.h.b16 %v746
        %v1083 = vunpack.c.l.b16 %v747
        %v1084 = vunpack.c.h.b16 %v747
        %v1085 = vunpack.c.l.b16 %v748
        %v1086 = vunpack.c.h.b16 %v748
        %v1087 = vunpack.c.l.b16 %v749
        %v1088 = vunpack.c.h.b16 %v749
        %v1089 = vunpack.c.l.b16 %v750
        %v1090 = vunpack.c.h.b16 %v750
        %v1091 = vunpack.c.l.b16 %v751
        %v1092 = vunpack.c.h.b16 %v751
        %v1093 = vunpack.c.l.b16 %v752
        %v1094 = vunpack.c.h.b16 %v752
        %v1095 = vunpack.c.l.b16 %v753
        %v1096 = vunpack.c.h.b16 %v753
        %v1097 = vunpack.c.l.b16 %v754
        %v1098 = vunpack.c.h.b16 %v754
        %v1099 = vunpack.c.l.b16 %v755
        %v1100 = vunpack.c.h.b16 %v755
        %v1101 = vunpack.c.l.b16 %v756
        %v1102 = vunpack.c.h.b16 %v756
        %v1103 = vunpack.c.l.b16 %v757
        %v1104 = vunpack.c.h.b16 %v757
        %v1105 = vunpack.c.l.b16 %v758
        %v1106 = vunpack.c.h.b16 %v758
        %v1107 = vunpack.c.l.b16 %v759
        %v1108 = vunpack.c.h.b16 %v759
        %v1109 = vunpack.c.l.b16 %v760
        %v1110 = vunpack.c.h.b16 %v760
        %v1111 = vunpack.c.l.b16 %v761
        %v1112 = vunpack.c.h.b16 %v761
        %v1113 = vunpack.c.l.b16 %v762
        %v1114 = vunpack.c.h.b16 %v762
        %v1115 = vunpack.c.l.b16 %v763
        %v1116 = vunpack.c.h.b16 %v763
        %v1117 = vunpack.c.l.b16 %v764
        %v1118 = vunpack.c.h.b16 %v764
        %v1119 = vunpack.c.l.b16 %v765
        %v1120 = vunpack.c.h.b16 %v765
        %v1121 = vunpack.c.l.b16 %v766
        %v1122 = vunpack.c.h.b16 %v766
        %v1123 = vunpack.c.l.b16 %v767
        %v1124 = vunpack.c.h.b16 %v767
        %v1125 = vunpack.c.l.b16 %v768
        %v1126 = vunpack.c.h.b16 %v768
        %v1127 = vunpack.c.l.b16 %v769
        %v1128 = vunpack.c.h.b16 %v769
        %v1129 = vunpack.c.l.b16 %v770
        %v1130 = vunpack.c.h.b16 %v770
        %v1131 = vunpack.c.l.b16 %v771
        %v1132 = vunpack.c.h.b16 %v771
        %v1133 = vunpack.c.l.b16 %v772
        %v1134 = vunpack.c.h.b16 %v772
        %v1135 = vunpack.c.l.b16 %v773
        %v1136 = vunpack.c.h.b16 %v773
        %v1137 = vunpack.c.l.b16 %v774
        %v1138 = vunpack.c.h.b16 %v774
        %v1139 = vunpack.c.l.b16 %v775
        %v1140 = vunpack.c.h.b16 %v775
        %v1141 = vunpack.c.l.b16 %v776
        %v1142 = vunpack.c.h.b16 %v776
        %v1143 = vunpack.c.l.b16 %v777
        %v1144 = vunpack.c.h.b16 %v777
        %v1145 = vunpack.c.l.b16 %v778
        %v1146 = vunpack.c.h.b16 %v778
        %v1147 = vunpack.c.l.b16 %v779
        %v1148 = vunpack.c.h.b16 %v779
        %v1149 = vunpack.c.l.b16 %v780
        %v1150 = vunpack.c.h.b16 %v780
        %v1151 = vunpack.c.l.b16 %v781
        %v1152 = vunpack.c.h.b16 %v781
        %v1153 = vunpack.c.l.b16 %v782
        %v1154 = vunpack.c.h.b16 %v782
        %v1155 = vunpack.c.l.b16 %v783
        %v1156 = vunpack.c.h.b16 %v783
        %v1157 = vunpack.c.l.b16 %v784
        %v1158 = vunpack.c.h.b16 %v784
        %v1159 = vunpack.c.l.b16 %v785
        %v1160 = vunpack.c.h.b16 %v785
        %v1161 = vunpack.c.l.b16 %v786
        %v1162 = vunpack.c.h.b16 %v786
        %v1163 = vunpack.c.l.b16 %v787
        %v1164 = vunpack.c.h.b16 %v787
        %v1165 = vunpack.c.l.b16 %v788
        %v1166 = vunpack.c.h.b16 %v788
        %v1167 = vunpack.c.l.b16 %v789
        %v1168 = vunpack.c.h.b16 %v789
        %v1169 = vunpack.c.l.b16 %v790
        %v1170 = vunpack.c.h.b16 %v790
        %v1171 = vunpack.c.l.b16 %v791
        %v1172 = vunpack.c.h.b16 %v791
        %v1173 = vunpack.c.l.b16 %v792
        %v1174 = vunpack.c.h.b16 %v792
        %v1175 = vunpack.c.l.b16 %v793
        %v1176 = vunpack.c.h.b16 %v793
        %v1177 = vunpack.c.l.b16 %v794
        %v1178 = vunpack.c.h.b16 %v794
        %v1179 = vpack.c.b16 %v927, %v923
        %v1180 = vpack.c.b16 %v928, %v924
        %v1181 = vpack.c.b16 %v929, %v925
        %v1182 = vpack.c.b16 %v930, %v926
        %v1183 = vpack.c.b16 %v935, %v931
        %v1184 = vpack.c.b16 %v936, %v932
        %v1185 = vpack.c.b16 %v937, %v933
        %v1186 = vpack.c.b16 %v938, %v934
        %v1187 = vpack.c.b16 %v943, %v939
        %v1188 = vpack.c.b16 %v944, %v940
        %v1189 = vpack.c.b16 %v945, %v941
        %v1190 = vpack.c.b16 %v946, %v942
        %v1191 = vpack.c.b16 %v951, %v947
        %v1192 = vpack.c.b16 %v952, %v948
        %v1193 = vpack.c.b16 %v953, %v949
        %v1194 = vpack.c.b16 %v954, %v950
        %v1195 = vpack.c.b16 %v959, %v955
        %v1196 = vpack.c.b16 %v960, %v956
        %v1197 = vpack.c.b16 %v961, %v957
        %v1198 = vpack.c.b16 %v962, %v958
        %v1199 = vpack.c.b16 %v967, %v963
        %v1200 = vpack.c.b16 %v968, %v964
        %v1201 = vpack.c.b16 %v969, %v965
        %v1202 = vpack.c.b16 %v970, %v966
        %v1203 = vpack.c.b16 %v975, %v971
        %v1204 = vpack.c.b16 %v976, %v972
        %v1205 = vpack.c.b16 %v977, %v973
        %v1206 = vpack.c.b16 %v978, %v974
        %v1207 = vpack.c.b16 %v983, %v979
        %v1208 = vpack.c.b16 %v984, %v980
        %v1209 = vpack.c.b16 %v985, %v981
        %v1210 = vpack.c.b16 %v986, %v982
        %v1211 = vpack.c.b16 %v991, %v987
        %v1212 = vpack.c.b16 %v992, %v988
        %v1213 = vpack.c.b16 %v993, %v989
        %v1214 = vpack.c.b16 %v994, %v990
        %v1215 = vpack.c.b16 %v999, %v995
        %v1216 = vpack.c.b16 %v1000, %v996
        %v1217 = vpack.c.b16 %v1001, %v997
        %v1218 = vpack.c.b16 %v1002, %v998
        %v1219 = vpack.c.b16 %v1007, %v1003
        %v1220 = vpack.c.b16 %v1008, %v1004
        %v1221 = vpack.c.b16 %v1009, %v1005
        %v1222 = vpack.c.b16 %v1010, %v1006
        %v1223 = vpack.c.b16 %v1015, %v1011
        %v1224 = vpack.c.b16 %v1016, %v1012
        %v1225 = vpack.c.b16 %v1017, %v1013
        %v1226 = vpack.c.b16 %v1018, %v1014
        %v1227 = vpack.c.b16 %v1023, %v1019
        %v1228 = vpack.c.b16 %v1024, %v1020
        %v1229 = vpack.c.b16 %v1025, %v1021
        %v1230 = vpack.c.b16 %v1026, %v1022
        %v1231 = vpack.c.b16 %v1031, %v1027
        %v1232 = vpack.c.b16 %v1032, %v1028
        %v1233 = vpack.c.b16 %v1033, %v1029
        %v1234 = vpack.c.b16 %v1034, %v1030
        %v1235 = vpack.c.b16 %v1039, %v1035
        %v1236 = vpack.c.b16 %v1040, %v1036
        %v1237 = vpack.c.b16 %v1041, %v1037
        %v1238 = vpack.c.b16 %v1042, %v1038
        %v1239 = vpack.c.b16 %v1047, %v1043
        %v1240 = vpack.c.b16 %v1048, %v1044
        %v1241 = vpack.c.b16 %v1049, %v1045
        %v1242 = vpack.c.b16 %v1050, %v1046
        %v1243 = vpack.c.b16 %v1055, %v1051
        %v1244 = vpack.c.b16 %v1056, %v1052
        %v1245 = vpack.c.b16 %v1057, %v1053
        %v1246 = vpack.c.b16 %v1058, %v1054
        %v1247 = vpack.c.b16 %v1063, %v1059
        %v1248 = vpack.c.b16 %v1064, %v1060
        %v1249 = vpack.c.b16 %v1065, %v1061
        %v1250 = vpack.c.b16 %v1066, %v1062
        %v1251 = vpack.c.b16 %v1071, %v1067
        %v1252 = vpack.c.b16 %v1072, %v1068
        %v1253 = vpack.c.b16 %v1073, %v1069
        %v1254 = vpack.c.b16 %v1074, %v1070
        %v1255 = vpack.c.b16 %v1079, %v1075
        %v1256 = vpack.c.b16 %v1080, %v1076
        %v1257 = vpack.c.b16 %v1081, %v1077
        %v1258 = vpack.c.b16 %v1082, %v1078
        %v1259 = vpack.c.b16 %v1087, %v1083
        %v1260 = vpack.c.b16 %v1088, %v1084
        %v1261 = vpack.c.b16 %v1089, %v1085
        %v1262 = vpack.c.b16 %v1090, %v1086
        %v1263 = vpack.c.b16 %v1095, %v1091
        %v1264 = vpack.c.b16 %v1096, %v1092
        %v1265 = vpack.c.b16 %v1097, %v1093
        %v1266 = vpack.c.b16 %v1098, %v1094
        %v1267 = vpack.c.b16 %v1103, %v1099
        %v1268 = vpack.c.b16 %v1104, %v1100
        %v1269 = vpack.c.b16 %v1105, %v1101
        %v1270 = vpack.c.b16 %v1106, %v1102
        %v1271 = vpack.c.b16 %v1111, %v1107
        %v1272 = vpack.c.b16 %v1112, %v1108
        %v1273 = vpack.c.b16 %v1113, %v1109
        %v1274 = vpack.c.b16 %v1114, %v1110
        %v1275 = vpack.c.b16 %v1119, %v1115
        %v1276 = vpack.c.b16 %v1120, %v1116
        %v1277 = vpack.c.b16 %v1121, %v1117
        %v1278 = vpack.c.b16 %v1122, %v1118
        %v1279 = vpack.c.b16 %v1127, %v1123
        %v1280 = vpack.c.b16 %v1128, %v1124
        %v1281 = vpack.c.b16 %v1129, %v1125
        %v1282 = vpack.c.b16 %v1130, %v1126
        %v1283 = vpack.c.b16 %v1135, %v1131
        %v1284 = vpack.c.b16 %v1136, %v1132
        %v1285 = vpack.c.b16 %v1137, %v1133
        %v1286 = vpack.c.b16 %v1138, %v1134
        %v1287 = vpack.c.b16 %v1143, %v1139
        %v1288 = vpack.c.b16 %v1144, %v1140
        %v1289 = vpack.c.b16 %v1145, %v1141
        %v1290 = vpack.c.b16 %v1146, %v1142
        %v1291 = vpack.c.b16 %v1151, %v1147
        %v1292 = vpack.c.b16 %v1152, %v1148
        %v1293 = vpack.c.b16 %v1153, %v1149
        %v1294 = vpack.c.b16 %v1154, %v1150
        %v1295 = vpack.c.b16 %v1159, %v1155
        %v1296 = vpack.c.b16 %v1160, %v1156
        %v1297 = vpack.c.b16 %v1161, %v1157
        %v1298 = vpack.c.b16 %v1162, %v1158
        %v1299 = vpack.c.b16 %v1167, %v1163
        %v1300 = vpack.c.b16 %v1168, %v1164
        %v1301 = vpack.c.b16 %v1169, %v1165
        %v1302 = vpack.c.b16 %v1170, %v1166
        %v1303 = vpack.c.b16 %v1175, %v1171
        %v1304 = vpack.c.b16 %v1176, %v1172
        %v1305 = vpack.c.b16 %v1177, %v1173
        %v1306 = vpack.c.b16 %v1178, %v1174
        %v1499 = vunpack.c.l.b16 %v539
        %v1500 = vunpack.c.l.b16 %v540
        %v1501 = vunpack.c.l.b16 %v541
        %v1502 = vunpack.c.l.b16 %v542
        %v1503 = vunpack.c.l.b16 %v543
        %v1504 = vunpack.c.l.b16 %v544
        %v1505 = vunpack.c.l.b16 %v545
        %v1506 = vunpack.c.l.b16 %v546
        %v1507 = vunpack.c.l.b16 %v547
        %v1508 = vunpack.c.l.b16 %v548
        %v1509 = vunpack.c.l.b16 %v549
        %v1510 = vunpack.c.l.b16 %v550
        %v1511 = vunpack.c.l.b16 %v551
        %v1512 = vunpack.c.l.b16 %v552
        %v1513 = vunpack.c.l.b16 %v553
        %v1514 = vunpack.c.l.b16 %v554
        %v1515 = vunpack.c.l.b16 %v555
        %v1516 = vunpack.c.l.b16 %v556
        %v1517 = vunpack.c.l.b16 %v557
        %v1518 = vunpack.c.l.b16 %v558
        %v1519 = vunpack.c.l.b16 %v559
        %v1520 = vunpack.c.l.b16 %v560
        %v1521 = vunpack.c.l.b16 %v561
        %v1522 = vunpack.c.l.b16 %v562
        %v1523 = vunpack.c.l.b16 %v563
        %v1524 = vunpack.c.l.b16 %v564
        %v1525 = vunpack.c.l.b16 %v565
        %v1526 = vunpack.c.l.b16 %v566
        %v1527 = vunpack.c.l.b16 %v567
        %v1528 = vunpack.c.l.b16 %v568
        %v1529 = vunpack.c.l.b16 %v569
        %v1530 = vunpack.c.l.b16 %v570
        %v1531 = vunpack.c.l.b16 %v571
        %v1532 = vunpack.c.l.b16 %v572
        %v1533 = vunpack.c.l.b16 %v573
        %v1534 = vunpack.c.l.b16 %v574
        %v1535 = vunpack.c.l.b16 %v575
        %v1536 = vunpack.c.l.b16 %v576
        %v1537 = vunpack.c.l.b16 %v577
        %v1538 = vunpack.c.l.b16 %v578
        %v1539 = vunpack.c.l.b16 %v579
        %v1540 = vunpack.c.l.b16 %v580
        %v1541 = vunpack.c.l.b16 %v581
        %v1542 = vunpack.c.l.b16 %v582
        %v1543 = vunpack.c.l.b16 %v583
        %v1544 = vunpack.c.l.b16 %v584
        %v1545 = vunpack.c.l.b16 %v585
        %v1546 = vunpack.c.l.b16 %v586
        %v1547 = vunpack.c.l.b16 %v587
        %v1548 = vunpack.c.l.b16 %v588
        %v1549 = vunpack.c.l.b16 %v589
        %v1550 = vunpack.c.l.b16 %v590
        %v1551 = vunpack.c.l.b16 %v591
        %v1552 = vunpack.c.l.b16 %v592
        %v1553 = vunpack.c.l.b16 %v593
        %v1554 = vunpack.c.l.b16 %v594
        %v1555 = vunpack.c.l.b16 %v595
        %v1556 = vunpack.c.l.b16 %v596
        %v1557 = vunpack.c.l.b16 %v597
        %v1558 = vunpack.c.l.b16 %v598
        %v1559 = vunpack.c.l.b16 %v599
        %v1560 = vunpack.c.l.b16 %v600
        %v1561 = vunpack.c.l.b16 %v601
        %v1562 = vunpack.c.l.b16 %v602
        %v1563 = vpack.c.b16 %v1500, %v1499
        %v1564 = vpack.c.b16 %v1502, %v1501
        %v1565 = vpack.c.b16 %v1504, %v1503
        %v1566 = vpack.c.b16 %v1506, %v1505
        %v1567 = vpack.c.b16 %v1508, %v1507
        %v1568 = vpack.c.b16 %v1510, %v1509
        %v1569 = vpack.c.b16 %v1512, %v1511
        %v1570 = vpack.c.b16 %v1514, %v1513
        %v1571 = vpack.c.b16 %v1516, %v1515
        %v1572 = vpack.c.b16 %v1518, %v1517
        %v1573 = vpack.c.b16 %v1520, %v1519
        %v1574 = vpack.c.b16 %v1522, %v1521
        %v1575 = vpack.c.b16 %v1524, %v1523
        %v1576 = vpack.c.b16 %v1526, %v1525
        %v1577 = vpack.c.b16 %v1528, %v1527
        %v1578 = vpack.c.b16 %v1530, %v1529
        %v1579 = vpack.c.b16 %v1532, %v1531
        %v1580 = vpack.c.b16 %v1534, %v1533
        %v1581 = vpack.c.b16 %v1536, %v1535
        %v1582 = vpack.c.b16 %v1538, %v1537
        %v1583 = vpack.c.b16 %v1540, %v1539
        %v1584 = vpack.c.b16 %v1542, %v1541
        %v1585 = vpack.c.b16 %v1544, %v1543
        %v1586 = vpack.c.b16 %v1546, %v1545
        %v1587 = vpack.c.b16 %v1548, %v1547
        %v1588 = vpack.c.b16 %v1550, %v1549
        %v1589 = vpack.c.b16 %v1552, %v1551
        %v1590 = vpack.c.b16 %v1554, %v1553
        %v1591 = vpack.c.b16 %v1556, %v1555
        %v1592 = vpack.c.b16 %v1558, %v1557
        %v1593 = vpack.c.b16 %v1560, %v1559
        %v1594 = vpack.c.b16 %v1562, %v1561
        %1627 = vmatprep.subr.bf16.mxu0 0
        %1628 = vmatpush1.bf16.msra.mxu0 %v1570
        %1629 = vmatprep.subr.bf16.mxu0 0
        %1630 = vmatpush1.bf16.msra.mxu0 %v1569
        %1631 = vmatprep.subr.bf16.mxu0 0
        %1632 = vmatpush1.bf16.msra.mxu0 %v1568
        %1633 = vmatprep.subr.bf16.mxu0 0
        %1634 = vmatpush1.bf16.msra.mxu0 %v1567
        %1635 = vmatprep.subr.bf16.mxu0 0
        %1636 = vmatpush1.bf16.msra.mxu0 %v1566
        %1637 = vmatprep.subr.bf16.mxu0 0
        %1638 = vmatpush1.bf16.msra.mxu0 %v1565
        %1639 = vmatprep.subr.bf16.mxu0 0
        %1640 = vmatpush1.bf16.msra.mxu0 %v1564
        %1641 = vmatprep.subr.bf16.mxu0 0
        %1642 = vmatpush1.bf16.msra.mxu0 %v1563
        %1643 = vmatprep.subr.bf16.mxu0 0
        %1644 = vmatpush2.bf16.msra.mxu0 %v1578
        %1645 = vmatprep.subr.bf16.mxu0 0
        %1646 = vmatpush2.bf16.msra.mxu0 %v1577
        %1647 = vmatprep.subr.bf16.mxu0 0
        %1648 = vmatpush2.bf16.msra.mxu0 %v1576
        %1649 = vmatprep.subr.bf16.mxu0 0
        %1650 = vmatpush2.bf16.msra.mxu0 %v1575
        %1651 = vmatprep.subr.bf16.mxu0 0
        %1652 = vmatpush2.bf16.msra.mxu0 %v1574
        %1653 = vmatprep.subr.bf16.mxu0 0
        %1654 = vmatpush2.bf16.msra.mxu0 %v1573
        %1655 = vmatprep.subr.bf16.mxu0 0
        %1656 = vmatpush2.bf16.msra.mxu0 %v1572
        %1657 = vmatprep.subr.bf16.mxu0 0
        %1658 = vmatpush2.bf16.msra.mxu0 %v1571
        %1659 = vmatprep.mubr.bf16.mxu0 %v1180
        %1660 = vmatmul.mubr.bf16.gmra.mxu0 %v1179
        %v1661 = vpop.f32.mrf.mxu0
        %v1662 = vadd.f32 0.0, %v1661
        %v1663 = vpop.f32.mrf.mxu0
        %v1664 = vpop.f32.mrf.mxu0
        %v1665 = vadd.f32 0.0, %v1664
        %v1666 = vpop.f32.mrf.mxu0
        %1667 = vmatprep.mubr.bf16.mxu0 %v1184
        %1668 = vmatmul.mubr.bf16.gmra.mxu0 %v1183
        %v1669 = vpop.f32.mrf.mxu0
        %v1670 = vadd.f32 0.0, %v1669
        %v1671 = vpop.f32.mrf.mxu0
        %v1672 = vpop.f32.mrf.mxu0
        %v1673 = vadd.f32 0.0, %v1672
        %v1674 = vpop.f32.mrf.mxu0
        %1675 = vmatprep.mubr.bf16.mxu0 %v1188
        %1676 = vmatmul.mubr.bf16.gmra.mxu0 %v1187
        %v1677 = vpop.f32.mrf.mxu0
        %v1678 = vadd.f32 0.0, %v1677
        %v1679 = vpop.f32.mrf.mxu0
        %v1680 = vpop.f32.mrf.mxu0
        %v1681 = vadd.f32 0.0, %v1680
        %v1682 = vpop.f32.mrf.mxu0
        %1683 = vmatprep.mubr.bf16.mxu0 %v1192
        %1684 = vmatmul.mubr.bf16.gmra.mxu0 %v1191
        %v1685 = vpop.f32.mrf.mxu0
        %v1686 = vadd.f32 0.0, %v1685
        %v1687 = vpop.f32.mrf.mxu0
        %v1688 = vpop.f32.mrf.mxu0
        %v1689 = vadd.f32 0.0, %v1688
        %v1690 = vpop.f32.mrf.mxu0
        %1691 = vmatprep.mubr.bf16.mxu0 %v1196
        %1692 = vmatmul.mubr.bf16.gmra.mxu0 %v1195
        %v1693 = vpop.f32.mrf.mxu0
        %v1694 = vadd.f32 0.0, %v1693
        %v1695 = vpop.f32.mrf.mxu0
        %v1696 = vpop.f32.mrf.mxu0
        %v1697 = vadd.f32 0.0, %v1696
        %v1698 = vpop.f32.mrf.mxu0
        %1699 = vmatprep.mubr.bf16.mxu0 %v1200
        %1700 = vmatmul.mubr.bf16.gmra.mxu0 %v1199
        %v1701 = vpop.f32.mrf.mxu0
        %v1702 = vadd.f32 0.0, %v1701
        %v1703 = vpop.f32.mrf.mxu0
        %v1704 = vpop.f32.mrf.mxu0
        %v1705 = vadd.f32 0.0, %v1704
        %v1706 = vpop.f32.mrf.mxu0
        %1707 = vmatprep.mubr.bf16.mxu0 %v1204
        %1708 = vmatmul.mubr.bf16.gmra.mxu0 %v1203
        %v1709 = vpop.f32.mrf.mxu0
        %v1710 = vadd.f32 0.0, %v1709
        %v1711 = vpop.f32.mrf.mxu0
        %v1712 = vpop.f32.mrf.mxu0
        %v1713 = vadd.f32 0.0, %v1712
        %v1714 = vpop.f32.mrf.mxu0
        %1715 = vmatprep.mubr.bf16.mxu0 %v1208
        %1716 = vmatmul.mubr.bf16.gmra.mxu0 %v1207
        %v1717 = vpop.f32.mrf.mxu0
        %v1718 = vadd.f32 0.0, %v1717
        %v1719 = vpop.f32.mrf.mxu0
        %v1720 = vpop.f32.mrf.mxu0
        %v1721 = vadd.f32 0.0, %v1720
        %v1722 = vpop.f32.mrf.mxu0
        %1723 = vmatprep.mubr.bf16.mxu0 %v1212
        %1724 = vmatmul.mubr.bf16.gmra.mxu0 %v1211
        %v1725 = vpop.f32.mrf.mxu0
        %v1726 = vadd.f32 0.0, %v1725
        %v1727 = vpop.f32.mrf.mxu0
        %v1728 = vpop.f32.mrf.mxu0
        %v1729 = vadd.f32 0.0, %v1728
        %v1730 = vpop.f32.mrf.mxu0
        %1731 = vmatprep.mubr.bf16.mxu0 %v1216
        %1732 = vmatmul.mubr.bf16.gmra.mxu0 %v1215
        %v1733 = vpop.f32.mrf.mxu0
        %v1734 = vadd.f32 0.0, %v1733
        %v1735 = vpop.f32.mrf.mxu0
        %v1736 = vpop.f32.mrf.mxu0
        %v1737 = vadd.f32 0.0, %v1736
        %v1738 = vpop.f32.mrf.mxu0
        %1739 = vmatprep.mubr.bf16.mxu0 %v1220
        %1740 = vmatmul.mubr.bf16.gmra.mxu0 %v1219
        %v1741 = vpop.f32.mrf.mxu0
        %v1742 = vadd.f32 0.0, %v1741
        %v1743 = vpop.f32.mrf.mxu0
        %v1744 = vpop.f32.mrf.mxu0
        %v1745 = vadd.f32 0.0, %v1744
        %v1746 = vpop.f32.mrf.mxu0
        %1747 = vmatprep.mubr.bf16.mxu0 %v1224
        %1748 = vmatmul.mubr.bf16.gmra.mxu0 %v1223
        %v1749 = vpop.f32.mrf.mxu0
        %v1750 = vadd.f32 0.0, %v1749
        %v1751 = vpop.f32.mrf.mxu0
        %v1752 = vpop.f32.mrf.mxu0
        %v1753 = vadd.f32 0.0, %v1752
        %v1754 = vpop.f32.mrf.mxu0
        %1755 = vmatprep.mubr.bf16.mxu0 %v1228
        %1756 = vmatmul.mubr.bf16.gmra.mxu0 %v1227
        %v1757 = vpop.f32.mrf.mxu0
        %v1758 = vadd.f32 0.0, %v1757
        %v1759 = vpop.f32.mrf.mxu0
        %v1760 = vpop.f32.mrf.mxu0
        %v1761 = vadd.f32 0.0, %v1760
        %v1762 = vpop.f32.mrf.mxu0
        %1763 = vmatprep.mubr.bf16.mxu0 %v1232
        %1764 = vmatmul.mubr.bf16.gmra.mxu0 %v1231
        %v1765 = vpop.f32.mrf.mxu0
        %v1766 = vadd.f32 0.0, %v1765
        %v1767 = vpop.f32.mrf.mxu0
        %v1768 = vpop.f32.mrf.mxu0
        %v1769 = vadd.f32 0.0, %v1768
        %v1770 = vpop.f32.mrf.mxu0
        %1771 = vmatprep.mubr.bf16.mxu0 %v1236
        %1772 = vmatmul.mubr.bf16.gmra.mxu0 %v1235
        %v1773 = vpop.f32.mrf.mxu0
        %v1774 = vadd.f32 0.0, %v1773
        %v1775 = vpop.f32.mrf.mxu0
        %v1776 = vpop.f32.mrf.mxu0
        %v1777 = vadd.f32 0.0, %v1776
        %v1778 = vpop.f32.mrf.mxu0
        %1779 = vmatprep.mubr.bf16.mxu0 %v1240
        %1780 = vmatmul.mubr.bf16.gmra.mxu0 %v1239
        %v1781 = vpop.f32.mrf.mxu0
        %v1782 = vadd.f32 0.0, %v1781
        %v1783 = vpop.f32.mrf.mxu0
        %v1784 = vpop.f32.mrf.mxu0
        %v1785 = vadd.f32 0.0, %v1784
        %v1786 = vpop.f32.mrf.mxu0
        %1787 = vmatprep.mubr.bf16.mxu0 %v1244
        %1788 = vmatmul.mubr.bf16.gmra.mxu0 %v1243
        %v1789 = vpop.f32.mrf.mxu0
        %v1790 = vadd.f32 0.0, %v1789
        %v1791 = vpop.f32.mrf.mxu0
        %v1792 = vpop.f32.mrf.mxu0
        %v1793 = vadd.f32 0.0, %v1792
        %v1794 = vpop.f32.mrf.mxu0
        %1795 = vmatprep.mubr.bf16.mxu0 %v1248
        %1796 = vmatmul.mubr.bf16.gmra.mxu0 %v1247
        %v1797 = vpop.f32.mrf.mxu0
        %v1798 = vadd.f32 0.0, %v1797
        %v1799 = vpop.f32.mrf.mxu0
        %v1800 = vpop.f32.mrf.mxu0
        %v1801 = vadd.f32 0.0, %v1800
        %v1802 = vpop.f32.mrf.mxu0
        %1803 = vmatprep.mubr.bf16.mxu0 %v1252
        %1804 = vmatmul.mubr.bf16.gmra.mxu0 %v1251
        %v1805 = vpop.f32.mrf.mxu0
        %v1806 = vadd.f32 0.0, %v1805
        %v1807 = vpop.f32.mrf.mxu0
        %v1808 = vpop.f32.mrf.mxu0
        %v1809 = vadd.f32 0.0, %v1808
        %v1810 = vpop.f32.mrf.mxu0
        %1811 = vmatprep.mubr.bf16.mxu0 %v1256
        %1812 = vmatmul.mubr.bf16.gmra.mxu0 %v1255
        %v1813 = vpop.f32.mrf.mxu0
        %v1814 = vadd.f32 0.0, %v1813
        %v1815 = vpop.f32.mrf.mxu0
        %v1816 = vpop.f32.mrf.mxu0
        %v1817 = vadd.f32 0.0, %v1816
        %v1818 = vpop.f32.mrf.mxu0
        %1819 = vmatprep.mubr.bf16.mxu0 %v1260
        %1820 = vmatmul.mubr.bf16.gmra.mxu0 %v1259
        %v1821 = vpop.f32.mrf.mxu0
        %v1822 = vadd.f32 0.0, %v1821
        %v1823 = vpop.f32.mrf.mxu0
        %v1824 = vpop.f32.mrf.mxu0
        %v1825 = vadd.f32 0.0, %v1824
        %v1826 = vpop.f32.mrf.mxu0
        %1827 = vmatprep.mubr.bf16.mxu0 %v1264
        %1828 = vmatmul.mubr.bf16.gmra.mxu0 %v1263
        %v1829 = vpop.f32.mrf.mxu0
        %v1830 = vadd.f32 0.0, %v1829
        %v1831 = vpop.f32.mrf.mxu0
        %v1832 = vpop.f32.mrf.mxu0
        %v1833 = vadd.f32 0.0, %v1832
        %v1834 = vpop.f32.mrf.mxu0
        %1835 = vmatprep.mubr.bf16.mxu0 %v1268
        %1836 = vmatmul.mubr.bf16.gmra.mxu0 %v1267
        %v1837 = vpop.f32.mrf.mxu0
        %v1838 = vadd.f32 0.0, %v1837
        %v1839 = vpop.f32.mrf.mxu0
        %v1840 = vpop.f32.mrf.mxu0
        %v1841 = vadd.f32 0.0, %v1840
        %v1842 = vpop.f32.mrf.mxu0
        %1843 = vmatprep.mubr.bf16.mxu0 %v1272
        %1844 = vmatmul.mubr.bf16.gmra.mxu0 %v1271
        %v1845 = vpop.f32.mrf.mxu0
        %v1846 = vadd.f32 0.0, %v1845
        %v1847 = vpop.f32.mrf.mxu0
        %v1848 = vpop.f32.mrf.mxu0
        %v1849 = vadd.f32 0.0, %v1848
        %v1850 = vpop.f32.mrf.mxu0
        %1851 = vmatprep.mubr.bf16.mxu0 %v1276
        %1852 = vmatmul.mubr.bf16.gmra.mxu0 %v1275
        %v1853 = vpop.f32.mrf.mxu0
        %v1854 = vadd.f32 0.0, %v1853
        %v1855 = vpop.f32.mrf.mxu0
        %v1856 = vpop.f32.mrf.mxu0
        %v1857 = vadd.f32 0.0, %v1856
        %v1858 = vpop.f32.mrf.mxu0
        %1859 = vmatprep.mubr.bf16.mxu0 %v1280
        %1860 = vmatmul.mubr.bf16.gmra.mxu0 %v1279
        %v1861 = vpop.f32.mrf.mxu0
        %v1862 = vadd.f32 0.0, %v1861
        %v1863 = vpop.f32.mrf.mxu0
        %v1864 = vpop.f32.mrf.mxu0
        %v1865 = vadd.f32 0.0, %v1864
        %v1866 = vpop.f32.mrf.mxu0
        %1867 = vmatprep.mubr.bf16.mxu0 %v1284
        %1868 = vmatmul.mubr.bf16.gmra.mxu0 %v1283
        %v1869 = vpop.f32.mrf.mxu0
        %v1870 = vadd.f32 0.0, %v1869
        %v1871 = vpop.f32.mrf.mxu0
        %v1872 = vpop.f32.mrf.mxu0
        %v1873 = vadd.f32 0.0, %v1872
        %v1874 = vpop.f32.mrf.mxu0
        %1875 = vmatprep.mubr.bf16.mxu0 %v1288
        %1876 = vmatmul.mubr.bf16.gmra.mxu0 %v1287
        %v1877 = vpop.f32.mrf.mxu0
        %v1878 = vadd.f32 0.0, %v1877
        %v1879 = vpop.f32.mrf.mxu0
        %v1880 = vpop.f32.mrf.mxu0
        %v1881 = vadd.f32 0.0, %v1880
        %v1882 = vpop.f32.mrf.mxu0
        %1883 = vmatprep.mubr.bf16.mxu0 %v1292
        %1884 = vmatmul.mubr.bf16.gmra.mxu0 %v1291
        %v1885 = vpop.f32.mrf.mxu0
        %v1886 = vadd.f32 0.0, %v1885
        %v1887 = vpop.f32.mrf.mxu0
        %v1888 = vpop.f32.mrf.mxu0
        %v1889 = vadd.f32 0.0, %v1888
        %v1890 = vpop.f32.mrf.mxu0
        %1891 = vmatprep.mubr.bf16.mxu0 %v1296
        %1892 = vmatmul.mubr.bf16.gmra.mxu0 %v1295
        %v1893 = vpop.f32.mrf.mxu0
        %v1894 = vadd.f32 0.0, %v1893
        %v1895 = vpop.f32.mrf.mxu0
        %v1896 = vpop.f32.mrf.mxu0
        %v1897 = vadd.f32 0.0, %v1896
        %v1898 = vpop.f32.mrf.mxu0
        %1899 = vmatprep.mubr.bf16.mxu0 %v1300
        %1900 = vmatmul.mubr.bf16.gmra.mxu0 %v1299
        %v1901 = vpop.f32.mrf.mxu0
        %v1902 = vadd.f32 0.0, %v1901
        %v1903 = vpop.f32.mrf.mxu0
        %v1904 = vpop.f32.mrf.mxu0
        %v1905 = vadd.f32 0.0, %v1904
        %v1906 = vpop.f32.mrf.mxu0
        %1907 = vmatprep.mubr.bf16.mxu0 %v1304
        %1908 = vmatmul.mubr.bf16.gmra.mxu0 %v1303
        %v1909 = vpop.f32.mrf.mxu0
        %v1910 = vadd.f32 0.0, %v1909
        %v1911 = vpop.f32.mrf.mxu0
        %v1912 = vpop.f32.mrf.mxu0
        %v1913 = vadd.f32 0.0, %v1912
        %v1914 = vpop.f32.mrf.mxu0
        %1915 = vdwg.mxu0
        %1916 = vmatprep.subr.bf16.mxu0 0
        %1917 = vmatpush1.bf16.msra.mxu0 %v1586
        %1918 = vmatprep.subr.bf16.mxu0 0
        %1919 = vmatpush1.bf16.msra.mxu0 %v1585
        %1920 = vmatprep.subr.bf16.mxu0 0
        %1921 = vmatpush1.bf16.msra.mxu0 %v1584
        %1922 = vmatprep.subr.bf16.mxu0 0
        %1923 = vmatpush1.bf16.msra.mxu0 %v1583
        %1924 = vmatprep.subr.bf16.mxu0 0
        %1925 = vmatpush1.bf16.msra.mxu0 %v1582
        %1926 = vmatprep.subr.bf16.mxu0 0
        %1927 = vmatpush1.bf16.msra.mxu0 %v1581
        %1928 = vmatprep.subr.bf16.mxu0 0
        %1929 = vmatpush1.bf16.msra.mxu0 %v1580
        %1930 = vmatprep.subr.bf16.mxu0 0
        %1931 = vmatpush1.bf16.msra.mxu0 %v1579
        %1932 = vmatprep.subr.bf16.mxu0 0
        %1933 = vmatpush2.bf16.msra.mxu0 %v1594
        %1934 = vmatprep.subr.bf16.mxu0 0
        %1935 = vmatpush2.bf16.msra.mxu0 %v1593
        %1936 = vmatprep.subr.bf16.mxu0 0
        %1937 = vmatpush2.bf16.msra.mxu0 %v1592
        %1938 = vmatprep.subr.bf16.mxu0 0
        %1939 = vmatpush2.bf16.msra.mxu0 %v1591
        %1940 = vmatprep.subr.bf16.mxu0 0
        %1941 = vmatpush2.bf16.msra.mxu0 %v1590
        %1942 = vmatprep.subr.bf16.mxu0 0
        %1943 = vmatpush2.bf16.msra.mxu0 %v1589
        %1944 = vmatprep.subr.bf16.mxu0 0
        %1945 = vmatpush2.bf16.msra.mxu0 %v1588
        %1946 = vmatprep.subr.bf16.mxu0 0
        %1947 = vmatpush2.bf16.msra.mxu0 %v1587
        %1948 = vmatprep.mubr.bf16.mxu0 %v1182
        %1949 = vmatmul.mubr.bf16.gmra.mxu0 %v1181
        %v1950 = vpop.f32.mrf.mxu0
        %v1951 = vadd.f32 %v1662, %v1950
        %v1952 = vpop.f32.mrf.mxu0
        %v1953 = vpop.f32.mrf.mxu0
        %v1954 = vadd.f32 %v1665, %v1953
        %v1955 = vpop.f32.mrf.mxu0
        %1956 = vmatprep.mubr.bf16.mxu0 %v1186
        %1957 = vmatmul.mubr.bf16.gmra.mxu0 %v1185
        %v1958 = vpop.f32.mrf.mxu0
        %v1959 = vadd.f32 %v1670, %v1958
        %v1960 = vpop.f32.mrf.mxu0
        %v1961 = vpop.f32.mrf.mxu0
        %v1962 = vadd.f32 %v1673, %v1961
        %v1963 = vpop.f32.mrf.mxu0
        %1964 = vmatprep.mubr.bf16.mxu0 %v1190
        %1965 = vmatmul.mubr.bf16.gmra.mxu0 %v1189
        %v1966 = vpop.f32.mrf.mxu0
        %v1967 = vadd.f32 %v1678, %v1966
        %v1968 = vpop.f32.mrf.mxu0
        %v1969 = vpop.f32.mrf.mxu0
        %v1970 = vadd.f32 %v1681, %v1969
        %v1971 = vpop.f32.mrf.mxu0
        %1972 = vmatprep.mubr.bf16.mxu0 %v1194
        %1973 = vmatmul.mubr.bf16.gmra.mxu0 %v1193
        %v1974 = vpop.f32.mrf.mxu0
        %v1975 = vadd.f32 %v1686, %v1974
        %v1976 = vpop.f32.mrf.mxu0
        %v1977 = vpop.f32.mrf.mxu0
        %v1978 = vadd.f32 %v1689, %v1977
        %v1979 = vpop.f32.mrf.mxu0
        %1980 = vmatprep.mubr.bf16.mxu0 %v1198
        %1981 = vmatmul.mubr.bf16.gmra.mxu0 %v1197
        %v1982 = vpop.f32.mrf.mxu0
        %v1983 = vadd.f32 %v1694, %v1982
        %v1984 = vpop.f32.mrf.mxu0
        %v1985 = vpop.f32.mrf.mxu0
        %v1986 = vadd.f32 %v1697, %v1985
        %v1987 = vpop.f32.mrf.mxu0
        %1988 = vmatprep.mubr.bf16.mxu0 %v1202
        %1989 = vmatmul.mubr.bf16.gmra.mxu0 %v1201
        %v1990 = vpop.f32.mrf.mxu0
        %v1991 = vadd.f32 %v1702, %v1990
        %v1992 = vpop.f32.mrf.mxu0
        %v1993 = vpop.f32.mrf.mxu0
        %v1994 = vadd.f32 %v1705, %v1993
        %v1995 = vpop.f32.mrf.mxu0
        %1996 = vmatprep.mubr.bf16.mxu0 %v1206
        %1997 = vmatmul.mubr.bf16.gmra.mxu0 %v1205
        %v1998 = vpop.f32.mrf.mxu0
        %v1999 = vadd.f32 %v1710, %v1998
        %v2000 = vpop.f32.mrf.mxu0
        %v2001 = vpop.f32.mrf.mxu0
        %v2002 = vadd.f32 %v1713, %v2001
        %v2003 = vpop.f32.mrf.mxu0
        %2004 = vmatprep.mubr.bf16.mxu0 %v1210
        %2005 = vmatmul.mubr.bf16.gmra.mxu0 %v1209
        %v2006 = vpop.f32.mrf.mxu0
        %v2007 = vadd.f32 %v1718, %v2006
        %v2008 = vpop.f32.mrf.mxu0
        %v2009 = vpop.f32.mrf.mxu0
        %v2010 = vadd.f32 %v1721, %v2009
        %v2011 = vpop.f32.mrf.mxu0
        %2012 = vmatprep.mubr.bf16.mxu0 %v1214
        %2013 = vmatmul.mubr.bf16.gmra.mxu0 %v1213
        %v2014 = vpop.f32.mrf.mxu0
        %v2015 = vadd.f32 %v1726, %v2014
        %v2016 = vpop.f32.mrf.mxu0
        %v2017 = vpop.f32.mrf.mxu0
        %v2018 = vadd.f32 %v1729, %v2017
        %v2019 = vpop.f32.mrf.mxu0
        %2020 = vmatprep.mubr.bf16.mxu0 %v1218
        %2021 = vmatmul.mubr.bf16.gmra.mxu0 %v1217
        %v2022 = vpop.f32.mrf.mxu0
        %v2023 = vadd.f32 %v1734, %v2022
        %v2024 = vpop.f32.mrf.mxu0
        %v2025 = vpop.f32.mrf.mxu0
        %v2026 = vadd.f32 %v1737, %v2025
        %v2027 = vpop.f32.mrf.mxu0
        %2028 = vmatprep.mubr.bf16.mxu0 %v1222
        %2029 = vmatmul.mubr.bf16.gmra.mxu0 %v1221
        %v2030 = vpop.f32.mrf.mxu0
        %v2031 = vadd.f32 %v1742, %v2030
        %v2032 = vpop.f32.mrf.mxu0
        %v2033 = vpop.f32.mrf.mxu0
        %v2034 = vadd.f32 %v1745, %v2033
        %v2035 = vpop.f32.mrf.mxu0
        %2036 = vmatprep.mubr.bf16.mxu0 %v1226
        %2037 = vmatmul.mubr.bf16.gmra.mxu0 %v1225
        %v2038 = vpop.f32.mrf.mxu0
        %v2039 = vadd.f32 %v1750, %v2038
        %v2040 = vpop.f32.mrf.mxu0
        %v2041 = vpop.f32.mrf.mxu0
        %v2042 = vadd.f32 %v1753, %v2041
        %v2043 = vpop.f32.mrf.mxu0
        %2044 = vmatprep.mubr.bf16.mxu0 %v1230
        %2045 = vmatmul.mubr.bf16.gmra.mxu0 %v1229
        %v2046 = vpop.f32.mrf.mxu0
        %v2047 = vadd.f32 %v1758, %v2046
        %v2048 = vpop.f32.mrf.mxu0
        %v2049 = vpop.f32.mrf.mxu0
        %v2050 = vadd.f32 %v1761, %v2049
        %v2051 = vpop.f32.mrf.mxu0
        %2052 = vmatprep.mubr.bf16.mxu0 %v1234
        %2053 = vmatmul.mubr.bf16.gmra.mxu0 %v1233
        %v2054 = vpop.f32.mrf.mxu0
        %v2055 = vadd.f32 %v1766, %v2054
        %v2056 = vpop.f32.mrf.mxu0
        %v2057 = vpop.f32.mrf.mxu0
        %v2058 = vadd.f32 %v1769, %v2057
        %v2059 = vpop.f32.mrf.mxu0
        %2060 = vmatprep.mubr.bf16.mxu0 %v1238
        %2061 = vmatmul.mubr.bf16.gmra.mxu0 %v1237
        %v2062 = vpop.f32.mrf.mxu0
        %v2063 = vadd.f32 %v1774, %v2062
        %v2064 = vpop.f32.mrf.mxu0
        %v2065 = vpop.f32.mrf.mxu0
        %v2066 = vadd.f32 %v1777, %v2065
        %v2067 = vpop.f32.mrf.mxu0
        %2068 = vmatprep.mubr.bf16.mxu0 %v1242
        %2069 = vmatmul.mubr.bf16.gmra.mxu0 %v1241
        %v2070 = vpop.f32.mrf.mxu0
        %v2071 = vadd.f32 %v1782, %v2070
        %v2072 = vpop.f32.mrf.mxu0
        %v2073 = vpop.f32.mrf.mxu0
        %v2074 = vadd.f32 %v1785, %v2073
        %v2075 = vpop.f32.mrf.mxu0
        %2076 = vmatprep.mubr.bf16.mxu0 %v1246
        %2077 = vmatmul.mubr.bf16.gmra.mxu0 %v1245
        %v2078 = vpop.f32.mrf.mxu0
        %v2079 = vadd.f32 %v1790, %v2078
        %v2080 = vpop.f32.mrf.mxu0
        %v2081 = vpop.f32.mrf.mxu0
        %v2082 = vadd.f32 %v1793, %v2081
        %v2083 = vpop.f32.mrf.mxu0
        %2084 = vmatprep.mubr.bf16.mxu0 %v1250
        %2085 = vmatmul.mubr.bf16.gmra.mxu0 %v1249
        %v2086 = vpop.f32.mrf.mxu0
        %v2087 = vadd.f32 %v1798, %v2086
        %v2088 = vpop.f32.mrf.mxu0
        %v2089 = vpop.f32.mrf.mxu0
        %v2090 = vadd.f32 %v1801, %v2089
        %v2091 = vpop.f32.mrf.mxu0
        %2092 = vmatprep.mubr.bf16.mxu0 %v1254
        %2093 = vmatmul.mubr.bf16.gmra.mxu0 %v1253
        %v2094 = vpop.f32.mrf.mxu0
        %v2095 = vadd.f32 %v1806, %v2094
        %v2096 = vpop.f32.mrf.mxu0
        %v2097 = vpop.f32.mrf.mxu0
        %v2098 = vadd.f32 %v1809, %v2097
        %v2099 = vpop.f32.mrf.mxu0
        %2100 = vmatprep.mubr.bf16.mxu0 %v1258
        %2101 = vmatmul.mubr.bf16.gmra.mxu0 %v1257
        %v2102 = vpop.f32.mrf.mxu0
        %v2103 = vadd.f32 %v1814, %v2102
        %v2104 = vpop.f32.mrf.mxu0
        %v2105 = vpop.f32.mrf.mxu0
        %v2106 = vadd.f32 %v1817, %v2105
        %v2107 = vpop.f32.mrf.mxu0
        %2108 = vmatprep.mubr.bf16.mxu0 %v1262
        %2109 = vmatmul.mubr.bf16.gmra.mxu0 %v1261
        %v2110 = vpop.f32.mrf.mxu0
        %v2111 = vadd.f32 %v1822, %v2110
        %v2112 = vpop.f32.mrf.mxu0
        %v2113 = vpop.f32.mrf.mxu0
        %v2114 = vadd.f32 %v1825, %v2113
        %v2115 = vpop.f32.mrf.mxu0
        %2116 = vmatprep.mubr.bf16.mxu0 %v1266
        %2117 = vmatmul.mubr.bf16.gmra.mxu0 %v1265
        %v2118 = vpop.f32.mrf.mxu0
        %v2119 = vadd.f32 %v1830, %v2118
        %v2120 = vpop.f32.mrf.mxu0
        %v2121 = vpop.f32.mrf.mxu0
        %v2122 = vadd.f32 %v1833, %v2121
        %v2123 = vpop.f32.mrf.mxu0
        %2124 = vmatprep.mubr.bf16.mxu0 %v1270
        %2125 = vmatmul.mubr.bf16.gmra.mxu0 %v1269
        %v2126 = vpop.f32.mrf.mxu0
        %v2127 = vadd.f32 %v1838, %v2126
        %v2128 = vpop.f32.mrf.mxu0
        %v2129 = vpop.f32.mrf.mxu0
        %v2130 = vadd.f32 %v1841, %v2129
        %v2131 = vpop.f32.mrf.mxu0
        %2132 = vmatprep.mubr.bf16.mxu0 %v1274
        %2133 = vmatmul.mubr.bf16.gmra.mxu0 %v1273
        %v2134 = vpop.f32.mrf.mxu0
        %v2135 = vadd.f32 %v1846, %v2134
        %v2136 = vpop.f32.mrf.mxu0
        %v2137 = vpop.f32.mrf.mxu0
        %v2138 = vadd.f32 %v1849, %v2137
        %v2139 = vpop.f32.mrf.mxu0
        %2140 = vmatprep.mubr.bf16.mxu0 %v1278
        %2141 = vmatmul.mubr.bf16.gmra.mxu0 %v1277
        %v2142 = vpop.f32.mrf.mxu0
        %v2143 = vadd.f32 %v1854, %v2142
        %v2144 = vpop.f32.mrf.mxu0
        %v2145 = vpop.f32.mrf.mxu0
        %v2146 = vadd.f32 %v1857, %v2145
        %v2147 = vpop.f32.mrf.mxu0
        %2148 = vmatprep.mubr.bf16.mxu0 %v1282
        %2149 = vmatmul.mubr.bf16.gmra.mxu0 %v1281
        %v2150 = vpop.f32.mrf.mxu0
        %v2151 = vadd.f32 %v1862, %v2150
        %v2152 = vpop.f32.mrf.mxu0
        %v2153 = vpop.f32.mrf.mxu0
        %v2154 = vadd.f32 %v1865, %v2153
        %v2155 = vpop.f32.mrf.mxu0
        %2156 = vmatprep.mubr.bf16.mxu0 %v1286
        %2157 = vmatmul.mubr.bf16.gmra.mxu0 %v1285
        %v2158 = vpop.f32.mrf.mxu0
        %v2159 = vadd.f32 %v1870, %v2158
        %v2160 = vpop.f32.mrf.mxu0
        %v2161 = vpop.f32.mrf.mxu0
        %v2162 = vadd.f32 %v1873, %v2161
        %v2163 = vpop.f32.mrf.mxu0
        %2164 = vmatprep.mubr.bf16.mxu0 %v1290
        %2165 = vmatmul.mubr.bf16.gmra.mxu0 %v1289
        %v2166 = vpop.f32.mrf.mxu0
        %v2167 = vadd.f32 %v1878, %v2166
        %v2168 = vpop.f32.mrf.mxu0
        %v2169 = vpop.f32.mrf.mxu0
        %v2170 = vadd.f32 %v1881, %v2169
        %v2171 = vpop.f32.mrf.mxu0
        %2172 = vmatprep.mubr.bf16.mxu0 %v1294
        %2173 = vmatmul.mubr.bf16.gmra.mxu0 %v1293
        %v2174 = vpop.f32.mrf.mxu0
        %v2175 = vadd.f32 %v1886, %v2174
        %v2176 = vpop.f32.mrf.mxu0
        %v2177 = vpop.f32.mrf.mxu0
        %v2178 = vadd.f32 %v1889, %v2177
        %v2179 = vpop.f32.mrf.mxu0
        %2180 = vmatprep.mubr.bf16.mxu0 %v1298
        %2181 = vmatmul.mubr.bf16.gmra.mxu0 %v1297
        %v2182 = vpop.f32.mrf.mxu0
        %v2183 = vadd.f32 %v1894, %v2182
        %v2184 = vpop.f32.mrf.mxu0
        %v2185 = vpop.f32.mrf.mxu0
        %v2186 = vadd.f32 %v1897, %v2185
        %v2187 = vpop.f32.mrf.mxu0
        %2188 = vmatprep.mubr.bf16.mxu0 %v1302
        %2189 = vmatmul.mubr.bf16.gmra.mxu0 %v1301
        %v2190 = vpop.f32.mrf.mxu0
        %v2191 = vadd.f32 %v1902, %v2190
        %v2192 = vpop.f32.mrf.mxu0
        %v2193 = vpop.f32.mrf.mxu0
        %v2194 = vadd.f32 %v1905, %v2193
        %v2195 = vpop.f32.mrf.mxu0
        %2196 = vmatprep.mubr.bf16.mxu0 %v1306
        %2197 = vmatmul.mubr.bf16.gmra.mxu0 %v1305
        %v2198 = vpop.f32.mrf.mxu0
        %v2199 = vadd.f32 %v1910, %v2198
        %v2200 = vpop.f32.mrf.mxu0
        %v2201 = vpop.f32.mrf.mxu0
        %v2202 = vadd.f32 %v1913, %v2201
        %v2203 = vpop.f32.mrf.mxu0
        %2204 = vdwg.mxu0
        %v2205 = vadd.f32 %v603, %v1951
        %v2206 = vadd.f32 %v604, %v1954
        %v2207 = vadd.f32 %v605, %v1959
        %v2208 = vadd.f32 %v606, %v1962
        %v2209 = vadd.f32 %v607, %v1967
        %v2210 = vadd.f32 %v608, %v1970
        %v2211 = vadd.f32 %v609, %v1975
        %v2212 = vadd.f32 %v610, %v1978
        %v2213 = vadd.f32 %v611, %v1983
        %v2214 = vadd.f32 %v612, %v1986
        %v2215 = vadd.f32 %v613, %v1991
        %v2216 = vadd.f32 %v614, %v1994
        %v2217 = vadd.f32 %v615, %v1999
        %v2218 = vadd.f32 %v616, %v2002
        %v2219 = vadd.f32 %v617, %v2007
        %v2220 = vadd.f32 %v618, %v2010
        %v2221 = vadd.f32 %v619, %v2015
        %v2222 = vadd.f32 %v620, %v2018
        %v2223 = vadd.f32 %v621, %v2023
        %v2224 = vadd.f32 %v622, %v2026
        %v2225 = vadd.f32 %v623, %v2031
        %v2226 = vadd.f32 %v624, %v2034
        %v2227 = vadd.f32 %v625, %v2039
        %v2228 = vadd.f32 %v626, %v2042
        %v2229 = vadd.f32 %v627, %v2047
        %v2230 = vadd.f32 %v628, %v2050
        %v2231 = vadd.f32 %v629, %v2055
        %v2232 = vadd.f32 %v630, %v2058
        %v2233 = vadd.f32 %v631, %v2063
        %v2234 = vadd.f32 %v632, %v2066
        %v2235 = vadd.f32 %v633, %v2071
        %v2236 = vadd.f32 %v634, %v2074
        %v2237 = vadd.f32 %v635, %v2079
        %v2238 = vadd.f32 %v636, %v2082
        %v2239 = vadd.f32 %v637, %v2087
        %v2240 = vadd.f32 %v638, %v2090
        %v2241 = vadd.f32 %v639, %v2095
        %v2242 = vadd.f32 %v640, %v2098
        %v2243 = vadd.f32 %v641, %v2103
        %v2244 = vadd.f32 %v642, %v2106
        %v2245 = vadd.f32 %v643, %v2111
        %v2246 = vadd.f32 %v644, %v2114
        %v2247 = vadd.f32 %v645, %v2119
        %v2248 = vadd.f32 %v646, %v2122
        %v2249 = vadd.f32 %v647, %v2127
        %v2250 = vadd.f32 %v648, %v2130
        %v2251 = vadd.f32 %v649, %v2135
        %v2252 = vadd.f32 %v650, %v2138
        %v2253 = vadd.f32 %v651, %v2143
        %v2254 = vadd.f32 %v652, %v2146
        %v2255 = vadd.f32 %v653, %v2151
        %v2256 = vadd.f32 %v654, %v2154
        %v2257 = vadd.f32 %v655, %v2159
        %v2258 = vadd.f32 %v656, %v2162
        %v2259 = vadd.f32 %v657, %v2167
        %v2260 = vadd.f32 %v658, %v2170
        %v2261 = vadd.f32 %v659, %v2175
        %v2262 = vadd.f32 %v660, %v2178
        %v2263 = vadd.f32 %v661, %v2183
        %v2264 = vadd.f32 %v662, %v2186
        %v2265 = vadd.f32 %v663, %v2191
        %v2266 = vadd.f32 %v664, %v2194
        %v2267 = vadd.f32 %v665, %v2199
        %v2268 = vadd.f32 %v666, %v2202
        %2269 = vst [vmem:[#allocation2] sm:$0xff] %v2205
        %2270 = vst [vmem:[#allocation2 + $0x8] sm:$0xff] %v2206
        %2271 = vst [vmem:[#allocation2 + $0x10] sm:$0xff] %v2207
        %2272 = vst [vmem:[#allocation2 + $0x18] sm:$0xff] %v2208
        %2273 = vst [vmem:[#allocation2 + $0x20] sm:$0xff] %v2209
        %2274 = vst [vmem:[#allocation2 + $0x28] sm:$0xff] %v2210
        %2275 = vst [vmem:[#allocation2 + $0x30] sm:$0xff] %v2211
        %2276 = vst [vmem:[#allocation2 + $0x38] sm:$0xff] %v2212
        %2277 = vst [vmem:[#allocation2 + $0x40] sm:$0xff] %v2213
        %2278 = vst [vmem:[#allocation2 + $0x48] sm:$0xff] %v2214
        %2279 = vst [vmem:[#allocation2 + $0x50] sm:$0xff] %v2215
        %2280 = vst [vmem:[#allocation2 + $0x58] sm:$0xff] %v2216
        %2281 = vst [vmem:[#allocation2 + $0x60] sm:$0xff] %v2217
        %2282 = vst [vmem:[#allocation2 + $0x68] sm:$0xff] %v2218
        %2283 = vst [vmem:[#allocation2 + $0x70] sm:$0xff] %v2219
        %2284 = vst [vmem:[#allocation2 + $0x78] sm:$0xff] %v2220
        %2285 = vst [vmem:[#allocation2 + $0x80] sm:$0xff] %v2221
        %2286 = vst [vmem:[#allocation2 + $0x88] sm:$0xff] %v2222
        %2287 = vst [vmem:[#allocation2 + $0x90] sm:$0xff] %v2223
        %2288 = vst [vmem:[#allocation2 + $0x98] sm:$0xff] %v2224
        %2289 = vst [vmem:[#allocation2 + $0xa0] sm:$0xff] %v2225
        %2290 = vst [vmem:[#allocation2 + $0xa8] sm:$0xff] %v2226
        %2291 = vst [vmem:[#allocation2 + $0xb0] sm:$0xff] %v2227
        %2292 = vst [vmem:[#allocation2 + $0xb8] sm:$0xff] %v2228
        %2293 = vst [vmem:[#allocation2 + $0xc0] sm:$0xff] %v2229
        %2294 = vst [vmem:[#allocation2 + $0xc8] sm:$0xff] %v2230
        %2295 = vst [vmem:[#allocation2 + $0xd0] sm:$0xff] %v2231
        %2296 = vst [vmem:[#allocation2 + $0xd8] sm:$0xff] %v2232
        %2297 = vst [vmem:[#allocation2 + $0xe0] sm:$0xff] %v2233
        %2298 = vst [vmem:[#allocation2 + $0xe8] sm:$0xff] %v2234
        %2299 = vst [vmem:[#allocation2 + $0xf0] sm:$0xff] %v2235
        %2300 = vst [vmem:[#allocation2 + $0xf8] sm:$0xff] %v2236
        %2301 = vst [vmem:[#allocation2 + $0x100] sm:$0xff] %v2237
        %2302 = vst [vmem:[#allocation2 + $0x108] sm:$0xff] %v2238
        %2303 = vst [vmem:[#allocation2 + $0x110] sm:$0xff] %v2239
        %2304 = vst [vmem:[#allocation2 + $0x118] sm:$0xff] %v2240
        %2305 = vst [vmem:[#allocation2 + $0x120] sm:$0xff] %v2241
        %2306 = vst [vmem:[#allocation2 + $0x128] sm:$0xff] %v2242
        %2307 = vst [vmem:[#allocation2 + $0x130] sm:$0xff] %v2243
        %2308 = vst [vmem:[#allocation2 + $0x138] sm:$0xff] %v2244
        %2309 = vst [vmem:[#allocation2 + $0x140] sm:$0xff] %v2245
        %2310 = vst [vmem:[#allocation2 + $0x148] sm:$0xff] %v2246
        %2311 = vst [vmem:[#allocation2 + $0x150] sm:$0xff] %v2247
        %2312 = vst [vmem:[#allocation2 + $0x158] sm:$0xff] %v2248
        %2313 = vst [vmem:[#allocation2 + $0x160] sm:$0xff] %v2249
        %2314 = vst [vmem:[#allocation2 + $0x168] sm:$0xff] %v2250
        %2315 = vst [vmem:[#allocation2 + $0x170] sm:$0xff] %v2251
        %2316 = vst [vmem:[#allocation2 + $0x178] sm:$0xff] %v2252
        %2317 = vst [vmem:[#allocation2 + $0x180] sm:$0xff] %v2253
        %2318 = vst [vmem:[#allocation2 + $0x188] sm:$0xff] %v2254
        %2319 = vst [vmem:[#allocation2 + $0x190] sm:$0xff] %v2255
        %2320 = vst [vmem:[#allocation2 + $0x198] sm:$0xff] %v2256
        %2321 = vst [vmem:[#allocation2 + $0x1a0] sm:$0xff] %v2257
        %2322 = vst [vmem:[#allocation2 + $0x1a8] sm:$0xff] %v2258
        %2323 = vst [vmem:[#allocation2 + $0x1b0] sm:$0xff] %v2259
        %2324 = vst [vmem:[#allocation2 + $0x1b8] sm:$0xff] %v2260
        %2325 = vst [vmem:[#allocation2 + $0x1c0] sm:$0xff] %v2261
        %2326 = vst [vmem:[#allocation2 + $0x1c8] sm:$0xff] %v2262
        %2327 = vst [vmem:[#allocation2 + $0x1d0] sm:$0xff] %v2263
        %2328 = vst [vmem:[#allocation2 + $0x1d8] sm:$0xff] %v2264
        %2329 = vst [vmem:[#allocation2 + $0x1e0] sm:$0xff] %v2265
        %2330 = vst [vmem:[#allocation2 + $0x1e8] sm:$0xff] %v2266
        %2331 = vst [vmem:[#allocation2 + $0x1f0] sm:$0xff] %v2267
        %2332 = vst [vmem:[#allocation2 + $0x1f8] sm:$0xff] %v2268
        %p2333 = scmp.eq.s32.totalorder %s19, 1
        // Predicated region
        $region60: #{gnn_forward.9} parent=50 // pred_check
          %p2334 = pneg %p2333
        $region61: #{gnn_forward.9} parent=50 // pred_check_branch
          %2336 = sbr.rel (%p2334) target = $region63
        $region62: #{gnn_forward.9} parent=50 // pred_region
          %v2337 = vld [vmem:[#allocation2] sm:$0xff]
          %v2338 = vld [vmem:[#allocation2 + $0x8] sm:$0xff]
          %v2339 = vld [vmem:[#allocation2 + $0x10] sm:$0xff]
          %v2340 = vld [vmem:[#allocation2 + $0x18] sm:$0xff]
          %v2341 = vld [vmem:[#allocation2 + $0x20] sm:$0xff]
          %v2342 = vld [vmem:[#allocation2 + $0x28] sm:$0xff]
          %v2343 = vld [vmem:[#allocation2 + $0x30] sm:$0xff]
          %v2344 = vld [vmem:[#allocation2 + $0x38] sm:$0xff]
          %v2345 = vld [vmem:[#allocation2 + $0x40] sm:$0xff]
          %v2346 = vld [vmem:[#allocation2 + $0x48] sm:$0xff]
          %v2347 = vld [vmem:[#allocation2 + $0x50] sm:$0xff]
          %v2348 = vld [vmem:[#allocation2 + $0x58] sm:$0xff]
          %v2349 = vld [vmem:[#allocation2 + $0x60] sm:$0xff]
          %v2350 = vld [vmem:[#allocation2 + $0x68] sm:$0xff]
          %v2351 = vld [vmem:[#allocation2 + $0x70] sm:$0xff]
          %v2352 = vld [vmem:[#allocation2 + $0x78] sm:$0xff]
          %v2353 = vld [vmem:[#allocation2 + $0x80] sm:$0xff]
          %v2354 = vld [vmem:[#allocation2 + $0x88] sm:$0xff]
          %v2355 = vld [vmem:[#allocation2 + $0x90] sm:$0xff]
          %v2356 = vld [vmem:[#allocation2 + $0x98] sm:$0xff]
          %v2357 = vld [vmem:[#allocation2 + $0xa0] sm:$0xff]
          %v2358 = vld [vmem:[#allocation2 + $0xa8] sm:$0xff]
          %v2359 = vld [vmem:[#allocation2 + $0xb0] sm:$0xff]
          %v2360 = vld [vmem:[#allocation2 + $0xb8] sm:$0xff]
          %v2361 = vld [vmem:[#allocation2 + $0xc0] sm:$0xff]
          %v2362 = vld [vmem:[#allocation2 + $0xc8] sm:$0xff]
          %v2363 = vld [vmem:[#allocation2 + $0xd0] sm:$0xff]
          %v2364 = vld [vmem:[#allocation2 + $0xd8] sm:$0xff]
          %v2365 = vld [vmem:[#allocation2 + $0xe0] sm:$0xff]
          %v2366 = vld [vmem:[#allocation2 + $0xe8] sm:$0xff]
          %v2367 = vld [vmem:[#allocation2 + $0xf0] sm:$0xff]
          %v2368 = vld [vmem:[#allocation2 + $0xf8] sm:$0xff]
          %v2369 = vld [vmem:[#allocation2 + $0x100] sm:$0xff]
          %v2370 = vld [vmem:[#allocation2 + $0x108] sm:$0xff]
          %v2371 = vld [vmem:[#allocation2 + $0x110] sm:$0xff]
          %v2372 = vld [vmem:[#allocation2 + $0x118] sm:$0xff]
          %v2373 = vld [vmem:[#allocation2 + $0x120] sm:$0xff]
          %v2374 = vld [vmem:[#allocation2 + $0x128] sm:$0xff]
          %v2375 = vld [vmem:[#allocation2 + $0x130] sm:$0xff]
          %v2376 = vld [vmem:[#allocation2 + $0x138] sm:$0xff]
          %v2377 = vld [vmem:[#allocation2 + $0x140] sm:$0xff]
          %v2378 = vld [vmem:[#allocation2 + $0x148] sm:$0xff]
          %v2379 = vld [vmem:[#allocation2 + $0x150] sm:$0xff]
          %v2380 = vld [vmem:[#allocation2 + $0x158] sm:$0xff]
          %v2381 = vld [vmem:[#allocation2 + $0x160] sm:$0xff]
          %v2382 = vld [vmem:[#allocation2 + $0x168] sm:$0xff]
          %v2383 = vld [vmem:[#allocation2 + $0x170] sm:$0xff]
          %v2384 = vld [vmem:[#allocation2 + $0x178] sm:$0xff]
          %v2385 = vld [vmem:[#allocation2 + $0x180] sm:$0xff]
          %v2386 = vld [vmem:[#allocation2 + $0x188] sm:$0xff]
          %v2387 = vld [vmem:[#allocation2 + $0x190] sm:$0xff]
          %v2388 = vld [vmem:[#allocation2 + $0x198] sm:$0xff]
          %v2389 = vld [vmem:[#allocation2 + $0x1a0] sm:$0xff]
          %v2390 = vld [vmem:[#allocation2 + $0x1a8] sm:$0xff]
          %v2391 = vld [vmem:[#allocation2 + $0x1b0] sm:$0xff]
          %v2392 = vld [vmem:[#allocation2 + $0x1b8] sm:$0xff]
          %v2393 = vld [vmem:[#allocation2 + $0x1c0] sm:$0xff]
          %v2394 = vld [vmem:[#allocation2 + $0x1c8] sm:$0xff]
          %v2395 = vld [vmem:[#allocation2 + $0x1d0] sm:$0xff]
          %v2396 = vld [vmem:[#allocation2 + $0x1d8] sm:$0xff]
          %v2397 = vld [vmem:[#allocation2 + $0x1e0] sm:$0xff]
          %v2398 = vld [vmem:[#allocation2 + $0x1e8] sm:$0xff]
          %v2399 = vld [vmem:[#allocation2 + $0x1f0] sm:$0xff]
          %v2400 = vld [vmem:[#allocation2 + $0x1f8] sm:$0xff]
          %v2401 = vld [vmem:[%s2] sm:$0x1]
          %v2403 = vlaneseq
          %v2404 = vshrl.u32 %v2403, 7
          %v2405 = vsub.s32 0, %v2404
          %v2406 = vrot.slane %v2401, %v2405
          %v2408 = vadd.f32 %v2337, %v2406
          %v2409 = vadd.f32 %v2338, %v2406
          %v2410 = vadd.f32 %v2339, %v2406
          %v2411 = vadd.f32 %v2340, %v2406
          %v2412 = vadd.f32 %v2341, %v2406
          %v2413 = vadd.f32 %v2342, %v2406
          %v2414 = vadd.f32 %v2343, %v2406
          %v2415 = vadd.f32 %v2344, %v2406
          %v2416 = vadd.f32 %v2345, %v2406
          %v2417 = vadd.f32 %v2346, %v2406
          %v2418 = vadd.f32 %v2347, %v2406
          %v2419 = vadd.f32 %v2348, %v2406
          %v2420 = vadd.f32 %v2349, %v2406
          %v2421 = vadd.f32 %v2350, %v2406
          %v2422 = vadd.f32 %v2351, %v2406
          %v2423 = vadd.f32 %v2352, %v2406
          %v2424 = vadd.f32 %v2353, %v2406
          %v2425 = vadd.f32 %v2354, %v2406
          %v2426 = vadd.f32 %v2355, %v2406
          %v2427 = vadd.f32 %v2356, %v2406
          %v2428 = vadd.f32 %v2357, %v2406
          %v2429 = vadd.f32 %v2358, %v2406
          %v2430 = vadd.f32 %v2359, %v2406
          %v2431 = vadd.f32 %v2360, %v2406
          %v2432 = vadd.f32 %v2361, %v2406
          %v2433 = vadd.f32 %v2362, %v2406
          %v2434 = vadd.f32 %v2363, %v2406
          %v2435 = vadd.f32 %v2364, %v2406
          %v2436 = vadd.f32 %v2365, %v2406
          %v2437 = vadd.f32 %v2366, %v2406
          %v2438 = vadd.f32 %v2367, %v2406
          %v2439 = vadd.f32 %v2368, %v2406
          %v2440 = vadd.f32 %v2369, %v2406
          %v2441 = vadd.f32 %v2370, %v2406
          %v2442 = vadd.f32 %v2371, %v2406
          %v2443 = vadd.f32 %v2372, %v2406
          %v2444 = vadd.f32 %v2373, %v2406
          %v2445 = vadd.f32 %v2374, %v2406
          %v2446 = vadd.f32 %v2375, %v2406
          %v2447 = vadd.f32 %v2376, %v2406
          %v2448 = vadd.f32 %v2377, %v2406
          %v2449 = vadd.f32 %v2378, %v2406
          %v2450 = vadd.f32 %v2379, %v2406
          %v2451 = vadd.f32 %v2380, %v2406
          %v2452 = vadd.f32 %v2381, %v2406
          %v2453 = vadd.f32 %v2382, %v2406
          %v2454 = vadd.f32 %v2383, %v2406
          %v2455 = vadd.f32 %v2384, %v2406
          %v2456 = vadd.f32 %v2385, %v2406
          %v2457 = vadd.f32 %v2386, %v2406
          %v2458 = vadd.f32 %v2387, %v2406
          %v2459 = vadd.f32 %v2388, %v2406
          %v2460 = vadd.f32 %v2389, %v2406
          %v2461 = vadd.f32 %v2390, %v2406
          %v2462 = vadd.f32 %v2391, %v2406
          %v2463 = vadd.f32 %v2392, %v2406
          %v2464 = vadd.f32 %v2393, %v2406
          %v2465 = vadd.f32 %v2394, %v2406
          %v2466 = vadd.f32 %v2395, %v2406
          %v2467 = vadd.f32 %v2396, %v2406
          %v2468 = vadd.f32 %v2397, %v2406
          %v2469 = vadd.f32 %v2398, %v2406
          %v2470 = vadd.f32 %v2399, %v2406
          %v2471 = vadd.f32 %v2400, %v2406
          %v2472 = vmax.f32 %v2408, 0.0
          %v2473 = vmax.f32 %v2409, 0.0
          %v2474 = vmax.f32 %v2410, 0.0
          %v2475 = vmax.f32 %v2411, 0.0
          %v2476 = vmax.f32 %v2412, 0.0
          %v2477 = vmax.f32 %v2413, 0.0
          %v2478 = vmax.f32 %v2414, 0.0
          %v2479 = vmax.f32 %v2415, 0.0
          %v2480 = vmax.f32 %v2416, 0.0
          %v2481 = vmax.f32 %v2417, 0.0
          %v2482 = vmax.f32 %v2418, 0.0
          %v2483 = vmax.f32 %v2419, 0.0
          %v2484 = vmax.f32 %v2420, 0.0
          %v2485 = vmax.f32 %v2421, 0.0
          %v2486 = vmax.f32 %v2422, 0.0
          %v2487 = vmax.f32 %v2423, 0.0
          %v2488 = vmax.f32 %v2424, 0.0
          %v2489 = vmax.f32 %v2425, 0.0
          %v2490 = vmax.f32 %v2426, 0.0
          %v2491 = vmax.f32 %v2427, 0.0
          %v2492 = vmax.f32 %v2428, 0.0
          %v2493 = vmax.f32 %v2429, 0.0
          %v2494 = vmax.f32 %v2430, 0.0
          %v2495 = vmax.f32 %v2431, 0.0
          %v2496 = vmax.f32 %v2432, 0.0
          %v2497 = vmax.f32 %v2433, 0.0
          %v2498 = vmax.f32 %v2434, 0.0
          %v2499 = vmax.f32 %v2435, 0.0
          %v2500 = vmax.f32 %v2436, 0.0
          %v2501 = vmax.f32 %v2437, 0.0
          %v2502 = vmax.f32 %v2438, 0.0
          %v2503 = vmax.f32 %v2439, 0.0
          %v2504 = vmax.f32 %v2440, 0.0
          %v2505 = vmax.f32 %v2441, 0.0
          %v2506 = vmax.f32 %v2442, 0.0
          %v2507 = vmax.f32 %v2443, 0.0
          %v2508 = vmax.f32 %v2444, 0.0
          %v2509 = vmax.f32 %v2445, 0.0
          %v2510 = vmax.f32 %v2446, 0.0
          %v2511 = vmax.f32 %v2447, 0.0
          %v2512 = vmax.f32 %v2448, 0.0
          %v2513 = vmax.f32 %v2449, 0.0
          %v2514 = vmax.f32 %v2450, 0.0
          %v2515 = vmax.f32 %v2451, 0.0
          %v2516 = vmax.f32 %v2452, 0.0
          %v2517 = vmax.f32 %v2453, 0.0
          %v2518 = vmax.f32 %v2454, 0.0
          %v2519 = vmax.f32 %v2455, 0.0
          %v2520 = vmax.f32 %v2456, 0.0
          %v2521 = vmax.f32 %v2457, 0.0
          %v2522 = vmax.f32 %v2458, 0.0
          %v2523 = vmax.f32 %v2459, 0.0
          %v2524 = vmax.f32 %v2460, 0.0
          %v2525 = vmax.f32 %v2461, 0.0
          %v2526 = vmax.f32 %v2462, 0.0
          %v2527 = vmax.f32 %v2463, 0.0
          %v2528 = vmax.f32 %v2464, 0.0
          %v2529 = vmax.f32 %v2465, 0.0
          %v2530 = vmax.f32 %v2466, 0.0
          %v2531 = vmax.f32 %v2467, 0.0
          %v2532 = vmax.f32 %v2468, 0.0
          %v2533 = vmax.f32 %v2469, 0.0
          %v2534 = vmax.f32 %v2470, 0.0
          %v2535 = vmax.f32 %v2471, 0.0
          %v2536 = vpack.c.bf16 %v2473, %v2472
          %v2537 = vpack.c.bf16 %v2475, %v2474
          %v2538 = vpack.c.bf16 %v2477, %v2476
          %v2539 = vpack.c.bf16 %v2479, %v2478
          %v2540 = vpack.c.bf16 %v2481, %v2480
          %v2541 = vpack.c.bf16 %v2483, %v2482
          %v2542 = vpack.c.bf16 %v2485, %v2484
          %v2543 = vpack.c.bf16 %v2487, %v2486
          %v2544 = vpack.c.bf16 %v2489, %v2488
          %v2545 = vpack.c.bf16 %v2491, %v2490
          %v2546 = vpack.c.bf16 %v2493, %v2492
          %v2547 = vpack.c.bf16 %v2495, %v2494
          %v2548 = vpack.c.bf16 %v2497, %v2496
          %v2549 = vpack.c.bf16 %v2499, %v2498
          %v2550 = vpack.c.bf16 %v2501, %v2500
          %v2551 = vpack.c.bf16 %v2503, %v2502
          %v2552 = vpack.c.bf16 %v2505, %v2504
          %v2553 = vpack.c.bf16 %v2507, %v2506
          %v2554 = vpack.c.bf16 %v2509, %v2508
          %v2555 = vpack.c.bf16 %v2511, %v2510
          %v2556 = vpack.c.bf16 %v2513, %v2512
          %v2557 = vpack.c.bf16 %v2515, %v2514
          %v2558 = vpack.c.bf16 %v2517, %v2516
          %v2559 = vpack.c.bf16 %v2519, %v2518
          %v2560 = vpack.c.bf16 %v2521, %v2520
          %v2561 = vpack.c.bf16 %v2523, %v2522
          %v2562 = vpack.c.bf16 %v2525, %v2524
          %v2563 = vpack.c.bf16 %v2527, %v2526
          %v2564 = vpack.c.bf16 %v2529, %v2528
          %v2565 = vpack.c.bf16 %v2531, %v2530
          %v2566 = vpack.c.bf16 %v2533, %v2532
          %v2567 = vpack.c.bf16 %v2535, %v2534
          %v2600 = vunpack.c.l.b16 %v2536
          %v2601 = vunpack.c.h.b16 %v2536
          %v2602 = vunpack.c.l.b16 %v2537
          %v2603 = vunpack.c.h.b16 %v2537
          %v2604 = vunpack.c.l.b16 %v2538
          %v2605 = vunpack.c.h.b16 %v2538
          %v2606 = vunpack.c.l.b16 %v2539
          %v2607 = vunpack.c.h.b16 %v2539
          %v2608 = vunpack.c.l.b16 %v2540
          %v2609 = vunpack.c.h.b16 %v2540
          %v2610 = vunpack.c.l.b16 %v2541
          %v2611 = vunpack.c.h.b16 %v2541
          %v2612 = vunpack.c.l.b16 %v2542
          %v2613 = vunpack.c.h.b16 %v2542
          %v2614 = vunpack.c.l.b16 %v2543
          %v2615 = vunpack.c.h.b16 %v2543
          %v2616 = vunpack.c.l.b16 %v2544
          %v2617 = vunpack.c.h.b16 %v2544
          %v2618 = vunpack.c.l.b16 %v2545
          %v2619 = vunpack.c.h.b16 %v2545
          %v2620 = vunpack.c.l.b16 %v2546
          %v2621 = vunpack.c.h.b16 %v2546
          %v2622 = vunpack.c.l.b16 %v2547
          %v2623 = vunpack.c.h.b16 %v2547
          %v2624 = vunpack.c.l.b16 %v2548
          %v2625 = vunpack.c.h.b16 %v2548
          %v2626 = vunpack.c.l.b16 %v2549
          %v2627 = vunpack.c.h.b16 %v2549
          %v2628 = vunpack.c.l.b16 %v2550
          %v2629 = vunpack.c.h.b16 %v2550
          %v2630 = vunpack.c.l.b16 %v2551
          %v2631 = vunpack.c.h.b16 %v2551
          %v2632 = vunpack.c.l.b16 %v2552
          %v2633 = vunpack.c.h.b16 %v2552
          %v2634 = vunpack.c.l.b16 %v2553
          %v2635 = vunpack.c.h.b16 %v2553
          %v2636 = vunpack.c.l.b16 %v2554
          %v2637 = vunpack.c.h.b16 %v2554
          %v2638 = vunpack.c.l.b16 %v2555
          %v2639 = vunpack.c.h.b16 %v2555
          %v2640 = vunpack.c.l.b16 %v2556
          %v2641 = vunpack.c.h.b16 %v2556
          %v2642 = vunpack.c.l.b16 %v2557
          %v2643 = vunpack.c.h.b16 %v2557
          %v2644 = vunpack.c.l.b16 %v2558
          %v2645 = vunpack.c.h.b16 %v2558
          %v2646 = vunpack.c.l.b16 %v2559
          %v2647 = vunpack.c.h.b16 %v2559
          %v2648 = vunpack.c.l.b16 %v2560
          %v2649 = vunpack.c.h.b16 %v2560
          %v2650 = vunpack.c.l.b16 %v2561
          %v2651 = vunpack.c.h.b16 %v2561
          %v2652 = vunpack.c.l.b16 %v2562
          %v2653 = vunpack.c.h.b16 %v2562
          %v2654 = vunpack.c.l.b16 %v2563
          %v2655 = vunpack.c.h.b16 %v2563
          %v2656 = vunpack.c.l.b16 %v2564
          %v2657 = vunpack.c.h.b16 %v2564
          %v2658 = vunpack.c.l.b16 %v2565
          %v2659 = vunpack.c.h.b16 %v2565
          %v2660 = vunpack.c.l.b16 %v2566
          %v2661 = vunpack.c.h.b16 %v2566
          %v2662 = vunpack.c.l.b16 %v2567
          %v2663 = vunpack.c.h.b16 %v2567
          %v2664 = vpack.c.b16 %v2600, %v2600
          %v2665 = vpack.c.b16 %v2601, %v2601
          %v2666 = vpack.c.b16 %v2602, %v2602
          %v2667 = vpack.c.b16 %v2603, %v2603
          %v2668 = vpack.c.b16 %v2604, %v2604
          %v2669 = vpack.c.b16 %v2605, %v2605
          %v2670 = vpack.c.b16 %v2606, %v2606
          %v2671 = vpack.c.b16 %v2607, %v2607
          %v2672 = vpack.c.b16 %v2608, %v2608
          %v2673 = vpack.c.b16 %v2609, %v2609
          %v2674 = vpack.c.b16 %v2610, %v2610
          %v2675 = vpack.c.b16 %v2611, %v2611
          %v2676 = vpack.c.b16 %v2612, %v2612
          %v2677 = vpack.c.b16 %v2613, %v2613
          %v2678 = vpack.c.b16 %v2614, %v2614
          %v2679 = vpack.c.b16 %v2615, %v2615
          %v2680 = vpack.c.b16 %v2616, %v2616
          %v2681 = vpack.c.b16 %v2617, %v2617
          %v2682 = vpack.c.b16 %v2618, %v2618
          %v2683 = vpack.c.b16 %v2619, %v2619
          %v2684 = vpack.c.b16 %v2620, %v2620
          %v2685 = vpack.c.b16 %v2621, %v2621
          %v2686 = vpack.c.b16 %v2622, %v2622
          %v2687 = vpack.c.b16 %v2623, %v2623
          %v2688 = vpack.c.b16 %v2624, %v2624
          %v2689 = vpack.c.b16 %v2625, %v2625
          %v2690 = vpack.c.b16 %v2626, %v2626
          %v2691 = vpack.c.b16 %v2627, %v2627
          %v2692 = vpack.c.b16 %v2628, %v2628
          %v2693 = vpack.c.b16 %v2629, %v2629
          %v2694 = vpack.c.b16 %v2630, %v2630
          %v2695 = vpack.c.b16 %v2631, %v2631
          %v2696 = vpack.c.b16 %v2632, %v2632
          %v2697 = vpack.c.b16 %v2633, %v2633
          %v2698 = vpack.c.b16 %v2634, %v2634
          %v2699 = vpack.c.b16 %v2635, %v2635
          %v2700 = vpack.c.b16 %v2636, %v2636
          %v2701 = vpack.c.b16 %v2637, %v2637
          %v2702 = vpack.c.b16 %v2638, %v2638
          %v2703 = vpack.c.b16 %v2639, %v2639
          %v2704 = vpack.c.b16 %v2640, %v2640
          %v2705 = vpack.c.b16 %v2641, %v2641
          %v2706 = vpack.c.b16 %v2642, %v2642
          %v2707 = vpack.c.b16 %v2643, %v2643
          %v2708 = vpack.c.b16 %v2644, %v2644
          %v2709 = vpack.c.b16 %v2645, %v2645
          %v2710 = vpack.c.b16 %v2646, %v2646
          %v2711 = vpack.c.b16 %v2647, %v2647
          %v2712 = vpack.c.b16 %v2648, %v2648
          %v2713 = vpack.c.b16 %v2649, %v2649
          %v2714 = vpack.c.b16 %v2650, %v2650
          %v2715 = vpack.c.b16 %v2651, %v2651
          %v2716 = vpack.c.b16 %v2652, %v2652
          %v2717 = vpack.c.b16 %v2653, %v2653
          %v2718 = vpack.c.b16 %v2654, %v2654
          %v2719 = vpack.c.b16 %v2655, %v2655
          %v2720 = vpack.c.b16 %v2656, %v2656
          %v2721 = vpack.c.b16 %v2657, %v2657
          %v2722 = vpack.c.b16 %v2658, %v2658
          %v2723 = vpack.c.b16 %v2659, %v2659
          %v2724 = vpack.c.b16 %v2660, %v2660
          %v2725 = vpack.c.b16 %v2661, %v2661
          %v2726 = vpack.c.b16 %v2662, %v2662
          %v2727 = vpack.c.b16 %v2663, %v2663
          %2792 = vst [vmem:[%s463] sm:$0xf] %v2664
          %2793 = vst [vmem:[%s463 + $0x4] sm:$0xf] %v2665
          %2794 = vst [vmem:[%s463 + $0x8] sm:$0xf] %v2666
          %2795 = vst [vmem:[%s463 + $0xc] sm:$0xf] %v2667
          %2796 = vst [vmem:[%s463 + $0x10] sm:$0xf] %v2668
          %2797 = vst [vmem:[%s463 + $0x14] sm:$0xf] %v2669
          %2798 = vst [vmem:[%s463 + $0x18] sm:$0xf] %v2670
          %2799 = vst [vmem:[%s463 + $0x1c] sm:$0xf] %v2671
          %2800 = vst [vmem:[%s463 + $0x20] sm:$0xf] %v2672
          %2801 = vst [vmem:[%s463 + $0x24] sm:$0xf] %v2673
          %2802 = vst [vmem:[%s463 + $0x28] sm:$0xf] %v2674
          %2803 = vst [vmem:[%s463 + $0x2c] sm:$0xf] %v2675
          %2804 = vst [vmem:[%s463 + $0x30] sm:$0xf] %v2676
          %2805 = vst [vmem:[%s463 + $0x34] sm:$0xf] %v2677
          %2806 = vst [vmem:[%s463 + $0x38] sm:$0xf] %v2678
          %2807 = vst [vmem:[%s463 + $0x3c] sm:$0xf] %v2679
          %2808 = vst [vmem:[%s463 + $0x40] sm:$0xf] %v2680
          %2809 = vst [vmem:[%s463 + $0x44] sm:$0xf] %v2681
          %2810 = vst [vmem:[%s463 + $0x48] sm:$0xf] %v2682
          %2811 = vst [vmem:[%s463 + $0x4c] sm:$0xf] %v2683
          %2812 = vst [vmem:[%s463 + $0x50] sm:$0xf] %v2684
          %2813 = vst [vmem:[%s463 + $0x54] sm:$0xf] %v2685
          %2814 = vst [vmem:[%s463 + $0x58] sm:$0xf] %v2686
          %2815 = vst [vmem:[%s463 + $0x5c] sm:$0xf] %v2687
          %2816 = vst [vmem:[%s463 + $0x60] sm:$0xf] %v2688
          %2817 = vst [vmem:[%s463 + $0x64] sm:$0xf] %v2689
          %2818 = vst [vmem:[%s463 + $0x68] sm:$0xf] %v2690
          %2819 = vst [vmem:[%s463 + $0x6c] sm:$0xf] %v2691
          %2820 = vst [vmem:[%s463 + $0x70] sm:$0xf] %v2692
          %2821 = vst [vmem:[%s463 + $0x74] sm:$0xf] %v2693
          %2822 = vst [vmem:[%s463 + $0x78] sm:$0xf] %v2694
          %2823 = vst [vmem:[%s463 + $0x7c] sm:$0xf] %v2695
          %2824 = vst [vmem:[%s463 + $0x80] sm:$0xf] %v2696
          %2825 = vst [vmem:[%s463 + $0x84] sm:$0xf] %v2697
          %2826 = vst [vmem:[%s463 + $0x88] sm:$0xf] %v2698
          %2827 = vst [vmem:[%s463 + $0x8c] sm:$0xf] %v2699
          %2828 = vst [vmem:[%s463 + $0x90] sm:$0xf] %v2700
          %2829 = vst [vmem:[%s463 + $0x94] sm:$0xf] %v2701
          %2830 = vst [vmem:[%s463 + $0x98] sm:$0xf] %v2702
          %2831 = vst [vmem:[%s463 + $0x9c] sm:$0xf] %v2703
          %2832 = vst [vmem:[%s463 + $0xa0] sm:$0xf] %v2704
          %2833 = vst [vmem:[%s463 + $0xa4] sm:$0xf] %v2705
          %2834 = vst [vmem:[%s463 + $0xa8] sm:$0xf] %v2706
          %2835 = vst [vmem:[%s463 + $0xac] sm:$0xf] %v2707
          %2836 = vst [vmem:[%s463 + $0xb0] sm:$0xf] %v2708
          %2837 = vst [vmem:[%s463 + $0xb4] sm:$0xf] %v2709
          %2838 = vst [vmem:[%s463 + $0xb8] sm:$0xf] %v2710
          %2839 = vst [vmem:[%s463 + $0xbc] sm:$0xf] %v2711
          %2840 = vst [vmem:[%s463 + $0xc0] sm:$0xf] %v2712
          %2841 = vst [vmem:[%s463 + $0xc4] sm:$0xf] %v2713
          %2842 = vst [vmem:[%s463 + $0xc8] sm:$0xf] %v2714
          %2843 = vst [vmem:[%s463 + $0xcc] sm:$0xf] %v2715
          %2844 = vst [vmem:[%s463 + $0xd0] sm:$0xf] %v2716
          %2845 = vst [vmem:[%s463 + $0xd4] sm:$0xf] %v2717
          %2846 = vst [vmem:[%s463 + $0xd8] sm:$0xf] %v2718
          %2847 = vst [vmem:[%s463 + $0xdc] sm:$0xf] %v2719
          %2848 = vst [vmem:[%s463 + $0xe0] sm:$0xf] %v2720
          %2849 = vst [vmem:[%s463 + $0xe4] sm:$0xf] %v2721
          %2850 = vst [vmem:[%s463 + $0xe8] sm:$0xf] %v2722
          %2851 = vst [vmem:[%s463 + $0xec] sm:$0xf] %v2723
          %2852 = vst [vmem:[%s463 + $0xf0] sm:$0xf] %v2724
          %2853 = vst [vmem:[%s463 + $0xf4] sm:$0xf] %v2725
          %2854 = vst [vmem:[%s463 + $0xf8] sm:$0xf] %v2726
          %2855 = vst [vmem:[%s463 + $0xfc] sm:$0xf] %v2727
        $region63: #{gnn_forward.9} parent=50 // pred_fallthru
          _
        %s2856 = smul.u32 64, %s18
        %p2857 = scmp.lt.s32.totalorder %s2856, 127
        %s2858 = scalar_select %p2857, %s2856, 127
        %s2859 = smul.addr %s2858, 4
        %s2860 = scalar_lea.vmem %s3, %s2859
        // Predicated region
        $region64: #{gnn_forward.9} parent=50 // pred_check
          %p2861 = pneg %p114
        $region65: #{gnn_forward.9} parent=50 // pred_check_branch
          %2863 = sbr.rel (%p2861) target = $region67
        $region66: #{gnn_forward.9} parent=50 // pred_region
          %s2864 = smul.u32 64, %s18
        $region67: #{gnn_forward.9} parent=50 // pred_fallthru
          _
      $region51: #{gnn_forward.9} parent=5 // pred_fallthru
        _
      %p2865 = scmp.le.s32.totalorder 2, %s9
      // Predicated region
      $region68: #{gnn_forward.9} parent=5 // pred_check
        %p2866 = pneg %p2865
      $region69: #{gnn_forward.9} parent=5 // pred_check_branch
        %2868 = sbr.rel (%p2866) target = $region71
      $region70: #{gnn_forward.9} parent=5 // pred_region
        %s2869 = ssub.s32 %s9, 2
        // Predicated region
        $region72: #{gnn_forward.9} parent=70 // pred_check
          %p2870 = pneg %p120
        $region73: #{gnn_forward.9} parent=70 // pred_check_branch
          %2872 = sbr.rel (%p2870) target = $region75
        $region74: #{gnn_forward.9} parent=70 // pred_region
          %s2873 = smul.u32 64, %s20
          %p2874 = scmp.lt.s32.totalorder %s2873, 127
          %s2875 = scalar_select %p2874, %s2873, 127
          %s2876 = smul.addr %s2875, 4
          %s2877 = scalar_lea.vmem %s3, %s2876
        $region75: #{gnn_forward.9} parent=70 // pred_fallthru
          _
      $region71: #{gnn_forward.9} parent=5 // pred_fallthru
        _
    $region6: #{gnn_forward.9} parent=1 // loop_footer
      %s13 = sadd.s32 1, %s9
    $region7: #{gnn_forward.9} parent=1 // loop_footer_branch
      %8 = sbr.rel target = $region3
    $region8: #{gnn_forward.9} parent=1 // loop_exit
      _

// kernel: gnn_forward.11
$region0: #{gnn_forward.11}
  #allocation0 [shape = 'u32[]', space=smem, size = 0x4, offset = 0x4, fixed_abs, tag = 'smem constant byte address 0x4 - core index']
  #allocation1 [shape = 'u32[144,128]{1,0:T(1,128)}', space=vmem, size = 0x12000, scoped, tag = 'internal scratch']
  #allocation2 [shape = 'f32[512,128]{1,0:T(8,128)}', space=vmem, size = 0x40000, scoped, tag = 'scratch operand']
  %s0 = inlined_call_operand.vmem [shape: bf16[1024,1024], index: 0, kind: input, shape index: {}]
  %s1 = inlined_call_operand.vmem [shape: bf16[1024,128], index: 1, kind: input, shape index: {}]
  %s2 = inlined_call_operand.vmem [shape: f32[1,128], index: 2, kind: input, shape index: {}]
  %s3 = inlined_call_operand.vmem [shape: f32[1024,128], index: 3, kind: output, shape index: {}]
  %s4 = sld [smem:[#allocation0]]
  $region76: #{gnn_forward.11} parent=0
    _
  %s6 = ssub.s32 1, %s4
  %s7 = scalar_select 0, %s6, %s4
  $region1: #{gnn_forward.11} parent=0
    #allocation3 [shape = 'u8[1048576]{0}', space=vmem, size = 0x100000, scoped, tag = 'input window, operand 0']
    loop: start=0, step=1, limit=6
    $region2: #{gnn_forward.11} parent=1 // loop_pre_header
      _
    $region3: #{gnn_forward.11} parent=1 // loop_header
      %s9 = sphi 0, %s13
      %p10 = scmp.ge.s32.totalorder %s9, 6
      %s16 = sphi 0, %s28
      %s17 = sphi 0, %s24
      %s18 = sphi 0, %s16
      %s19 = sphi 0, %s17
      %s20 = sphi 0, %s18
      %s21 = sphi 0, %s19
      %s33 = sphi 0, %s35
      %s36 = sphi 0, %s33
      %s37 = sphi 0, %s36
      %s53 = sphi 0, %s37
      %s57 = sphi 0, %s57
      %s59 = sphi 0, %s57
      %s60 = sphi 0, %s59
      %s74 = sphi 0, %s60
      %s78 = sphi 0, %s78
      %s80 = sphi 0, %s78
      %s81 = sphi 0, %s80
      %s95 = sphi 0, %s81
      %s101 = sphi 0, %s103
      %s104 = sphi 0, %s101
      %s105 = sphi 0, %s104
      %s121 = sphi 0, %s105
    $region4: #{gnn_forward.11} parent=1 // loop_header_branch
      %12 = sbr.rel (%p10) target = $region8
    $region5: #{gnn_forward.11} parent=1 // loop_body
      %s14 = ssub.s32 %s9, 1
      %s15 = ssub.s32 %s9, 2
      %s22 = sadd.s32 1, %s17
      %p23 = scmp.ge.s32.totalorder %s22, 2
      %s24 = scalar_select %p23, 0, %s22
      %s25 = sadd.s32 1, %s16
      %s26 = scalar_select %p23, %s25, %s16
      %p27 = scmp.ge.s32.totalorder %s26, 2
      %s28 = scalar_select %p27, 0, %s26
      %s29 = ssub.s32 %s16, %s28
      %s30 = ssub.s32 %s17, %s24
      %s31 = sor.u32 %s29, %s30
      %p32 = scmp.eq.s32.totalorder %s31, 0
      %s34 = sadd.s32 %s33, 1
      %s35 = scalar_select %p32, %s33, %s34
      %p38 = pneg %p32
      %p39 = scmp.eq.s32.totalorder %s9, 3
      %p40 = por %p38, %p39
      %p41 = scmp.ne.s32.totalorder %s33, %s36
      %p42 = scmp.eq.s32.totalorder %s9, 0
      %p43 = por %p41, %p42
      %p44 = scmp.ne.s32.totalorder %s33, %s36
      %p45 = scmp.eq.s32.totalorder %s14, 3
      %p46 = por %p44, %p45
      %p47 = scmp.ne.s32.totalorder %s36, %s37
      %p48 = scmp.eq.s32.totalorder %s14, 0
      %p49 = por %p47, %p48
      %p50 = scmp.ne.s32.totalorder %s36, %s37
      %p51 = scmp.eq.s32.totalorder %s15, 3
      %p52 = por %p50, %p51
      %p54 = scmp.ne.s32.totalorder %s37, %s53
      %p55 = scmp.eq.s32.totalorder %s15, 0
      %p56 = por %p54, %p55
      %s58 = sadd.s32 %s57, 1
      %p61 = scmp.eq.s32.totalorder %s9, 3
      %p62 = scmp.ne.s32.totalorder %s57, %s59
      %p63 = scmp.eq.s32.totalorder %s9, 0
      %p64 = por %p62, %p63
      %p65 = scmp.ne.s32.totalorder %s57, %s59
      %p66 = scmp.eq.s32.totalorder %s14, 3
      %p67 = por %p65, %p66
      %p68 = scmp.ne.s32.totalorder %s59, %s60
      %p69 = scmp.eq.s32.totalorder %s14, 0
      %p70 = por %p68, %p69
      %p71 = scmp.ne.s32.totalorder %s59, %s60
      %p72 = scmp.eq.s32.totalorder %s15, 3
      %p73 = por %p71, %p72
      %p75 = scmp.ne.s32.totalorder %s60, %s74
      %p76 = scmp.eq.s32.totalorder %s15, 0
      %p77 = por %p75, %p76
      %s79 = sadd.s32 %s78, 1
      %p82 = scmp.eq.s32.totalorder %s9, 3
      %p83 = scmp.ne.s32.totalorder %s78, %s80
      %p84 = scmp.eq.s32.totalorder %s9, 0
      %p85 = por %p83, %p84
      %p86 = scmp.ne.s32.totalorder %s78, %s80
      %p87 = scmp.eq.s32.totalorder %s14, 3
      %p88 = por %p86, %p87
      %p89 = scmp.ne.s32.totalorder %s80, %s81
      %p90 = scmp.eq.s32.totalorder %s14, 0
      %p91 = por %p89, %p90
      %p92 = scmp.ne.s32.totalorder %s80, %s81
      %p93 = scmp.eq.s32.totalorder %s15, 3
      %p94 = por %p92, %p93
      %p96 = scmp.ne.s32.totalorder %s81, %s95
      %p97 = scmp.eq.s32.totalorder %s15, 0
      %p98 = por %p96, %p97
      %s99 = ssub.s32 %s16, %s28
      %p100 = scmp.eq.s32.totalorder %s99, 0
      %s102 = sadd.s32 %s101, 1
      %s103 = scalar_select %p100, %s101, %s102
      %p106 = pneg %p100
      %p107 = scmp.eq.s32.totalorder %s9, 3
      %p108 = por %p106, %p107
      %p109 = scmp.ne.s32.totalorder %s101, %s104
      %p110 = scmp.eq.s32.totalorder %s9, 0
      %p111 = por %p109, %p110
      %p112 = scmp.ne.s32.totalorder %s101, %s104
      %p113 = scmp.eq.s32.totalorder %s14, 3
      %p114 = por %p112, %p113
      %p115 = scmp.ne.s32.totalorder %s104, %s105
      %p116 = scmp.eq.s32.totalorder %s14, 0
      %p117 = por %p115, %p116
      %p118 = scmp.ne.s32.totalorder %s104, %s105
      %p119 = scmp.eq.s32.totalorder %s15, 3
      %p120 = por %p118, %p119
      %p122 = scmp.ne.s32.totalorder %s105, %s121
      %p123 = scmp.eq.s32.totalorder %s15, 0
      %p124 = por %p122, %p123
      %p125 = scmp.le.s32.totalorder 1, %s9
      %p126 = scmp.lt.s32.totalorder %s9, 5
      %p127 = pnand %p125, %p126
      %p128 = pneg %p127
      // Predicated region
      $region9: #{gnn_forward.11} parent=5 // pred_check
        _
      $region10: #{gnn_forward.11} parent=5 // pred_check_branch
        %130 = sbr.rel (%p127) target = $region12
      $region11: #{gnn_forward.11} parent=5 // pred_region
        %s131 = ssub.s32 %s9, 1
        // Predicated region
        $region13: #{gnn_forward.11} parent=11 // pred_check
          %p132 = pneg %p70
        $region14: #{gnn_forward.11} parent=11 // pred_check_branch
          %134 = sbr.rel (%p132) target = $region16
        $region15: #{gnn_forward.11} parent=11 // pred_region
          _
        $region16: #{gnn_forward.11} parent=11 // pred_fallthru
          _
        // Predicated region
        $region17: #{gnn_forward.11} parent=11 // pred_check
          %p135 = pneg %p91
        $region18: #{gnn_forward.11} parent=11 // pred_check_branch
          %137 = sbr.rel (%p135) target = $region20
        $region19: #{gnn_forward.11} parent=11 // pred_region
          _
        $region20: #{gnn_forward.11} parent=11 // pred_fallthru
          _
      $region12: #{gnn_forward.11} parent=5 // pred_fallthru
        _
      %p138 = scmp.lt.s32.totalorder %s9, 4
      // Predicated region
      $region21: #{gnn_forward.11} parent=5 // pred_check
        %p139 = pneg %p138
      $region22: #{gnn_forward.11} parent=5 // pred_check_branch
        %141 = sbr.rel (%p139) target = $region24
      $region23: #{gnn_forward.11} parent=5 // pred_region
        // Predicated region
        $region25: #{gnn_forward.11} parent=23 // pred_check
          %p142 = pneg %p43
        $region26: #{gnn_forward.11} parent=23 // pred_check_branch
          %144 = sbr.rel (%p142) target = $region28
        $region27: #{gnn_forward.11} parent=23 // pred_region
          %s145 = sand.u32 %s33, 1
          %s146 = sand.u32 %s33, 1
          %s147 = smul.addr %s146, 1024
          %s148 = scalar_lea.vmem [#allocation3], %s147
          %s149 = smul.u32 64, %s16
          %s150 = smul.u32 4, %s17
          %s151 = smul.addr %s149, 8
          %s152 = sadd.s32 %s150, %s151
          %s153 = smul.addr %s152, 4
          %s154 = scalar_lea.vmem %s0, %s153
          // Predicated region
          $region29: #{gnn_forward.11} parent=27 // pred_check
            _
          $region30: #{gnn_forward.11} parent=27 // pred_check_branch
            %156 = sbr.rel (0) target = $region32
          $region31: #{gnn_forward.11} parent=27 // pred_region
            // Predicated region
            $region33: #{gnn_forward.11} parent=31 // pred_check
              _
            $region34: #{gnn_forward.11} parent=31 // pred_check_branch
              %158 = sbr.rel (0) target = $region36
            $region35: #{gnn_forward.11} parent=31 // pred_region
              loop: start=0, step=1, limit=1
              $region37: #{gnn_forward.11} parent=35 // loop_pre_header
                _
              $region38: #{gnn_forward.11} parent=35 // loop_header
                %s160 = sphi 0, %s164
                %p161 = scmp.ge.s32.totalorder %s160, 1
                %s165 = sphi %s154, %s154
                %s166 = sphi %s148, %s148
              $region39: #{gnn_forward.11} parent=35 // loop_header_branch
                %163 = sbr.rel (%p161) target = $region43
              $region40: #{gnn_forward.11} parent=35 // loop_body
                %v167 = vld [vmem:[%s165] sm:$0xff]
                %168 = vst [vmem:[%s166] sm:$0xff] %v167
                %v169 = vld [vmem:[%s165 + $0x8] sm:$0xff]
                %170 = vst [vmem:[%s166 + $0x8] sm:$0xff] %v169
                %v171 = vld [vmem:[%s165 + $0x20] sm:$0xff]
                %172 = vst [vmem:[%s166 + $0x10] sm:$0xff] %v171
                %v173 = vld [vmem:[%s165 + $0x28] sm:$0xff]
                %174 = vst [vmem:[%s166 + $0x18] sm:$0xff] %v173
                %v175 = vld [vmem:[%s165 + $0x40] sm:$0xff]
                %176 = vst [vmem:[%s166 + $0x20] sm:$0xff] %v175
                %v177 = vld [vmem:[%s165 + $0x48] sm:$0xff]
                %178 = vst [vmem:[%s166 + $0x28] sm:$0xff] %v177
                %v179 = vld [vmem:[%s165 + $0x60] sm:$0xff]
                %180 = vst [vmem:[%s166 + $0x30] sm:$0xff] %v179
                %v181 = vld [vmem:[%s165 + $0x68] sm:$0xff]
                %182 = vst [vmem:[%s166 + $0x38] sm:$0xff] %v181
                %v183 = vld [vmem:[%s165 + $0x80] sm:$0xff]
                %184 = vst [vmem:[%s166 + $0x40] sm:$0xff] %v183
                %v185 = vld [vmem:[%s165 + $0x88] sm:$0xff]
                %186 = vst [vmem:[%s166 + $0x48] sm:$0xff] %v185
                %v187 = vld [vmem:[%s165 + $0xa0] sm:$0xff]
                %188 = vst [vmem:[%s166 + $0x50] sm:$0xff] %v187
                %v189 = vld [vmem:[%s165 + $0xa8] sm:$0xff]
                %190 = vst [vmem:[%s166 + $0x58] sm:$0xff] %v189
                %v191 = vld [vmem:[%s165 + $0xc0] sm:$0xff]
                %192 = vst [vmem:[%s166 + $0x60] sm:$0xff] %v191
                %v193 = vld [vmem:[%s165 + $0xc8] sm:$0xff]
                %194 = vst [vmem:[%s166 + $0x68] sm:$0xff] %v193
                %v195 = vld [vmem:[%s165 + $0xe0] sm:$0xff]
                %196 = vst [vmem:[%s166 + $0x70] sm:$0xff] %v195
                %v197 = vld [vmem:[%s165 + $0xe8] sm:$0xff]
                %198 = vst [vmem:[%s166 + $0x78] sm:$0xff] %v197
                %v199 = vld [vmem:[%s165 + $0x100] sm:$0xff]
                %200 = vst [vmem:[%s166 + $0x80] sm:$0xff] %v199
                %v201 = vld [vmem:[%s165 + $0x108] sm:$0xff]
                %202 = vst [vmem:[%s166 + $0x88] sm:$0xff] %v201
                %v203 = vld [vmem:[%s165 + $0x120] sm:$0xff]
                %204 = vst [vmem:[%s166 + $0x90] sm:$0xff] %v203
                %v205 = vld [vmem:[%s165 + $0x128] sm:$0xff]
                %206 = vst [vmem:[%s166 + $0x98] sm:$0xff] %v205
                %v207 = vld [vmem:[%s165 + $0x140] sm:$0xff]
                %208 = vst [vmem:[%s166 + $0xa0] sm:$0xff] %v207
                %v209 = vld [vmem:[%s165 + $0x148] sm:$0xff]
                %210 = vst [vmem:[%s166 + $0xa8] sm:$0xff] %v209
                %v211 = vld [vmem:[%s165 + $0x160] sm:$0xff]
                %212 = vst [vmem:[%s166 + $0xb0] sm:$0xff] %v211
                %v213 = vld [vmem:[%s165 + $0x168] sm:$0xff]
                %214 = vst [vmem:[%s166 + $0xb8] sm:$0xff] %v213
                %v215 = vld [vmem:[%s165 + $0x180] sm:$0xff]
                %216 = vst [vmem:[%s166 + $0xc0] sm:$0xff] %v215
                %v217 = vld [vmem:[%s165 + $0x188] sm:$0xff]
                %218 = vst [vmem:[%s166 + $0xc8] sm:$0xff] %v217
                %v219 = vld [vmem:[%s165 + $0x1a0] sm:$0xff]
                %220 = vst [vmem:[%s166 + $0xd0] sm:$0xff] %v219
                %v221 = vld [vmem:[%s165 + $0x1a8] sm:$0xff]
                %222 = vst [vmem:[%s166 + $0xd8] sm:$0xff] %v221
                %v223 = vld [vmem:[%s165 + $0x1c0] sm:$0xff]
                %224 = vst [vmem:[%s166 + $0xe0] sm:$0xff] %v223
                %v225 = vld [vmem:[%s165 + $0x1c8] sm:$0xff]
                %226 = vst [vmem:[%s166 + $0xe8] sm:$0xff] %v225
                %v227 = vld [vmem:[%s165 + $0x1e0] sm:$0xff]
                %228 = vst [vmem:[%s166 + $0xf0] sm:$0xff] %v227
                %v229 = vld [vmem:[%s165 + $0x1e8] sm:$0xff]
                %230 = vst [vmem:[%s166 + $0xf8] sm:$0xff] %v229
                %v231 = vld [vmem:[%s165 + $0x200] sm:$0xff]
                %232 = vst [vmem:[%s166 + $0x100] sm:$0xff] %v231
                %v233 = vld [vmem:[%s165 + $0x208] sm:$0xff]
                %234 = vst [vmem:[%s166 + $0x108] sm:$0xff] %v233
                %v235 = vld [vmem:[%s165 + $0x220] sm:$0xff]
                %236 = vst [vmem:[%s166 + $0x110] sm:$0xff] %v235
                %v237 = vld [vmem:[%s165 + $0x228] sm:$0xff]
                %238 = vst [vmem:[%s166 + $0x118] sm:$0xff] %v237
                %v239 = vld [vmem:[%s165 + $0x240] sm:$0xff]
                %240 = vst [vmem:[%s166 + $0x120] sm:$0xff] %v239
                %v241 = vld [vmem:[%s165 + $0x248] sm:$0xff]
                %242 = vst [vmem:[%s166 + $0x128] sm:$0xff] %v241
                %v243 = vld [vmem:[%s165 + $0x260] sm:$0xff]
                %244 = vst [vmem:[%s166 + $0x130] sm:$0xff] %v243
                %v245 = vld [vmem:[%s165 + $0x268] sm:$0xff]
                %246 = vst [vmem:[%s166 + $0x138] sm:$0xff] %v245
                %v247 = vld [vmem:[%s165 + $0x280] sm:$0xff]
                %248 = vst [vmem:[%s166 + $0x140] sm:$0xff] %v247
                %v249 = vld [vmem:[%s165 + $0x288] sm:$0xff]
                %250 = vst [vmem:[%s166 + $0x148] sm:$0xff] %v249
                %v251 = vld [vmem:[%s165 + $0x2a0] sm:$0xff]
                %252 = vst [vmem:[%s166 + $0x150] sm:$0xff] %v251
                %v253 = vld [vmem:[%s165 + $0x2a8] sm:$0xff]
                %254 = vst [vmem:[%s166 + $0x158] sm:$0xff] %v253
                %v255 = vld [vmem:[%s165 + $0x2c0] sm:$0xff]
                %256 = vst [vmem:[%s166 + $0x160] sm:$0xff] %v255
                %v257 = vld [vmem:[%s165 + $0x2c8] sm:$0xff]
                %258 = vst [vmem:[%s166 + $0x168] sm:$0xff] %v257
                %v259 = vld [vmem:[%s165 + $0x2e0] sm:$0xff]
                %260 = vst [vmem:[%s166 + $0x170] sm:$0xff] %v259
                %v261 = vld [vmem:[%s165 + $0x2e8] sm:$0xff]
                %262 = vst [vmem:[%s166 + $0x178] sm:$0xff] %v261
                %v263 = vld [vmem:[%s165 + $0x300] sm:$0xff]
                %264 = vst [vmem:[%s166 + $0x180] sm:$0xff] %v263
                %v265 = vld [vmem:[%s165 + $0x308] sm:$0xff]
                %266 = vst [vmem:[%s166 + $0x188] sm:$0xff] %v265
                %v267 = vld [vmem:[%s165 + $0x320] sm:$0xff]
                %268 = vst [vmem:[%s166 + $0x190] sm:$0xff] %v267
                %v269 = vld [vmem:[%s165 + $0x328] sm:$0xff]
                %270 = vst [vmem:[%s166 + $0x198] sm:$0xff] %v269
                %v271 = vld [vmem:[%s165 + $0x340] sm:$0xff]
                %272 = vst [vmem:[%s166 + $0x1a0] sm:$0xff] %v271
                %v273 = vld [vmem:[%s165 + $0x348] sm:$0xff]
                %274 = vst [vmem:[%s166 + $0x1a8] sm:$0xff] %v273
                %v275 = vld [vmem:[%s165 + $0x360] sm:$0xff]
                %276 = vst [vmem:[%s166 + $0x1b0] sm:$0xff] %v275
                %v277 = vld [vmem:[%s165 + $0x368] sm:$0xff]
                %278 = vst [vmem:[%s166 + $0x1b8] sm:$0xff] %v277
                %v279 = vld [vmem:[%s165 + $0x380] sm:$0xff]
                %280 = vst [vmem:[%s166 + $0x1c0] sm:$0xff] %v279
                %v281 = vld [vmem:[%s165 + $0x388] sm:$0xff]
                %282 = vst [vmem:[%s166 + $0x1c8] sm:$0xff] %v281
                %v283 = vld [vmem:[%s165 + $0x3a0] sm:$0xff]
                %284 = vst [vmem:[%s166 + $0x1d0] sm:$0xff] %v283
                %v285 = vld [vmem:[%s165 + $0x3a8] sm:$0xff]
                %286 = vst [vmem:[%s166 + $0x1d8] sm:$0xff] %v285
                %v287 = vld [vmem:[%s165 + $0x3c0] sm:$0xff]
                %288 = vst [vmem:[%s166 + $0x1e0] sm:$0xff] %v287
                %v289 = vld [vmem:[%s165 + $0x3c8] sm:$0xff]
                %290 = vst [vmem:[%s166 + $0x1e8] sm:$0xff] %v289
                %v291 = vld [vmem:[%s165 + $0x3e0] sm:$0xff]
                %292 = vst [vmem:[%s166 + $0x1f0] sm:$0xff] %v291
                %v293 = vld [vmem:[%s165 + $0x3e8] sm:$0xff]
                %294 = vst [vmem:[%s166 + $0x1f8] sm:$0xff] %v293
                %v295 = vld [vmem:[%s165 + $0x400] sm:$0xff]
                %296 = vst [vmem:[%s166 + $0x200] sm:$0xff] %v295
                %v297 = vld [vmem:[%s165 + $0x408] sm:$0xff]
                %298 = vst [vmem:[%s166 + $0x208] sm:$0xff] %v297
                %v299 = vld [vmem:[%s165 + $0x420] sm:$0xff]
                %300 = vst [vmem:[%s166 + $0x210] sm:$0xff] %v299
                %v301 = vld [vmem:[%s165 + $0x428] sm:$0xff]
                %302 = vst [vmem:[%s166 + $0x218] sm:$0xff] %v301
                %v303 = vld [vmem:[%s165 + $0x440] sm:$0xff]
                %304 = vst [vmem:[%s166 + $0x220] sm:$0xff] %v303
                %v305 = vld [vmem:[%s165 + $0x448] sm:$0xff]
                %306 = vst [vmem:[%s166 + $0x228] sm:$0xff] %v305
                %v307 = vld [vmem:[%s165 + $0x460] sm:$0xff]
                %308 = vst [vmem:[%s166 + $0x230] sm:$0xff] %v307
                %v309 = vld [vmem:[%s165 + $0x468] sm:$0xff]
                %310 = vst [vmem:[%s166 + $0x238] sm:$0xff] %v309
                %v311 = vld [vmem:[%s165 + $0x480] sm:$0xff]
                %312 = vst [vmem:[%s166 + $0x240] sm:$0xff] %v311
                %v313 = vld [vmem:[%s165 + $0x488] sm:$0xff]
                %314 = vst [vmem:[%s166 + $0x248] sm:$0xff] %v313
                %v315 = vld [vmem:[%s165 + $0x4a0] sm:$0xff]
                %316 = vst [vmem:[%s166 + $0x250] sm:$0xff] %v315
                %v317 = vld [vmem:[%s165 + $0x4a8] sm:$0xff]
                %318 = vst [vmem:[%s166 + $0x258] sm:$0xff] %v317
                %v319 = vld [vmem:[%s165 + $0x4c0] sm:$0xff]
                %320 = vst [vmem:[%s166 + $0x260] sm:$0xff] %v319
                %v321 = vld [vmem:[%s165 + $0x4c8] sm:$0xff]
                %322 = vst [vmem:[%s166 + $0x268] sm:$0xff] %v321
                %v323 = vld [vmem:[%s165 + $0x4e0] sm:$0xff]
                %324 = vst [vmem:[%s166 + $0x270] sm:$0xff] %v323
                %v325 = vld [vmem:[%s165 + $0x4e8] sm:$0xff]
                %326 = vst [vmem:[%s166 + $0x278] sm:$0xff] %v325
                %v327 = vld [vmem:[%s165 + $0x500] sm:$0xff]
                %328 = vst [vmem:[%s166 + $0x280] sm:$0xff] %v327
                %v329 = vld [vmem:[%s165 + $0x508] sm:$0xff]
                %330 = vst [vmem:[%s166 + $0x288] sm:$0xff] %v329
                %v331 = vld [vmem:[%s165 + $0x520] sm:$0xff]
                %332 = vst [vmem:[%s166 + $0x290] sm:$0xff] %v331
                %v333 = vld [vmem:[%s165 + $0x528] sm:$0xff]
                %334 = vst [vmem:[%s166 + $0x298] sm:$0xff] %v333
                %v335 = vld [vmem:[%s165 + $0x540] sm:$0xff]
                %336 = vst [vmem:[%s166 + $0x2a0] sm:$0xff] %v335
                %v337 = vld [vmem:[%s165 + $0x548] sm:$0xff]
                %338 = vst [vmem:[%s166 + $0x2a8] sm:$0xff] %v337
                %v339 = vld [vmem:[%s165 + $0x560] sm:$0xff]
                %340 = vst [vmem:[%s166 + $0x2b0] sm:$0xff] %v339
                %v341 = vld [vmem:[%s165 + $0x568] sm:$0xff]
                %342 = vst [vmem:[%s166 + $0x2b8] sm:$0xff] %v341
                %v343 = vld [vmem:[%s165 + $0x580] sm:$0xff]
                %344 = vst [vmem:[%s166 + $0x2c0] sm:$0xff] %v343
                %v345 = vld [vmem:[%s165 + $0x588] sm:$0xff]
                %346 = vst [vmem:[%s166 + $0x2c8] sm:$0xff] %v345
                %v347 = vld [vmem:[%s165 + $0x5a0] sm:$0xff]
                %348 = vst [vmem:[%s166 + $0x2d0] sm:$0xff] %v347
                %v349 = vld [vmem:[%s165 + $0x5a8] sm:$0xff]
                %350 = vst [vmem:[%s166 + $0x2d8] sm:$0xff] %v349
                %v351 = vld [vmem:[%s165 + $0x5c0] sm:$0xff]
                %352 = vst [vmem:[%s166 + $0x2e0] sm:$0xff] %v351
                %v353 = vld [vmem:[%s165 + $0x5c8] sm:$0xff]
                %354 = vst [vmem:[%s166 + $0x2e8] sm:$0xff] %v353
                %v355 = vld [vmem:[%s165 + $0x5e0] sm:$0xff]
                %356 = vst [vmem:[%s166 + $0x2f0] sm:$0xff] %v355
                %v357 = vld [vmem:[%s165 + $0x5e8] sm:$0xff]
                %358 = vst [vmem:[%s166 + $0x2f8] sm:$0xff] %v357
                %v359 = vld [vmem:[%s165 + $0x600] sm:$0xff]
                %360 = vst [vmem:[%s166 + $0x300] sm:$0xff] %v359
                %v361 = vld [vmem:[%s165 + $0x608] sm:$0xff]
                %362 = vst [vmem:[%s166 + $0x308] sm:$0xff] %v361
                %v363 = vld [vmem:[%s165 + $0x620] sm:$0xff]
                %364 = vst [vmem:[%s166 + $0x310] sm:$0xff] %v363
                %v365 = vld [vmem:[%s165 + $0x628] sm:$0xff]
                %366 = vst [vmem:[%s166 + $0x318] sm:$0xff] %v365
                %v367 = vld [vmem:[%s165 + $0x640] sm:$0xff]
                %368 = vst [vmem:[%s166 + $0x320] sm:$0xff] %v367
                %v369 = vld [vmem:[%s165 + $0x648] sm:$0xff]
                %370 = vst [vmem:[%s166 + $0x328] sm:$0xff] %v369
                %v371 = vld [vmem:[%s165 + $0x660] sm:$0xff]
                %372 = vst [vmem:[%s166 + $0x330] sm:$0xff] %v371
                %v373 = vld [vmem:[%s165 + $0x668] sm:$0xff]
                %374 = vst [vmem:[%s166 + $0x338] sm:$0xff] %v373
                %v375 = vld [vmem:[%s165 + $0x680] sm:$0xff]
                %376 = vst [vmem:[%s166 + $0x340] sm:$0xff] %v375
                %v377 = vld [vmem:[%s165 + $0x688] sm:$0xff]
                %378 = vst [vmem:[%s166 + $0x348] sm:$0xff] %v377
                %v379 = vld [vmem:[%s165 + $0x6a0] sm:$0xff]
                %380 = vst [vmem:[%s166 + $0x350] sm:$0xff] %v379
                %v381 = vld [vmem:[%s165 + $0x6a8] sm:$0xff]
                %382 = vst [vmem:[%s166 + $0x358] sm:$0xff] %v381
                %v383 = vld [vmem:[%s165 + $0x6c0] sm:$0xff]
                %384 = vst [vmem:[%s166 + $0x360] sm:$0xff] %v383
                %v385 = vld [vmem:[%s165 + $0x6c8] sm:$0xff]
                %386 = vst [vmem:[%s166 + $0x368] sm:$0xff] %v385
                %v387 = vld [vmem:[%s165 + $0x6e0] sm:$0xff]
                %388 = vst [vmem:[%s166 + $0x370] sm:$0xff] %v387
                %v389 = vld [vmem:[%s165 + $0x6e8] sm:$0xff]
                %390 = vst [vmem:[%s166 + $0x378] sm:$0xff] %v389
                %v391 = vld [vmem:[%s165 + $0x700] sm:$0xff]
                %392 = vst [vmem:[%s166 + $0x380] sm:$0xff] %v391
                %v393 = vld [vmem:[%s165 + $0x708] sm:$0xff]
                %394 = vst [vmem:[%s166 + $0x388] sm:$0xff] %v393
                %v395 = vld [vmem:[%s165 + $0x720] sm:$0xff]
                %396 = vst [vmem:[%s166 + $0x390] sm:$0xff] %v395
                %v397 = vld [vmem:[%s165 + $0x728] sm:$0xff]
                %398 = vst [vmem:[%s166 + $0x398] sm:$0xff] %v397
                %v399 = vld [vmem:[%s165 + $0x740] sm:$0xff]
                %400 = vst [vmem:[%s166 + $0x3a0] sm:$0xff] %v399
                %v401 = vld [vmem:[%s165 + $0x748] sm:$0xff]
                %402 = vst [vmem:[%s166 + $0x3a8] sm:$0xff] %v401
                %v403 = vld [vmem:[%s165 + $0x760] sm:$0xff]
                %404 = vst [vmem:[%s166 + $0x3b0] sm:$0xff] %v403
                %v405 = vld [vmem:[%s165 + $0x768] sm:$0xff]
                %406 = vst [vmem:[%s166 + $0x3b8] sm:$0xff] %v405
                %v407 = vld [vmem:[%s165 + $0x780] sm:$0xff]
                %408 = vst [vmem:[%s166 + $0x3c0] sm:$0xff] %v407
                %v409 = vld [vmem:[%s165 + $0x788] sm:$0xff]
                %410 = vst [vmem:[%s166 + $0x3c8] sm:$0xff] %v409
                %v411 = vld [vmem:[%s165 + $0x7a0] sm:$0xff]
                %412 = vst [vmem:[%s166 + $0x3d0] sm:$0xff] %v411
                %v413 = vld [vmem:[%s165 + $0x7a8] sm:$0xff]
                %414 = vst [vmem:[%s166 + $0x3d8] sm:$0xff] %v413
                %v415 = vld [vmem:[%s165 + $0x7c0] sm:$0xff]
                %416 = vst [vmem:[%s166 + $0x3e0] sm:$0xff] %v415
                %v417 = vld [vmem:[%s165 + $0x7c8] sm:$0xff]
                %418 = vst [vmem:[%s166 + $0x3e8] sm:$0xff] %v417
                %v419 = vld [vmem:[%s165 + $0x7e0] sm:$0xff]
                %420 = vst [vmem:[%s166 + $0x3f0] sm:$0xff] %v419
                %v421 = vld [vmem:[%s165 + $0x7e8] sm:$0xff]
                %422 = vst [vmem:[%s166 + $0x3f8] sm:$0xff] %v421
              $region41: #{gnn_forward.11} parent=35 // loop_footer
                %s164 = sadd.s32 1, %s160
              $region42: #{gnn_forward.11} parent=35 // loop_footer_branch
                %159 = sbr.rel target = $region38
              $region43: #{gnn_forward.11} parent=35 // loop_exit
                _
            $region36: #{gnn_forward.11} parent=31 // pred_fallthru
              _
            // Predicated region
            $region44: #{gnn_forward.11} parent=31 // pred_check
              _
            $region45: #{gnn_forward.11} parent=31 // pred_check_branch
              %424 = sbr.rel target = $region47
            $region46: #{gnn_forward.11} parent=31 // pred_region
              _
            $region47: #{gnn_forward.11} parent=31 // pred_fallthru
              _
          $region32: #{gnn_forward.11} parent=27 // pred_fallthru
            _
          %425 = vnop
        $region28: #{gnn_forward.11} parent=23 // pred_fallthru
          _
      $region24: #{gnn_forward.11} parent=5 // pred_fallthru
        _
      %p426 = scmp.le.s32.totalorder 1, %s9
      %p427 = scmp.lt.s32.totalorder %s9, 5
      %p428 = pnand %p426, %p427
      %p429 = pneg %p428
      // Predicated region
      $region48: #{gnn_forward.11} parent=5 // pred_check
        _
      $region49: #{gnn_forward.11} parent=5 // pred_check_branch
        %431 = sbr.rel (%p428) target = $region51
      $region50: #{gnn_forward.11} parent=5 // pred_region
        %s432 = ssub.s32 %s9, 1
        %s433 = sand.u32 %s36, 1
        %s434 = sand.u32 %s36, 1
        %s435 = smul.addr %s434, 1024
        %s436 = scalar_lea.vmem [#allocation3], %s435
        // Predicated region
        $region52: #{gnn_forward.11} parent=50 // pred_check
          %p437 = pneg %p49
        $region53: #{gnn_forward.11} parent=50 // pred_check_branch
          %439 = sbr.rel (%p437) target = $region55
        $region54: #{gnn_forward.11} parent=50 // pred_region
          _
        $region55: #{gnn_forward.11} parent=50 // pred_fallthru
          _
        %s440 = sand.u32 %s36, 1
        %s441 = sand.u32 %s36, 1
        %s442 = smul.addr %s441, 1024
        %s443 = scalar_lea.vmem [#allocation3], %s442
        %p444 = pneg %p49
        %p445 = pneg %p46
        %p446 = pneg %p70
        %p447 = pneg %p67
        %p448 = pneg %p91
        %p449 = pneg %p88
        %p450 = pneg %p117
        %p451 = pneg %p114
        %s452 = smul.u32 64, %s18
        %p453 = scmp.lt.s32.totalorder %s452, 127
        %s454 = scalar_select %p453, %s452, 127
        %s455 = smul.addr %s454, 8
        %s456 = scalar_lea.vmem %s3, %s455
        %s457 = smul.u32 64, %s18
        %s458 = smul.u32 4, %s19
        %s459 = smul.u32 64, %s18
        %p460 = scmp.lt.s32.totalorder %s459, 127
        %s461 = scalar_select %p460, %s459, 127
        %s462 = smul.addr %s461, 8
        %s463 = scalar_lea.vmem %s3, %s462
        %s464 = smul.u32 64, %s18
        %p466 = scmp.eq.s32.totalorder %s19, 0
        // Predicated region
        $region56: #{gnn_forward.11} parent=50 // pred_check
          %p467 = pneg %p466
        $region57: #{gnn_forward.11} parent=50 // pred_check_branch
          %469 = sbr.rel (%p467) target = $region59
        $region58: #{gnn_forward.11} parent=50 // pred_region
          %470 = vst [vmem:[#allocation2] sm:$0xff] 0.0
          %471 = vst [vmem:[#allocation2 + $0x8] sm:$0xff] 0.0
          %472 = vst [vmem:[#allocation2 + $0x10] sm:$0xff] 0.0
          %473 = vst [vmem:[#allocation2 + $0x18] sm:$0xff] 0.0
          %474 = vst [vmem:[#allocation2 + $0x20] sm:$0xff] 0.0
          %475 = vst [vmem:[#allocation2 + $0x28] sm:$0xff] 0.0
          %476 = vst [vmem:[#allocation2 + $0x30] sm:$0xff] 0.0
          %477 = vst [vmem:[#allocation2 + $0x38] sm:$0xff] 0.0
          %478 = vst [vmem:[#allocation2 + $0x40] sm:$0xff] 0.0
          %479 = vst [vmem:[#allocation2 + $0x48] sm:$0xff] 0.0
          %480 = vst [vmem:[#allocation2 + $0x50] sm:$0xff] 0.0
          %481 = vst [vmem:[#allocation2 + $0x58] sm:$0xff] 0.0
          %482 = vst [vmem:[#allocation2 + $0x60] sm:$0xff] 0.0
          %483 = vst [vmem:[#allocation2 + $0x68] sm:$0xff] 0.0
          %484 = vst [vmem:[#allocation2 + $0x70] sm:$0xff] 0.0
          %485 = vst [vmem:[#allocation2 + $0x78] sm:$0xff] 0.0
          %486 = vst [vmem:[#allocation2 + $0x80] sm:$0xff] 0.0
          %487 = vst [vmem:[#allocation2 + $0x88] sm:$0xff] 0.0
          %488 = vst [vmem:[#allocation2 + $0x90] sm:$0xff] 0.0
          %489 = vst [vmem:[#allocation2 + $0x98] sm:$0xff] 0.0
          %490 = vst [vmem:[#allocation2 + $0xa0] sm:$0xff] 0.0
          %491 = vst [vmem:[#allocation2 + $0xa8] sm:$0xff] 0.0
          %492 = vst [vmem:[#allocation2 + $0xb0] sm:$0xff] 0.0
          %493 = vst [vmem:[#allocation2 + $0xb8] sm:$0xff] 0.0
          %494 = vst [vmem:[#allocation2 + $0xc0] sm:$0xff] 0.0
          %495 = vst [vmem:[#allocation2 + $0xc8] sm:$0xff] 0.0
          %496 = vst [vmem:[#allocation2 + $0xd0] sm:$0xff] 0.0
          %497 = vst [vmem:[#allocation2 + $0xd8] sm:$0xff] 0.0
          %498 = vst [vmem:[#allocation2 + $0xe0] sm:$0xff] 0.0
          %499 = vst [vmem:[#allocation2 + $0xe8] sm:$0xff] 0.0
          %500 = vst [vmem:[#allocation2 + $0xf0] sm:$0xff] 0.0
          %501 = vst [vmem:[#allocation2 + $0xf8] sm:$0xff] 0.0
          %502 = vst [vmem:[#allocation2 + $0x100] sm:$0xff] 0.0
          %503 = vst [vmem:[#allocation2 + $0x108] sm:$0xff] 0.0
          %504 = vst [vmem:[#allocation2 + $0x110] sm:$0xff] 0.0
          %505 = vst [vmem:[#allocation2 + $0x118] sm:$0xff] 0.0
          %506 = vst [vmem:[#allocation2 + $0x120] sm:$0xff] 0.0
          %507 = vst [vmem:[#allocation2 + $0x128] sm:$0xff] 0.0
          %508 = vst [vmem:[#allocation2 + $0x130] sm:$0xff] 0.0
          %509 = vst [vmem:[#allocation2 + $0x138] sm:$0xff] 0.0
          %510 = vst [vmem:[#allocation2 + $0x140] sm:$0xff] 0.0
          %511 = vst [vmem:[#allocation2 + $0x148] sm:$0xff] 0.0
          %512 = vst [vmem:[#allocation2 + $0x150] sm:$0xff] 0.0
          %513 = vst [vmem:[#allocation2 + $0x158] sm:$0xff] 0.0
          %514 = vst [vmem:[#allocation2 + $0x160] sm:$0xff] 0.0
          %515 = vst [vmem:[#allocation2 + $0x168] sm:$0xff] 0.0
          %516 = vst [vmem:[#allocation2 + $0x170] sm:$0xff] 0.0
          %517 = vst [vmem:[#allocation2 + $0x178] sm:$0xff] 0.0
          %518 = vst [vmem:[#allocation2 + $0x180] sm:$0xff] 0.0
          %519 = vst [vmem:[#allocation2 + $0x188] sm:$0xff] 0.0
          %520 = vst [vmem:[#allocation2 + $0x190] sm:$0xff] 0.0
          %521 = vst [vmem:[#allocation2 + $0x198] sm:$0xff] 0.0
          %522 = vst [vmem:[#allocation2 + $0x1a0] sm:$0xff] 0.0
          %523 = vst [vmem:[#allocation2 + $0x1a8] sm:$0xff] 0.0
          %524 = vst [vmem:[#allocation2 + $0x1b0] sm:$0xff] 0.0
          %525 = vst [vmem:[#allocation2 + $0x1b8] sm:$0xff] 0.0
          %526 = vst [vmem:[#allocation2 + $0x1c0] sm:$0xff] 0.0
          %527 = vst [vmem:[#allocation2 + $0x1c8] sm:$0xff] 0.0
          %528 = vst [vmem:[#allocation2 + $0x1d0] sm:$0xff] 0.0
          %529 = vst [vmem:[#allocation2 + $0x1d8] sm:$0xff] 0.0
          %530 = vst [vmem:[#allocation2 + $0x1e0] sm:$0xff] 0.0
          %531 = vst [vmem:[#allocation2 + $0x1e8] sm:$0xff] 0.0
          %532 = vst [vmem:[#allocation2 + $0x1f0] sm:$0xff] 0.0
          %533 = vst [vmem:[#allocation2 + $0x1f8] sm:$0xff] 0.0
        $region59: #{gnn_forward.11} parent=50 // pred_fallthru
          _
        %s534 = smul.u32 %s19, 512
        %s535 = sshra.s32 %s534, 3
        %s536 = sand.u32 %s534, 7
        %s537 = smul.addr %s535, 4
        %s538 = scalar_lea.vmem %s1, %s537
        %v539 = vld [vmem:[%s538] sm:$0xf]
        %v540 = vld [vmem:[%s538 + $0x4] sm:$0xf]
        %v541 = vld [vmem:[%s538 + $0x8] sm:$0xf]
        %v542 = vld [vmem:[%s538 + $0xc] sm:$0xf]
        %v543 = vld [vmem:[%s538 + $0x10] sm:$0xf]
        %v544 = vld [vmem:[%s538 + $0x14] sm:$0xf]
        %v545 = vld [vmem:[%s538 + $0x18] sm:$0xf]
        %v546 = vld [vmem:[%s538 + $0x1c] sm:$0xf]
        %v547 = vld [vmem:[%s538 + $0x20] sm:$0xf]
        %v548 = vld [vmem:[%s538 + $0x24] sm:$0xf]
        %v549 = vld [vmem:[%s538 + $0x28] sm:$0xf]
        %v550 = vld [vmem:[%s538 + $0x2c] sm:$0xf]
        %v551 = vld [vmem:[%s538 + $0x30] sm:$0xf]
        %v552 = vld [vmem:[%s538 + $0x34] sm:$0xf]
        %v553 = vld [vmem:[%s538 + $0x38] sm:$0xf]
        %v554 = vld [vmem:[%s538 + $0x3c] sm:$0xf]
        %v555 = vld [vmem:[%s538 + $0x40] sm:$0xf]
        %v556 = vld [vmem:[%s538 + $0x44] sm:$0xf]
        %v557 = vld [vmem:[%s538 + $0x48] sm:$0xf]
        %v558 = vld [vmem:[%s538 + $0x4c] sm:$0xf]
        %v559 = vld [vmem:[%s538 + $0x50] sm:$0xf]
        %v560 = vld [vmem:[%s538 + $0x54] sm:$0xf]
        %v561 = vld [vmem:[%s538 + $0x58] sm:$0xf]
        %v562 = vld [vmem:[%s538 + $0x5c] sm:$0xf]
        %v563 = vld [vmem:[%s538 + $0x60] sm:$0xf]
        %v564 = vld [vmem:[%s538 + $0x64] sm:$0xf]
        %v565 = vld [vmem:[%s538 + $0x68] sm:$0xf]
        %v566 = vld [vmem:[%s538 + $0x6c] sm:$0xf]
        %v567 = vld [vmem:[%s538 + $0x70] sm:$0xf]
        %v568 = vld [vmem:[%s538 + $0x74] sm:$0xf]
        %v569 = vld [vmem:[%s538 + $0x78] sm:$0xf]
        %v570 = vld [vmem:[%s538 + $0x7c] sm:$0xf]
        %v571 = vld [vmem:[%s538 + $0x80] sm:$0xf]
        %v572 = vld [vmem:[%s538 + $0x84] sm:$0xf]
        %v573 = vld [vmem:[%s538 + $0x88] sm:$0xf]
        %v574 = vld [vmem:[%s538 + $0x8c] sm:$0xf]
        %v575 = vld [vmem:[%s538 + $0x90] sm:$0xf]
        %v576 = vld [vmem:[%s538 + $0x94] sm:$0xf]
        %v577 = vld [vmem:[%s538 + $0x98] sm:$0xf]
        %v578 = vld [vmem:[%s538 + $0x9c] sm:$0xf]
        %v579 = vld [vmem:[%s538 + $0xa0] sm:$0xf]
        %v580 = vld [vmem:[%s538 + $0xa4] sm:$0xf]
        %v581 = vld [vmem:[%s538 + $0xa8] sm:$0xf]
        %v582 = vld [vmem:[%s538 + $0xac] sm:$0xf]
        %v583 = vld [vmem:[%s538 + $0xb0] sm:$0xf]
        %v584 = vld [vmem:[%s538 + $0xb4] sm:$0xf]
        %v585 = vld [vmem:[%s538 + $0xb8] sm:$0xf]
        %v586 = vld [vmem:[%s538 + $0xbc] sm:$0xf]
        %v587 = vld [vmem:[%s538 + $0xc0] sm:$0xf]
        %v588 = vld [vmem:[%s538 + $0xc4] sm:$0xf]
        %v589 = vld [vmem:[%s538 + $0xc8] sm:$0xf]
        %v590 = vld [vmem:[%s538 + $0xcc] sm:$0xf]
        %v591 = vld [vmem:[%s538 + $0xd0] sm:$0xf]
        %v592 = vld [vmem:[%s538 + $0xd4] sm:$0xf]
        %v593 = vld [vmem:[%s538 + $0xd8] sm:$0xf]
        %v594 = vld [vmem:[%s538 + $0xdc] sm:$0xf]
        %v595 = vld [vmem:[%s538 + $0xe0] sm:$0xf]
        %v596 = vld [vmem:[%s538 + $0xe4] sm:$0xf]
        %v597 = vld [vmem:[%s538 + $0xe8] sm:$0xf]
        %v598 = vld [vmem:[%s538 + $0xec] sm:$0xf]
        %v599 = vld [vmem:[%s538 + $0xf0] sm:$0xf]
        %v600 = vld [vmem:[%s538 + $0xf4] sm:$0xf]
        %v601 = vld [vmem:[%s538 + $0xf8] sm:$0xf]
        %v602 = vld [vmem:[%s538 + $0xfc] sm:$0xf]
        %v603 = vld [vmem:[#allocation2] sm:$0xff]
        %v604 = vld [vmem:[#allocation2 + $0x8] sm:$0xff]
        %v605 = vld [vmem:[#allocation2 + $0x10] sm:$0xff]
        %v606 = vld [vmem:[#allocation2 + $0x18] sm:$0xff]
        %v607 = vld [vmem:[#allocation2 + $0x20] sm:$0xff]
        %v608 = vld [vmem:[#allocation2 + $0x28] sm:$0xff]
        %v609 = vld [vmem:[#allocation2 + $0x30] sm:$0xff]
        %v610 = vld [vmem:[#allocation2 + $0x38] sm:$0xff]
        %v611 = vld [vmem:[#allocation2 + $0x40] sm:$0xff]
        %v612 = vld [vmem:[#allocation2 + $0x48] sm:$0xff]
        %v613 = vld [vmem:[#allocation2 + $0x50] sm:$0xff]
        %v614 = vld [vmem:[#allocation2 + $0x58] sm:$0xff]
        %v615 = vld [vmem:[#allocation2 + $0x60] sm:$0xff]
        %v616 = vld [vmem:[#allocation2 + $0x68] sm:$0xff]
        %v617 = vld [vmem:[#allocation2 + $0x70] sm:$0xff]
        %v618 = vld [vmem:[#allocation2 + $0x78] sm:$0xff]
        %v619 = vld [vmem:[#allocation2 + $0x80] sm:$0xff]
        %v620 = vld [vmem:[#allocation2 + $0x88] sm:$0xff]
        %v621 = vld [vmem:[#allocation2 + $0x90] sm:$0xff]
        %v622 = vld [vmem:[#allocation2 + $0x98] sm:$0xff]
        %v623 = vld [vmem:[#allocation2 + $0xa0] sm:$0xff]
        %v624 = vld [vmem:[#allocation2 + $0xa8] sm:$0xff]
        %v625 = vld [vmem:[#allocation2 + $0xb0] sm:$0xff]
        %v626 = vld [vmem:[#allocation2 + $0xb8] sm:$0xff]
        %v627 = vld [vmem:[#allocation2 + $0xc0] sm:$0xff]
        %v628 = vld [vmem:[#allocation2 + $0xc8] sm:$0xff]
        %v629 = vld [vmem:[#allocation2 + $0xd0] sm:$0xff]
        %v630 = vld [vmem:[#allocation2 + $0xd8] sm:$0xff]
        %v631 = vld [vmem:[#allocation2 + $0xe0] sm:$0xff]
        %v632 = vld [vmem:[#allocation2 + $0xe8] sm:$0xff]
        %v633 = vld [vmem:[#allocation2 + $0xf0] sm:$0xff]
        %v634 = vld [vmem:[#allocation2 + $0xf8] sm:$0xff]
        %v635 = vld [vmem:[#allocation2 + $0x100] sm:$0xff]
        %v636 = vld [vmem:[#allocation2 + $0x108] sm:$0xff]
        %v637 = vld [vmem:[#allocation2 + $0x110] sm:$0xff]
        %v638 = vld [vmem:[#allocation2 + $0x118] sm:$0xff]
        %v639 = vld [vmem:[#allocation2 + $0x120] sm:$0xff]
        %v640 = vld [vmem:[#allocation2 + $0x128] sm:$0xff]
        %v641 = vld [vmem:[#allocation2 + $0x130] sm:$0xff]
        %v642 = vld [vmem:[#allocation2 + $0x138] sm:$0xff]
        %v643 = vld [vmem:[#allocation2 + $0x140] sm:$0xff]
        %v644 = vld [vmem:[#allocation2 + $0x148] sm:$0xff]
        %v645 = vld [vmem:[#allocation2 + $0x150] sm:$0xff]
        %v646 = vld [vmem:[#allocation2 + $0x158] sm:$0xff]
        %v647 = vld [vmem:[#allocation2 + $0x160] sm:$0xff]
        %v648 = vld [vmem:[#allocation2 + $0x168] sm:$0xff]
        %v649 = vld [vmem:[#allocation2 + $0x170] sm:$0xff]
        %v650 = vld [vmem:[#allocation2 + $0x178] sm:$0xff]
        %v651 = vld [vmem:[#allocation2 + $0x180] sm:$0xff]
        %v652 = vld [vmem:[#allocation2 + $0x188] sm:$0xff]
        %v653 = vld [vmem:[#allocation2 + $0x190] sm:$0xff]
        %v654 = vld [vmem:[#allocation2 + $0x198] sm:$0xff]
        %v655 = vld [vmem:[#allocation2 + $0x1a0] sm:$0xff]
        %v656 = vld [vmem:[#allocation2 + $0x1a8] sm:$0xff]
        %v657 = vld [vmem:[#allocation2 + $0x1b0] sm:$0xff]
        %v658 = vld [vmem:[#allocation2 + $0x1b8] sm:$0xff]
        %v659 = vld [vmem:[#allocation2 + $0x1c0] sm:$0xff]
        %v660 = vld [vmem:[#allocation2 + $0x1c8] sm:$0xff]
        %v661 = vld [vmem:[#allocation2 + $0x1d0] sm:$0xff]
        %v662 = vld [vmem:[#allocation2 + $0x1d8] sm:$0xff]
        %v663 = vld [vmem:[#allocation2 + $0x1e0] sm:$0xff]
        %v664 = vld [vmem:[#allocation2 + $0x1e8] sm:$0xff]
        %v665 = vld [vmem:[#allocation2 + $0x1f0] sm:$0xff]
        %v666 = vld [vmem:[#allocation2 + $0x1f8] sm:$0xff]
        %v667 = vld [vmem:[%s436] sm:$0xff]
        %v668 = vld [vmem:[%s436 + $0x8] sm:$0xff]
        %v669 = vld [vmem:[%s436 + $0x10] sm:$0xff]
        %v670 = vld [vmem:[%s436 + $0x18] sm:$0xff]
        %v671 = vld [vmem:[%s436 + $0x20] sm:$0xff]
        %v672 = vld [vmem:[%s436 + $0x28] sm:$0xff]
        %v673 = vld [vmem:[%s436 + $0x30] sm:$0xff]
        %v674 = vld [vmem:[%s436 + $0x38] sm:$0xff]
        %v675 = vld [vmem:[%s436 + $0x40] sm:$0xff]
        %v676 = vld [vmem:[%s436 + $0x48] sm:$0xff]
        %v677 = vld [vmem:[%s436 + $0x50] sm:$0xff]
        %v678 = vld [vmem:[%s436 + $0x58] sm:$0xff]
        %v679 = vld [vmem:[%s436 + $0x60] sm:$0xff]
        %v680 = vld [vmem:[%s436 + $0x68] sm:$0xff]
        %v681 = vld [vmem:[%s436 + $0x70] sm:$0xff]
        %v682 = vld [vmem:[%s436 + $0x78] sm:$0xff]
        %v683 = vld [vmem:[%s436 + $0x80] sm:$0xff]
        %v684 = vld [vmem:[%s436 + $0x88] sm:$0xff]
        %v685 = vld [vmem:[%s436 + $0x90] sm:$0xff]
        %v686 = vld [vmem:[%s436 + $0x98] sm:$0xff]
        %v687 = vld [vmem:[%s436 + $0xa0] sm:$0xff]
        %v688 = vld [vmem:[%s436 + $0xa8] sm:$0xff]
        %v689 = vld [vmem:[%s436 + $0xb0] sm:$0xff]
        %v690 = vld [vmem:[%s436 + $0xb8] sm:$0xff]
        %v691 = vld [vmem:[%s436 + $0xc0] sm:$0xff]
        %v692 = vld [vmem:[%s436 + $0xc8] sm:$0xff]
        %v693 = vld [vmem:[%s436 + $0xd0] sm:$0xff]
        %v694 = vld [vmem:[%s436 + $0xd8] sm:$0xff]
        %v695 = vld [vmem:[%s436 + $0xe0] sm:$0xff]
        %v696 = vld [vmem:[%s436 + $0xe8] sm:$0xff]
        %v697 = vld [vmem:[%s436 + $0xf0] sm:$0xff]
        %v698 = vld [vmem:[%s436 + $0xf8] sm:$0xff]
        %v699 = vld [vmem:[%s436 + $0x100] sm:$0xff]
        %v700 = vld [vmem:[%s436 + $0x108] sm:$0xff]
        %v701 = vld [vmem:[%s436 + $0x110] sm:$0xff]
        %v702 = vld [vmem:[%s436 + $0x118] sm:$0xff]
        %v703 = vld [vmem:[%s436 + $0x120] sm:$0xff]
        %v704 = vld [vmem:[%s436 + $0x128] sm:$0xff]
        %v705 = vld [vmem:[%s436 + $0x130] sm:$0xff]
        %v706 = vld [vmem:[%s436 + $0x138] sm:$0xff]
        %v707 = vld [vmem:[%s436 + $0x140] sm:$0xff]
        %v708 = vld [vmem:[%s436 + $0x148] sm:$0xff]
        %v709 = vld [vmem:[%s436 + $0x150] sm:$0xff]
        %v710 = vld [vmem:[%s436 + $0x158] sm:$0xff]
        %v711 = vld [vmem:[%s436 + $0x160] sm:$0xff]
        %v712 = vld [vmem:[%s436 + $0x168] sm:$0xff]
        %v713 = vld [vmem:[%s436 + $0x170] sm:$0xff]
        %v714 = vld [vmem:[%s436 + $0x178] sm:$0xff]
        %v715 = vld [vmem:[%s436 + $0x180] sm:$0xff]
        %v716 = vld [vmem:[%s436 + $0x188] sm:$0xff]
        %v717 = vld [vmem:[%s436 + $0x190] sm:$0xff]
        %v718 = vld [vmem:[%s436 + $0x198] sm:$0xff]
        %v719 = vld [vmem:[%s436 + $0x1a0] sm:$0xff]
        %v720 = vld [vmem:[%s436 + $0x1a8] sm:$0xff]
        %v721 = vld [vmem:[%s436 + $0x1b0] sm:$0xff]
        %v722 = vld [vmem:[%s436 + $0x1b8] sm:$0xff]
        %v723 = vld [vmem:[%s436 + $0x1c0] sm:$0xff]
        %v724 = vld [vmem:[%s436 + $0x1c8] sm:$0xff]
        %v725 = vld [vmem:[%s436 + $0x1d0] sm:$0xff]
        %v726 = vld [vmem:[%s436 + $0x1d8] sm:$0xff]
        %v727 = vld [vmem:[%s436 + $0x1e0] sm:$0xff]
        %v728 = vld [vmem:[%s436 + $0x1e8] sm:$0xff]
        %v729 = vld [vmem:[%s436 + $0x1f0] sm:$0xff]
        %v730 = vld [vmem:[%s436 + $0x1f8] sm:$0xff]
        %v731 = vld [vmem:[%s436 + $0x200] sm:$0xff]
        %v732 = vld [vmem:[%s436 + $0x208] sm:$0xff]
        %v733 = vld [vmem:[%s436 + $0x210] sm:$0xff]
        %v734 = vld [vmem:[%s436 + $0x218] sm:$0xff]
        %v735 = vld [vmem:[%s436 + $0x220] sm:$0xff]
        %v736 = vld [vmem:[%s436 + $0x228] sm:$0xff]
        %v737 = vld [vmem:[%s436 + $0x230] sm:$0xff]
        %v738 = vld [vmem:[%s436 + $0x238] sm:$0xff]
        %v739 = vld [vmem:[%s436 + $0x240] sm:$0xff]
        %v740 = vld [vmem:[%s436 + $0x248] sm:$0xff]
        %v741 = vld [vmem:[%s436 + $0x250] sm:$0xff]
        %v742 = vld [vmem:[%s436 + $0x258] sm:$0xff]
        %v743 = vld [vmem:[%s436 + $0x260] sm:$0xff]
        %v744 = vld [vmem:[%s436 + $0x268] sm:$0xff]
        %v745 = vld [vmem:[%s436 + $0x270] sm:$0xff]
        %v746 = vld [vmem:[%s436 + $0x278] sm:$0xff]
        %v747 = vld [vmem:[%s436 + $0x280] sm:$0xff]
        %v748 = vld [vmem:[%s436 + $0x288] sm:$0xff]
        %v749 = vld [vmem:[%s436 + $0x290] sm:$0xff]
        %v750 = vld [vmem:[%s436 + $0x298] sm:$0xff]
        %v751 = vld [vmem:[%s436 + $0x2a0] sm:$0xff]
        %v752 = vld [vmem:[%s436 + $0x2a8] sm:$0xff]
        %v753 = vld [vmem:[%s436 + $0x2b0] sm:$0xff]
        %v754 = vld [vmem:[%s436 + $0x2b8] sm:$0xff]
        %v755 = vld [vmem:[%s436 + $0x2c0] sm:$0xff]
        %v756 = vld [vmem:[%s436 + $0x2c8] sm:$0xff]
        %v757 = vld [vmem:[%s436 + $0x2d0] sm:$0xff]
        %v758 = vld [vmem:[%s436 + $0x2d8] sm:$0xff]
        %v759 = vld [vmem:[%s436 + $0x2e0] sm:$0xff]
        %v760 = vld [vmem:[%s436 + $0x2e8] sm:$0xff]
        %v761 = vld [vmem:[%s436 + $0x2f0] sm:$0xff]
        %v762 = vld [vmem:[%s436 + $0x2f8] sm:$0xff]
        %v763 = vld [vmem:[%s436 + $0x300] sm:$0xff]
        %v764 = vld [vmem:[%s436 + $0x308] sm:$0xff]
        %v765 = vld [vmem:[%s436 + $0x310] sm:$0xff]
        %v766 = vld [vmem:[%s436 + $0x318] sm:$0xff]
        %v767 = vld [vmem:[%s436 + $0x320] sm:$0xff]
        %v768 = vld [vmem:[%s436 + $0x328] sm:$0xff]
        %v769 = vld [vmem:[%s436 + $0x330] sm:$0xff]
        %v770 = vld [vmem:[%s436 + $0x338] sm:$0xff]
        %v771 = vld [vmem:[%s436 + $0x340] sm:$0xff]
        %v772 = vld [vmem:[%s436 + $0x348] sm:$0xff]
        %v773 = vld [vmem:[%s436 + $0x350] sm:$0xff]
        %v774 = vld [vmem:[%s436 + $0x358] sm:$0xff]
        %v775 = vld [vmem:[%s436 + $0x360] sm:$0xff]
        %v776 = vld [vmem:[%s436 + $0x368] sm:$0xff]
        %v777 = vld [vmem:[%s436 + $0x370] sm:$0xff]
        %v778 = vld [vmem:[%s436 + $0x378] sm:$0xff]
        %v779 = vld [vmem:[%s436 + $0x380] sm:$0xff]
        %v780 = vld [vmem:[%s436 + $0x388] sm:$0xff]
        %v781 = vld [vmem:[%s436 + $0x390] sm:$0xff]
        %v782 = vld [vmem:[%s436 + $0x398] sm:$0xff]
        %v783 = vld [vmem:[%s436 + $0x3a0] sm:$0xff]
        %v784 = vld [vmem:[%s436 + $0x3a8] sm:$0xff]
        %v785 = vld [vmem:[%s436 + $0x3b0] sm:$0xff]
        %v786 = vld [vmem:[%s436 + $0x3b8] sm:$0xff]
        %v787 = vld [vmem:[%s436 + $0x3c0] sm:$0xff]
        %v788 = vld [vmem:[%s436 + $0x3c8] sm:$0xff]
        %v789 = vld [vmem:[%s436 + $0x3d0] sm:$0xff]
        %v790 = vld [vmem:[%s436 + $0x3d8] sm:$0xff]
        %v791 = vld [vmem:[%s436 + $0x3e0] sm:$0xff]
        %v792 = vld [vmem:[%s436 + $0x3e8] sm:$0xff]
        %v793 = vld [vmem:[%s436 + $0x3f0] sm:$0xff]
        %v794 = vld [vmem:[%s436 + $0x3f8] sm:$0xff]
        %v923 = vunpack.c.l.b16 %v667
        %v924 = vunpack.c.h.b16 %v667
        %v925 = vunpack.c.l.b16 %v668
        %v926 = vunpack.c.h.b16 %v668
        %v927 = vunpack.c.l.b16 %v669
        %v928 = vunpack.c.h.b16 %v669
        %v929 = vunpack.c.l.b16 %v670
        %v930 = vunpack.c.h.b16 %v670
        %v931 = vunpack.c.l.b16 %v671
        %v932 = vunpack.c.h.b16 %v671
        %v933 = vunpack.c.l.b16 %v672
        %v934 = vunpack.c.h.b16 %v672
        %v935 = vunpack.c.l.b16 %v673
        %v936 = vunpack.c.h.b16 %v673
        %v937 = vunpack.c.l.b16 %v674
        %v938 = vunpack.c.h.b16 %v674
        %v939 = vunpack.c.l.b16 %v675
        %v940 = vunpack.c.h.b16 %v675
        %v941 = vunpack.c.l.b16 %v676
        %v942 = vunpack.c.h.b16 %v676
        %v943 = vunpack.c.l.b16 %v677
        %v944 = vunpack.c.h.b16 %v677
        %v945 = vunpack.c.l.b16 %v678
        %v946 = vunpack.c.h.b16 %v678
        %v947 = vunpack.c.l.b16 %v679
        %v948 = vunpack.c.h.b16 %v679
        %v949 = vunpack.c.l.b16 %v680
        %v950 = vunpack.c.h.b16 %v680
        %v951 = vunpack.c.l.b16 %v681
        %v952 = vunpack.c.h.b16 %v681
        %v953 = vunpack.c.l.b16 %v682
        %v954 = vunpack.c.h.b16 %v682
        %v955 = vunpack.c.l.b16 %v683
        %v956 = vunpack.c.h.b16 %v683
        %v957 = vunpack.c.l.b16 %v684
        %v958 = vunpack.c.h.b16 %v684
        %v959 = vunpack.c.l.b16 %v685
        %v960 = vunpack.c.h.b16 %v685
        %v961 = vunpack.c.l.b16 %v686
        %v962 = vunpack.c.h.b16 %v686
        %v963 = vunpack.c.l.b16 %v687
        %v964 = vunpack.c.h.b16 %v687
        %v965 = vunpack.c.l.b16 %v688
        %v966 = vunpack.c.h.b16 %v688
        %v967 = vunpack.c.l.b16 %v689
        %v968 = vunpack.c.h.b16 %v689
        %v969 = vunpack.c.l.b16 %v690
        %v970 = vunpack.c.h.b16 %v690
        %v971 = vunpack.c.l.b16 %v691
        %v972 = vunpack.c.h.b16 %v691
        %v973 = vunpack.c.l.b16 %v692
        %v974 = vunpack.c.h.b16 %v692
        %v975 = vunpack.c.l.b16 %v693
        %v976 = vunpack.c.h.b16 %v693
        %v977 = vunpack.c.l.b16 %v694
        %v978 = vunpack.c.h.b16 %v694
        %v979 = vunpack.c.l.b16 %v695
        %v980 = vunpack.c.h.b16 %v695
        %v981 = vunpack.c.l.b16 %v696
        %v982 = vunpack.c.h.b16 %v696
        %v983 = vunpack.c.l.b16 %v697
        %v984 = vunpack.c.h.b16 %v697
        %v985 = vunpack.c.l.b16 %v698
        %v986 = vunpack.c.h.b16 %v698
        %v987 = vunpack.c.l.b16 %v699
        %v988 = vunpack.c.h.b16 %v699
        %v989 = vunpack.c.l.b16 %v700
        %v990 = vunpack.c.h.b16 %v700
        %v991 = vunpack.c.l.b16 %v701
        %v992 = vunpack.c.h.b16 %v701
        %v993 = vunpack.c.l.b16 %v702
        %v994 = vunpack.c.h.b16 %v702
        %v995 = vunpack.c.l.b16 %v703
        %v996 = vunpack.c.h.b16 %v703
        %v997 = vunpack.c.l.b16 %v704
        %v998 = vunpack.c.h.b16 %v704
        %v999 = vunpack.c.l.b16 %v705
        %v1000 = vunpack.c.h.b16 %v705
        %v1001 = vunpack.c.l.b16 %v706
        %v1002 = vunpack.c.h.b16 %v706
        %v1003 = vunpack.c.l.b16 %v707
        %v1004 = vunpack.c.h.b16 %v707
        %v1005 = vunpack.c.l.b16 %v708
        %v1006 = vunpack.c.h.b16 %v708
        %v1007 = vunpack.c.l.b16 %v709
        %v1008 = vunpack.c.h.b16 %v709
        %v1009 = vunpack.c.l.b16 %v710
        %v1010 = vunpack.c.h.b16 %v710
        %v1011 = vunpack.c.l.b16 %v711
        %v1012 = vunpack.c.h.b16 %v711
        %v1013 = vunpack.c.l.b16 %v712
        %v1014 = vunpack.c.h.b16 %v712
        %v1015 = vunpack.c.l.b16 %v713
        %v1016 = vunpack.c.h.b16 %v713
        %v1017 = vunpack.c.l.b16 %v714
        %v1018 = vunpack.c.h.b16 %v714
        %v1019 = vunpack.c.l.b16 %v715
        %v1020 = vunpack.c.h.b16 %v715
        %v1021 = vunpack.c.l.b16 %v716
        %v1022 = vunpack.c.h.b16 %v716
        %v1023 = vunpack.c.l.b16 %v717
        %v1024 = vunpack.c.h.b16 %v717
        %v1025 = vunpack.c.l.b16 %v718
        %v1026 = vunpack.c.h.b16 %v718
        %v1027 = vunpack.c.l.b16 %v719
        %v1028 = vunpack.c.h.b16 %v719
        %v1029 = vunpack.c.l.b16 %v720
        %v1030 = vunpack.c.h.b16 %v720
        %v1031 = vunpack.c.l.b16 %v721
        %v1032 = vunpack.c.h.b16 %v721
        %v1033 = vunpack.c.l.b16 %v722
        %v1034 = vunpack.c.h.b16 %v722
        %v1035 = vunpack.c.l.b16 %v723
        %v1036 = vunpack.c.h.b16 %v723
        %v1037 = vunpack.c.l.b16 %v724
        %v1038 = vunpack.c.h.b16 %v724
        %v1039 = vunpack.c.l.b16 %v725
        %v1040 = vunpack.c.h.b16 %v725
        %v1041 = vunpack.c.l.b16 %v726
        %v1042 = vunpack.c.h.b16 %v726
        %v1043 = vunpack.c.l.b16 %v727
        %v1044 = vunpack.c.h.b16 %v727
        %v1045 = vunpack.c.l.b16 %v728
        %v1046 = vunpack.c.h.b16 %v728
        %v1047 = vunpack.c.l.b16 %v729
        %v1048 = vunpack.c.h.b16 %v729
        %v1049 = vunpack.c.l.b16 %v730
        %v1050 = vunpack.c.h.b16 %v730
        %v1051 = vunpack.c.l.b16 %v731
        %v1052 = vunpack.c.h.b16 %v731
        %v1053 = vunpack.c.l.b16 %v732
        %v1054 = vunpack.c.h.b16 %v732
        %v1055 = vunpack.c.l.b16 %v733
        %v1056 = vunpack.c.h.b16 %v733
        %v1057 = vunpack.c.l.b16 %v734
        %v1058 = vunpack.c.h.b16 %v734
        %v1059 = vunpack.c.l.b16 %v735
        %v1060 = vunpack.c.h.b16 %v735
        %v1061 = vunpack.c.l.b16 %v736
        %v1062 = vunpack.c.h.b16 %v736
        %v1063 = vunpack.c.l.b16 %v737
        %v1064 = vunpack.c.h.b16 %v737
        %v1065 = vunpack.c.l.b16 %v738
        %v1066 = vunpack.c.h.b16 %v738
        %v1067 = vunpack.c.l.b16 %v739
        %v1068 = vunpack.c.h.b16 %v739
        %v1069 = vunpack.c.l.b16 %v740
        %v1070 = vunpack.c.h.b16 %v740
        %v1071 = vunpack.c.l.b16 %v741
        %v1072 = vunpack.c.h.b16 %v741
        %v1073 = vunpack.c.l.b16 %v742
        %v1074 = vunpack.c.h.b16 %v742
        %v1075 = vunpack.c.l.b16 %v743
        %v1076 = vunpack.c.h.b16 %v743
        %v1077 = vunpack.c.l.b16 %v744
        %v1078 = vunpack.c.h.b16 %v744
        %v1079 = vunpack.c.l.b16 %v745
        %v1080 = vunpack.c.h.b16 %v745
        %v1081 = vunpack.c.l.b16 %v746
        %v1082 = vunpack.c.h.b16 %v746
        %v1083 = vunpack.c.l.b16 %v747
        %v1084 = vunpack.c.h.b16 %v747
        %v1085 = vunpack.c.l.b16 %v748
        %v1086 = vunpack.c.h.b16 %v748
        %v1087 = vunpack.c.l.b16 %v749
        %v1088 = vunpack.c.h.b16 %v749
        %v1089 = vunpack.c.l.b16 %v750
        %v1090 = vunpack.c.h.b16 %v750
        %v1091 = vunpack.c.l.b16 %v751
        %v1092 = vunpack.c.h.b16 %v751
        %v1093 = vunpack.c.l.b16 %v752
        %v1094 = vunpack.c.h.b16 %v752
        %v1095 = vunpack.c.l.b16 %v753
        %v1096 = vunpack.c.h.b16 %v753
        %v1097 = vunpack.c.l.b16 %v754
        %v1098 = vunpack.c.h.b16 %v754
        %v1099 = vunpack.c.l.b16 %v755
        %v1100 = vunpack.c.h.b16 %v755
        %v1101 = vunpack.c.l.b16 %v756
        %v1102 = vunpack.c.h.b16 %v756
        %v1103 = vunpack.c.l.b16 %v757
        %v1104 = vunpack.c.h.b16 %v757
        %v1105 = vunpack.c.l.b16 %v758
        %v1106 = vunpack.c.h.b16 %v758
        %v1107 = vunpack.c.l.b16 %v759
        %v1108 = vunpack.c.h.b16 %v759
        %v1109 = vunpack.c.l.b16 %v760
        %v1110 = vunpack.c.h.b16 %v760
        %v1111 = vunpack.c.l.b16 %v761
        %v1112 = vunpack.c.h.b16 %v761
        %v1113 = vunpack.c.l.b16 %v762
        %v1114 = vunpack.c.h.b16 %v762
        %v1115 = vunpack.c.l.b16 %v763
        %v1116 = vunpack.c.h.b16 %v763
        %v1117 = vunpack.c.l.b16 %v764
        %v1118 = vunpack.c.h.b16 %v764
        %v1119 = vunpack.c.l.b16 %v765
        %v1120 = vunpack.c.h.b16 %v765
        %v1121 = vunpack.c.l.b16 %v766
        %v1122 = vunpack.c.h.b16 %v766
        %v1123 = vunpack.c.l.b16 %v767
        %v1124 = vunpack.c.h.b16 %v767
        %v1125 = vunpack.c.l.b16 %v768
        %v1126 = vunpack.c.h.b16 %v768
        %v1127 = vunpack.c.l.b16 %v769
        %v1128 = vunpack.c.h.b16 %v769
        %v1129 = vunpack.c.l.b16 %v770
        %v1130 = vunpack.c.h.b16 %v770
        %v1131 = vunpack.c.l.b16 %v771
        %v1132 = vunpack.c.h.b16 %v771
        %v1133 = vunpack.c.l.b16 %v772
        %v1134 = vunpack.c.h.b16 %v772
        %v1135 = vunpack.c.l.b16 %v773
        %v1136 = vunpack.c.h.b16 %v773
        %v1137 = vunpack.c.l.b16 %v774
        %v1138 = vunpack.c.h.b16 %v774
        %v1139 = vunpack.c.l.b16 %v775
        %v1140 = vunpack.c.h.b16 %v775
        %v1141 = vunpack.c.l.b16 %v776
        %v1142 = vunpack.c.h.b16 %v776
        %v1143 = vunpack.c.l.b16 %v777
        %v1144 = vunpack.c.h.b16 %v777
        %v1145 = vunpack.c.l.b16 %v778
        %v1146 = vunpack.c.h.b16 %v778
        %v1147 = vunpack.c.l.b16 %v779
        %v1148 = vunpack.c.h.b16 %v779
        %v1149 = vunpack.c.l.b16 %v780
        %v1150 = vunpack.c.h.b16 %v780
        %v1151 = vunpack.c.l.b16 %v781
        %v1152 = vunpack.c.h.b16 %v781
        %v1153 = vunpack.c.l.b16 %v782
        %v1154 = vunpack.c.h.b16 %v782
        %v1155 = vunpack.c.l.b16 %v783
        %v1156 = vunpack.c.h.b16 %v783
        %v1157 = vunpack.c.l.b16 %v784
        %v1158 = vunpack.c.h.b16 %v784
        %v1159 = vunpack.c.l.b16 %v785
        %v1160 = vunpack.c.h.b16 %v785
        %v1161 = vunpack.c.l.b16 %v786
        %v1162 = vunpack.c.h.b16 %v786
        %v1163 = vunpack.c.l.b16 %v787
        %v1164 = vunpack.c.h.b16 %v787
        %v1165 = vunpack.c.l.b16 %v788
        %v1166 = vunpack.c.h.b16 %v788
        %v1167 = vunpack.c.l.b16 %v789
        %v1168 = vunpack.c.h.b16 %v789
        %v1169 = vunpack.c.l.b16 %v790
        %v1170 = vunpack.c.h.b16 %v790
        %v1171 = vunpack.c.l.b16 %v791
        %v1172 = vunpack.c.h.b16 %v791
        %v1173 = vunpack.c.l.b16 %v792
        %v1174 = vunpack.c.h.b16 %v792
        %v1175 = vunpack.c.l.b16 %v793
        %v1176 = vunpack.c.h.b16 %v793
        %v1177 = vunpack.c.l.b16 %v794
        %v1178 = vunpack.c.h.b16 %v794
        %v1179 = vpack.c.b16 %v927, %v923
        %v1180 = vpack.c.b16 %v928, %v924
        %v1181 = vpack.c.b16 %v929, %v925
        %v1182 = vpack.c.b16 %v930, %v926
        %v1183 = vpack.c.b16 %v935, %v931
        %v1184 = vpack.c.b16 %v936, %v932
        %v1185 = vpack.c.b16 %v937, %v933
        %v1186 = vpack.c.b16 %v938, %v934
        %v1187 = vpack.c.b16 %v943, %v939
        %v1188 = vpack.c.b16 %v944, %v940
        %v1189 = vpack.c.b16 %v945, %v941
        %v1190 = vpack.c.b16 %v946, %v942
        %v1191 = vpack.c.b16 %v951, %v947
        %v1192 = vpack.c.b16 %v952, %v948
        %v1193 = vpack.c.b16 %v953, %v949
        %v1194 = vpack.c.b16 %v954, %v950
        %v1195 = vpack.c.b16 %v959, %v955
        %v1196 = vpack.c.b16 %v960, %v956
        %v1197 = vpack.c.b16 %v961, %v957
        %v1198 = vpack.c.b16 %v962, %v958
        %v1199 = vpack.c.b16 %v967, %v963
        %v1200 = vpack.c.b16 %v968, %v964
        %v1201 = vpack.c.b16 %v969, %v965
        %v1202 = vpack.c.b16 %v970, %v966
        %v1203 = vpack.c.b16 %v975, %v971
        %v1204 = vpack.c.b16 %v976, %v972
        %v1205 = vpack.c.b16 %v977, %v973
        %v1206 = vpack.c.b16 %v978, %v974
        %v1207 = vpack.c.b16 %v983, %v979
        %v1208 = vpack.c.b16 %v984, %v980
        %v1209 = vpack.c.b16 %v985, %v981
        %v1210 = vpack.c.b16 %v986, %v982
        %v1211 = vpack.c.b16 %v991, %v987
        %v1212 = vpack.c.b16 %v992, %v988
        %v1213 = vpack.c.b16 %v993, %v989
        %v1214 = vpack.c.b16 %v994, %v990
        %v1215 = vpack.c.b16 %v999, %v995
        %v1216 = vpack.c.b16 %v1000, %v996
        %v1217 = vpack.c.b16 %v1001, %v997
        %v1218 = vpack.c.b16 %v1002, %v998
        %v1219 = vpack.c.b16 %v1007, %v1003
        %v1220 = vpack.c.b16 %v1008, %v1004
        %v1221 = vpack.c.b16 %v1009, %v1005
        %v1222 = vpack.c.b16 %v1010, %v1006
        %v1223 = vpack.c.b16 %v1015, %v1011
        %v1224 = vpack.c.b16 %v1016, %v1012
        %v1225 = vpack.c.b16 %v1017, %v1013
        %v1226 = vpack.c.b16 %v1018, %v1014
        %v1227 = vpack.c.b16 %v1023, %v1019
        %v1228 = vpack.c.b16 %v1024, %v1020
        %v1229 = vpack.c.b16 %v1025, %v1021
        %v1230 = vpack.c.b16 %v1026, %v1022
        %v1231 = vpack.c.b16 %v1031, %v1027
        %v1232 = vpack.c.b16 %v1032, %v1028
        %v1233 = vpack.c.b16 %v1033, %v1029
        %v1234 = vpack.c.b16 %v1034, %v1030
        %v1235 = vpack.c.b16 %v1039, %v1035
        %v1236 = vpack.c.b16 %v1040, %v1036
        %v1237 = vpack.c.b16 %v1041, %v1037
        %v1238 = vpack.c.b16 %v1042, %v1038
        %v1239 = vpack.c.b16 %v1047, %v1043
        %v1240 = vpack.c.b16 %v1048, %v1044
        %v1241 = vpack.c.b16 %v1049, %v1045
        %v1242 = vpack.c.b16 %v1050, %v1046
        %v1243 = vpack.c.b16 %v1055, %v1051
        %v1244 = vpack.c.b16 %v1056, %v1052
        %v1245 = vpack.c.b16 %v1057, %v1053
        %v1246 = vpack.c.b16 %v1058, %v1054
        %v1247 = vpack.c.b16 %v1063, %v1059
        %v1248 = vpack.c.b16 %v1064, %v1060
        %v1249 = vpack.c.b16 %v1065, %v1061
        %v1250 = vpack.c.b16 %v1066, %v1062
        %v1251 = vpack.c.b16 %v1071, %v1067
        %v1252 = vpack.c.b16 %v1072, %v1068
        %v1253 = vpack.c.b16 %v1073, %v1069
        %v1254 = vpack.c.b16 %v1074, %v1070
        %v1255 = vpack.c.b16 %v1079, %v1075
        %v1256 = vpack.c.b16 %v1080, %v1076
        %v1257 = vpack.c.b16 %v1081, %v1077
        %v1258 = vpack.c.b16 %v1082, %v1078
        %v1259 = vpack.c.b16 %v1087, %v1083
        %v1260 = vpack.c.b16 %v1088, %v1084
        %v1261 = vpack.c.b16 %v1089, %v1085
        %v1262 = vpack.c.b16 %v1090, %v1086
        %v1263 = vpack.c.b16 %v1095, %v1091
        %v1264 = vpack.c.b16 %v1096, %v1092
        %v1265 = vpack.c.b16 %v1097, %v1093
        %v1266 = vpack.c.b16 %v1098, %v1094
        %v1267 = vpack.c.b16 %v1103, %v1099
        %v1268 = vpack.c.b16 %v1104, %v1100
        %v1269 = vpack.c.b16 %v1105, %v1101
        %v1270 = vpack.c.b16 %v1106, %v1102
        %v1271 = vpack.c.b16 %v1111, %v1107
        %v1272 = vpack.c.b16 %v1112, %v1108
        %v1273 = vpack.c.b16 %v1113, %v1109
        %v1274 = vpack.c.b16 %v1114, %v1110
        %v1275 = vpack.c.b16 %v1119, %v1115
        %v1276 = vpack.c.b16 %v1120, %v1116
        %v1277 = vpack.c.b16 %v1121, %v1117
        %v1278 = vpack.c.b16 %v1122, %v1118
        %v1279 = vpack.c.b16 %v1127, %v1123
        %v1280 = vpack.c.b16 %v1128, %v1124
        %v1281 = vpack.c.b16 %v1129, %v1125
        %v1282 = vpack.c.b16 %v1130, %v1126
        %v1283 = vpack.c.b16 %v1135, %v1131
        %v1284 = vpack.c.b16 %v1136, %v1132
        %v1285 = vpack.c.b16 %v1137, %v1133
        %v1286 = vpack.c.b16 %v1138, %v1134
        %v1287 = vpack.c.b16 %v1143, %v1139
        %v1288 = vpack.c.b16 %v1144, %v1140
        %v1289 = vpack.c.b16 %v1145, %v1141
        %v1290 = vpack.c.b16 %v1146, %v1142
        %v1291 = vpack.c.b16 %v1151, %v1147
        %v1292 = vpack.c.b16 %v1152, %v1148
        %v1293 = vpack.c.b16 %v1153, %v1149
        %v1294 = vpack.c.b16 %v1154, %v1150
        %v1295 = vpack.c.b16 %v1159, %v1155
        %v1296 = vpack.c.b16 %v1160, %v1156
        %v1297 = vpack.c.b16 %v1161, %v1157
        %v1298 = vpack.c.b16 %v1162, %v1158
        %v1299 = vpack.c.b16 %v1167, %v1163
        %v1300 = vpack.c.b16 %v1168, %v1164
        %v1301 = vpack.c.b16 %v1169, %v1165
        %v1302 = vpack.c.b16 %v1170, %v1166
        %v1303 = vpack.c.b16 %v1175, %v1171
        %v1304 = vpack.c.b16 %v1176, %v1172
        %v1305 = vpack.c.b16 %v1177, %v1173
        %v1306 = vpack.c.b16 %v1178, %v1174
        %v1499 = vunpack.c.l.b16 %v539
        %v1500 = vunpack.c.l.b16 %v540
        %v1501 = vunpack.c.l.b16 %v541
        %v1502 = vunpack.c.l.b16 %v542
        %v1503 = vunpack.c.l.b16 %v543
        %v1504 = vunpack.c.l.b16 %v544
        %v1505 = vunpack.c.l.b16 %v545
        %v1506 = vunpack.c.l.b16 %v546
        %v1507 = vunpack.c.l.b16 %v547
        %v1508 = vunpack.c.l.b16 %v548
        %v1509 = vunpack.c.l.b16 %v549
        %v1510 = vunpack.c.l.b16 %v550
        %v1511 = vunpack.c.l.b16 %v551
        %v1512 = vunpack.c.l.b16 %v552
        %v1513 = vunpack.c.l.b16 %v553
        %v1514 = vunpack.c.l.b16 %v554
        %v1515 = vunpack.c.l.b16 %v555
        %v1516 = vunpack.c.l.b16 %v556
        %v1517 = vunpack.c.l.b16 %v557
        %v1518 = vunpack.c.l.b16 %v558
        %v1519 = vunpack.c.l.b16 %v559
        %v1520 = vunpack.c.l.b16 %v560
        %v1521 = vunpack.c.l.b16 %v561
        %v1522 = vunpack.c.l.b16 %v562
        %v1523 = vunpack.c.l.b16 %v563
        %v1524 = vunpack.c.l.b16 %v564
        %v1525 = vunpack.c.l.b16 %v565
        %v1526 = vunpack.c.l.b16 %v566
        %v1527 = vunpack.c.l.b16 %v567
        %v1528 = vunpack.c.l.b16 %v568
        %v1529 = vunpack.c.l.b16 %v569
        %v1530 = vunpack.c.l.b16 %v570
        %v1531 = vunpack.c.l.b16 %v571
        %v1532 = vunpack.c.l.b16 %v572
        %v1533 = vunpack.c.l.b16 %v573
        %v1534 = vunpack.c.l.b16 %v574
        %v1535 = vunpack.c.l.b16 %v575
        %v1536 = vunpack.c.l.b16 %v576
        %v1537 = vunpack.c.l.b16 %v577
        %v1538 = vunpack.c.l.b16 %v578
        %v1539 = vunpack.c.l.b16 %v579
        %v1540 = vunpack.c.l.b16 %v580
        %v1541 = vunpack.c.l.b16 %v581
        %v1542 = vunpack.c.l.b16 %v582
        %v1543 = vunpack.c.l.b16 %v583
        %v1544 = vunpack.c.l.b16 %v584
        %v1545 = vunpack.c.l.b16 %v585
        %v1546 = vunpack.c.l.b16 %v586
        %v1547 = vunpack.c.l.b16 %v587
        %v1548 = vunpack.c.l.b16 %v588
        %v1549 = vunpack.c.l.b16 %v589
        %v1550 = vunpack.c.l.b16 %v590
        %v1551 = vunpack.c.l.b16 %v591
        %v1552 = vunpack.c.l.b16 %v592
        %v1553 = vunpack.c.l.b16 %v593
        %v1554 = vunpack.c.l.b16 %v594
        %v1555 = vunpack.c.l.b16 %v595
        %v1556 = vunpack.c.l.b16 %v596
        %v1557 = vunpack.c.l.b16 %v597
        %v1558 = vunpack.c.l.b16 %v598
        %v1559 = vunpack.c.l.b16 %v599
        %v1560 = vunpack.c.l.b16 %v600
        %v1561 = vunpack.c.l.b16 %v601
        %v1562 = vunpack.c.l.b16 %v602
        %v1563 = vpack.c.b16 %v1500, %v1499
        %v1564 = vpack.c.b16 %v1502, %v1501
        %v1565 = vpack.c.b16 %v1504, %v1503
        %v1566 = vpack.c.b16 %v1506, %v1505
        %v1567 = vpack.c.b16 %v1508, %v1507
        %v1568 = vpack.c.b16 %v1510, %v1509
        %v1569 = vpack.c.b16 %v1512, %v1511
        %v1570 = vpack.c.b16 %v1514, %v1513
        %v1571 = vpack.c.b16 %v1516, %v1515
        %v1572 = vpack.c.b16 %v1518, %v1517
        %v1573 = vpack.c.b16 %v1520, %v1519
        %v1574 = vpack.c.b16 %v1522, %v1521
        %v1575 = vpack.c.b16 %v1524, %v1523
        %v1576 = vpack.c.b16 %v1526, %v1525
        %v1577 = vpack.c.b16 %v1528, %v1527
        %v1578 = vpack.c.b16 %v1530, %v1529
        %v1579 = vpack.c.b16 %v1532, %v1531
        %v1580 = vpack.c.b16 %v1534, %v1533
        %v1581 = vpack.c.b16 %v1536, %v1535
        %v1582 = vpack.c.b16 %v1538, %v1537
        %v1583 = vpack.c.b16 %v1540, %v1539
        %v1584 = vpack.c.b16 %v1542, %v1541
        %v1585 = vpack.c.b16 %v1544, %v1543
        %v1586 = vpack.c.b16 %v1546, %v1545
        %v1587 = vpack.c.b16 %v1548, %v1547
        %v1588 = vpack.c.b16 %v1550, %v1549
        %v1589 = vpack.c.b16 %v1552, %v1551
        %v1590 = vpack.c.b16 %v1554, %v1553
        %v1591 = vpack.c.b16 %v1556, %v1555
        %v1592 = vpack.c.b16 %v1558, %v1557
        %v1593 = vpack.c.b16 %v1560, %v1559
        %v1594 = vpack.c.b16 %v1562, %v1561
        %1627 = vmatprep.subr.bf16.mxu0 0
        %1628 = vmatpush1.bf16.msra.mxu0 %v1570
        %1629 = vmatprep.subr.bf16.mxu0 0
        %1630 = vmatpush1.bf16.msra.mxu0 %v1569
        %1631 = vmatprep.subr.bf16.mxu0 0
        %1632 = vmatpush1.bf16.msra.mxu0 %v1568
        %1633 = vmatprep.subr.bf16.mxu0 0
        %1634 = vmatpush1.bf16.msra.mxu0 %v1567
        %1635 = vmatprep.subr.bf16.mxu0 0
        %1636 = vmatpush1.bf16.msra.mxu0 %v1566
        %1637 = vmatprep.subr.bf16.mxu0 0
        %1638 = vmatpush1.bf16.msra.mxu0 %v1565
        %1639 = vmatprep.subr.bf16.mxu0 0
        %1640 = vmatpush1.bf16.msra.mxu0 %v1564
        %1641 = vmatprep.subr.bf16.mxu0 0
        %1642 = vmatpush1.bf16.msra.mxu0 %v1563
        %1643 = vmatprep.subr.bf16.mxu0 0
        %1644 = vmatpush2.bf16.msra.mxu0 %v1578
        %1645 = vmatprep.subr.bf16.mxu0 0
        %1646 = vmatpush2.bf16.msra.mxu0 %v1577
        %1647 = vmatprep.subr.bf16.mxu0 0
        %1648 = vmatpush2.bf16.msra.mxu0 %v1576
        %1649 = vmatprep.subr.bf16.mxu0 0
        %1650 = vmatpush2.bf16.msra.mxu0 %v1575
        %1651 = vmatprep.subr.bf16.mxu0 0
        %1652 = vmatpush2.bf16.msra.mxu0 %v1574
        %1653 = vmatprep.subr.bf16.mxu0 0
        %1654 = vmatpush2.bf16.msra.mxu0 %v1573
        %1655 = vmatprep.subr.bf16.mxu0 0
        %1656 = vmatpush2.bf16.msra.mxu0 %v1572
        %1657 = vmatprep.subr.bf16.mxu0 0
        %1658 = vmatpush2.bf16.msra.mxu0 %v1571
        %1659 = vmatprep.mubr.bf16.mxu0 %v1180
        %1660 = vmatmul.mubr.bf16.gmra.mxu0 %v1179
        %v1661 = vpop.f32.mrf.mxu0
        %v1662 = vadd.f32 0.0, %v1661
        %v1663 = vpop.f32.mrf.mxu0
        %v1664 = vpop.f32.mrf.mxu0
        %v1665 = vadd.f32 0.0, %v1664
        %v1666 = vpop.f32.mrf.mxu0
        %1667 = vmatprep.mubr.bf16.mxu0 %v1184
        %1668 = vmatmul.mubr.bf16.gmra.mxu0 %v1183
        %v1669 = vpop.f32.mrf.mxu0
        %v1670 = vadd.f32 0.0, %v1669
        %v1671 = vpop.f32.mrf.mxu0
        %v1672 = vpop.f32.mrf.mxu0
        %v1673 = vadd.f32 0.0, %v1672
        %v1674 = vpop.f32.mrf.mxu0
        %1675 = vmatprep.mubr.bf16.mxu0 %v1188
        %1676 = vmatmul.mubr.bf16.gmra.mxu0 %v1187
        %v1677 = vpop.f32.mrf.mxu0
        %v1678 = vadd.f32 0.0, %v1677
        %v1679 = vpop.f32.mrf.mxu0
        %v1680 = vpop.f32.mrf.mxu0
        %v1681 = vadd.f32 0.0, %v1680
        %v1682 = vpop.f32.mrf.mxu0
        %1683 = vmatprep.mubr.bf16.mxu0 %v1192
        %1684 = vmatmul.mubr.bf16.gmra.mxu0 %v1191
        %v1685 = vpop.f32.mrf.mxu0
        %v1686 = vadd.f32 0.0, %v1685
        %v1687 = vpop.f32.mrf.mxu0
        %v1688 = vpop.f32.mrf.mxu0
        %v1689 = vadd.f32 0.0, %v1688
        %v1690 = vpop.f32.mrf.mxu0
        %1691 = vmatprep.mubr.bf16.mxu0 %v1196
        %1692 = vmatmul.mubr.bf16.gmra.mxu0 %v1195
        %v1693 = vpop.f32.mrf.mxu0
        %v1694 = vadd.f32 0.0, %v1693
        %v1695 = vpop.f32.mrf.mxu0
        %v1696 = vpop.f32.mrf.mxu0
        %v1697 = vadd.f32 0.0, %v1696
        %v1698 = vpop.f32.mrf.mxu0
        %1699 = vmatprep.mubr.bf16.mxu0 %v1200
        %1700 = vmatmul.mubr.bf16.gmra.mxu0 %v1199
        %v1701 = vpop.f32.mrf.mxu0
        %v1702 = vadd.f32 0.0, %v1701
        %v1703 = vpop.f32.mrf.mxu0
        %v1704 = vpop.f32.mrf.mxu0
        %v1705 = vadd.f32 0.0, %v1704
        %v1706 = vpop.f32.mrf.mxu0
        %1707 = vmatprep.mubr.bf16.mxu0 %v1204
        %1708 = vmatmul.mubr.bf16.gmra.mxu0 %v1203
        %v1709 = vpop.f32.mrf.mxu0
        %v1710 = vadd.f32 0.0, %v1709
        %v1711 = vpop.f32.mrf.mxu0
        %v1712 = vpop.f32.mrf.mxu0
        %v1713 = vadd.f32 0.0, %v1712
        %v1714 = vpop.f32.mrf.mxu0
        %1715 = vmatprep.mubr.bf16.mxu0 %v1208
        %1716 = vmatmul.mubr.bf16.gmra.mxu0 %v1207
        %v1717 = vpop.f32.mrf.mxu0
        %v1718 = vadd.f32 0.0, %v1717
        %v1719 = vpop.f32.mrf.mxu0
        %v1720 = vpop.f32.mrf.mxu0
        %v1721 = vadd.f32 0.0, %v1720
        %v1722 = vpop.f32.mrf.mxu0
        %1723 = vmatprep.mubr.bf16.mxu0 %v1212
        %1724 = vmatmul.mubr.bf16.gmra.mxu0 %v1211
        %v1725 = vpop.f32.mrf.mxu0
        %v1726 = vadd.f32 0.0, %v1725
        %v1727 = vpop.f32.mrf.mxu0
        %v1728 = vpop.f32.mrf.mxu0
        %v1729 = vadd.f32 0.0, %v1728
        %v1730 = vpop.f32.mrf.mxu0
        %1731 = vmatprep.mubr.bf16.mxu0 %v1216
        %1732 = vmatmul.mubr.bf16.gmra.mxu0 %v1215
        %v1733 = vpop.f32.mrf.mxu0
        %v1734 = vadd.f32 0.0, %v1733
        %v1735 = vpop.f32.mrf.mxu0
        %v1736 = vpop.f32.mrf.mxu0
        %v1737 = vadd.f32 0.0, %v1736
        %v1738 = vpop.f32.mrf.mxu0
        %1739 = vmatprep.mubr.bf16.mxu0 %v1220
        %1740 = vmatmul.mubr.bf16.gmra.mxu0 %v1219
        %v1741 = vpop.f32.mrf.mxu0
        %v1742 = vadd.f32 0.0, %v1741
        %v1743 = vpop.f32.mrf.mxu0
        %v1744 = vpop.f32.mrf.mxu0
        %v1745 = vadd.f32 0.0, %v1744
        %v1746 = vpop.f32.mrf.mxu0
        %1747 = vmatprep.mubr.bf16.mxu0 %v1224
        %1748 = vmatmul.mubr.bf16.gmra.mxu0 %v1223
        %v1749 = vpop.f32.mrf.mxu0
        %v1750 = vadd.f32 0.0, %v1749
        %v1751 = vpop.f32.mrf.mxu0
        %v1752 = vpop.f32.mrf.mxu0
        %v1753 = vadd.f32 0.0, %v1752
        %v1754 = vpop.f32.mrf.mxu0
        %1755 = vmatprep.mubr.bf16.mxu0 %v1228
        %1756 = vmatmul.mubr.bf16.gmra.mxu0 %v1227
        %v1757 = vpop.f32.mrf.mxu0
        %v1758 = vadd.f32 0.0, %v1757
        %v1759 = vpop.f32.mrf.mxu0
        %v1760 = vpop.f32.mrf.mxu0
        %v1761 = vadd.f32 0.0, %v1760
        %v1762 = vpop.f32.mrf.mxu0
        %1763 = vmatprep.mubr.bf16.mxu0 %v1232
        %1764 = vmatmul.mubr.bf16.gmra.mxu0 %v1231
        %v1765 = vpop.f32.mrf.mxu0
        %v1766 = vadd.f32 0.0, %v1765
        %v1767 = vpop.f32.mrf.mxu0
        %v1768 = vpop.f32.mrf.mxu0
        %v1769 = vadd.f32 0.0, %v1768
        %v1770 = vpop.f32.mrf.mxu0
        %1771 = vmatprep.mubr.bf16.mxu0 %v1236
        %1772 = vmatmul.mubr.bf16.gmra.mxu0 %v1235
        %v1773 = vpop.f32.mrf.mxu0
        %v1774 = vadd.f32 0.0, %v1773
        %v1775 = vpop.f32.mrf.mxu0
        %v1776 = vpop.f32.mrf.mxu0
        %v1777 = vadd.f32 0.0, %v1776
        %v1778 = vpop.f32.mrf.mxu0
        %1779 = vmatprep.mubr.bf16.mxu0 %v1240
        %1780 = vmatmul.mubr.bf16.gmra.mxu0 %v1239
        %v1781 = vpop.f32.mrf.mxu0
        %v1782 = vadd.f32 0.0, %v1781
        %v1783 = vpop.f32.mrf.mxu0
        %v1784 = vpop.f32.mrf.mxu0
        %v1785 = vadd.f32 0.0, %v1784
        %v1786 = vpop.f32.mrf.mxu0
        %1787 = vmatprep.mubr.bf16.mxu0 %v1244
        %1788 = vmatmul.mubr.bf16.gmra.mxu0 %v1243
        %v1789 = vpop.f32.mrf.mxu0
        %v1790 = vadd.f32 0.0, %v1789
        %v1791 = vpop.f32.mrf.mxu0
        %v1792 = vpop.f32.mrf.mxu0
        %v1793 = vadd.f32 0.0, %v1792
        %v1794 = vpop.f32.mrf.mxu0
        %1795 = vmatprep.mubr.bf16.mxu0 %v1248
        %1796 = vmatmul.mubr.bf16.gmra.mxu0 %v1247
        %v1797 = vpop.f32.mrf.mxu0
        %v1798 = vadd.f32 0.0, %v1797
        %v1799 = vpop.f32.mrf.mxu0
        %v1800 = vpop.f32.mrf.mxu0
        %v1801 = vadd.f32 0.0, %v1800
        %v1802 = vpop.f32.mrf.mxu0
        %1803 = vmatprep.mubr.bf16.mxu0 %v1252
        %1804 = vmatmul.mubr.bf16.gmra.mxu0 %v1251
        %v1805 = vpop.f32.mrf.mxu0
        %v1806 = vadd.f32 0.0, %v1805
        %v1807 = vpop.f32.mrf.mxu0
        %v1808 = vpop.f32.mrf.mxu0
        %v1809 = vadd.f32 0.0, %v1808
        %v1810 = vpop.f32.mrf.mxu0
        %1811 = vmatprep.mubr.bf16.mxu0 %v1256
        %1812 = vmatmul.mubr.bf16.gmra.mxu0 %v1255
        %v1813 = vpop.f32.mrf.mxu0
        %v1814 = vadd.f32 0.0, %v1813
        %v1815 = vpop.f32.mrf.mxu0
        %v1816 = vpop.f32.mrf.mxu0
        %v1817 = vadd.f32 0.0, %v1816
        %v1818 = vpop.f32.mrf.mxu0
        %1819 = vmatprep.mubr.bf16.mxu0 %v1260
        %1820 = vmatmul.mubr.bf16.gmra.mxu0 %v1259
        %v1821 = vpop.f32.mrf.mxu0
        %v1822 = vadd.f32 0.0, %v1821
        %v1823 = vpop.f32.mrf.mxu0
        %v1824 = vpop.f32.mrf.mxu0
        %v1825 = vadd.f32 0.0, %v1824
        %v1826 = vpop.f32.mrf.mxu0
        %1827 = vmatprep.mubr.bf16.mxu0 %v1264
        %1828 = vmatmul.mubr.bf16.gmra.mxu0 %v1263
        %v1829 = vpop.f32.mrf.mxu0
        %v1830 = vadd.f32 0.0, %v1829
        %v1831 = vpop.f32.mrf.mxu0
        %v1832 = vpop.f32.mrf.mxu0
        %v1833 = vadd.f32 0.0, %v1832
        %v1834 = vpop.f32.mrf.mxu0
        %1835 = vmatprep.mubr.bf16.mxu0 %v1268
        %1836 = vmatmul.mubr.bf16.gmra.mxu0 %v1267
        %v1837 = vpop.f32.mrf.mxu0
        %v1838 = vadd.f32 0.0, %v1837
        %v1839 = vpop.f32.mrf.mxu0
        %v1840 = vpop.f32.mrf.mxu0
        %v1841 = vadd.f32 0.0, %v1840
        %v1842 = vpop.f32.mrf.mxu0
        %1843 = vmatprep.mubr.bf16.mxu0 %v1272
        %1844 = vmatmul.mubr.bf16.gmra.mxu0 %v1271
        %v1845 = vpop.f32.mrf.mxu0
        %v1846 = vadd.f32 0.0, %v1845
        %v1847 = vpop.f32.mrf.mxu0
        %v1848 = vpop.f32.mrf.mxu0
        %v1849 = vadd.f32 0.0, %v1848
        %v1850 = vpop.f32.mrf.mxu0
        %1851 = vmatprep.mubr.bf16.mxu0 %v1276
        %1852 = vmatmul.mubr.bf16.gmra.mxu0 %v1275
        %v1853 = vpop.f32.mrf.mxu0
        %v1854 = vadd.f32 0.0, %v1853
        %v1855 = vpop.f32.mrf.mxu0
        %v1856 = vpop.f32.mrf.mxu0
        %v1857 = vadd.f32 0.0, %v1856
        %v1858 = vpop.f32.mrf.mxu0
        %1859 = vmatprep.mubr.bf16.mxu0 %v1280
        %1860 = vmatmul.mubr.bf16.gmra.mxu0 %v1279
        %v1861 = vpop.f32.mrf.mxu0
        %v1862 = vadd.f32 0.0, %v1861
        %v1863 = vpop.f32.mrf.mxu0
        %v1864 = vpop.f32.mrf.mxu0
        %v1865 = vadd.f32 0.0, %v1864
        %v1866 = vpop.f32.mrf.mxu0
        %1867 = vmatprep.mubr.bf16.mxu0 %v1284
        %1868 = vmatmul.mubr.bf16.gmra.mxu0 %v1283
        %v1869 = vpop.f32.mrf.mxu0
        %v1870 = vadd.f32 0.0, %v1869
        %v1871 = vpop.f32.mrf.mxu0
        %v1872 = vpop.f32.mrf.mxu0
        %v1873 = vadd.f32 0.0, %v1872
        %v1874 = vpop.f32.mrf.mxu0
        %1875 = vmatprep.mubr.bf16.mxu0 %v1288
        %1876 = vmatmul.mubr.bf16.gmra.mxu0 %v1287
        %v1877 = vpop.f32.mrf.mxu0
        %v1878 = vadd.f32 0.0, %v1877
        %v1879 = vpop.f32.mrf.mxu0
        %v1880 = vpop.f32.mrf.mxu0
        %v1881 = vadd.f32 0.0, %v1880
        %v1882 = vpop.f32.mrf.mxu0
        %1883 = vmatprep.mubr.bf16.mxu0 %v1292
        %1884 = vmatmul.mubr.bf16.gmra.mxu0 %v1291
        %v1885 = vpop.f32.mrf.mxu0
        %v1886 = vadd.f32 0.0, %v1885
        %v1887 = vpop.f32.mrf.mxu0
        %v1888 = vpop.f32.mrf.mxu0
        %v1889 = vadd.f32 0.0, %v1888
        %v1890 = vpop.f32.mrf.mxu0
        %1891 = vmatprep.mubr.bf16.mxu0 %v1296
        %1892 = vmatmul.mubr.bf16.gmra.mxu0 %v1295
        %v1893 = vpop.f32.mrf.mxu0
        %v1894 = vadd.f32 0.0, %v1893
        %v1895 = vpop.f32.mrf.mxu0
        %v1896 = vpop.f32.mrf.mxu0
        %v1897 = vadd.f32 0.0, %v1896
        %v1898 = vpop.f32.mrf.mxu0
        %1899 = vmatprep.mubr.bf16.mxu0 %v1300
        %1900 = vmatmul.mubr.bf16.gmra.mxu0 %v1299
        %v1901 = vpop.f32.mrf.mxu0
        %v1902 = vadd.f32 0.0, %v1901
        %v1903 = vpop.f32.mrf.mxu0
        %v1904 = vpop.f32.mrf.mxu0
        %v1905 = vadd.f32 0.0, %v1904
        %v1906 = vpop.f32.mrf.mxu0
        %1907 = vmatprep.mubr.bf16.mxu0 %v1304
        %1908 = vmatmul.mubr.bf16.gmra.mxu0 %v1303
        %v1909 = vpop.f32.mrf.mxu0
        %v1910 = vadd.f32 0.0, %v1909
        %v1911 = vpop.f32.mrf.mxu0
        %v1912 = vpop.f32.mrf.mxu0
        %v1913 = vadd.f32 0.0, %v1912
        %v1914 = vpop.f32.mrf.mxu0
        %1915 = vdwg.mxu0
        %1916 = vmatprep.subr.bf16.mxu0 0
        %1917 = vmatpush1.bf16.msra.mxu0 %v1586
        %1918 = vmatprep.subr.bf16.mxu0 0
        %1919 = vmatpush1.bf16.msra.mxu0 %v1585
        %1920 = vmatprep.subr.bf16.mxu0 0
        %1921 = vmatpush1.bf16.msra.mxu0 %v1584
        %1922 = vmatprep.subr.bf16.mxu0 0
        %1923 = vmatpush1.bf16.msra.mxu0 %v1583
        %1924 = vmatprep.subr.bf16.mxu0 0
        %1925 = vmatpush1.bf16.msra.mxu0 %v1582
        %1926 = vmatprep.subr.bf16.mxu0 0
        %1927 = vmatpush1.bf16.msra.mxu0 %v1581
        %1928 = vmatprep.subr.bf16.mxu0 0
        %1929 = vmatpush1.bf16.msra.mxu0 %v1580
        %1930 = vmatprep.subr.bf16.mxu0 0
        %1931 = vmatpush1.bf16.msra.mxu0 %v1579
        %1932 = vmatprep.subr.bf16.mxu0 0
        %1933 = vmatpush2.bf16.msra.mxu0 %v1594
        %1934 = vmatprep.subr.bf16.mxu0 0
        %1935 = vmatpush2.bf16.msra.mxu0 %v1593
        %1936 = vmatprep.subr.bf16.mxu0 0
        %1937 = vmatpush2.bf16.msra.mxu0 %v1592
        %1938 = vmatprep.subr.bf16.mxu0 0
        %1939 = vmatpush2.bf16.msra.mxu0 %v1591
        %1940 = vmatprep.subr.bf16.mxu0 0
        %1941 = vmatpush2.bf16.msra.mxu0 %v1590
        %1942 = vmatprep.subr.bf16.mxu0 0
        %1943 = vmatpush2.bf16.msra.mxu0 %v1589
        %1944 = vmatprep.subr.bf16.mxu0 0
        %1945 = vmatpush2.bf16.msra.mxu0 %v1588
        %1946 = vmatprep.subr.bf16.mxu0 0
        %1947 = vmatpush2.bf16.msra.mxu0 %v1587
        %1948 = vmatprep.mubr.bf16.mxu0 %v1182
        %1949 = vmatmul.mubr.bf16.gmra.mxu0 %v1181
        %v1950 = vpop.f32.mrf.mxu0
        %v1951 = vadd.f32 %v1662, %v1950
        %v1952 = vpop.f32.mrf.mxu0
        %v1953 = vpop.f32.mrf.mxu0
        %v1954 = vadd.f32 %v1665, %v1953
        %v1955 = vpop.f32.mrf.mxu0
        %1956 = vmatprep.mubr.bf16.mxu0 %v1186
        %1957 = vmatmul.mubr.bf16.gmra.mxu0 %v1185
        %v1958 = vpop.f32.mrf.mxu0
        %v1959 = vadd.f32 %v1670, %v1958
        %v1960 = vpop.f32.mrf.mxu0
        %v1961 = vpop.f32.mrf.mxu0
        %v1962 = vadd.f32 %v1673, %v1961
        %v1963 = vpop.f32.mrf.mxu0
        %1964 = vmatprep.mubr.bf16.mxu0 %v1190
        %1965 = vmatmul.mubr.bf16.gmra.mxu0 %v1189
        %v1966 = vpop.f32.mrf.mxu0
        %v1967 = vadd.f32 %v1678, %v1966
        %v1968 = vpop.f32.mrf.mxu0
        %v1969 = vpop.f32.mrf.mxu0
        %v1970 = vadd.f32 %v1681, %v1969
        %v1971 = vpop.f32.mrf.mxu0
        %1972 = vmatprep.mubr.bf16.mxu0 %v1194
        %1973 = vmatmul.mubr.bf16.gmra.mxu0 %v1193
        %v1974 = vpop.f32.mrf.mxu0
        %v1975 = vadd.f32 %v1686, %v1974
        %v1976 = vpop.f32.mrf.mxu0
        %v1977 = vpop.f32.mrf.mxu0
        %v1978 = vadd.f32 %v1689, %v1977
        %v1979 = vpop.f32.mrf.mxu0
        %1980 = vmatprep.mubr.bf16.mxu0 %v1198
        %1981 = vmatmul.mubr.bf16.gmra.mxu0 %v1197
        %v1982 = vpop.f32.mrf.mxu0
        %v1983 = vadd.f32 %v1694, %v1982
        %v1984 = vpop.f32.mrf.mxu0
        %v1985 = vpop.f32.mrf.mxu0
        %v1986 = vadd.f32 %v1697, %v1985
        %v1987 = vpop.f32.mrf.mxu0
        %1988 = vmatprep.mubr.bf16.mxu0 %v1202
        %1989 = vmatmul.mubr.bf16.gmra.mxu0 %v1201
        %v1990 = vpop.f32.mrf.mxu0
        %v1991 = vadd.f32 %v1702, %v1990
        %v1992 = vpop.f32.mrf.mxu0
        %v1993 = vpop.f32.mrf.mxu0
        %v1994 = vadd.f32 %v1705, %v1993
        %v1995 = vpop.f32.mrf.mxu0
        %1996 = vmatprep.mubr.bf16.mxu0 %v1206
        %1997 = vmatmul.mubr.bf16.gmra.mxu0 %v1205
        %v1998 = vpop.f32.mrf.mxu0
        %v1999 = vadd.f32 %v1710, %v1998
        %v2000 = vpop.f32.mrf.mxu0
        %v2001 = vpop.f32.mrf.mxu0
        %v2002 = vadd.f32 %v1713, %v2001
        %v2003 = vpop.f32.mrf.mxu0
        %2004 = vmatprep.mubr.bf16.mxu0 %v1210
        %2005 = vmatmul.mubr.bf16.gmra.mxu0 %v1209
        %v2006 = vpop.f32.mrf.mxu0
        %v2007 = vadd.f32 %v1718, %v2006
        %v2008 = vpop.f32.mrf.mxu0
        %v2009 = vpop.f32.mrf.mxu0
        %v2010 = vadd.f32 %v1721, %v2009
        %v2011 = vpop.f32.mrf.mxu0
        %2012 = vmatprep.mubr.bf16.mxu0 %v1214
        %2013 = vmatmul.mubr.bf16.gmra.mxu0 %v1213
        %v2014 = vpop.f32.mrf.mxu0
        %v2015 = vadd.f32 %v1726, %v2014
        %v2016 = vpop.f32.mrf.mxu0
        %v2017 = vpop.f32.mrf.mxu0
        %v2018 = vadd.f32 %v1729, %v2017
        %v2019 = vpop.f32.mrf.mxu0
        %2020 = vmatprep.mubr.bf16.mxu0 %v1218
        %2021 = vmatmul.mubr.bf16.gmra.mxu0 %v1217
        %v2022 = vpop.f32.mrf.mxu0
        %v2023 = vadd.f32 %v1734, %v2022
        %v2024 = vpop.f32.mrf.mxu0
        %v2025 = vpop.f32.mrf.mxu0
        %v2026 = vadd.f32 %v1737, %v2025
        %v2027 = vpop.f32.mrf.mxu0
        %2028 = vmatprep.mubr.bf16.mxu0 %v1222
        %2029 = vmatmul.mubr.bf16.gmra.mxu0 %v1221
        %v2030 = vpop.f32.mrf.mxu0
        %v2031 = vadd.f32 %v1742, %v2030
        %v2032 = vpop.f32.mrf.mxu0
        %v2033 = vpop.f32.mrf.mxu0
        %v2034 = vadd.f32 %v1745, %v2033
        %v2035 = vpop.f32.mrf.mxu0
        %2036 = vmatprep.mubr.bf16.mxu0 %v1226
        %2037 = vmatmul.mubr.bf16.gmra.mxu0 %v1225
        %v2038 = vpop.f32.mrf.mxu0
        %v2039 = vadd.f32 %v1750, %v2038
        %v2040 = vpop.f32.mrf.mxu0
        %v2041 = vpop.f32.mrf.mxu0
        %v2042 = vadd.f32 %v1753, %v2041
        %v2043 = vpop.f32.mrf.mxu0
        %2044 = vmatprep.mubr.bf16.mxu0 %v1230
        %2045 = vmatmul.mubr.bf16.gmra.mxu0 %v1229
        %v2046 = vpop.f32.mrf.mxu0
        %v2047 = vadd.f32 %v1758, %v2046
        %v2048 = vpop.f32.mrf.mxu0
        %v2049 = vpop.f32.mrf.mxu0
        %v2050 = vadd.f32 %v1761, %v2049
        %v2051 = vpop.f32.mrf.mxu0
        %2052 = vmatprep.mubr.bf16.mxu0 %v1234
        %2053 = vmatmul.mubr.bf16.gmra.mxu0 %v1233
        %v2054 = vpop.f32.mrf.mxu0
        %v2055 = vadd.f32 %v1766, %v2054
        %v2056 = vpop.f32.mrf.mxu0
        %v2057 = vpop.f32.mrf.mxu0
        %v2058 = vadd.f32 %v1769, %v2057
        %v2059 = vpop.f32.mrf.mxu0
        %2060 = vmatprep.mubr.bf16.mxu0 %v1238
        %2061 = vmatmul.mubr.bf16.gmra.mxu0 %v1237
        %v2062 = vpop.f32.mrf.mxu0
        %v2063 = vadd.f32 %v1774, %v2062
        %v2064 = vpop.f32.mrf.mxu0
        %v2065 = vpop.f32.mrf.mxu0
        %v2066 = vadd.f32 %v1777, %v2065
        %v2067 = vpop.f32.mrf.mxu0
        %2068 = vmatprep.mubr.bf16.mxu0 %v1242
        %2069 = vmatmul.mubr.bf16.gmra.mxu0 %v1241
        %v2070 = vpop.f32.mrf.mxu0
        %v2071 = vadd.f32 %v1782, %v2070
        %v2072 = vpop.f32.mrf.mxu0
        %v2073 = vpop.f32.mrf.mxu0
        %v2074 = vadd.f32 %v1785, %v2073
        %v2075 = vpop.f32.mrf.mxu0
        %2076 = vmatprep.mubr.bf16.mxu0 %v1246
        %2077 = vmatmul.mubr.bf16.gmra.mxu0 %v1245
        %v2078 = vpop.f32.mrf.mxu0
        %v2079 = vadd.f32 %v1790, %v2078
        %v2080 = vpop.f32.mrf.mxu0
        %v2081 = vpop.f32.mrf.mxu0
        %v2082 = vadd.f32 %v1793, %v2081
        %v2083 = vpop.f32.mrf.mxu0
        %2084 = vmatprep.mubr.bf16.mxu0 %v1250
        %2085 = vmatmul.mubr.bf16.gmra.mxu0 %v1249
        %v2086 = vpop.f32.mrf.mxu0
        %v2087 = vadd.f32 %v1798, %v2086
        %v2088 = vpop.f32.mrf.mxu0
        %v2089 = vpop.f32.mrf.mxu0
        %v2090 = vadd.f32 %v1801, %v2089
        %v2091 = vpop.f32.mrf.mxu0
        %2092 = vmatprep.mubr.bf16.mxu0 %v1254
        %2093 = vmatmul.mubr.bf16.gmra.mxu0 %v1253
        %v2094 = vpop.f32.mrf.mxu0
        %v2095 = vadd.f32 %v1806, %v2094
        %v2096 = vpop.f32.mrf.mxu0
        %v2097 = vpop.f32.mrf.mxu0
        %v2098 = vadd.f32 %v1809, %v2097
        %v2099 = vpop.f32.mrf.mxu0
        %2100 = vmatprep.mubr.bf16.mxu0 %v1258
        %2101 = vmatmul.mubr.bf16.gmra.mxu0 %v1257
        %v2102 = vpop.f32.mrf.mxu0
        %v2103 = vadd.f32 %v1814, %v2102
        %v2104 = vpop.f32.mrf.mxu0
        %v2105 = vpop.f32.mrf.mxu0
        %v2106 = vadd.f32 %v1817, %v2105
        %v2107 = vpop.f32.mrf.mxu0
        %2108 = vmatprep.mubr.bf16.mxu0 %v1262
        %2109 = vmatmul.mubr.bf16.gmra.mxu0 %v1261
        %v2110 = vpop.f32.mrf.mxu0
        %v2111 = vadd.f32 %v1822, %v2110
        %v2112 = vpop.f32.mrf.mxu0
        %v2113 = vpop.f32.mrf.mxu0
        %v2114 = vadd.f32 %v1825, %v2113
        %v2115 = vpop.f32.mrf.mxu0
        %2116 = vmatprep.mubr.bf16.mxu0 %v1266
        %2117 = vmatmul.mubr.bf16.gmra.mxu0 %v1265
        %v2118 = vpop.f32.mrf.mxu0
        %v2119 = vadd.f32 %v1830, %v2118
        %v2120 = vpop.f32.mrf.mxu0
        %v2121 = vpop.f32.mrf.mxu0
        %v2122 = vadd.f32 %v1833, %v2121
        %v2123 = vpop.f32.mrf.mxu0
        %2124 = vmatprep.mubr.bf16.mxu0 %v1270
        %2125 = vmatmul.mubr.bf16.gmra.mxu0 %v1269
        %v2126 = vpop.f32.mrf.mxu0
        %v2127 = vadd.f32 %v1838, %v2126
        %v2128 = vpop.f32.mrf.mxu0
        %v2129 = vpop.f32.mrf.mxu0
        %v2130 = vadd.f32 %v1841, %v2129
        %v2131 = vpop.f32.mrf.mxu0
        %2132 = vmatprep.mubr.bf16.mxu0 %v1274
        %2133 = vmatmul.mubr.bf16.gmra.mxu0 %v1273
        %v2134 = vpop.f32.mrf.mxu0
        %v2135 = vadd.f32 %v1846, %v2134
        %v2136 = vpop.f32.mrf.mxu0
        %v2137 = vpop.f32.mrf.mxu0
        %v2138 = vadd.f32 %v1849, %v2137
        %v2139 = vpop.f32.mrf.mxu0
        %2140 = vmatprep.mubr.bf16.mxu0 %v1278
        %2141 = vmatmul.mubr.bf16.gmra.mxu0 %v1277
        %v2142 = vpop.f32.mrf.mxu0
        %v2143 = vadd.f32 %v1854, %v2142
        %v2144 = vpop.f32.mrf.mxu0
        %v2145 = vpop.f32.mrf.mxu0
        %v2146 = vadd.f32 %v1857, %v2145
        %v2147 = vpop.f32.mrf.mxu0
        %2148 = vmatprep.mubr.bf16.mxu0 %v1282
        %2149 = vmatmul.mubr.bf16.gmra.mxu0 %v1281
        %v2150 = vpop.f32.mrf.mxu0
        %v2151 = vadd.f32 %v1862, %v2150
        %v2152 = vpop.f32.mrf.mxu0
        %v2153 = vpop.f32.mrf.mxu0
        %v2154 = vadd.f32 %v1865, %v2153
        %v2155 = vpop.f32.mrf.mxu0
        %2156 = vmatprep.mubr.bf16.mxu0 %v1286
        %2157 = vmatmul.mubr.bf16.gmra.mxu0 %v1285
        %v2158 = vpop.f32.mrf.mxu0
        %v2159 = vadd.f32 %v1870, %v2158
        %v2160 = vpop.f32.mrf.mxu0
        %v2161 = vpop.f32.mrf.mxu0
        %v2162 = vadd.f32 %v1873, %v2161
        %v2163 = vpop.f32.mrf.mxu0
        %2164 = vmatprep.mubr.bf16.mxu0 %v1290
        %2165 = vmatmul.mubr.bf16.gmra.mxu0 %v1289
        %v2166 = vpop.f32.mrf.mxu0
        %v2167 = vadd.f32 %v1878, %v2166
        %v2168 = vpop.f32.mrf.mxu0
        %v2169 = vpop.f32.mrf.mxu0
        %v2170 = vadd.f32 %v1881, %v2169
        %v2171 = vpop.f32.mrf.mxu0
        %2172 = vmatprep.mubr.bf16.mxu0 %v1294
        %2173 = vmatmul.mubr.bf16.gmra.mxu0 %v1293
        %v2174 = vpop.f32.mrf.mxu0
        %v2175 = vadd.f32 %v1886, %v2174
        %v2176 = vpop.f32.mrf.mxu0
        %v2177 = vpop.f32.mrf.mxu0
        %v2178 = vadd.f32 %v1889, %v2177
        %v2179 = vpop.f32.mrf.mxu0
        %2180 = vmatprep.mubr.bf16.mxu0 %v1298
        %2181 = vmatmul.mubr.bf16.gmra.mxu0 %v1297
        %v2182 = vpop.f32.mrf.mxu0
        %v2183 = vadd.f32 %v1894, %v2182
        %v2184 = vpop.f32.mrf.mxu0
        %v2185 = vpop.f32.mrf.mxu0
        %v2186 = vadd.f32 %v1897, %v2185
        %v2187 = vpop.f32.mrf.mxu0
        %2188 = vmatprep.mubr.bf16.mxu0 %v1302
        %2189 = vmatmul.mubr.bf16.gmra.mxu0 %v1301
        %v2190 = vpop.f32.mrf.mxu0
        %v2191 = vadd.f32 %v1902, %v2190
        %v2192 = vpop.f32.mrf.mxu0
        %v2193 = vpop.f32.mrf.mxu0
        %v2194 = vadd.f32 %v1905, %v2193
        %v2195 = vpop.f32.mrf.mxu0
        %2196 = vmatprep.mubr.bf16.mxu0 %v1306
        %2197 = vmatmul.mubr.bf16.gmra.mxu0 %v1305
        %v2198 = vpop.f32.mrf.mxu0
        %v2199 = vadd.f32 %v1910, %v2198
        %v2200 = vpop.f32.mrf.mxu0
        %v2201 = vpop.f32.mrf.mxu0
        %v2202 = vadd.f32 %v1913, %v2201
        %v2203 = vpop.f32.mrf.mxu0
        %2204 = vdwg.mxu0
        %v2205 = vadd.f32 %v603, %v1951
        %v2206 = vadd.f32 %v604, %v1954
        %v2207 = vadd.f32 %v605, %v1959
        %v2208 = vadd.f32 %v606, %v1962
        %v2209 = vadd.f32 %v607, %v1967
        %v2210 = vadd.f32 %v608, %v1970
        %v2211 = vadd.f32 %v609, %v1975
        %v2212 = vadd.f32 %v610, %v1978
        %v2213 = vadd.f32 %v611, %v1983
        %v2214 = vadd.f32 %v612, %v1986
        %v2215 = vadd.f32 %v613, %v1991
        %v2216 = vadd.f32 %v614, %v1994
        %v2217 = vadd.f32 %v615, %v1999
        %v2218 = vadd.f32 %v616, %v2002
        %v2219 = vadd.f32 %v617, %v2007
        %v2220 = vadd.f32 %v618, %v2010
        %v2221 = vadd.f32 %v619, %v2015
        %v2222 = vadd.f32 %v620, %v2018
        %v2223 = vadd.f32 %v621, %v2023
        %v2224 = vadd.f32 %v622, %v2026
        %v2225 = vadd.f32 %v623, %v2031
        %v2226 = vadd.f32 %v624, %v2034
        %v2227 = vadd.f32 %v625, %v2039
        %v2228 = vadd.f32 %v626, %v2042
        %v2229 = vadd.f32 %v627, %v2047
        %v2230 = vadd.f32 %v628, %v2050
        %v2231 = vadd.f32 %v629, %v2055
        %v2232 = vadd.f32 %v630, %v2058
        %v2233 = vadd.f32 %v631, %v2063
        %v2234 = vadd.f32 %v632, %v2066
        %v2235 = vadd.f32 %v633, %v2071
        %v2236 = vadd.f32 %v634, %v2074
        %v2237 = vadd.f32 %v635, %v2079
        %v2238 = vadd.f32 %v636, %v2082
        %v2239 = vadd.f32 %v637, %v2087
        %v2240 = vadd.f32 %v638, %v2090
        %v2241 = vadd.f32 %v639, %v2095
        %v2242 = vadd.f32 %v640, %v2098
        %v2243 = vadd.f32 %v641, %v2103
        %v2244 = vadd.f32 %v642, %v2106
        %v2245 = vadd.f32 %v643, %v2111
        %v2246 = vadd.f32 %v644, %v2114
        %v2247 = vadd.f32 %v645, %v2119
        %v2248 = vadd.f32 %v646, %v2122
        %v2249 = vadd.f32 %v647, %v2127
        %v2250 = vadd.f32 %v648, %v2130
        %v2251 = vadd.f32 %v649, %v2135
        %v2252 = vadd.f32 %v650, %v2138
        %v2253 = vadd.f32 %v651, %v2143
        %v2254 = vadd.f32 %v652, %v2146
        %v2255 = vadd.f32 %v653, %v2151
        %v2256 = vadd.f32 %v654, %v2154
        %v2257 = vadd.f32 %v655, %v2159
        %v2258 = vadd.f32 %v656, %v2162
        %v2259 = vadd.f32 %v657, %v2167
        %v2260 = vadd.f32 %v658, %v2170
        %v2261 = vadd.f32 %v659, %v2175
        %v2262 = vadd.f32 %v660, %v2178
        %v2263 = vadd.f32 %v661, %v2183
        %v2264 = vadd.f32 %v662, %v2186
        %v2265 = vadd.f32 %v663, %v2191
        %v2266 = vadd.f32 %v664, %v2194
        %v2267 = vadd.f32 %v665, %v2199
        %v2268 = vadd.f32 %v666, %v2202
        %2269 = vst [vmem:[#allocation2] sm:$0xff] %v2205
        %2270 = vst [vmem:[#allocation2 + $0x8] sm:$0xff] %v2206
        %2271 = vst [vmem:[#allocation2 + $0x10] sm:$0xff] %v2207
        %2272 = vst [vmem:[#allocation2 + $0x18] sm:$0xff] %v2208
        %2273 = vst [vmem:[#allocation2 + $0x20] sm:$0xff] %v2209
        %2274 = vst [vmem:[#allocation2 + $0x28] sm:$0xff] %v2210
        %2275 = vst [vmem:[#allocation2 + $0x30] sm:$0xff] %v2211
        %2276 = vst [vmem:[#allocation2 + $0x38] sm:$0xff] %v2212
        %2277 = vst [vmem:[#allocation2 + $0x40] sm:$0xff] %v2213
        %2278 = vst [vmem:[#allocation2 + $0x48] sm:$0xff] %v2214
        %2279 = vst [vmem:[#allocation2 + $0x50] sm:$0xff] %v2215
        %2280 = vst [vmem:[#allocation2 + $0x58] sm:$0xff] %v2216
        %2281 = vst [vmem:[#allocation2 + $0x60] sm:$0xff] %v2217
        %2282 = vst [vmem:[#allocation2 + $0x68] sm:$0xff] %v2218
        %2283 = vst [vmem:[#allocation2 + $0x70] sm:$0xff] %v2219
        %2284 = vst [vmem:[#allocation2 + $0x78] sm:$0xff] %v2220
        %2285 = vst [vmem:[#allocation2 + $0x80] sm:$0xff] %v2221
        %2286 = vst [vmem:[#allocation2 + $0x88] sm:$0xff] %v2222
        %2287 = vst [vmem:[#allocation2 + $0x90] sm:$0xff] %v2223
        %2288 = vst [vmem:[#allocation2 + $0x98] sm:$0xff] %v2224
        %2289 = vst [vmem:[#allocation2 + $0xa0] sm:$0xff] %v2225
        %2290 = vst [vmem:[#allocation2 + $0xa8] sm:$0xff] %v2226
        %2291 = vst [vmem:[#allocation2 + $0xb0] sm:$0xff] %v2227
        %2292 = vst [vmem:[#allocation2 + $0xb8] sm:$0xff] %v2228
        %2293 = vst [vmem:[#allocation2 + $0xc0] sm:$0xff] %v2229
        %2294 = vst [vmem:[#allocation2 + $0xc8] sm:$0xff] %v2230
        %2295 = vst [vmem:[#allocation2 + $0xd0] sm:$0xff] %v2231
        %2296 = vst [vmem:[#allocation2 + $0xd8] sm:$0xff] %v2232
        %2297 = vst [vmem:[#allocation2 + $0xe0] sm:$0xff] %v2233
        %2298 = vst [vmem:[#allocation2 + $0xe8] sm:$0xff] %v2234
        %2299 = vst [vmem:[#allocation2 + $0xf0] sm:$0xff] %v2235
        %2300 = vst [vmem:[#allocation2 + $0xf8] sm:$0xff] %v2236
        %2301 = vst [vmem:[#allocation2 + $0x100] sm:$0xff] %v2237
        %2302 = vst [vmem:[#allocation2 + $0x108] sm:$0xff] %v2238
        %2303 = vst [vmem:[#allocation2 + $0x110] sm:$0xff] %v2239
        %2304 = vst [vmem:[#allocation2 + $0x118] sm:$0xff] %v2240
        %2305 = vst [vmem:[#allocation2 + $0x120] sm:$0xff] %v2241
        %2306 = vst [vmem:[#allocation2 + $0x128] sm:$0xff] %v2242
        %2307 = vst [vmem:[#allocation2 + $0x130] sm:$0xff] %v2243
        %2308 = vst [vmem:[#allocation2 + $0x138] sm:$0xff] %v2244
        %2309 = vst [vmem:[#allocation2 + $0x140] sm:$0xff] %v2245
        %2310 = vst [vmem:[#allocation2 + $0x148] sm:$0xff] %v2246
        %2311 = vst [vmem:[#allocation2 + $0x150] sm:$0xff] %v2247
        %2312 = vst [vmem:[#allocation2 + $0x158] sm:$0xff] %v2248
        %2313 = vst [vmem:[#allocation2 + $0x160] sm:$0xff] %v2249
        %2314 = vst [vmem:[#allocation2 + $0x168] sm:$0xff] %v2250
        %2315 = vst [vmem:[#allocation2 + $0x170] sm:$0xff] %v2251
        %2316 = vst [vmem:[#allocation2 + $0x178] sm:$0xff] %v2252
        %2317 = vst [vmem:[#allocation2 + $0x180] sm:$0xff] %v2253
        %2318 = vst [vmem:[#allocation2 + $0x188] sm:$0xff] %v2254
        %2319 = vst [vmem:[#allocation2 + $0x190] sm:$0xff] %v2255
        %2320 = vst [vmem:[#allocation2 + $0x198] sm:$0xff] %v2256
        %2321 = vst [vmem:[#allocation2 + $0x1a0] sm:$0xff] %v2257
        %2322 = vst [vmem:[#allocation2 + $0x1a8] sm:$0xff] %v2258
        %2323 = vst [vmem:[#allocation2 + $0x1b0] sm:$0xff] %v2259
        %2324 = vst [vmem:[#allocation2 + $0x1b8] sm:$0xff] %v2260
        %2325 = vst [vmem:[#allocation2 + $0x1c0] sm:$0xff] %v2261
        %2326 = vst [vmem:[#allocation2 + $0x1c8] sm:$0xff] %v2262
        %2327 = vst [vmem:[#allocation2 + $0x1d0] sm:$0xff] %v2263
        %2328 = vst [vmem:[#allocation2 + $0x1d8] sm:$0xff] %v2264
        %2329 = vst [vmem:[#allocation2 + $0x1e0] sm:$0xff] %v2265
        %2330 = vst [vmem:[#allocation2 + $0x1e8] sm:$0xff] %v2266
        %2331 = vst [vmem:[#allocation2 + $0x1f0] sm:$0xff] %v2267
        %2332 = vst [vmem:[#allocation2 + $0x1f8] sm:$0xff] %v2268
        %p2333 = scmp.eq.s32.totalorder %s19, 1
        // Predicated region
        $region60: #{gnn_forward.11} parent=50 // pred_check
          %p2334 = pneg %p2333
        $region61: #{gnn_forward.11} parent=50 // pred_check_branch
          %2336 = sbr.rel (%p2334) target = $region63
        $region62: #{gnn_forward.11} parent=50 // pred_region
          %v2337 = vld [vmem:[#allocation2] sm:$0xff]
          %v2338 = vld [vmem:[#allocation2 + $0x8] sm:$0xff]
          %v2339 = vld [vmem:[#allocation2 + $0x10] sm:$0xff]
          %v2340 = vld [vmem:[#allocation2 + $0x18] sm:$0xff]
          %v2341 = vld [vmem:[#allocation2 + $0x20] sm:$0xff]
          %v2342 = vld [vmem:[#allocation2 + $0x28] sm:$0xff]
          %v2343 = vld [vmem:[#allocation2 + $0x30] sm:$0xff]
          %v2344 = vld [vmem:[#allocation2 + $0x38] sm:$0xff]
          %v2345 = vld [vmem:[#allocation2 + $0x40] sm:$0xff]
          %v2346 = vld [vmem:[#allocation2 + $0x48] sm:$0xff]
          %v2347 = vld [vmem:[#allocation2 + $0x50] sm:$0xff]
          %v2348 = vld [vmem:[#allocation2 + $0x58] sm:$0xff]
          %v2349 = vld [vmem:[#allocation2 + $0x60] sm:$0xff]
          %v2350 = vld [vmem:[#allocation2 + $0x68] sm:$0xff]
          %v2351 = vld [vmem:[#allocation2 + $0x70] sm:$0xff]
          %v2352 = vld [vmem:[#allocation2 + $0x78] sm:$0xff]
          %v2353 = vld [vmem:[#allocation2 + $0x80] sm:$0xff]
          %v2354 = vld [vmem:[#allocation2 + $0x88] sm:$0xff]
          %v2355 = vld [vmem:[#allocation2 + $0x90] sm:$0xff]
          %v2356 = vld [vmem:[#allocation2 + $0x98] sm:$0xff]
          %v2357 = vld [vmem:[#allocation2 + $0xa0] sm:$0xff]
          %v2358 = vld [vmem:[#allocation2 + $0xa8] sm:$0xff]
          %v2359 = vld [vmem:[#allocation2 + $0xb0] sm:$0xff]
          %v2360 = vld [vmem:[#allocation2 + $0xb8] sm:$0xff]
          %v2361 = vld [vmem:[#allocation2 + $0xc0] sm:$0xff]
          %v2362 = vld [vmem:[#allocation2 + $0xc8] sm:$0xff]
          %v2363 = vld [vmem:[#allocation2 + $0xd0] sm:$0xff]
          %v2364 = vld [vmem:[#allocation2 + $0xd8] sm:$0xff]
          %v2365 = vld [vmem:[#allocation2 + $0xe0] sm:$0xff]
          %v2366 = vld [vmem:[#allocation2 + $0xe8] sm:$0xff]
          %v2367 = vld [vmem:[#allocation2 + $0xf0] sm:$0xff]
          %v2368 = vld [vmem:[#allocation2 + $0xf8] sm:$0xff]
          %v2369 = vld [vmem:[#allocation2 + $0x100] sm:$0xff]
          %v2370 = vld [vmem:[#allocation2 + $0x108] sm:$0xff]
          %v2371 = vld [vmem:[#allocation2 + $0x110] sm:$0xff]
          %v2372 = vld [vmem:[#allocation2 + $0x118] sm:$0xff]
          %v2373 = vld [vmem:[#allocation2 + $0x120] sm:$0xff]
          %v2374 = vld [vmem:[#allocation2 + $0x128] sm:$0xff]
          %v2375 = vld [vmem:[#allocation2 + $0x130] sm:$0xff]
          %v2376 = vld [vmem:[#allocation2 + $0x138] sm:$0xff]
          %v2377 = vld [vmem:[#allocation2 + $0x140] sm:$0xff]
          %v2378 = vld [vmem:[#allocation2 + $0x148] sm:$0xff]
          %v2379 = vld [vmem:[#allocation2 + $0x150] sm:$0xff]
          %v2380 = vld [vmem:[#allocation2 + $0x158] sm:$0xff]
          %v2381 = vld [vmem:[#allocation2 + $0x160] sm:$0xff]
          %v2382 = vld [vmem:[#allocation2 + $0x168] sm:$0xff]
          %v2383 = vld [vmem:[#allocation2 + $0x170] sm:$0xff]
          %v2384 = vld [vmem:[#allocation2 + $0x178] sm:$0xff]
          %v2385 = vld [vmem:[#allocation2 + $0x180] sm:$0xff]
          %v2386 = vld [vmem:[#allocation2 + $0x188] sm:$0xff]
          %v2387 = vld [vmem:[#allocation2 + $0x190] sm:$0xff]
          %v2388 = vld [vmem:[#allocation2 + $0x198] sm:$0xff]
          %v2389 = vld [vmem:[#allocation2 + $0x1a0] sm:$0xff]
          %v2390 = vld [vmem:[#allocation2 + $0x1a8] sm:$0xff]
          %v2391 = vld [vmem:[#allocation2 + $0x1b0] sm:$0xff]
          %v2392 = vld [vmem:[#allocation2 + $0x1b8] sm:$0xff]
          %v2393 = vld [vmem:[#allocation2 + $0x1c0] sm:$0xff]
          %v2394 = vld [vmem:[#allocation2 + $0x1c8] sm:$0xff]
          %v2395 = vld [vmem:[#allocation2 + $0x1d0] sm:$0xff]
          %v2396 = vld [vmem:[#allocation2 + $0x1d8] sm:$0xff]
          %v2397 = vld [vmem:[#allocation2 + $0x1e0] sm:$0xff]
          %v2398 = vld [vmem:[#allocation2 + $0x1e8] sm:$0xff]
          %v2399 = vld [vmem:[#allocation2 + $0x1f0] sm:$0xff]
          %v2400 = vld [vmem:[#allocation2 + $0x1f8] sm:$0xff]
          %v2401 = vld [vmem:[%s2] sm:$0x1]
          %v2403 = vlaneseq
          %v2404 = vshrl.u32 %v2403, 7
          %v2405 = vsub.s32 0, %v2404
          %v2406 = vrot.slane %v2401, %v2405
          %v2408 = vadd.f32 %v2337, %v2406
          %v2409 = vadd.f32 %v2338, %v2406
          %v2410 = vadd.f32 %v2339, %v2406
          %v2411 = vadd.f32 %v2340, %v2406
          %v2412 = vadd.f32 %v2341, %v2406
          %v2413 = vadd.f32 %v2342, %v2406
          %v2414 = vadd.f32 %v2343, %v2406
          %v2415 = vadd.f32 %v2344, %v2406
          %v2416 = vadd.f32 %v2345, %v2406
          %v2417 = vadd.f32 %v2346, %v2406
          %v2418 = vadd.f32 %v2347, %v2406
          %v2419 = vadd.f32 %v2348, %v2406
          %v2420 = vadd.f32 %v2349, %v2406
          %v2421 = vadd.f32 %v2350, %v2406
          %v2422 = vadd.f32 %v2351, %v2406
          %v2423 = vadd.f32 %v2352, %v2406
          %v2424 = vadd.f32 %v2353, %v2406
          %v2425 = vadd.f32 %v2354, %v2406
          %v2426 = vadd.f32 %v2355, %v2406
          %v2427 = vadd.f32 %v2356, %v2406
          %v2428 = vadd.f32 %v2357, %v2406
          %v2429 = vadd.f32 %v2358, %v2406
          %v2430 = vadd.f32 %v2359, %v2406
          %v2431 = vadd.f32 %v2360, %v2406
          %v2432 = vadd.f32 %v2361, %v2406
          %v2433 = vadd.f32 %v2362, %v2406
          %v2434 = vadd.f32 %v2363, %v2406
          %v2435 = vadd.f32 %v2364, %v2406
          %v2436 = vadd.f32 %v2365, %v2406
          %v2437 = vadd.f32 %v2366, %v2406
          %v2438 = vadd.f32 %v2367, %v2406
          %v2439 = vadd.f32 %v2368, %v2406
          %v2440 = vadd.f32 %v2369, %v2406
          %v2441 = vadd.f32 %v2370, %v2406
          %v2442 = vadd.f32 %v2371, %v2406
          %v2443 = vadd.f32 %v2372, %v2406
          %v2444 = vadd.f32 %v2373, %v2406
          %v2445 = vadd.f32 %v2374, %v2406
          %v2446 = vadd.f32 %v2375, %v2406
          %v2447 = vadd.f32 %v2376, %v2406
          %v2448 = vadd.f32 %v2377, %v2406
          %v2449 = vadd.f32 %v2378, %v2406
          %v2450 = vadd.f32 %v2379, %v2406
          %v2451 = vadd.f32 %v2380, %v2406
          %v2452 = vadd.f32 %v2381, %v2406
          %v2453 = vadd.f32 %v2382, %v2406
          %v2454 = vadd.f32 %v2383, %v2406
          %v2455 = vadd.f32 %v2384, %v2406
          %v2456 = vadd.f32 %v2385, %v2406
          %v2457 = vadd.f32 %v2386, %v2406
          %v2458 = vadd.f32 %v2387, %v2406
          %v2459 = vadd.f32 %v2388, %v2406
          %v2460 = vadd.f32 %v2389, %v2406
          %v2461 = vadd.f32 %v2390, %v2406
          %v2462 = vadd.f32 %v2391, %v2406
          %v2463 = vadd.f32 %v2392, %v2406
          %v2464 = vadd.f32 %v2393, %v2406
          %v2465 = vadd.f32 %v2394, %v2406
          %v2466 = vadd.f32 %v2395, %v2406
          %v2467 = vadd.f32 %v2396, %v2406
          %v2468 = vadd.f32 %v2397, %v2406
          %v2469 = vadd.f32 %v2398, %v2406
          %v2470 = vadd.f32 %v2399, %v2406
          %v2471 = vadd.f32 %v2400, %v2406
          %v2472 = vlaneseq
          %v2473 = vand.u32 %v2472, 127
          %vm2474 = vcmp.lt.s32.totalorder %v2473, 10
          %v2475 = vsel %vm2474, %v2408, 0.0
          %v2476 = vsel %vm2474, %v2409, 0.0
          %v2477 = vsel %vm2474, %v2410, 0.0
          %v2478 = vsel %vm2474, %v2411, 0.0
          %v2479 = vsel %vm2474, %v2412, 0.0
          %v2480 = vsel %vm2474, %v2413, 0.0
          %v2481 = vsel %vm2474, %v2414, 0.0
          %v2482 = vsel %vm2474, %v2415, 0.0
          %v2483 = vsel %vm2474, %v2416, 0.0
          %v2484 = vsel %vm2474, %v2417, 0.0
          %v2485 = vsel %vm2474, %v2418, 0.0
          %v2486 = vsel %vm2474, %v2419, 0.0
          %v2487 = vsel %vm2474, %v2420, 0.0
          %v2488 = vsel %vm2474, %v2421, 0.0
          %v2489 = vsel %vm2474, %v2422, 0.0
          %v2490 = vsel %vm2474, %v2423, 0.0
          %v2491 = vsel %vm2474, %v2424, 0.0
          %v2492 = vsel %vm2474, %v2425, 0.0
          %v2493 = vsel %vm2474, %v2426, 0.0
          %v2494 = vsel %vm2474, %v2427, 0.0
          %v2495 = vsel %vm2474, %v2428, 0.0
          %v2496 = vsel %vm2474, %v2429, 0.0
          %v2497 = vsel %vm2474, %v2430, 0.0
          %v2498 = vsel %vm2474, %v2431, 0.0
          %v2499 = vsel %vm2474, %v2432, 0.0
          %v2500 = vsel %vm2474, %v2433, 0.0
          %v2501 = vsel %vm2474, %v2434, 0.0
          %v2502 = vsel %vm2474, %v2435, 0.0
          %v2503 = vsel %vm2474, %v2436, 0.0
          %v2504 = vsel %vm2474, %v2437, 0.0
          %v2505 = vsel %vm2474, %v2438, 0.0
          %v2506 = vsel %vm2474, %v2439, 0.0
          %v2507 = vsel %vm2474, %v2440, 0.0
          %v2508 = vsel %vm2474, %v2441, 0.0
          %v2509 = vsel %vm2474, %v2442, 0.0
          %v2510 = vsel %vm2474, %v2443, 0.0
          %v2511 = vsel %vm2474, %v2444, 0.0
          %v2512 = vsel %vm2474, %v2445, 0.0
          %v2513 = vsel %vm2474, %v2446, 0.0
          %v2514 = vsel %vm2474, %v2447, 0.0
          %v2515 = vsel %vm2474, %v2448, 0.0
          %v2516 = vsel %vm2474, %v2449, 0.0
          %v2517 = vsel %vm2474, %v2450, 0.0
          %v2518 = vsel %vm2474, %v2451, 0.0
          %v2519 = vsel %vm2474, %v2452, 0.0
          %v2520 = vsel %vm2474, %v2453, 0.0
          %v2521 = vsel %vm2474, %v2454, 0.0
          %v2522 = vsel %vm2474, %v2455, 0.0
          %v2523 = vsel %vm2474, %v2456, 0.0
          %v2524 = vsel %vm2474, %v2457, 0.0
          %v2525 = vsel %vm2474, %v2458, 0.0
          %v2526 = vsel %vm2474, %v2459, 0.0
          %v2527 = vsel %vm2474, %v2460, 0.0
          %v2528 = vsel %vm2474, %v2461, 0.0
          %v2529 = vsel %vm2474, %v2462, 0.0
          %v2530 = vsel %vm2474, %v2463, 0.0
          %v2531 = vsel %vm2474, %v2464, 0.0
          %v2532 = vsel %vm2474, %v2465, 0.0
          %v2533 = vsel %vm2474, %v2466, 0.0
          %v2534 = vsel %vm2474, %v2467, 0.0
          %v2535 = vsel %vm2474, %v2468, 0.0
          %v2536 = vsel %vm2474, %v2469, 0.0
          %v2537 = vsel %vm2474, %v2470, 0.0
          %v2538 = vsel %vm2474, %v2471, 0.0
          %v2539 = vmul.f32 %v2475, %v2475
          %v2540 = vmul.f32 %v2476, %v2476
          %v2541 = vmul.f32 %v2477, %v2477
          %v2542 = vmul.f32 %v2478, %v2478
          %v2543 = vmul.f32 %v2479, %v2479
          %v2544 = vmul.f32 %v2480, %v2480
          %v2545 = vmul.f32 %v2481, %v2481
          %v2546 = vmul.f32 %v2482, %v2482
          %v2547 = vmul.f32 %v2483, %v2483
          %v2548 = vmul.f32 %v2484, %v2484
          %v2549 = vmul.f32 %v2485, %v2485
          %v2550 = vmul.f32 %v2486, %v2486
          %v2551 = vmul.f32 %v2487, %v2487
          %v2552 = vmul.f32 %v2488, %v2488
          %v2553 = vmul.f32 %v2489, %v2489
          %v2554 = vmul.f32 %v2490, %v2490
          %v2555 = vmul.f32 %v2491, %v2491
          %v2556 = vmul.f32 %v2492, %v2492
          %v2557 = vmul.f32 %v2493, %v2493
          %v2558 = vmul.f32 %v2494, %v2494
          %v2559 = vmul.f32 %v2495, %v2495
          %v2560 = vmul.f32 %v2496, %v2496
          %v2561 = vmul.f32 %v2497, %v2497
          %v2562 = vmul.f32 %v2498, %v2498
          %v2563 = vmul.f32 %v2499, %v2499
          %v2564 = vmul.f32 %v2500, %v2500
          %v2565 = vmul.f32 %v2501, %v2501
          %v2566 = vmul.f32 %v2502, %v2502
          %v2567 = vmul.f32 %v2503, %v2503
          %v2568 = vmul.f32 %v2504, %v2504
          %v2569 = vmul.f32 %v2505, %v2505
          %v2570 = vmul.f32 %v2506, %v2506
          %v2571 = vmul.f32 %v2507, %v2507
          %v2572 = vmul.f32 %v2508, %v2508
          %v2573 = vmul.f32 %v2509, %v2509
          %v2574 = vmul.f32 %v2510, %v2510
          %v2575 = vmul.f32 %v2511, %v2511
          %v2576 = vmul.f32 %v2512, %v2512
          %v2577 = vmul.f32 %v2513, %v2513
          %v2578 = vmul.f32 %v2514, %v2514
          %v2579 = vmul.f32 %v2515, %v2515
          %v2580 = vmul.f32 %v2516, %v2516
          %v2581 = vmul.f32 %v2517, %v2517
          %v2582 = vmul.f32 %v2518, %v2518
          %v2583 = vmul.f32 %v2519, %v2519
          %v2584 = vmul.f32 %v2520, %v2520
          %v2585 = vmul.f32 %v2521, %v2521
          %v2586 = vmul.f32 %v2522, %v2522
          %v2587 = vmul.f32 %v2523, %v2523
          %v2588 = vmul.f32 %v2524, %v2524
          %v2589 = vmul.f32 %v2525, %v2525
          %v2590 = vmul.f32 %v2526, %v2526
          %v2591 = vmul.f32 %v2527, %v2527
          %v2592 = vmul.f32 %v2528, %v2528
          %v2593 = vmul.f32 %v2529, %v2529
          %v2594 = vmul.f32 %v2530, %v2530
          %v2595 = vmul.f32 %v2531, %v2531
          %v2596 = vmul.f32 %v2532, %v2532
          %v2597 = vmul.f32 %v2533, %v2533
          %v2598 = vmul.f32 %v2534, %v2534
          %v2599 = vmul.f32 %v2535, %v2535
          %v2600 = vmul.f32 %v2536, %v2536
          %v2601 = vmul.f32 %v2537, %v2537
          %v2602 = vmul.f32 %v2538, %v2538
          %2603 = vadd.xlane.f32.xlu0 %v2539
          %v2604 = vpop.xlane.xlu0 %2603
          %2605 = vadd.xlane.f32.xlu0 %v2540
          %v2606 = vpop.xlane.xlu0 %2605
          %2607 = vadd.xlane.f32.xlu0 %v2541
          %v2608 = vpop.xlane.xlu0 %2607
          %2609 = vadd.xlane.f32.xlu0 %v2542
          %v2610 = vpop.xlane.xlu0 %2609
          %2611 = vadd.xlane.f32.xlu0 %v2543
          %v2612 = vpop.xlane.xlu0 %2611
          %2613 = vadd.xlane.f32.xlu0 %v2544
          %v2614 = vpop.xlane.xlu0 %2613
          %2615 = vadd.xlane.f32.xlu0 %v2545
          %v2616 = vpop.xlane.xlu0 %2615
          %2617 = vadd.xlane.f32.xlu0 %v2546
          %v2618 = vpop.xlane.xlu0 %2617
          %2619 = vadd.xlane.f32.xlu0 %v2547
          %v2620 = vpop.xlane.xlu0 %2619
          %2621 = vadd.xlane.f32.xlu0 %v2548
          %v2622 = vpop.xlane.xlu0 %2621
          %2623 = vadd.xlane.f32.xlu0 %v2549
          %v2624 = vpop.xlane.xlu0 %2623
          %2625 = vadd.xlane.f32.xlu0 %v2550
          %v2626 = vpop.xlane.xlu0 %2625
          %2627 = vadd.xlane.f32.xlu0 %v2551
          %v2628 = vpop.xlane.xlu0 %2627
          %2629 = vadd.xlane.f32.xlu0 %v2552
          %v2630 = vpop.xlane.xlu0 %2629
          %2631 = vadd.xlane.f32.xlu0 %v2553
          %v2632 = vpop.xlane.xlu0 %2631
          %2633 = vadd.xlane.f32.xlu0 %v2554
          %v2634 = vpop.xlane.xlu0 %2633
          %2635 = vadd.xlane.f32.xlu0 %v2555
          %v2636 = vpop.xlane.xlu0 %2635
          %2637 = vadd.xlane.f32.xlu0 %v2556
          %v2638 = vpop.xlane.xlu0 %2637
          %2639 = vadd.xlane.f32.xlu0 %v2557
          %v2640 = vpop.xlane.xlu0 %2639
          %2641 = vadd.xlane.f32.xlu0 %v2558
          %v2642 = vpop.xlane.xlu0 %2641
          %2643 = vadd.xlane.f32.xlu0 %v2559
          %v2644 = vpop.xlane.xlu0 %2643
          %2645 = vadd.xlane.f32.xlu0 %v2560
          %v2646 = vpop.xlane.xlu0 %2645
          %2647 = vadd.xlane.f32.xlu0 %v2561
          %v2648 = vpop.xlane.xlu0 %2647
          %2649 = vadd.xlane.f32.xlu0 %v2562
          %v2650 = vpop.xlane.xlu0 %2649
          %2651 = vadd.xlane.f32.xlu0 %v2563
          %v2652 = vpop.xlane.xlu0 %2651
          %2653 = vadd.xlane.f32.xlu0 %v2564
          %v2654 = vpop.xlane.xlu0 %2653
          %2655 = vadd.xlane.f32.xlu0 %v2565
          %v2656 = vpop.xlane.xlu0 %2655
          %2657 = vadd.xlane.f32.xlu0 %v2566
          %v2658 = vpop.xlane.xlu0 %2657
          %2659 = vadd.xlane.f32.xlu0 %v2567
          %v2660 = vpop.xlane.xlu0 %2659
          %2661 = vadd.xlane.f32.xlu0 %v2568
          %v2662 = vpop.xlane.xlu0 %2661
          %2663 = vadd.xlane.f32.xlu0 %v2569
          %v2664 = vpop.xlane.xlu0 %2663
          %2665 = vadd.xlane.f32.xlu0 %v2570
          %v2666 = vpop.xlane.xlu0 %2665
          %2667 = vadd.xlane.f32.xlu0 %v2571
          %v2668 = vpop.xlane.xlu0 %2667
          %2669 = vadd.xlane.f32.xlu0 %v2572
          %v2670 = vpop.xlane.xlu0 %2669
          %2671 = vadd.xlane.f32.xlu0 %v2573
          %v2672 = vpop.xlane.xlu0 %2671
          %2673 = vadd.xlane.f32.xlu0 %v2574
          %v2674 = vpop.xlane.xlu0 %2673
          %2675 = vadd.xlane.f32.xlu0 %v2575
          %v2676 = vpop.xlane.xlu0 %2675
          %2677 = vadd.xlane.f32.xlu0 %v2576
          %v2678 = vpop.xlane.xlu0 %2677
          %2679 = vadd.xlane.f32.xlu0 %v2577
          %v2680 = vpop.xlane.xlu0 %2679
          %2681 = vadd.xlane.f32.xlu0 %v2578
          %v2682 = vpop.xlane.xlu0 %2681
          %2683 = vadd.xlane.f32.xlu0 %v2579
          %v2684 = vpop.xlane.xlu0 %2683
          %2685 = vadd.xlane.f32.xlu0 %v2580
          %v2686 = vpop.xlane.xlu0 %2685
          %2687 = vadd.xlane.f32.xlu0 %v2581
          %v2688 = vpop.xlane.xlu0 %2687
          %2689 = vadd.xlane.f32.xlu0 %v2582
          %v2690 = vpop.xlane.xlu0 %2689
          %2691 = vadd.xlane.f32.xlu0 %v2583
          %v2692 = vpop.xlane.xlu0 %2691
          %2693 = vadd.xlane.f32.xlu0 %v2584
          %v2694 = vpop.xlane.xlu0 %2693
          %2695 = vadd.xlane.f32.xlu0 %v2585
          %v2696 = vpop.xlane.xlu0 %2695
          %2697 = vadd.xlane.f32.xlu0 %v2586
          %v2698 = vpop.xlane.xlu0 %2697
          %2699 = vadd.xlane.f32.xlu0 %v2587
          %v2700 = vpop.xlane.xlu0 %2699
          %2701 = vadd.xlane.f32.xlu0 %v2588
          %v2702 = vpop.xlane.xlu0 %2701
          %2703 = vadd.xlane.f32.xlu0 %v2589
          %v2704 = vpop.xlane.xlu0 %2703
          %2705 = vadd.xlane.f32.xlu0 %v2590
          %v2706 = vpop.xlane.xlu0 %2705
          %2707 = vadd.xlane.f32.xlu0 %v2591
          %v2708 = vpop.xlane.xlu0 %2707
          %2709 = vadd.xlane.f32.xlu0 %v2592
          %v2710 = vpop.xlane.xlu0 %2709
          %2711 = vadd.xlane.f32.xlu0 %v2593
          %v2712 = vpop.xlane.xlu0 %2711
          %2713 = vadd.xlane.f32.xlu0 %v2594
          %v2714 = vpop.xlane.xlu0 %2713
          %2715 = vadd.xlane.f32.xlu0 %v2595
          %v2716 = vpop.xlane.xlu0 %2715
          %2717 = vadd.xlane.f32.xlu0 %v2596
          %v2718 = vpop.xlane.xlu0 %2717
          %2719 = vadd.xlane.f32.xlu0 %v2597
          %v2720 = vpop.xlane.xlu0 %2719
          %2721 = vadd.xlane.f32.xlu0 %v2598
          %v2722 = vpop.xlane.xlu0 %2721
          %2723 = vadd.xlane.f32.xlu0 %v2599
          %v2724 = vpop.xlane.xlu0 %2723
          %2725 = vadd.xlane.f32.xlu0 %v2600
          %v2726 = vpop.xlane.xlu0 %2725
          %2727 = vadd.xlane.f32.xlu0 %v2601
          %v2728 = vpop.xlane.xlu0 %2727
          %2729 = vadd.xlane.f32.xlu0 %v2602
          %v2730 = vpop.xlane.xlu0 %2729
          %v2731 = vmax.f32 %v2604, 1e-24
          %v2732 = vmax.f32 %v2606, 1e-24
          %v2733 = vmax.f32 %v2608, 1e-24
          %v2734 = vmax.f32 %v2610, 1e-24
          %v2735 = vmax.f32 %v2612, 1e-24
          %v2736 = vmax.f32 %v2614, 1e-24
          %v2737 = vmax.f32 %v2616, 1e-24
          %v2738 = vmax.f32 %v2618, 1e-24
          %v2739 = vmax.f32 %v2620, 1e-24
          %v2740 = vmax.f32 %v2622, 1e-24
          %v2741 = vmax.f32 %v2624, 1e-24
          %v2742 = vmax.f32 %v2626, 1e-24
          %v2743 = vmax.f32 %v2628, 1e-24
          %v2744 = vmax.f32 %v2630, 1e-24
          %v2745 = vmax.f32 %v2632, 1e-24
          %v2746 = vmax.f32 %v2634, 1e-24
          %v2747 = vmax.f32 %v2636, 1e-24
          %v2748 = vmax.f32 %v2638, 1e-24
          %v2749 = vmax.f32 %v2640, 1e-24
          %v2750 = vmax.f32 %v2642, 1e-24
          %v2751 = vmax.f32 %v2644, 1e-24
          %v2752 = vmax.f32 %v2646, 1e-24
          %v2753 = vmax.f32 %v2648, 1e-24
          %v2754 = vmax.f32 %v2650, 1e-24
          %v2755 = vmax.f32 %v2652, 1e-24
          %v2756 = vmax.f32 %v2654, 1e-24
          %v2757 = vmax.f32 %v2656, 1e-24
          %v2758 = vmax.f32 %v2658, 1e-24
          %v2759 = vmax.f32 %v2660, 1e-24
          %v2760 = vmax.f32 %v2662, 1e-24
          %v2761 = vmax.f32 %v2664, 1e-24
          %v2762 = vmax.f32 %v2666, 1e-24
          %v2763 = vmax.f32 %v2668, 1e-24
          %v2764 = vmax.f32 %v2670, 1e-24
          %v2765 = vmax.f32 %v2672, 1e-24
          %v2766 = vmax.f32 %v2674, 1e-24
          %v2767 = vmax.f32 %v2676, 1e-24
          %v2768 = vmax.f32 %v2678, 1e-24
          %v2769 = vmax.f32 %v2680, 1e-24
          %v2770 = vmax.f32 %v2682, 1e-24
          %v2771 = vmax.f32 %v2684, 1e-24
          %v2772 = vmax.f32 %v2686, 1e-24
          %v2773 = vmax.f32 %v2688, 1e-24
          %v2774 = vmax.f32 %v2690, 1e-24
          %v2775 = vmax.f32 %v2692, 1e-24
          %v2776 = vmax.f32 %v2694, 1e-24
          %v2777 = vmax.f32 %v2696, 1e-24
          %v2778 = vmax.f32 %v2698, 1e-24
          %v2779 = vmax.f32 %v2700, 1e-24
          %v2780 = vmax.f32 %v2702, 1e-24
          %v2781 = vmax.f32 %v2704, 1e-24
          %v2782 = vmax.f32 %v2706, 1e-24
          %v2783 = vmax.f32 %v2708, 1e-24
          %v2784 = vmax.f32 %v2710, 1e-24
          %v2785 = vmax.f32 %v2712, 1e-24
          %v2786 = vmax.f32 %v2714, 1e-24
          %v2787 = vmax.f32 %v2716, 1e-24
          %v2788 = vmax.f32 %v2718, 1e-24
          %v2789 = vmax.f32 %v2720, 1e-24
          %v2790 = vmax.f32 %v2722, 1e-24
          %v2791 = vmax.f32 %v2724, 1e-24
          %v2792 = vmax.f32 %v2726, 1e-24
          %v2793 = vmax.f32 %v2728, 1e-24
          %v2794 = vmax.f32 %v2730, 1e-24
          %v2795 = vrsqrt.pop %v2731
          %v2796 = vrsqrt.pop %v2732
          %v2797 = vrsqrt.pop %v2733
          %v2798 = vrsqrt.pop %v2734
          %v2799 = vrsqrt.pop %v2735
          %v2800 = vrsqrt.pop %v2736
          %v2801 = vrsqrt.pop %v2737
          %v2802 = vrsqrt.pop %v2738
          %v2803 = vrsqrt.pop %v2739
          %v2804 = vrsqrt.pop %v2740
          %v2805 = vrsqrt.pop %v2741
          %v2806 = vrsqrt.pop %v2742
          %v2807 = vrsqrt.pop %v2743
          %v2808 = vrsqrt.pop %v2744
          %v2809 = vrsqrt.pop %v2745
          %v2810 = vrsqrt.pop %v2746
          %v2811 = vrsqrt.pop %v2747
          %v2812 = vrsqrt.pop %v2748
          %v2813 = vrsqrt.pop %v2749
          %v2814 = vrsqrt.pop %v2750
          %v2815 = vrsqrt.pop %v2751
          %v2816 = vrsqrt.pop %v2752
          %v2817 = vrsqrt.pop %v2753
          %v2818 = vrsqrt.pop %v2754
          %v2819 = vrsqrt.pop %v2755
          %v2820 = vrsqrt.pop %v2756
          %v2821 = vrsqrt.pop %v2757
          %v2822 = vrsqrt.pop %v2758
          %v2823 = vrsqrt.pop %v2759
          %v2824 = vrsqrt.pop %v2760
          %v2825 = vrsqrt.pop %v2761
          %v2826 = vrsqrt.pop %v2762
          %v2827 = vrsqrt.pop %v2763
          %v2828 = vrsqrt.pop %v2764
          %v2829 = vrsqrt.pop %v2765
          %v2830 = vrsqrt.pop %v2766
          %v2831 = vrsqrt.pop %v2767
          %v2832 = vrsqrt.pop %v2768
          %v2833 = vrsqrt.pop %v2769
          %v2834 = vrsqrt.pop %v2770
          %v2835 = vrsqrt.pop %v2771
          %v2836 = vrsqrt.pop %v2772
          %v2837 = vrsqrt.pop %v2773
          %v2838 = vrsqrt.pop %v2774
          %v2839 = vrsqrt.pop %v2775
          %v2840 = vrsqrt.pop %v2776
          %v2841 = vrsqrt.pop %v2777
          %v2842 = vrsqrt.pop %v2778
          %v2843 = vrsqrt.pop %v2779
          %v2844 = vrsqrt.pop %v2780
          %v2845 = vrsqrt.pop %v2781
          %v2846 = vrsqrt.pop %v2782
          %v2847 = vrsqrt.pop %v2783
          %v2848 = vrsqrt.pop %v2784
          %v2849 = vrsqrt.pop %v2785
          %v2850 = vrsqrt.pop %v2786
          %v2851 = vrsqrt.pop %v2787
          %v2852 = vrsqrt.pop %v2788
          %v2853 = vrsqrt.pop %v2789
          %v2854 = vrsqrt.pop %v2790
          %v2855 = vrsqrt.pop %v2791
          %v2856 = vrsqrt.pop %v2792
          %v2857 = vrsqrt.pop %v2793
          %v2858 = vrsqrt.pop %v2794
          %v2859 = vmul.f32 %v2475, %v2795
          %v2860 = vmul.f32 %v2476, %v2796
          %v2861 = vmul.f32 %v2477, %v2797
          %v2862 = vmul.f32 %v2478, %v2798
          %v2863 = vmul.f32 %v2479, %v2799
          %v2864 = vmul.f32 %v2480, %v2800
          %v2865 = vmul.f32 %v2481, %v2801
          %v2866 = vmul.f32 %v2482, %v2802
          %v2867 = vmul.f32 %v2483, %v2803
          %v2868 = vmul.f32 %v2484, %v2804
          %v2869 = vmul.f32 %v2485, %v2805
          %v2870 = vmul.f32 %v2486, %v2806
          %v2871 = vmul.f32 %v2487, %v2807
          %v2872 = vmul.f32 %v2488, %v2808
          %v2873 = vmul.f32 %v2489, %v2809
          %v2874 = vmul.f32 %v2490, %v2810
          %v2875 = vmul.f32 %v2491, %v2811
          %v2876 = vmul.f32 %v2492, %v2812
          %v2877 = vmul.f32 %v2493, %v2813
          %v2878 = vmul.f32 %v2494, %v2814
          %v2879 = vmul.f32 %v2495, %v2815
          %v2880 = vmul.f32 %v2496, %v2816
          %v2881 = vmul.f32 %v2497, %v2817
          %v2882 = vmul.f32 %v2498, %v2818
          %v2883 = vmul.f32 %v2499, %v2819
          %v2884 = vmul.f32 %v2500, %v2820
          %v2885 = vmul.f32 %v2501, %v2821
          %v2886 = vmul.f32 %v2502, %v2822
          %v2887 = vmul.f32 %v2503, %v2823
          %v2888 = vmul.f32 %v2504, %v2824
          %v2889 = vmul.f32 %v2505, %v2825
          %v2890 = vmul.f32 %v2506, %v2826
          %v2891 = vmul.f32 %v2507, %v2827
          %v2892 = vmul.f32 %v2508, %v2828
          %v2893 = vmul.f32 %v2509, %v2829
          %v2894 = vmul.f32 %v2510, %v2830
          %v2895 = vmul.f32 %v2511, %v2831
          %v2896 = vmul.f32 %v2512, %v2832
          %v2897 = vmul.f32 %v2513, %v2833
          %v2898 = vmul.f32 %v2514, %v2834
          %v2899 = vmul.f32 %v2515, %v2835
          %v2900 = vmul.f32 %v2516, %v2836
          %v2901 = vmul.f32 %v2517, %v2837
          %v2902 = vmul.f32 %v2518, %v2838
          %v2903 = vmul.f32 %v2519, %v2839
          %v2904 = vmul.f32 %v2520, %v2840
          %v2905 = vmul.f32 %v2521, %v2841
          %v2906 = vmul.f32 %v2522, %v2842
          %v2907 = vmul.f32 %v2523, %v2843
          %v2908 = vmul.f32 %v2524, %v2844
          %v2909 = vmul.f32 %v2525, %v2845
          %v2910 = vmul.f32 %v2526, %v2846
          %v2911 = vmul.f32 %v2527, %v2847
          %v2912 = vmul.f32 %v2528, %v2848
          %v2913 = vmul.f32 %v2529, %v2849
          %v2914 = vmul.f32 %v2530, %v2850
          %v2915 = vmul.f32 %v2531, %v2851
          %v2916 = vmul.f32 %v2532, %v2852
          %v2917 = vmul.f32 %v2533, %v2853
          %v2918 = vmul.f32 %v2534, %v2854
          %v2919 = vmul.f32 %v2535, %v2855
          %v2920 = vmul.f32 %v2536, %v2856
          %v2921 = vmul.f32 %v2537, %v2857
          %v2922 = vmul.f32 %v2538, %v2858
          %v2923 = vsel %vm2474, %v2859, -inf
          %v2924 = vsel %vm2474, %v2860, -inf
          %v2925 = vsel %vm2474, %v2861, -inf
          %v2926 = vsel %vm2474, %v2862, -inf
          %v2927 = vsel %vm2474, %v2863, -inf
          %v2928 = vsel %vm2474, %v2864, -inf
          %v2929 = vsel %vm2474, %v2865, -inf
          %v2930 = vsel %vm2474, %v2866, -inf
          %v2931 = vsel %vm2474, %v2867, -inf
          %v2932 = vsel %vm2474, %v2868, -inf
          %v2933 = vsel %vm2474, %v2869, -inf
          %v2934 = vsel %vm2474, %v2870, -inf
          %v2935 = vsel %vm2474, %v2871, -inf
          %v2936 = vsel %vm2474, %v2872, -inf
          %v2937 = vsel %vm2474, %v2873, -inf
          %v2938 = vsel %vm2474, %v2874, -inf
          %v2939 = vsel %vm2474, %v2875, -inf
          %v2940 = vsel %vm2474, %v2876, -inf
          %v2941 = vsel %vm2474, %v2877, -inf
          %v2942 = vsel %vm2474, %v2878, -inf
          %v2943 = vsel %vm2474, %v2879, -inf
          %v2944 = vsel %vm2474, %v2880, -inf
          %v2945 = vsel %vm2474, %v2881, -inf
          %v2946 = vsel %vm2474, %v2882, -inf
          %v2947 = vsel %vm2474, %v2883, -inf
          %v2948 = vsel %vm2474, %v2884, -inf
          %v2949 = vsel %vm2474, %v2885, -inf
          %v2950 = vsel %vm2474, %v2886, -inf
          %v2951 = vsel %vm2474, %v2887, -inf
          %v2952 = vsel %vm2474, %v2888, -inf
          %v2953 = vsel %vm2474, %v2889, -inf
          %v2954 = vsel %vm2474, %v2890, -inf
          %v2955 = vsel %vm2474, %v2891, -inf
          %v2956 = vsel %vm2474, %v2892, -inf
          %v2957 = vsel %vm2474, %v2893, -inf
          %v2958 = vsel %vm2474, %v2894, -inf
          %v2959 = vsel %vm2474, %v2895, -inf
          %v2960 = vsel %vm2474, %v2896, -inf
          %v2961 = vsel %vm2474, %v2897, -inf
          %v2962 = vsel %vm2474, %v2898, -inf
          %v2963 = vsel %vm2474, %v2899, -inf
          %v2964 = vsel %vm2474, %v2900, -inf
          %v2965 = vsel %vm2474, %v2901, -inf
          %v2966 = vsel %vm2474, %v2902, -inf
          %v2967 = vsel %vm2474, %v2903, -inf
          %v2968 = vsel %vm2474, %v2904, -inf
          %v2969 = vsel %vm2474, %v2905, -inf
          %v2970 = vsel %vm2474, %v2906, -inf
          %v2971 = vsel %vm2474, %v2907, -inf
          %v2972 = vsel %vm2474, %v2908, -inf
          %v2973 = vsel %vm2474, %v2909, -inf
          %v2974 = vsel %vm2474, %v2910, -inf
          %v2975 = vsel %vm2474, %v2911, -inf
          %v2976 = vsel %vm2474, %v2912, -inf
          %v2977 = vsel %vm2474, %v2913, -inf
          %v2978 = vsel %vm2474, %v2914, -inf
          %v2979 = vsel %vm2474, %v2915, -inf
          %v2980 = vsel %vm2474, %v2916, -inf
          %v2981 = vsel %vm2474, %v2917, -inf
          %v2982 = vsel %vm2474, %v2918, -inf
          %v2983 = vsel %vm2474, %v2919, -inf
          %v2984 = vsel %vm2474, %v2920, -inf
          %v2985 = vsel %vm2474, %v2921, -inf
          %v2986 = vsel %vm2474, %v2922, -inf
          %2987 = vmax.xlane.f32.xlu0 %v2923
          %v2988 = vpop.xlane.xlu0 %2987
          %2989 = vmax.xlane.f32.xlu0 %v2924
          %v2990 = vpop.xlane.xlu0 %2989
          %2991 = vmax.xlane.f32.xlu0 %v2925
          %v2992 = vpop.xlane.xlu0 %2991
          %2993 = vmax.xlane.f32.xlu0 %v2926
          %v2994 = vpop.xlane.xlu0 %2993
          %2995 = vmax.xlane.f32.xlu0 %v2927
          %v2996 = vpop.xlane.xlu0 %2995
          %2997 = vmax.xlane.f32.xlu0 %v2928
          %v2998 = vpop.xlane.xlu0 %2997
          %2999 = vmax.xlane.f32.xlu0 %v2929
          %v3000 = vpop.xlane.xlu0 %2999
          %3001 = vmax.xlane.f32.xlu0 %v2930
          %v3002 = vpop.xlane.xlu0 %3001
          %3003 = vmax.xlane.f32.xlu0 %v2931
          %v3004 = vpop.xlane.xlu0 %3003
          %3005 = vmax.xlane.f32.xlu0 %v2932
          %v3006 = vpop.xlane.xlu0 %3005
          %3007 = vmax.xlane.f32.xlu0 %v2933
          %v3008 = vpop.xlane.xlu0 %3007
          %3009 = vmax.xlane.f32.xlu0 %v2934
          %v3010 = vpop.xlane.xlu0 %3009
          %3011 = vmax.xlane.f32.xlu0 %v2935
          %v3012 = vpop.xlane.xlu0 %3011
          %3013 = vmax.xlane.f32.xlu0 %v2936
          %v3014 = vpop.xlane.xlu0 %3013
          %3015 = vmax.xlane.f32.xlu0 %v2937
          %v3016 = vpop.xlane.xlu0 %3015
          %3017 = vmax.xlane.f32.xlu0 %v2938
          %v3018 = vpop.xlane.xlu0 %3017
          %3019 = vmax.xlane.f32.xlu0 %v2939
          %v3020 = vpop.xlane.xlu0 %3019
          %3021 = vmax.xlane.f32.xlu0 %v2940
          %v3022 = vpop.xlane.xlu0 %3021
          %3023 = vmax.xlane.f32.xlu0 %v2941
          %v3024 = vpop.xlane.xlu0 %3023
          %3025 = vmax.xlane.f32.xlu0 %v2942
          %v3026 = vpop.xlane.xlu0 %3025
          %3027 = vmax.xlane.f32.xlu0 %v2943
          %v3028 = vpop.xlane.xlu0 %3027
          %3029 = vmax.xlane.f32.xlu0 %v2944
          %v3030 = vpop.xlane.xlu0 %3029
          %3031 = vmax.xlane.f32.xlu0 %v2945
          %v3032 = vpop.xlane.xlu0 %3031
          %3033 = vmax.xlane.f32.xlu0 %v2946
          %v3034 = vpop.xlane.xlu0 %3033
          %3035 = vmax.xlane.f32.xlu0 %v2947
          %v3036 = vpop.xlane.xlu0 %3035
          %3037 = vmax.xlane.f32.xlu0 %v2948
          %v3038 = vpop.xlane.xlu0 %3037
          %3039 = vmax.xlane.f32.xlu0 %v2949
          %v3040 = vpop.xlane.xlu0 %3039
          %3041 = vmax.xlane.f32.xlu0 %v2950
          %v3042 = vpop.xlane.xlu0 %3041
          %3043 = vmax.xlane.f32.xlu0 %v2951
          %v3044 = vpop.xlane.xlu0 %3043
          %3045 = vmax.xlane.f32.xlu0 %v2952
          %v3046 = vpop.xlane.xlu0 %3045
          %3047 = vmax.xlane.f32.xlu0 %v2953
          %v3048 = vpop.xlane.xlu0 %3047
          %3049 = vmax.xlane.f32.xlu0 %v2954
          %v3050 = vpop.xlane.xlu0 %3049
          %3051 = vmax.xlane.f32.xlu0 %v2955
          %v3052 = vpop.xlane.xlu0 %3051
          %3053 = vmax.xlane.f32.xlu0 %v2956
          %v3054 = vpop.xlane.xlu0 %3053
          %3055 = vmax.xlane.f32.xlu0 %v2957
          %v3056 = vpop.xlane.xlu0 %3055
          %3057 = vmax.xlane.f32.xlu0 %v2958
          %v3058 = vpop.xlane.xlu0 %3057
          %3059 = vmax.xlane.f32.xlu0 %v2959
          %v3060 = vpop.xlane.xlu0 %3059
          %3061 = vmax.xlane.f32.xlu0 %v2960
          %v3062 = vpop.xlane.xlu0 %3061
          %3063 = vmax.xlane.f32.xlu0 %v2961
          %v3064 = vpop.xlane.xlu0 %3063
          %3065 = vmax.xlane.f32.xlu0 %v2962
          %v3066 = vpop.xlane.xlu0 %3065
          %3067 = vmax.xlane.f32.xlu0 %v2963
          %v3068 = vpop.xlane.xlu0 %3067
          %3069 = vmax.xlane.f32.xlu0 %v2964
          %v3070 = vpop.xlane.xlu0 %3069
          %3071 = vmax.xlane.f32.xlu0 %v2965
          %v3072 = vpop.xlane.xlu0 %3071
          %3073 = vmax.xlane.f32.xlu0 %v2966
          %v3074 = vpop.xlane.xlu0 %3073
          %3075 = vmax.xlane.f32.xlu0 %v2967
          %v3076 = vpop.xlane.xlu0 %3075
          %3077 = vmax.xlane.f32.xlu0 %v2968
          %v3078 = vpop.xlane.xlu0 %3077
          %3079 = vmax.xlane.f32.xlu0 %v2969
          %v3080 = vpop.xlane.xlu0 %3079
          %3081 = vmax.xlane.f32.xlu0 %v2970
          %v3082 = vpop.xlane.xlu0 %3081
          %3083 = vmax.xlane.f32.xlu0 %v2971
          %v3084 = vpop.xlane.xlu0 %3083
          %3085 = vmax.xlane.f32.xlu0 %v2972
          %v3086 = vpop.xlane.xlu0 %3085
          %3087 = vmax.xlane.f32.xlu0 %v2973
          %v3088 = vpop.xlane.xlu0 %3087
          %3089 = vmax.xlane.f32.xlu0 %v2974
          %v3090 = vpop.xlane.xlu0 %3089
          %3091 = vmax.xlane.f32.xlu0 %v2975
          %v3092 = vpop.xlane.xlu0 %3091
          %3093 = vmax.xlane.f32.xlu0 %v2976
          %v3094 = vpop.xlane.xlu0 %3093
          %3095 = vmax.xlane.f32.xlu0 %v2977
          %v3096 = vpop.xlane.xlu0 %3095
          %3097 = vmax.xlane.f32.xlu0 %v2978
          %v3098 = vpop.xlane.xlu0 %3097
          %3099 = vmax.xlane.f32.xlu0 %v2979
          %v3100 = vpop.xlane.xlu0 %3099
          %3101 = vmax.xlane.f32.xlu0 %v2980
          %v3102 = vpop.xlane.xlu0 %3101
          %3103 = vmax.xlane.f32.xlu0 %v2981
          %v3104 = vpop.xlane.xlu0 %3103
          %3105 = vmax.xlane.f32.xlu0 %v2982
          %v3106 = vpop.xlane.xlu0 %3105
          %3107 = vmax.xlane.f32.xlu0 %v2983
          %v3108 = vpop.xlane.xlu0 %3107
          %3109 = vmax.xlane.f32.xlu0 %v2984
          %v3110 = vpop.xlane.xlu0 %3109
          %3111 = vmax.xlane.f32.xlu0 %v2985
          %v3112 = vpop.xlane.xlu0 %3111
          %3113 = vmax.xlane.f32.xlu0 %v2986
          %v3114 = vpop.xlane.xlu0 %3113
          %v3115 = vsub.f32 %v2859, %v2988
          %v3116 = vsub.f32 %v2860, %v2990
          %v3117 = vsub.f32 %v2861, %v2992
          %v3118 = vsub.f32 %v2862, %v2994
          %v3119 = vsub.f32 %v2863, %v2996
          %v3120 = vsub.f32 %v2864, %v2998
          %v3121 = vsub.f32 %v2865, %v3000
          %v3122 = vsub.f32 %v2866, %v3002
          %v3123 = vsub.f32 %v2867, %v3004
          %v3124 = vsub.f32 %v2868, %v3006
          %v3125 = vsub.f32 %v2869, %v3008
          %v3126 = vsub.f32 %v2870, %v3010
          %v3127 = vsub.f32 %v2871, %v3012
          %v3128 = vsub.f32 %v2872, %v3014
          %v3129 = vsub.f32 %v2873, %v3016
          %v3130 = vsub.f32 %v2874, %v3018
          %v3131 = vsub.f32 %v2875, %v3020
          %v3132 = vsub.f32 %v2876, %v3022
          %v3133 = vsub.f32 %v2877, %v3024
          %v3134 = vsub.f32 %v2878, %v3026
          %v3135 = vsub.f32 %v2879, %v3028
          %v3136 = vsub.f32 %v2880, %v3030
          %v3137 = vsub.f32 %v2881, %v3032
          %v3138 = vsub.f32 %v2882, %v3034
          %v3139 = vsub.f32 %v2883, %v3036
          %v3140 = vsub.f32 %v2884, %v3038
          %v3141 = vsub.f32 %v2885, %v3040
          %v3142 = vsub.f32 %v2886, %v3042
          %v3143 = vsub.f32 %v2887, %v3044
          %v3144 = vsub.f32 %v2888, %v3046
          %v3145 = vsub.f32 %v2889, %v3048
          %v3146 = vsub.f32 %v2890, %v3050
          %v3147 = vsub.f32 %v2891, %v3052
          %v3148 = vsub.f32 %v2892, %v3054
          %v3149 = vsub.f32 %v2893, %v3056
          %v3150 = vsub.f32 %v2894, %v3058
          %v3151 = vsub.f32 %v2895, %v3060
          %v3152 = vsub.f32 %v2896, %v3062
          %v3153 = vsub.f32 %v2897, %v3064
          %v3154 = vsub.f32 %v2898, %v3066
          %v3155 = vsub.f32 %v2899, %v3068
          %v3156 = vsub.f32 %v2900, %v3070
          %v3157 = vsub.f32 %v2901, %v3072
          %v3158 = vsub.f32 %v2902, %v3074
          %v3159 = vsub.f32 %v2903, %v3076
          %v3160 = vsub.f32 %v2904, %v3078
          %v3161 = vsub.f32 %v2905, %v3080
          %v3162 = vsub.f32 %v2906, %v3082
          %v3163 = vsub.f32 %v2907, %v3084
          %v3164 = vsub.f32 %v2908, %v3086
          %v3165 = vsub.f32 %v2909, %v3088
          %v3166 = vsub.f32 %v2910, %v3090
          %v3167 = vsub.f32 %v2911, %v3092
          %v3168 = vsub.f32 %v2912, %v3094
          %v3169 = vsub.f32 %v2913, %v3096
          %v3170 = vsub.f32 %v2914, %v3098
          %v3171 = vsub.f32 %v2915, %v3100
          %v3172 = vsub.f32 %v2916, %v3102
          %v3173 = vsub.f32 %v2917, %v3104
          %v3174 = vsub.f32 %v2918, %v3106
          %v3175 = vsub.f32 %v2919, %v3108
          %v3176 = vsub.f32 %v2920, %v3110
          %v3177 = vsub.f32 %v2921, %v3112
          %v3178 = vsub.f32 %v2922, %v3114
          %v3179 = vmul.f32 %v3115, 1.442695
          %v3180 = vpow.pop %v3179
          %v3181 = vmul.f32 %v3116, 1.442695
          %v3182 = vpow.pop %v3181
          %v3183 = vmul.f32 %v3117, 1.442695
          %v3184 = vpow.pop %v3183
          %v3185 = vmul.f32 %v3118, 1.442695
          %v3186 = vpow.pop %v3185
          %v3187 = vmul.f32 %v3119, 1.442695
          %v3188 = vpow.pop %v3187
          %v3189 = vmul.f32 %v3120, 1.442695
          %v3190 = vpow.pop %v3189
          %v3191 = vmul.f32 %v3121, 1.442695
          %v3192 = vpow.pop %v3191
          %v3193 = vmul.f32 %v3122, 1.442695
          %v3194 = vpow.pop %v3193
          %v3195 = vmul.f32 %v3123, 1.442695
          %v3196 = vpow.pop %v3195
          %v3197 = vmul.f32 %v3124, 1.442695
          %v3198 = vpow.pop %v3197
          %v3199 = vmul.f32 %v3125, 1.442695
          %v3200 = vpow.pop %v3199
          %v3201 = vmul.f32 %v3126, 1.442695
          %v3202 = vpow.pop %v3201
          %v3203 = vmul.f32 %v3127, 1.442695
          %v3204 = vpow.pop %v3203
          %v3205 = vmul.f32 %v3128, 1.442695
          %v3206 = vpow.pop %v3205
          %v3207 = vmul.f32 %v3129, 1.442695
          %v3208 = vpow.pop %v3207
          %v3209 = vmul.f32 %v3130, 1.442695
          %v3210 = vpow.pop %v3209
          %v3211 = vmul.f32 %v3131, 1.442695
          %v3212 = vpow.pop %v3211
          %v3213 = vmul.f32 %v3132, 1.442695
          %v3214 = vpow.pop %v3213
          %v3215 = vmul.f32 %v3133, 1.442695
          %v3216 = vpow.pop %v3215
          %v3217 = vmul.f32 %v3134, 1.442695
          %v3218 = vpow.pop %v3217
          %v3219 = vmul.f32 %v3135, 1.442695
          %v3220 = vpow.pop %v3219
          %v3221 = vmul.f32 %v3136, 1.442695
          %v3222 = vpow.pop %v3221
          %v3223 = vmul.f32 %v3137, 1.442695
          %v3224 = vpow.pop %v3223
          %v3225 = vmul.f32 %v3138, 1.442695
          %v3226 = vpow.pop %v3225
          %v3227 = vmul.f32 %v3139, 1.442695
          %v3228 = vpow.pop %v3227
          %v3229 = vmul.f32 %v3140, 1.442695
          %v3230 = vpow.pop %v3229
          %v3231 = vmul.f32 %v3141, 1.442695
          %v3232 = vpow.pop %v3231
          %v3233 = vmul.f32 %v3142, 1.442695
          %v3234 = vpow.pop %v3233
          %v3235 = vmul.f32 %v3143, 1.442695
          %v3236 = vpow.pop %v3235
          %v3237 = vmul.f32 %v3144, 1.442695
          %v3238 = vpow.pop %v3237
          %v3239 = vmul.f32 %v3145, 1.442695
          %v3240 = vpow.pop %v3239
          %v3241 = vmul.f32 %v3146, 1.442695
          %v3242 = vpow.pop %v3241
          %v3243 = vmul.f32 %v3147, 1.442695
          %v3244 = vpow.pop %v3243
          %v3245 = vmul.f32 %v3148, 1.442695
          %v3246 = vpow.pop %v3245
          %v3247 = vmul.f32 %v3149, 1.442695
          %v3248 = vpow.pop %v3247
          %v3249 = vmul.f32 %v3150, 1.442695
          %v3250 = vpow.pop %v3249
          %v3251 = vmul.f32 %v3151, 1.442695
          %v3252 = vpow.pop %v3251
          %v3253 = vmul.f32 %v3152, 1.442695
          %v3254 = vpow.pop %v3253
          %v3255 = vmul.f32 %v3153, 1.442695
          %v3256 = vpow.pop %v3255
          %v3257 = vmul.f32 %v3154, 1.442695
          %v3258 = vpow.pop %v3257
          %v3259 = vmul.f32 %v3155, 1.442695
          %v3260 = vpow.pop %v3259
          %v3261 = vmul.f32 %v3156, 1.442695
          %v3262 = vpow.pop %v3261
          %v3263 = vmul.f32 %v3157, 1.442695
          %v3264 = vpow.pop %v3263
          %v3265 = vmul.f32 %v3158, 1.442695
          %v3266 = vpow.pop %v3265
          %v3267 = vmul.f32 %v3159, 1.442695
          %v3268 = vpow.pop %v3267
          %v3269 = vmul.f32 %v3160, 1.442695
          %v3270 = vpow.pop %v3269
          %v3271 = vmul.f32 %v3161, 1.442695
          %v3272 = vpow.pop %v3271
          %v3273 = vmul.f32 %v3162, 1.442695
          %v3274 = vpow.pop %v3273
          %v3275 = vmul.f32 %v3163, 1.442695
          %v3276 = vpow.pop %v3275
          %v3277 = vmul.f32 %v3164, 1.442695
          %v3278 = vpow.pop %v3277
          %v3279 = vmul.f32 %v3165, 1.442695
          %v3280 = vpow.pop %v3279
          %v3281 = vmul.f32 %v3166, 1.442695
          %v3282 = vpow.pop %v3281
          %v3283 = vmul.f32 %v3167, 1.442695
          %v3284 = vpow.pop %v3283
          %v3285 = vmul.f32 %v3168, 1.442695
          %v3286 = vpow.pop %v3285
          %v3287 = vmul.f32 %v3169, 1.442695
          %v3288 = vpow.pop %v3287
          %v3289 = vmul.f32 %v3170, 1.442695
          %v3290 = vpow.pop %v3289
          %v3291 = vmul.f32 %v3171, 1.442695
          %v3292 = vpow.pop %v3291
          %v3293 = vmul.f32 %v3172, 1.442695
          %v3294 = vpow.pop %v3293
          %v3295 = vmul.f32 %v3173, 1.442695
          %v3296 = vpow.pop %v3295
          %v3297 = vmul.f32 %v3174, 1.442695
          %v3298 = vpow.pop %v3297
          %v3299 = vmul.f32 %v3175, 1.442695
          %v3300 = vpow.pop %v3299
          %v3301 = vmul.f32 %v3176, 1.442695
          %v3302 = vpow.pop %v3301
          %v3303 = vmul.f32 %v3177, 1.442695
          %v3304 = vpow.pop %v3303
          %v3305 = vmul.f32 %v3178, 1.442695
          %v3306 = vpow.pop %v3305
          %v3307 = vsel %vm2474, %v3180, 0.0
          %v3308 = vsel %vm2474, %v3182, 0.0
          %v3309 = vsel %vm2474, %v3184, 0.0
          %v3310 = vsel %vm2474, %v3186, 0.0
          %v3311 = vsel %vm2474, %v3188, 0.0
          %v3312 = vsel %vm2474, %v3190, 0.0
          %v3313 = vsel %vm2474, %v3192, 0.0
          %v3314 = vsel %vm2474, %v3194, 0.0
          %v3315 = vsel %vm2474, %v3196, 0.0
          %v3316 = vsel %vm2474, %v3198, 0.0
          %v3317 = vsel %vm2474, %v3200, 0.0
          %v3318 = vsel %vm2474, %v3202, 0.0
          %v3319 = vsel %vm2474, %v3204, 0.0
          %v3320 = vsel %vm2474, %v3206, 0.0
          %v3321 = vsel %vm2474, %v3208, 0.0
          %v3322 = vsel %vm2474, %v3210, 0.0
          %v3323 = vsel %vm2474, %v3212, 0.0
          %v3324 = vsel %vm2474, %v3214, 0.0
          %v3325 = vsel %vm2474, %v3216, 0.0
          %v3326 = vsel %vm2474, %v3218, 0.0
          %v3327 = vsel %vm2474, %v3220, 0.0
          %v3328 = vsel %vm2474, %v3222, 0.0
          %v3329 = vsel %vm2474, %v3224, 0.0
          %v3330 = vsel %vm2474, %v3226, 0.0
          %v3331 = vsel %vm2474, %v3228, 0.0
          %v3332 = vsel %vm2474, %v3230, 0.0
          %v3333 = vsel %vm2474, %v3232, 0.0
          %v3334 = vsel %vm2474, %v3234, 0.0
          %v3335 = vsel %vm2474, %v3236, 0.0
          %v3336 = vsel %vm2474, %v3238, 0.0
          %v3337 = vsel %vm2474, %v3240, 0.0
          %v3338 = vsel %vm2474, %v3242, 0.0
          %v3339 = vsel %vm2474, %v3244, 0.0
          %v3340 = vsel %vm2474, %v3246, 0.0
          %v3341 = vsel %vm2474, %v3248, 0.0
          %v3342 = vsel %vm2474, %v3250, 0.0
          %v3343 = vsel %vm2474, %v3252, 0.0
          %v3344 = vsel %vm2474, %v3254, 0.0
          %v3345 = vsel %vm2474, %v3256, 0.0
          %v3346 = vsel %vm2474, %v3258, 0.0
          %v3347 = vsel %vm2474, %v3260, 0.0
          %v3348 = vsel %vm2474, %v3262, 0.0
          %v3349 = vsel %vm2474, %v3264, 0.0
          %v3350 = vsel %vm2474, %v3266, 0.0
          %v3351 = vsel %vm2474, %v3268, 0.0
          %v3352 = vsel %vm2474, %v3270, 0.0
          %v3353 = vsel %vm2474, %v3272, 0.0
          %v3354 = vsel %vm2474, %v3274, 0.0
          %v3355 = vsel %vm2474, %v3276, 0.0
          %v3356 = vsel %vm2474, %v3278, 0.0
          %v3357 = vsel %vm2474, %v3280, 0.0
          %v3358 = vsel %vm2474, %v3282, 0.0
          %v3359 = vsel %vm2474, %v3284, 0.0
          %v3360 = vsel %vm2474, %v3286, 0.0
          %v3361 = vsel %vm2474, %v3288, 0.0
          %v3362 = vsel %vm2474, %v3290, 0.0
          %v3363 = vsel %vm2474, %v3292, 0.0
          %v3364 = vsel %vm2474, %v3294, 0.0
          %v3365 = vsel %vm2474, %v3296, 0.0
          %v3366 = vsel %vm2474, %v3298, 0.0
          %v3367 = vsel %vm2474, %v3300, 0.0
          %v3368 = vsel %vm2474, %v3302, 0.0
          %v3369 = vsel %vm2474, %v3304, 0.0
          %v3370 = vsel %vm2474, %v3306, 0.0
          %3371 = vadd.xlane.f32.xlu0 %v3307
          %v3372 = vpop.xlane.xlu0 %3371
          %3373 = vadd.xlane.f32.xlu0 %v3308
          %v3374 = vpop.xlane.xlu0 %3373
          %3375 = vadd.xlane.f32.xlu0 %v3309
          %v3376 = vpop.xlane.xlu0 %3375
          %3377 = vadd.xlane.f32.xlu0 %v3310
          %v3378 = vpop.xlane.xlu0 %3377
          %3379 = vadd.xlane.f32.xlu0 %v3311
          %v3380 = vpop.xlane.xlu0 %3379
          %3381 = vadd.xlane.f32.xlu0 %v3312
          %v3382 = vpop.xlane.xlu0 %3381
          %3383 = vadd.xlane.f32.xlu0 %v3313
          %v3384 = vpop.xlane.xlu0 %3383
          %3385 = vadd.xlane.f32.xlu0 %v3314
          %v3386 = vpop.xlane.xlu0 %3385
          %3387 = vadd.xlane.f32.xlu0 %v3315
          %v3388 = vpop.xlane.xlu0 %3387
          %3389 = vadd.xlane.f32.xlu0 %v3316
          %v3390 = vpop.xlane.xlu0 %3389
          %3391 = vadd.xlane.f32.xlu0 %v3317
          %v3392 = vpop.xlane.xlu0 %3391
          %3393 = vadd.xlane.f32.xlu0 %v3318
          %v3394 = vpop.xlane.xlu0 %3393
          %3395 = vadd.xlane.f32.xlu0 %v3319
          %v3396 = vpop.xlane.xlu0 %3395
          %3397 = vadd.xlane.f32.xlu0 %v3320
          %v3398 = vpop.xlane.xlu0 %3397
          %3399 = vadd.xlane.f32.xlu0 %v3321
          %v3400 = vpop.xlane.xlu0 %3399
          %3401 = vadd.xlane.f32.xlu0 %v3322
          %v3402 = vpop.xlane.xlu0 %3401
          %3403 = vadd.xlane.f32.xlu0 %v3323
          %v3404 = vpop.xlane.xlu0 %3403
          %3405 = vadd.xlane.f32.xlu0 %v3324
          %v3406 = vpop.xlane.xlu0 %3405
          %3407 = vadd.xlane.f32.xlu0 %v3325
          %v3408 = vpop.xlane.xlu0 %3407
          %3409 = vadd.xlane.f32.xlu0 %v3326
          %v3410 = vpop.xlane.xlu0 %3409
          %3411 = vadd.xlane.f32.xlu0 %v3327
          %v3412 = vpop.xlane.xlu0 %3411
          %3413 = vadd.xlane.f32.xlu0 %v3328
          %v3414 = vpop.xlane.xlu0 %3413
          %3415 = vadd.xlane.f32.xlu0 %v3329
          %v3416 = vpop.xlane.xlu0 %3415
          %3417 = vadd.xlane.f32.xlu0 %v3330
          %v3418 = vpop.xlane.xlu0 %3417
          %3419 = vadd.xlane.f32.xlu0 %v3331
          %v3420 = vpop.xlane.xlu0 %3419
          %3421 = vadd.xlane.f32.xlu0 %v3332
          %v3422 = vpop.xlane.xlu0 %3421
          %3423 = vadd.xlane.f32.xlu0 %v3333
          %v3424 = vpop.xlane.xlu0 %3423
          %3425 = vadd.xlane.f32.xlu0 %v3334
          %v3426 = vpop.xlane.xlu0 %3425
          %3427 = vadd.xlane.f32.xlu0 %v3335
          %v3428 = vpop.xlane.xlu0 %3427
          %3429 = vadd.xlane.f32.xlu0 %v3336
          %v3430 = vpop.xlane.xlu0 %3429
          %3431 = vadd.xlane.f32.xlu0 %v3337
          %v3432 = vpop.xlane.xlu0 %3431
          %3433 = vadd.xlane.f32.xlu0 %v3338
          %v3434 = vpop.xlane.xlu0 %3433
          %3435 = vadd.xlane.f32.xlu0 %v3339
          %v3436 = vpop.xlane.xlu0 %3435
          %3437 = vadd.xlane.f32.xlu0 %v3340
          %v3438 = vpop.xlane.xlu0 %3437
          %3439 = vadd.xlane.f32.xlu0 %v3341
          %v3440 = vpop.xlane.xlu0 %3439
          %3441 = vadd.xlane.f32.xlu0 %v3342
          %v3442 = vpop.xlane.xlu0 %3441
          %3443 = vadd.xlane.f32.xlu0 %v3343
          %v3444 = vpop.xlane.xlu0 %3443
          %3445 = vadd.xlane.f32.xlu0 %v3344
          %v3446 = vpop.xlane.xlu0 %3445
          %3447 = vadd.xlane.f32.xlu0 %v3345
          %v3448 = vpop.xlane.xlu0 %3447
          %3449 = vadd.xlane.f32.xlu0 %v3346
          %v3450 = vpop.xlane.xlu0 %3449
          %3451 = vadd.xlane.f32.xlu0 %v3347
          %v3452 = vpop.xlane.xlu0 %3451
          %3453 = vadd.xlane.f32.xlu0 %v3348
          %v3454 = vpop.xlane.xlu0 %3453
          %3455 = vadd.xlane.f32.xlu0 %v3349
          %v3456 = vpop.xlane.xlu0 %3455
          %3457 = vadd.xlane.f32.xlu0 %v3350
          %v3458 = vpop.xlane.xlu0 %3457
          %3459 = vadd.xlane.f32.xlu0 %v3351
          %v3460 = vpop.xlane.xlu0 %3459
          %3461 = vadd.xlane.f32.xlu0 %v3352
          %v3462 = vpop.xlane.xlu0 %3461
          %3463 = vadd.xlane.f32.xlu0 %v3353
          %v3464 = vpop.xlane.xlu0 %3463
          %3465 = vadd.xlane.f32.xlu0 %v3354
          %v3466 = vpop.xlane.xlu0 %3465
          %3467 = vadd.xlane.f32.xlu0 %v3355
          %v3468 = vpop.xlane.xlu0 %3467
          %3469 = vadd.xlane.f32.xlu0 %v3356
          %v3470 = vpop.xlane.xlu0 %3469
          %3471 = vadd.xlane.f32.xlu0 %v3357
          %v3472 = vpop.xlane.xlu0 %3471
          %3473 = vadd.xlane.f32.xlu0 %v3358
          %v3474 = vpop.xlane.xlu0 %3473
          %3475 = vadd.xlane.f32.xlu0 %v3359
          %v3476 = vpop.xlane.xlu0 %3475
          %3477 = vadd.xlane.f32.xlu0 %v3360
          %v3478 = vpop.xlane.xlu0 %3477
          %3479 = vadd.xlane.f32.xlu0 %v3361
          %v3480 = vpop.xlane.xlu0 %3479
          %3481 = vadd.xlane.f32.xlu0 %v3362
          %v3482 = vpop.xlane.xlu0 %3481
          %3483 = vadd.xlane.f32.xlu0 %v3363
          %v3484 = vpop.xlane.xlu0 %3483
          %3485 = vadd.xlane.f32.xlu0 %v3364
          %v3486 = vpop.xlane.xlu0 %3485
          %3487 = vadd.xlane.f32.xlu0 %v3365
          %v3488 = vpop.xlane.xlu0 %3487
          %3489 = vadd.xlane.f32.xlu0 %v3366
          %v3490 = vpop.xlane.xlu0 %3489
          %3491 = vadd.xlane.f32.xlu0 %v3367
          %v3492 = vpop.xlane.xlu0 %3491
          %3493 = vadd.xlane.f32.xlu0 %v3368
          %v3494 = vpop.xlane.xlu0 %3493
          %3495 = vadd.xlane.f32.xlu0 %v3369
          %v3496 = vpop.xlane.xlu0 %3495
          %3497 = vadd.xlane.f32.xlu0 %v3370
          %v3498 = vpop.xlane.xlu0 %3497
          %v3499 = vlog2.pop %v3372
          %v3500 = vmul.f32 %v3499, 0.6931472
          %v3501 = vlog2.pop %v3374
          %v3502 = vmul.f32 %v3501, 0.6931472
          %v3503 = vlog2.pop %v3376
          %v3504 = vmul.f32 %v3503, 0.6931472
          %v3505 = vlog2.pop %v3378
          %v3506 = vmul.f32 %v3505, 0.6931472
          %v3507 = vlog2.pop %v3380
          %v3508 = vmul.f32 %v3507, 0.6931472
          %v3509 = vlog2.pop %v3382
          %v3510 = vmul.f32 %v3509, 0.6931472
          %v3511 = vlog2.pop %v3384
          %v3512 = vmul.f32 %v3511, 0.6931472
          %v3513 = vlog2.pop %v3386
          %v3514 = vmul.f32 %v3513, 0.6931472
          %v3515 = vlog2.pop %v3388
          %v3516 = vmul.f32 %v3515, 0.6931472
          %v3517 = vlog2.pop %v3390
          %v3518 = vmul.f32 %v3517, 0.6931472
          %v3519 = vlog2.pop %v3392
          %v3520 = vmul.f32 %v3519, 0.6931472
          %v3521 = vlog2.pop %v3394
          %v3522 = vmul.f32 %v3521, 0.6931472
          %v3523 = vlog2.pop %v3396
          %v3524 = vmul.f32 %v3523, 0.6931472
          %v3525 = vlog2.pop %v3398
          %v3526 = vmul.f32 %v3525, 0.6931472
          %v3527 = vlog2.pop %v3400
          %v3528 = vmul.f32 %v3527, 0.6931472
          %v3529 = vlog2.pop %v3402
          %v3530 = vmul.f32 %v3529, 0.6931472
          %v3531 = vlog2.pop %v3404
          %v3532 = vmul.f32 %v3531, 0.6931472
          %v3533 = vlog2.pop %v3406
          %v3534 = vmul.f32 %v3533, 0.6931472
          %v3535 = vlog2.pop %v3408
          %v3536 = vmul.f32 %v3535, 0.6931472
          %v3537 = vlog2.pop %v3410
          %v3538 = vmul.f32 %v3537, 0.6931472
          %v3539 = vlog2.pop %v3412
          %v3540 = vmul.f32 %v3539, 0.6931472
          %v3541 = vlog2.pop %v3414
          %v3542 = vmul.f32 %v3541, 0.6931472
          %v3543 = vlog2.pop %v3416
          %v3544 = vmul.f32 %v3543, 0.6931472
          %v3545 = vlog2.pop %v3418
          %v3546 = vmul.f32 %v3545, 0.6931472
          %v3547 = vlog2.pop %v3420
          %v3548 = vmul.f32 %v3547, 0.6931472
          %v3549 = vlog2.pop %v3422
          %v3550 = vmul.f32 %v3549, 0.6931472
          %v3551 = vlog2.pop %v3424
          %v3552 = vmul.f32 %v3551, 0.6931472
          %v3553 = vlog2.pop %v3426
          %v3554 = vmul.f32 %v3553, 0.6931472
          %v3555 = vlog2.pop %v3428
          %v3556 = vmul.f32 %v3555, 0.6931472
          %v3557 = vlog2.pop %v3430
          %v3558 = vmul.f32 %v3557, 0.6931472
          %v3559 = vlog2.pop %v3432
          %v3560 = vmul.f32 %v3559, 0.6931472
          %v3561 = vlog2.pop %v3434
          %v3562 = vmul.f32 %v3561, 0.6931472
          %v3563 = vlog2.pop %v3436
          %v3564 = vmul.f32 %v3563, 0.6931472
          %v3565 = vlog2.pop %v3438
          %v3566 = vmul.f32 %v3565, 0.6931472
          %v3567 = vlog2.pop %v3440
          %v3568 = vmul.f32 %v3567, 0.6931472
          %v3569 = vlog2.pop %v3442
          %v3570 = vmul.f32 %v3569, 0.6931472
          %v3571 = vlog2.pop %v3444
          %v3572 = vmul.f32 %v3571, 0.6931472
          %v3573 = vlog2.pop %v3446
          %v3574 = vmul.f32 %v3573, 0.6931472
          %v3575 = vlog2.pop %v3448
          %v3576 = vmul.f32 %v3575, 0.6931472
          %v3577 = vlog2.pop %v3450
          %v3578 = vmul.f32 %v3577, 0.6931472
          %v3579 = vlog2.pop %v3452
          %v3580 = vmul.f32 %v3579, 0.6931472
          %v3581 = vlog2.pop %v3454
          %v3582 = vmul.f32 %v3581, 0.6931472
          %v3583 = vlog2.pop %v3456
          %v3584 = vmul.f32 %v3583, 0.6931472
          %v3585 = vlog2.pop %v3458
          %v3586 = vmul.f32 %v3585, 0.6931472
          %v3587 = vlog2.pop %v3460
          %v3588 = vmul.f32 %v3587, 0.6931472
          %v3589 = vlog2.pop %v3462
          %v3590 = vmul.f32 %v3589, 0.6931472
          %v3591 = vlog2.pop %v3464
          %v3592 = vmul.f32 %v3591, 0.6931472
          %v3593 = vlog2.pop %v3466
          %v3594 = vmul.f32 %v3593, 0.6931472
          %v3595 = vlog2.pop %v3468
          %v3596 = vmul.f32 %v3595, 0.6931472
          %v3597 = vlog2.pop %v3470
          %v3598 = vmul.f32 %v3597, 0.6931472
          %v3599 = vlog2.pop %v3472
          %v3600 = vmul.f32 %v3599, 0.6931472
          %v3601 = vlog2.pop %v3474
          %v3602 = vmul.f32 %v3601, 0.6931472
          %v3603 = vlog2.pop %v3476
          %v3604 = vmul.f32 %v3603, 0.6931472
          %v3605 = vlog2.pop %v3478
          %v3606 = vmul.f32 %v3605, 0.6931472
          %v3607 = vlog2.pop %v3480
          %v3608 = vmul.f32 %v3607, 0.6931472
          %v3609 = vlog2.pop %v3482
          %v3610 = vmul.f32 %v3609, 0.6931472
          %v3611 = vlog2.pop %v3484
          %v3612 = vmul.f32 %v3611, 0.6931472
          %v3613 = vlog2.pop %v3486
          %v3614 = vmul.f32 %v3613, 0.6931472
          %v3615 = vlog2.pop %v3488
          %v3616 = vmul.f32 %v3615, 0.6931472
          %v3617 = vlog2.pop %v3490
          %v3618 = vmul.f32 %v3617, 0.6931472
          %v3619 = vlog2.pop %v3492
          %v3620 = vmul.f32 %v3619, 0.6931472
          %v3621 = vlog2.pop %v3494
          %v3622 = vmul.f32 %v3621, 0.6931472
          %v3623 = vlog2.pop %v3496
          %v3624 = vmul.f32 %v3623, 0.6931472
          %v3625 = vlog2.pop %v3498
          %v3626 = vmul.f32 %v3625, 0.6931472
          %v3627 = vadd.f32 %v3500, %v2988
          %v3628 = vadd.f32 %v3502, %v2990
          %v3629 = vadd.f32 %v3504, %v2992
          %v3630 = vadd.f32 %v3506, %v2994
          %v3631 = vadd.f32 %v3508, %v2996
          %v3632 = vadd.f32 %v3510, %v2998
          %v3633 = vadd.f32 %v3512, %v3000
          %v3634 = vadd.f32 %v3514, %v3002
          %v3635 = vadd.f32 %v3516, %v3004
          %v3636 = vadd.f32 %v3518, %v3006
          %v3637 = vadd.f32 %v3520, %v3008
          %v3638 = vadd.f32 %v3522, %v3010
          %v3639 = vadd.f32 %v3524, %v3012
          %v3640 = vadd.f32 %v3526, %v3014
          %v3641 = vadd.f32 %v3528, %v3016
          %v3642 = vadd.f32 %v3530, %v3018
          %v3643 = vadd.f32 %v3532, %v3020
          %v3644 = vadd.f32 %v3534, %v3022
          %v3645 = vadd.f32 %v3536, %v3024
          %v3646 = vadd.f32 %v3538, %v3026
          %v3647 = vadd.f32 %v3540, %v3028
          %v3648 = vadd.f32 %v3542, %v3030
          %v3649 = vadd.f32 %v3544, %v3032
          %v3650 = vadd.f32 %v3546, %v3034
          %v3651 = vadd.f32 %v3548, %v3036
          %v3652 = vadd.f32 %v3550, %v3038
          %v3653 = vadd.f32 %v3552, %v3040
          %v3654 = vadd.f32 %v3554, %v3042
          %v3655 = vadd.f32 %v3556, %v3044
          %v3656 = vadd.f32 %v3558, %v3046
          %v3657 = vadd.f32 %v3560, %v3048
          %v3658 = vadd.f32 %v3562, %v3050
          %v3659 = vadd.f32 %v3564, %v3052
          %v3660 = vadd.f32 %v3566, %v3054
          %v3661 = vadd.f32 %v3568, %v3056
          %v3662 = vadd.f32 %v3570, %v3058
          %v3663 = vadd.f32 %v3572, %v3060
          %v3664 = vadd.f32 %v3574, %v3062
          %v3665 = vadd.f32 %v3576, %v3064
          %v3666 = vadd.f32 %v3578, %v3066
          %v3667 = vadd.f32 %v3580, %v3068
          %v3668 = vadd.f32 %v3582, %v3070
          %v3669 = vadd.f32 %v3584, %v3072
          %v3670 = vadd.f32 %v3586, %v3074
          %v3671 = vadd.f32 %v3588, %v3076
          %v3672 = vadd.f32 %v3590, %v3078
          %v3673 = vadd.f32 %v3592, %v3080
          %v3674 = vadd.f32 %v3594, %v3082
          %v3675 = vadd.f32 %v3596, %v3084
          %v3676 = vadd.f32 %v3598, %v3086
          %v3677 = vadd.f32 %v3600, %v3088
          %v3678 = vadd.f32 %v3602, %v3090
          %v3679 = vadd.f32 %v3604, %v3092
          %v3680 = vadd.f32 %v3606, %v3094
          %v3681 = vadd.f32 %v3608, %v3096
          %v3682 = vadd.f32 %v3610, %v3098
          %v3683 = vadd.f32 %v3612, %v3100
          %v3684 = vadd.f32 %v3614, %v3102
          %v3685 = vadd.f32 %v3616, %v3104
          %v3686 = vadd.f32 %v3618, %v3106
          %v3687 = vadd.f32 %v3620, %v3108
          %v3688 = vadd.f32 %v3622, %v3110
          %v3689 = vadd.f32 %v3624, %v3112
          %v3690 = vadd.f32 %v3626, %v3114
          %v3691 = vsub.f32 %v2859, %v3627
          %v3692 = vsub.f32 %v2860, %v3628
          %v3693 = vsub.f32 %v2861, %v3629
          %v3694 = vsub.f32 %v2862, %v3630
          %v3695 = vsub.f32 %v2863, %v3631
          %v3696 = vsub.f32 %v2864, %v3632
          %v3697 = vsub.f32 %v2865, %v3633
          %v3698 = vsub.f32 %v2866, %v3634
          %v3699 = vsub.f32 %v2867, %v3635
          %v3700 = vsub.f32 %v2868, %v3636
          %v3701 = vsub.f32 %v2869, %v3637
          %v3702 = vsub.f32 %v2870, %v3638
          %v3703 = vsub.f32 %v2871, %v3639
          %v3704 = vsub.f32 %v2872, %v3640
          %v3705 = vsub.f32 %v2873, %v3641
          %v3706 = vsub.f32 %v2874, %v3642
          %v3707 = vsub.f32 %v2875, %v3643
          %v3708 = vsub.f32 %v2876, %v3644
          %v3709 = vsub.f32 %v2877, %v3645
          %v3710 = vsub.f32 %v2878, %v3646
          %v3711 = vsub.f32 %v2879, %v3647
          %v3712 = vsub.f32 %v2880, %v3648
          %v3713 = vsub.f32 %v2881, %v3649
          %v3714 = vsub.f32 %v2882, %v3650
          %v3715 = vsub.f32 %v2883, %v3651
          %v3716 = vsub.f32 %v2884, %v3652
          %v3717 = vsub.f32 %v2885, %v3653
          %v3718 = vsub.f32 %v2886, %v3654
          %v3719 = vsub.f32 %v2887, %v3655
          %v3720 = vsub.f32 %v2888, %v3656
          %v3721 = vsub.f32 %v2889, %v3657
          %v3722 = vsub.f32 %v2890, %v3658
          %v3723 = vsub.f32 %v2891, %v3659
          %v3724 = vsub.f32 %v2892, %v3660
          %v3725 = vsub.f32 %v2893, %v3661
          %v3726 = vsub.f32 %v2894, %v3662
          %v3727 = vsub.f32 %v2895, %v3663
          %v3728 = vsub.f32 %v2896, %v3664
          %v3729 = vsub.f32 %v2897, %v3665
          %v3730 = vsub.f32 %v2898, %v3666
          %v3731 = vsub.f32 %v2899, %v3667
          %v3732 = vsub.f32 %v2900, %v3668
          %v3733 = vsub.f32 %v2901, %v3669
          %v3734 = vsub.f32 %v2902, %v3670
          %v3735 = vsub.f32 %v2903, %v3671
          %v3736 = vsub.f32 %v2904, %v3672
          %v3737 = vsub.f32 %v2905, %v3673
          %v3738 = vsub.f32 %v2906, %v3674
          %v3739 = vsub.f32 %v2907, %v3675
          %v3740 = vsub.f32 %v2908, %v3676
          %v3741 = vsub.f32 %v2909, %v3677
          %v3742 = vsub.f32 %v2910, %v3678
          %v3743 = vsub.f32 %v2911, %v3679
          %v3744 = vsub.f32 %v2912, %v3680
          %v3745 = vsub.f32 %v2913, %v3681
          %v3746 = vsub.f32 %v2914, %v3682
          %v3747 = vsub.f32 %v2915, %v3683
          %v3748 = vsub.f32 %v2916, %v3684
          %v3749 = vsub.f32 %v2917, %v3685
          %v3750 = vsub.f32 %v2918, %v3686
          %v3751 = vsub.f32 %v2919, %v3687
          %v3752 = vsub.f32 %v2920, %v3688
          %v3753 = vsub.f32 %v2921, %v3689
          %v3754 = vsub.f32 %v2922, %v3690
          %3755 = vst [vmem:[%s463] sm:$0xff] %v3691
          %3756 = vst [vmem:[%s463 + $0x8] sm:$0xff] %v3692
          %3757 = vst [vmem:[%s463 + $0x10] sm:$0xff] %v3693
          %3758 = vst [vmem:[%s463 + $0x18] sm:$0xff] %v3694
          %3759 = vst [vmem:[%s463 + $0x20] sm:$0xff] %v3695
          %3760 = vst [vmem:[%s463 + $0x28] sm:$0xff] %v3696
          %3761 = vst [vmem:[%s463 + $0x30] sm:$0xff] %v3697
          %3762 = vst [vmem:[%s463 + $0x38] sm:$0xff] %v3698
          %3763 = vst [vmem:[%s463 + $0x40] sm:$0xff] %v3699
          %3764 = vst [vmem:[%s463 + $0x48] sm:$0xff] %v3700
          %3765 = vst [vmem:[%s463 + $0x50] sm:$0xff] %v3701
          %3766 = vst [vmem:[%s463 + $0x58] sm:$0xff] %v3702
          %3767 = vst [vmem:[%s463 + $0x60] sm:$0xff] %v3703
          %3768 = vst [vmem:[%s463 + $0x68] sm:$0xff] %v3704
          %3769 = vst [vmem:[%s463 + $0x70] sm:$0xff] %v3705
          %3770 = vst [vmem:[%s463 + $0x78] sm:$0xff] %v3706
          %3771 = vst [vmem:[%s463 + $0x80] sm:$0xff] %v3707
          %3772 = vst [vmem:[%s463 + $0x88] sm:$0xff] %v3708
          %3773 = vst [vmem:[%s463 + $0x90] sm:$0xff] %v3709
          %3774 = vst [vmem:[%s463 + $0x98] sm:$0xff] %v3710
          %3775 = vst [vmem:[%s463 + $0xa0] sm:$0xff] %v3711
          %3776 = vst [vmem:[%s463 + $0xa8] sm:$0xff] %v3712
          %3777 = vst [vmem:[%s463 + $0xb0] sm:$0xff] %v3713
          %3778 = vst [vmem:[%s463 + $0xb8] sm:$0xff] %v3714
          %3779 = vst [vmem:[%s463 + $0xc0] sm:$0xff] %v3715
          %3780 = vst [vmem:[%s463 + $0xc8] sm:$0xff] %v3716
          %3781 = vst [vmem:[%s463 + $0xd0] sm:$0xff] %v3717
          %3782 = vst [vmem:[%s463 + $0xd8] sm:$0xff] %v3718
          %3783 = vst [vmem:[%s463 + $0xe0] sm:$0xff] %v3719
          %3784 = vst [vmem:[%s463 + $0xe8] sm:$0xff] %v3720
          %3785 = vst [vmem:[%s463 + $0xf0] sm:$0xff] %v3721
          %3786 = vst [vmem:[%s463 + $0xf8] sm:$0xff] %v3722
          %3787 = vst [vmem:[%s463 + $0x100] sm:$0xff] %v3723
          %3788 = vst [vmem:[%s463 + $0x108] sm:$0xff] %v3724
          %3789 = vst [vmem:[%s463 + $0x110] sm:$0xff] %v3725
          %3790 = vst [vmem:[%s463 + $0x118] sm:$0xff] %v3726
          %3791 = vst [vmem:[%s463 + $0x120] sm:$0xff] %v3727
          %3792 = vst [vmem:[%s463 + $0x128] sm:$0xff] %v3728
          %3793 = vst [vmem:[%s463 + $0x130] sm:$0xff] %v3729
          %3794 = vst [vmem:[%s463 + $0x138] sm:$0xff] %v3730
          %3795 = vst [vmem:[%s463 + $0x140] sm:$0xff] %v3731
          %3796 = vst [vmem:[%s463 + $0x148] sm:$0xff] %v3732
          %3797 = vst [vmem:[%s463 + $0x150] sm:$0xff] %v3733
          %3798 = vst [vmem:[%s463 + $0x158] sm:$0xff] %v3734
          %3799 = vst [vmem:[%s463 + $0x160] sm:$0xff] %v3735
          %3800 = vst [vmem:[%s463 + $0x168] sm:$0xff] %v3736
          %3801 = vst [vmem:[%s463 + $0x170] sm:$0xff] %v3737
          %3802 = vst [vmem:[%s463 + $0x178] sm:$0xff] %v3738
          %3803 = vst [vmem:[%s463 + $0x180] sm:$0xff] %v3739
          %3804 = vst [vmem:[%s463 + $0x188] sm:$0xff] %v3740
          %3805 = vst [vmem:[%s463 + $0x190] sm:$0xff] %v3741
          %3806 = vst [vmem:[%s463 + $0x198] sm:$0xff] %v3742
          %3807 = vst [vmem:[%s463 + $0x1a0] sm:$0xff] %v3743
          %3808 = vst [vmem:[%s463 + $0x1a8] sm:$0xff] %v3744
          %3809 = vst [vmem:[%s463 + $0x1b0] sm:$0xff] %v3745
          %3810 = vst [vmem:[%s463 + $0x1b8] sm:$0xff] %v3746
          %3811 = vst [vmem:[%s463 + $0x1c0] sm:$0xff] %v3747
          %3812 = vst [vmem:[%s463 + $0x1c8] sm:$0xff] %v3748
          %3813 = vst [vmem:[%s463 + $0x1d0] sm:$0xff] %v3749
          %3814 = vst [vmem:[%s463 + $0x1d8] sm:$0xff] %v3750
          %3815 = vst [vmem:[%s463 + $0x1e0] sm:$0xff] %v3751
          %3816 = vst [vmem:[%s463 + $0x1e8] sm:$0xff] %v3752
          %3817 = vst [vmem:[%s463 + $0x1f0] sm:$0xff] %v3753
          %3818 = vst [vmem:[%s463 + $0x1f8] sm:$0xff] %v3754
        $region63: #{gnn_forward.11} parent=50 // pred_fallthru
          _
        %s3819 = smul.u32 64, %s18
        %p3820 = scmp.lt.s32.totalorder %s3819, 127
        %s3821 = scalar_select %p3820, %s3819, 127
        %s3822 = smul.addr %s3821, 8
        %s3823 = scalar_lea.vmem %s3, %s3822
        // Predicated region
        $region64: #{gnn_forward.11} parent=50 // pred_check
          %p3824 = pneg %p114
        $region65: #{gnn_forward.11} parent=50 // pred_check_branch
          %3826 = sbr.rel (%p3824) target = $region67
        $region66: #{gnn_forward.11} parent=50 // pred_region
          %s3827 = smul.u32 64, %s18
        $region67: #{gnn_forward.11} parent=50 // pred_fallthru
          _
      $region51: #{gnn_forward.11} parent=5 // pred_fallthru
        _
      %p3828 = scmp.le.s32.totalorder 2, %s9
      // Predicated region
      $region68: #{gnn_forward.11} parent=5 // pred_check
        %p3829 = pneg %p3828
      $region69: #{gnn_forward.11} parent=5 // pred_check_branch
        %3831 = sbr.rel (%p3829) target = $region71
      $region70: #{gnn_forward.11} parent=5 // pred_region
        %s3832 = ssub.s32 %s9, 2
        // Predicated region
        $region72: #{gnn_forward.11} parent=70 // pred_check
          %p3833 = pneg %p120
        $region73: #{gnn_forward.11} parent=70 // pred_check_branch
          %3835 = sbr.rel (%p3833) target = $region75
        $region74: #{gnn_forward.11} parent=70 // pred_region
          %s3836 = smul.u32 64, %s20
          %p3837 = scmp.lt.s32.totalorder %s3836, 127
          %s3838 = scalar_select %p3837, %s3836, 127
          %s3839 = smul.addr %s3838, 8
          %s3840 = scalar_lea.vmem %s3, %s3839
        $region75: #{gnn_forward.11} parent=70 // pred_fallthru
          _
      $region71: #{gnn_forward.11} parent=5 // pred_fallthru
        _
    $region6: #{gnn_forward.11} parent=1 // loop_footer
      %s13 = sadd.s32 1, %s9
    $region7: #{gnn_forward.11} parent=1 // loop_footer_branch
      %8 = sbr.rel target = $region3
    $region8: #{gnn_forward.11} parent=1 // loop_exit
      _

</llo_original>
